<compile_context>
chip_gen: v6e
topology: v6e:2x2x1
jax: 0.10.0
libtpu: 0.0.40
codegen_flags: <defaults>
</compile_context>

<pallas_src>
import numpy as np

import jax
import jax.numpy as jnp
from jax import lax
from jax.experimental import pallas as pl
from jax.experimental.pallas import tpu as pltpu


_OFF = 7  # interior offset: with Wp % 8 == 0, write start (h+1)*Wp + 1 + _OFF ≡ 0 (mod 8)


def _r8(x):
    return (x + 7) // 8 * 8


def _geom(B, H1, W1):
    """Static geometry shared by the kernel body and the wrapper."""
    H2, W2 = H1 // 2, W1 // 2
    H3, W3 = H2 // 2, W2 // 2
    H4, W4 = H3 // 2, W3 // 2
    HO, WO = H4 // 2, W4 // 2
    WP2, WP3, WP4 = _r8(W2 + 2), _r8(W3 + 2), _r8(W4 + 2)   # sublane-aligned row pitch
    # per-image padded-slab row count (multiple of 8 so stacked images stay aligned);
    # must cover the deepest patch read: (H+2)*Wp + _OFF + 2 rows.
    SL2 = _r8((H2 + 2) * WP2 + _OFF + 2)
    SL3 = _r8((H3 + 2) * WP3 + _OFF + 2)
    SL4 = _r8((H4 + 2) * WP4 + _OFF + 2)
    # stacked conv-output row counts (covers through the last image's valid rows)
    MA2 = (B - 1) * SL2 + H2 * WP2
    MA3 = (B - 1) * SL3 + H3 * WP3
    MA4 = (B - 1) * SL4 + H4 * WP4
    return dict(H2=H2, W2=W2, H3=H3, W3=W3, H4=H4, W4=W4, HO=HO, WO=WO,
                WP2=WP2, WP3=WP3, WP4=WP4, SL2=SL2, SL3=SL3, SL4=SL4,
                MA2=MA2, MA3=MA3, MA4=MA4)


def _conv3x3_relu_wide(pin_ref, w_ref, b_ref, n_rows, wp):
    """3x3 conv (pad=1, cross-correlation) + bias + ReLU on stacked padded slabs.

    pin_ref: (>= n_rows + 2*wp + 2 + _OFF, Cin) bf16; padded pixel (b, hp, wpix)
             of image b lives at row b*slab + hp*wp + wpix + _OFF.
    w_ref:   (9, Cin, Cout) bf16 tap-major weights;  b_ref: (1, Cout) f32 bias.
    Returns (n_rows, Cout) f32; row b*slab + h*wp + w holds output (b, h, w)
    for w < W.  All other rows are garbage and are never read downstream.
    Accumulation is a single chained dot+add on one f32 value (MRB-friendly).
    """
    acc = None
    for kh in range(3):
        for kw in range(3):
            s = _OFF + kh * wp + kw
            d = jnp.dot(pin_ref[s:s + n_rows, :], w_ref[kh * 3 + kw],
                        preferred_element_type=jnp.float32)
            acc = d if acc is None else acc + d
    return jnp.maximum(acc + b_ref[...], 0.0)


def _pool2x2_row(src_ref, base, wrow, wo):
    """2x2/stride-2 max pool of one output row; src rows laid out as h*wrow + w."""
    def rd(start):
        if wo == 1:
            return src_ref[pl.ds(start, 1), :]
        return src_ref[pl.ds(start, wo, stride=2), :]
    return jnp.maximum(jnp.maximum(rd(base), rd(base + 1)),
                       jnp.maximum(rd(base + wrow), rd(base + wrow + 1)))


def _make_kernel(B, H1, W1):
    g = _geom(B, H1, W1)
    H2, W2, H3, W3, H4, W4 = g["H2"], g["W2"], g["H3"], g["W3"], g["H4"], g["W4"]
    HO, WO = g["HO"], g["WO"]
    WP2, WP3, WP4 = g["WP2"], g["WP3"], g["WP4"]
    SL2, SL3, SL4 = g["SL2"], g["SL3"], g["SL4"]
    MA2, MA3, MA4 = g["MA2"], g["MA3"], g["MA4"]

    def kernel(xcol_ref, w1_ref, b1_ref, w2_ref, b2_ref, w3_ref, b3_ref,
               w4_ref, b4_ref, o_ref, a1, p2, a2, p3, a3, p4, a4):
        # One-time zero fill of the padded slabs: padding rows/cols are never
        # written afterwards, and every interior row is fully rewritten on
        # every grid step.  Safe because the grid axis is "arbitrary"
        # (sequential on one core), so scratch persists from step 0 onward.
        @pl.when(pl.program_id(0) == 0)
        def _():
            p2[...] = jnp.zeros_like(p2)
            p3[...] = jnp.zeros_like(p3)
            p4[...] = jnp.zeros_like(p4)

        # ---- stage 1: single im2col dot for the whole batch block ----------
        # (taps folded into the contraction: K = 9*3 -> padded 32, M = B*H1*W1)
        a1[...] = jnp.maximum(
            jnp.dot(xcol_ref[...], w1_ref[...],
                    preferred_element_type=jnp.float32) + b1_ref[...], 0.0)

        # ---- pool1 -> interiors of the stage-2 slabs (bf16, aligned stores) -
        for b in range(B):
            for i in range(H2):
                v = _pool2x2_row(a1, b * H1 * W1 + 2 * i * W1, W1, W2)
                dst = b * SL2 + (i + 1) * WP2 + 1 + _OFF        # ≡ 0 (mod 8)
                p2[pl.ds(dst, W2), :] = v.astype(p2.dtype)

        # ---- stage 2 --------------------------------------------------------
        a2[...] = _conv3x3_relu_wide(p2, w2_ref, b2_ref, MA2, WP2)
        for b in range(B):
            for i in range(H3):
                v = _pool2x2_row(a2, b * SL2 + 2 * i * WP2, WP2, W3)
                dst = b * SL3 + (i + 1) * WP3 + 1 + _OFF
                p3[pl.ds(dst, W3), :] = v.astype(p3.dtype)

        # ---- stage 3 --------------------------------------------------------
        a3[...] = _conv3x3_relu_wide(p3, w3_ref, b3_ref, MA3, WP3)
        for b in range(B):
            for i in range(H4):
                v = _pool2x2_row(a3, b * SL3 + 2 * i * WP3, WP3, W4)
                dst = b * SL4 + (i + 1) * WP4 + 1 + _OFF
                p4[pl.ds(dst, W4), :] = v.astype(p4.dtype)

        # ---- stage 4 + final pool, straight to the lane-dense output --------
        a4[...] = _conv3x3_relu_wide(p4, w4_ref, b4_ref, MA4, WP4)
        for b in range(B):
            for i in range(HO):
                v = _pool2x2_row(a4, b * SL4 + 2 * i * WP4, WP4, WO)
                o_ref[b, pl.ds(i * WO, WO), :] = v

    return kernel


def first_cnn_forward(x_nchw, params, *, batch_block=None):
    """FirstCNN forward.  params: 4 x (w, b) with w in HWIO layout (3,3,Cin,Cout)."""
    (w1, b1), (w2, b2), (w3, b3), (w4, b4) = params
    N, cin, H1, W1 = x_nchw.shape
    assert H1 % 16 == 0 and W1 % 16 == 0, "need four rounds of 2x2 pooling"
    C1, C2, C3, C4 = (w.shape[-1] for w in (w1, w2, w3, w4))
    B = N if batch_block is None else batch_block
    assert N % B == 0, "batch block must divide the batch"

    g = _geom(B, H1, W1)
    HO, WO = g["HO"], g["WO"]

    # ---- stage-1 im2col in plain JAX (taps folded into the contraction), bf16.
    x = jnp.transpose(x_nchw, (0, 2, 3, 1))                       # NCHW -> NHWC
    xp = jnp.pad(x, ((0, 0), (1, 1), (1, 1), (0, 0)))
    cols = [xp[:, kh:kh + H1, kw:kw + W1, :]
            for kh in range(3) for kw in range(3)]
    K1 = 9 * cin
    K1p = _r8(K1)
    xcol = jnp.concatenate(cols, axis=-1).reshape(N * H1 * W1, K1)
    xcol = jnp.pad(xcol, ((0, 0), (0, K1p - K1))).astype(jnp.bfloat16)

    w1c = jnp.pad(w1.reshape(K1, C1),
                  ((0, K1p - K1), (0, 0))).astype(jnp.bfloat16)   # (K1p, C1)
    w2t = w2.reshape(9, C1, C2).astype(jnp.bfloat16)
    w3t = w3.reshape(9, C2, C3).astype(jnp.bfloat16)
    w4t = w4.reshape(9, C3, C4).astype(jnp.bfloat16)
    b1r, b2r, b3r, b4r = (b.reshape(1, -1).astype(jnp.float32)
                          for b in (b1, b2, b3, b4))

    out = pl.pallas_call(
        _make_kernel(B, H1, W1),
        out_shape=jax.ShapeDtypeStruct((N, HO * WO, C4), jnp.float32),
        grid_spec=pltpu.PrefetchScalarGridSpec(
            num_scalar_prefetch=0,
            grid=(N // B,),
            in_specs=[
                pl.BlockSpec((B * H1 * W1, K1p), lambda n: (n, 0)),
                pl.BlockSpec((K1p, C1), lambda n: (0, 0)),
                pl.BlockSpec((1, C1), lambda n: (0, 0)),
                pl.BlockSpec((9, C1, C2), lambda n: (0, 0, 0)),
                pl.BlockSpec((1, C2), lambda n: (0, 0)),
                pl.BlockSpec((9, C2, C3), lambda n: (0, 0, 0)),
                pl.BlockSpec((1, C3), lambda n: (0, 0)),
                pl.BlockSpec((9, C3, C4), lambda n: (0, 0, 0)),
                pl.BlockSpec((1, C4), lambda n: (0, 0)),
            ],
            out_specs=pl.BlockSpec((B, HO * WO, C4), lambda n: (n, 0, 0)),
            scratch_shapes=[
                pltpu.VMEM((B * H1 * W1, C1), jnp.float32),     # a1 (stacked)
                pltpu.VMEM((B * g["SL2"], C1), jnp.bfloat16),   # p2 padded slabs
                pltpu.VMEM((g["MA2"], C2), jnp.float32),        # a2
                pltpu.VMEM((B * g["SL3"], C2), jnp.bfloat16),   # p3
                pltpu.VMEM((g["MA3"], C3), jnp.float32),        # a3
                pltpu.VMEM((B * g["SL4"], C3), jnp.bfloat16),   # p4
                pltpu.VMEM((g["MA4"], C4), jnp.float32),        # a4
            ],
        ),
        # "arbitrary": the hoisted program_id==0 zero-fill relies on sequential
        # single-core execution of the (short, N/B-step) grid; measured
        # parallel-vs-arbitrary difference on a single TC is ~0.
        compiler_params=pltpu.CompilerParams(
            dimension_semantics=("arbitrary",)),
    )(xcol, w1c, b1r, w2t, b2r, w3t, b3r, w4t, b4r)

    # torch.flatten(x, 1) on NCHW == channel-major flatten of (Ho, Wo, C).
    return jnp.transpose(out, (0, 2, 1)).reshape(N, C4 * HO * WO)


def init_params(key):
    # (Cin, Cout) for conv1..conv4 of FirstCNN (all 3x3, padding=1).
    cfgs = [(3, 32), (32, 64), (64, 128), (128, 256)]
    params = []
    for i, (cin, cout) in enumerate(cfgs):
        kw_, kb = jax.random.split(jax.random.fold_in(key, i))
        bound = 1.0 / np.sqrt(cin * 9)
        w = jax.random.uniform(kw_, (3, 3, cin, cout), jnp.float32, -bound, bound)
        b = jax.random.uniform(kb, (cout,), jnp.float32, -bound, bound)
        params.append((w, b))
    return params


def ref_forward(x_nchw, params):
    # Pure-JAX reference (XLA conv / reduce_window) for correctness checking.
    x = x_nchw
    for (w, b) in params:
        y = lax.conv_general_dilated(
            x, w, window_strides=(1, 1), padding=[(1, 1), (1, 1)],
            dimension_numbers=('NCHW', 'HWIO', 'NCHW'),
            precision=lax.Precision.HIGHEST)
        y = jax.nn.relu(y + b[None, :, None, None])
        y = lax.reduce_window(y, -jnp.inf, lax.max,
                              (1, 1, 2, 2), (1, 1, 2, 2), 'VALID')
        x = y
    return x.reshape(x.shape[0], -1)


if __name__ == "__main__":
    key = jax.random.PRNGKey(0)
    params = init_params(jax.random.fold_in(key, 1))
    x = jax.random.normal(jax.random.fold_in(key, 2), (2, 3, 16, 16), jnp.float32)

    out = first_cnn_forward(x, params)          # B = N = 2 -> single grid step
    out = jax.block_until_ready(out)
    assert out.shape == (2, 256), out.shape

    ref = ref_forward(x, params)
    # Tolerance reflects bf16 MXU inputs vs. an f32 HIGHEST-precision reference.
    np.testing.assert_allclose(np.asarray(out), np.asarray(ref),
                               atol=2e-2, rtol=2e-2)
    print("KERNEL_OK")
</pallas_src>

<mosaic_0001>
module attributes {stable_mosaic.version = 11 : i64} {
  func.func @kernel(%arg0: i32, %arg1: memref<512x32xbf16, #tpu.memory_space<vmem>>, %arg2: memref<32x32xbf16, #tpu.memory_space<vmem>>, %arg3: memref<1x32xf32, #tpu.memory_space<vmem>>, %arg4: memref<9x32x64xbf16, #tpu.memory_space<vmem>>, %arg5: memref<1x64xf32, #tpu.memory_space<vmem>>, %arg6: memref<9x64x128xbf16, #tpu.memory_space<vmem>>, %arg7: memref<1x128xf32, #tpu.memory_space<vmem>>, %arg8: memref<9x128x256xbf16, #tpu.memory_space<vmem>>, %arg9: memref<1x256xf32, #tpu.memory_space<vmem>>, %arg10: memref<2x1x256xf32, #tpu.memory_space<vmem>>, %arg11: memref<512x32xf32, #tpu.memory_space<vmem>>, %arg12: memref<352x32xbf16, #tpu.memory_space<vmem>>, %arg13: memref<304x64xf32, #tpu.memory_space<vmem>>, %arg14: memref<128x64xbf16, #tpu.memory_space<vmem>>, %arg15: memref<96x128xf32, #tpu.memory_space<vmem>>, %arg16: memref<96x128xbf16, #tpu.memory_space<vmem>>, %arg17: memref<64x256xf32, #tpu.memory_space<vmem>>) attributes {dimension_semantics = [#tpu.dimension_semantics<arbitrary>], iteration_bounds = array<i64: 1>, scalar_prefetch = 0 : i64, scratch_operands = 7 : i64, tpu.core_type = #tpu.core_type<tc>, window_params = [{transform_indices = @transform_0, window_bounds = array<i64: 512, 32>}, {pipeline_mode = #tpu.pipeline_mode<synchronous>, transform_indices = @transform_1, window_bounds = array<i64: 32, 32>}, {pipeline_mode = #tpu.pipeline_mode<synchronous>, transform_indices = @transform_2, window_bounds = array<i64: 1, 32>}, {pipeline_mode = #tpu.pipeline_mode<synchronous>, transform_indices = @transform_3, window_bounds = array<i64: 9, 32, 64>}, {pipeline_mode = #tpu.pipeline_mode<synchronous>, transform_indices = @transform_4, window_bounds = array<i64: 1, 64>}, {pipeline_mode = #tpu.pipeline_mode<synchronous>, transform_indices = @transform_5, window_bounds = array<i64: 9, 64, 128>}, {pipeline_mode = #tpu.pipeline_mode<synchronous>, transform_indices = @transform_6, window_bounds = array<i64: 1, 128>}, {pipeline_mode = #tpu.pipeline_mode<synchronous>, transform_indices = @transform_7, window_bounds = array<i64: 9, 128, 256>}, {pipeline_mode = #tpu.pipeline_mode<synchronous>, transform_indices = @transform_8, window_bounds = array<i64: 1, 256>}, {transform_indices = @transform_9, window_bounds = array<i64: 2, 1, 256>}]} {
    %c0_i32 = arith.constant 0 : i32
    %0 = arith.cmpi eq, %arg0, %c0_i32 : i32
    %1 = arith.extui %0 : i1 to i32
    %c0_i32_0 = arith.constant 0 : i32
    %2 = arith.cmpi ne, %1, %c0_i32_0 : i32
    scf.if %2 {
      %cst_393 = arith.constant 0.000000e+00 : bf16
      %434 = vector.broadcast %cst_393 : bf16 to vector<352x32xbf16>
      %c0_394 = arith.constant 0 : index
      %c0_395 = arith.constant 0 : index
      %435 = vector.load %arg12[%c0_394, %c0_395] : memref<352x32xbf16, #tpu.memory_space<vmem>>, vector<352x32xbf16>
      tpu.vector_store %arg12[%c0_394, %c0_395], %434 {strides = array<i32>} : memref<352x32xbf16, #tpu.memory_space<vmem>>, vector<352x32xbf16>,
      %cst_396 = arith.constant 0.000000e+00 : bf16
      %436 = vector.broadcast %cst_396 : bf16 to vector<128x64xbf16>
      %c0_397 = arith.constant 0 : index
      %c0_398 = arith.constant 0 : index
      %437 = vector.load %arg14[%c0_397, %c0_398] : memref<128x64xbf16, #tpu.memory_space<vmem>>, vector<128x64xbf16>
      tpu.vector_store %arg14[%c0_397, %c0_398], %436 {strides = array<i32>} : memref<128x64xbf16, #tpu.memory_space<vmem>>, vector<128x64xbf16>,
      %cst_399 = arith.constant 0.000000e+00 : bf16
      %438 = vector.broadcast %cst_399 : bf16 to vector<96x128xbf16>
      %c0_400 = arith.constant 0 : index
      %c0_401 = arith.constant 0 : index
      %439 = vector.load %arg16[%c0_400, %c0_401] : memref<96x128xbf16, #tpu.memory_space<vmem>>, vector<96x128xbf16>
      tpu.vector_store %arg16[%c0_400, %c0_401], %438 {strides = array<i32>} : memref<96x128xbf16, #tpu.memory_space<vmem>>, vector<96x128xbf16>,
    } else {
    }
    %c0 = arith.constant 0 : index
    %c0_1 = arith.constant 0 : index
    %3 = vector.load %arg1[%c0, %c0_1] : memref<512x32xbf16, #tpu.memory_space<vmem>>, vector<512x32xbf16>
    %c0_2 = arith.constant 0 : index
    %c0_3 = arith.constant 0 : index
    %4 = vector.load %arg2[%c0_2, %c0_3] : memref<32x32xbf16, #tpu.memory_space<vmem>>, vector<32x32xbf16>
    %cst = arith.constant dense<0.000000e+00> : vector<512x32xf32>
    %5 = tpu.matmul %3, %4, %cst {dimension_numbers = #tpu.dot_dimension_numbers<[1], [0], [0], [1], [0, 0, 1, 1], [], []>} : vector<512x32xbf16>, vector<32x32xbf16>, vector<512x32xf32> -> vector<512x32xf32>
    %c0_4 = arith.constant 0 : index
    %c0_5 = arith.constant 0 : index
    %6 = vector.load %arg3[%c0_4, %c0_5] : memref<1x32xf32, #tpu.memory_space<vmem>>, vector<1x32xf32>
    %7 = vector.broadcast %6 : vector<1x32xf32> to vector<512x32xf32>
    %8 = arith.addf %5, %7 : vector<512x32xf32>
    %cst_6 = arith.constant 0.000000e+00 : f32
    %9 = vector.broadcast %cst_6 : f32 to vector<512x32xf32>
    %10 = arith.maximumf %8, %9 : vector<512x32xf32>
    %c0_7 = arith.constant 0 : index
    %c0_8 = arith.constant 0 : index
    %11 = vector.load %arg11[%c0_7, %c0_8] : memref<512x32xf32, #tpu.memory_space<vmem>>, vector<512x32xf32>
    tpu.vector_store %arg11[%c0_7, %c0_8], %10 {strides = array<i32>} : memref<512x32xf32, #tpu.memory_space<vmem>>, vector<512x32xf32>,
    %c0_9 = arith.constant 0 : index
    %c0_10 = arith.constant 0 : index
    %12 = tpu.strided_load %arg11[%c0_9, %c0_10] {strides = array<i32: 2, 1>} : memref<512x32xf32, #tpu.memory_space<vmem>>, vector<8x32xf32>
    %c1 = arith.constant 1 : index
    %c0_11 = arith.constant 0 : index
    %13 = tpu.strided_load %arg11[%c1, %c0_11] {strides = array<i32: 2, 1>} : memref<512x32xf32, #tpu.memory_space<vmem>>, vector<8x32xf32>
    %14 = arith.maximumf %12, %13 : vector<8x32xf32>
    %c16 = arith.constant 16 : index
    %c0_12 = arith.constant 0 : index
    %15 = tpu.strided_load %arg11[%c16, %c0_12] {strides = array<i32: 2, 1>} : memref<512x32xf32, #tpu.memory_space<vmem>>, vector<8x32xf32>
    %c17 = arith.constant 17 : index
    %c0_13 = arith.constant 0 : index
    %16 = tpu.strided_load %arg11[%c17, %c0_13] {strides = array<i32: 2, 1>} : memref<512x32xf32, #tpu.memory_space<vmem>>, vector<8x32xf32>
    %17 = arith.maximumf %15, %16 : vector<8x32xf32>
    %18 = arith.maximumf %14, %17 : vector<8x32xf32>
    %19 = arith.truncf %18 : vector<8x32xf32> to vector<8x32xbf16>
    %c24 = arith.constant 24 : index
    %c0_14 = arith.constant 0 : index
    %20 = vector.load %arg12[%c24, %c0_14] : memref<352x32xbf16, #tpu.memory_space<vmem>>, vector<8x32xbf16>
    tpu.vector_store %arg12[%c24, %c0_14], %19 {strides = array<i32>} : memref<352x32xbf16, #tpu.memory_space<vmem>>, vector<8x32xbf16>,
    %c32 = arith.constant 32 : index
    %c0_15 = arith.constant 0 : index
    %21 = tpu.strided_load %arg11[%c32, %c0_15] {strides = array<i32: 2, 1>} : memref<512x32xf32, #tpu.memory_space<vmem>>, vector<8x32xf32>
    %c33 = arith.constant 33 : index
    %c0_16 = arith.constant 0 : index
    %22 = tpu.strided_load %arg11[%c33, %c0_16] {strides = array<i32: 2, 1>} : memref<512x32xf32, #tpu.memory_space<vmem>>, vector<8x32xf32>
    %23 = arith.maximumf %21, %22 : vector<8x32xf32>
    %c48 = arith.constant 48 : index
    %c0_17 = arith.constant 0 : index
    %24 = tpu.strided_load %arg11[%c48, %c0_17] {strides = array<i32: 2, 1>} : memref<512x32xf32, #tpu.memory_space<vmem>>, vector<8x32xf32>
    %c49 = arith.constant 49 : index
    %c0_18 = arith.constant 0 : index
    %25 = tpu.strided_load %arg11[%c49, %c0_18] {strides = array<i32: 2, 1>} : memref<512x32xf32, #tpu.memory_space<vmem>>, vector<8x32xf32>
    %26 = arith.maximumf %24, %25 : vector<8x32xf32>
    %27 = arith.maximumf %23, %26 : vector<8x32xf32>
    %28 = arith.truncf %27 : vector<8x32xf32> to vector<8x32xbf16>
    %c40 = arith.constant 40 : index
    %c0_19 = arith.constant 0 : index
    %29 = vector.load %arg12[%c40, %c0_19] : memref<352x32xbf16, #tpu.memory_space<vmem>>, vector<8x32xbf16>
    tpu.vector_store %arg12[%c40, %c0_19], %28 {strides = array<i32>} : memref<352x32xbf16, #tpu.memory_space<vmem>>, vector<8x32xbf16>,
    %c64 = arith.constant 64 : index
    %c0_20 = arith.constant 0 : index
    %30 = tpu.strided_load %arg11[%c64, %c0_20] {strides = array<i32: 2, 1>} : memref<512x32xf32, #tpu.memory_space<vmem>>, vector<8x32xf32>
    %c65 = arith.constant 65 : index
    %c0_21 = arith.constant 0 : index
    %31 = tpu.strided_load %arg11[%c65, %c0_21] {strides = array<i32: 2, 1>} : memref<512x32xf32, #tpu.memory_space<vmem>>, vector<8x32xf32>
    %32 = arith.maximumf %30, %31 : vector<8x32xf32>
    %c80 = arith.constant 80 : index
    %c0_22 = arith.constant 0 : index
    %33 = tpu.strided_load %arg11[%c80, %c0_22] {strides = array<i32: 2, 1>} : memref<512x32xf32, #tpu.memory_space<vmem>>, vector<8x32xf32>
    %c81 = arith.constant 81 : index
    %c0_23 = arith.constant 0 : index
    %34 = tpu.strided_load %arg11[%c81, %c0_23] {strides = array<i32: 2, 1>} : memref<512x32xf32, #tpu.memory_space<vmem>>, vector<8x32xf32>
    %35 = arith.maximumf %33, %34 : vector<8x32xf32>
    %36 = arith.maximumf %32, %35 : vector<8x32xf32>
    %37 = arith.truncf %36 : vector<8x32xf32> to vector<8x32xbf16>
    %c56 = arith.constant 56 : index
    %c0_24 = arith.constant 0 : index
    %38 = vector.load %arg12[%c56, %c0_24] : memref<352x32xbf16, #tpu.memory_space<vmem>>, vector<8x32xbf16>
    tpu.vector_store %arg12[%c56, %c0_24], %37 {strides = array<i32>} : memref<352x32xbf16, #tpu.memory_space<vmem>>, vector<8x32xbf16>,
    %c96 = arith.constant 96 : index
    %c0_25 = arith.constant 0 : index
    %39 = tpu.strided_load %arg11[%c96, %c0_25] {strides = array<i32: 2, 1>} : memref<512x32xf32, #tpu.memory_space<vmem>>, vector<8x32xf32>
    %c97 = arith.constant 97 : index
    %c0_26 = arith.constant 0 : index
    %40 = tpu.strided_load %arg11[%c97, %c0_26] {strides = array<i32: 2, 1>} : memref<512x32xf32, #tpu.memory_space<vmem>>, vector<8x32xf32>
    %41 = arith.maximumf %39, %40 : vector<8x32xf32>
    %c112 = arith.constant 112 : index
    %c0_27 = arith.constant 0 : index
    %42 = tpu.strided_load %arg11[%c112, %c0_27] {strides = array<i32: 2, 1>} : memref<512x32xf32, #tpu.memory_space<vmem>>, vector<8x32xf32>
    %c113 = arith.constant 113 : index
    %c0_28 = arith.constant 0 : index
    %43 = tpu.strided_load %arg11[%c113, %c0_28] {strides = array<i32: 2, 1>} : memref<512x32xf32, #tpu.memory_space<vmem>>, vector<8x32xf32>
    %44 = arith.maximumf %42, %43 : vector<8x32xf32>
    %45 = arith.maximumf %41, %44 : vector<8x32xf32>
    %46 = arith.truncf %45 : vector<8x32xf32> to vector<8x32xbf16>
    %c72 = arith.constant 72 : index
    %c0_29 = arith.constant 0 : index
    %47 = vector.load %arg12[%c72, %c0_29] : memref<352x32xbf16, #tpu.memory_space<vmem>>, vector<8x32xbf16>
    tpu.vector_store %arg12[%c72, %c0_29], %46 {strides = array<i32>} : memref<352x32xbf16, #tpu.memory_space<vmem>>, vector<8x32xbf16>,
    %c128 = arith.constant 128 : index
    %c0_30 = arith.constant 0 : index
    %48 = tpu.strided_load %arg11[%c128, %c0_30] {strides = array<i32: 2, 1>} : memref<512x32xf32, #tpu.memory_space<vmem>>, vector<8x32xf32>
    %c129 = arith.constant 129 : index
    %c0_31 = arith.constant 0 : index
    %49 = tpu.strided_load %arg11[%c129, %c0_31] {strides = array<i32: 2, 1>} : memref<512x32xf32, #tpu.memory_space<vmem>>, vector<8x32xf32>
    %50 = arith.maximumf %48, %49 : vector<8x32xf32>
    %c144 = arith.constant 144 : index
    %c0_32 = arith.constant 0 : index
    %51 = tpu.strided_load %arg11[%c144, %c0_32] {strides = array<i32: 2, 1>} : memref<512x32xf32, #tpu.memory_space<vmem>>, vector<8x32xf32>
    %c145 = arith.constant 145 : index
    %c0_33 = arith.constant 0 : index
    %52 = tpu.strided_load %arg11[%c145, %c0_33] {strides = array<i32: 2, 1>} : memref<512x32xf32, #tpu.memory_space<vmem>>, vector<8x32xf32>
    %53 = arith.maximumf %51, %52 : vector<8x32xf32>
    %54 = arith.maximumf %50, %53 : vector<8x32xf32>
    %55 = arith.truncf %54 : vector<8x32xf32> to vector<8x32xbf16>
    %c88 = arith.constant 88 : index
    %c0_34 = arith.constant 0 : index
    %56 = vector.load %arg12[%c88, %c0_34] : memref<352x32xbf16, #tpu.memory_space<vmem>>, vector<8x32xbf16>
    tpu.vector_store %arg12[%c88, %c0_34], %55 {strides = array<i32>} : memref<352x32xbf16, #tpu.memory_space<vmem>>, vector<8x32xbf16>,
    %c160 = arith.constant 160 : index
    %c0_35 = arith.constant 0 : index
    %57 = tpu.strided_load %arg11[%c160, %c0_35] {strides = array<i32: 2, 1>} : memref<512x32xf32, #tpu.memory_space<vmem>>, vector<8x32xf32>
    %c161 = arith.constant 161 : index
    %c0_36 = arith.constant 0 : index
    %58 = tpu.strided_load %arg11[%c161, %c0_36] {strides = array<i32: 2, 1>} : memref<512x32xf32, #tpu.memory_space<vmem>>, vector<8x32xf32>
    %59 = arith.maximumf %57, %58 : vector<8x32xf32>
    %c176 = arith.constant 176 : index
    %c0_37 = arith.constant 0 : index
    %60 = tpu.strided_load %arg11[%c176, %c0_37] {strides = array<i32: 2, 1>} : memref<512x32xf32, #tpu.memory_space<vmem>>, vector<8x32xf32>
    %c177 = arith.constant 177 : index
    %c0_38 = arith.constant 0 : index
    %61 = tpu.strided_load %arg11[%c177, %c0_38] {strides = array<i32: 2, 1>} : memref<512x32xf32, #tpu.memory_space<vmem>>, vector<8x32xf32>
    %62 = arith.maximumf %60, %61 : vector<8x32xf32>
    %63 = arith.maximumf %59, %62 : vector<8x32xf32>
    %64 = arith.truncf %63 : vector<8x32xf32> to vector<8x32xbf16>
    %c104 = arith.constant 104 : index
    %c0_39 = arith.constant 0 : index
    %65 = vector.load %arg12[%c104, %c0_39] : memref<352x32xbf16, #tpu.memory_space<vmem>>, vector<8x32xbf16>
    tpu.vector_store %arg12[%c104, %c0_39], %64 {strides = array<i32>} : memref<352x32xbf16, #tpu.memory_space<vmem>>, vector<8x32xbf16>,
    %c192 = arith.constant 192 : index
    %c0_40 = arith.constant 0 : index
    %66 = tpu.strided_load %arg11[%c192, %c0_40] {strides = array<i32: 2, 1>} : memref<512x32xf32, #tpu.memory_space<vmem>>, vector<8x32xf32>
    %c193 = arith.constant 193 : index
    %c0_41 = arith.constant 0 : index
    %67 = tpu.strided_load %arg11[%c193, %c0_41] {strides = array<i32: 2, 1>} : memref<512x32xf32, #tpu.memory_space<vmem>>, vector<8x32xf32>
    %68 = arith.maximumf %66, %67 : vector<8x32xf32>
    %c208 = arith.constant 208 : index
    %c0_42 = arith.constant 0 : index
    %69 = tpu.strided_load %arg11[%c208, %c0_42] {strides = array<i32: 2, 1>} : memref<512x32xf32, #tpu.memory_space<vmem>>, vector<8x32xf32>
    %c209 = arith.constant 209 : index
    %c0_43 = arith.constant 0 : index
    %70 = tpu.strided_load %arg11[%c209, %c0_43] {strides = array<i32: 2, 1>} : memref<512x32xf32, #tpu.memory_space<vmem>>, vector<8x32xf32>
    %71 = arith.maximumf %69, %70 : vector<8x32xf32>
    %72 = arith.maximumf %68, %71 : vector<8x32xf32>
    %73 = arith.truncf %72 : vector<8x32xf32> to vector<8x32xbf16>
    %c120 = arith.constant 120 : index
    %c0_44 = arith.constant 0 : index
    %74 = vector.load %arg12[%c120, %c0_44] : memref<352x32xbf16, #tpu.memory_space<vmem>>, vector<8x32xbf16>
    tpu.vector_store %arg12[%c120, %c0_44], %73 {strides = array<i32>} : memref<352x32xbf16, #tpu.memory_space<vmem>>, vector<8x32xbf16>,
    %c224 = arith.constant 224 : index
    %c0_45 = arith.constant 0 : index
    %75 = tpu.strided_load %arg11[%c224, %c0_45] {strides = array<i32: 2, 1>} : memref<512x32xf32, #tpu.memory_space<vmem>>, vector<8x32xf32>
    %c225 = arith.constant 225 : index
    %c0_46 = arith.constant 0 : index
    %76 = tpu.strided_load %arg11[%c225, %c0_46] {strides = array<i32: 2, 1>} : memref<512x32xf32, #tpu.memory_space<vmem>>, vector<8x32xf32>
    %77 = arith.maximumf %75, %76 : vector<8x32xf32>
    %c240 = arith.constant 240 : index
    %c0_47 = arith.constant 0 : index
    %78 = tpu.strided_load %arg11[%c240, %c0_47] {strides = array<i32: 2, 1>} : memref<512x32xf32, #tpu.memory_space<vmem>>, vector<8x32xf32>
    %c241 = arith.constant 241 : index
    %c0_48 = arith.constant 0 : index
    %79 = tpu.strided_load %arg11[%c241, %c0_48] {strides = array<i32: 2, 1>} : memref<512x32xf32, #tpu.memory_space<vmem>>, vector<8x32xf32>
    %80 = arith.maximumf %78, %79 : vector<8x32xf32>
    %81 = arith.maximumf %77, %80 : vector<8x32xf32>
    %82 = arith.truncf %81 : vector<8x32xf32> to vector<8x32xbf16>
    %c136 = arith.constant 136 : index
    %c0_49 = arith.constant 0 : index
    %83 = vector.load %arg12[%c136, %c0_49] : memref<352x32xbf16, #tpu.memory_space<vmem>>, vector<8x32xbf16>
    tpu.vector_store %arg12[%c136, %c0_49], %82 {strides = array<i32>} : memref<352x32xbf16, #tpu.memory_space<vmem>>, vector<8x32xbf16>,
    %c256 = arith.constant 256 : index
    %c0_50 = arith.constant 0 : index
    %84 = tpu.strided_load %arg11[%c256, %c0_50] {strides = array<i32: 2, 1>} : memref<512x32xf32, #tpu.memory_space<vmem>>, vector<8x32xf32>
    %c257 = arith.constant 257 : index
    %c0_51 = arith.constant 0 : index
    %85 = tpu.strided_load %arg11[%c257, %c0_51] {strides = array<i32: 2, 1>} : memref<512x32xf32, #tpu.memory_space<vmem>>, vector<8x32xf32>
    %86 = arith.maximumf %84, %85 : vector<8x32xf32>
    %c272 = arith.constant 272 : index
    %c0_52 = arith.constant 0 : index
    %87 = tpu.strided_load %arg11[%c272, %c0_52] {strides = array<i32: 2, 1>} : memref<512x32xf32, #tpu.memory_space<vmem>>, vector<8x32xf32>
    %c273 = arith.constant 273 : index
    %c0_53 = arith.constant 0 : index
    %88 = tpu.strided_load %arg11[%c273, %c0_53] {strides = array<i32: 2, 1>} : memref<512x32xf32, #tpu.memory_space<vmem>>, vector<8x32xf32>
    %89 = arith.maximumf %87, %88 : vector<8x32xf32>
    %90 = arith.maximumf %86, %89 : vector<8x32xf32>
    %91 = arith.truncf %90 : vector<8x32xf32> to vector<8x32xbf16>
    %c200 = arith.constant 200 : index
    %c0_54 = arith.constant 0 : index
    %92 = vector.load %arg12[%c200, %c0_54] : memref<352x32xbf16, #tpu.memory_space<vmem>>, vector<8x32xbf16>
    tpu.vector_store %arg12[%c200, %c0_54], %91 {strides = array<i32>} : memref<352x32xbf16, #tpu.memory_space<vmem>>, vector<8x32xbf16>,
    %c288 = arith.constant 288 : index
    %c0_55 = arith.constant 0 : index
    %93 = tpu.strided_load %arg11[%c288, %c0_55] {strides = array<i32: 2, 1>} : memref<512x32xf32, #tpu.memory_space<vmem>>, vector<8x32xf32>
    %c289 = arith.constant 289 : index
    %c0_56 = arith.constant 0 : index
    %94 = tpu.strided_load %arg11[%c289, %c0_56] {strides = array<i32: 2, 1>} : memref<512x32xf32, #tpu.memory_space<vmem>>, vector<8x32xf32>
    %95 = arith.maximumf %93, %94 : vector<8x32xf32>
    %c304 = arith.constant 304 : index
    %c0_57 = arith.constant 0 : index
    %96 = tpu.strided_load %arg11[%c304, %c0_57] {strides = array<i32: 2, 1>} : memref<512x32xf32, #tpu.memory_space<vmem>>, vector<8x32xf32>
    %c305 = arith.constant 305 : index
    %c0_58 = arith.constant 0 : index
    %97 = tpu.strided_load %arg11[%c305, %c0_58] {strides = array<i32: 2, 1>} : memref<512x32xf32, #tpu.memory_space<vmem>>, vector<8x32xf32>
    %98 = arith.maximumf %96, %97 : vector<8x32xf32>
    %99 = arith.maximumf %95, %98 : vector<8x32xf32>
    %100 = arith.truncf %99 : vector<8x32xf32> to vector<8x32xbf16>
    %c216 = arith.constant 216 : index
    %c0_59 = arith.constant 0 : index
    %101 = vector.load %arg12[%c216, %c0_59] : memref<352x32xbf16, #tpu.memory_space<vmem>>, vector<8x32xbf16>
    tpu.vector_store %arg12[%c216, %c0_59], %100 {strides = array<i32>} : memref<352x32xbf16, #tpu.memory_space<vmem>>, vector<8x32xbf16>,
    %c320 = arith.constant 320 : index
    %c0_60 = arith.constant 0 : index
    %102 = tpu.strided_load %arg11[%c320, %c0_60] {strides = array<i32: 2, 1>} : memref<512x32xf32, #tpu.memory_space<vmem>>, vector<8x32xf32>
    %c321 = arith.constant 321 : index
    %c0_61 = arith.constant 0 : index
    %103 = tpu.strided_load %arg11[%c321, %c0_61] {strides = array<i32: 2, 1>} : memref<512x32xf32, #tpu.memory_space<vmem>>, vector<8x32xf32>
    %104 = arith.maximumf %102, %103 : vector<8x32xf32>
    %c336 = arith.constant 336 : index
    %c0_62 = arith.constant 0 : index
    %105 = tpu.strided_load %arg11[%c336, %c0_62] {strides = array<i32: 2, 1>} : memref<512x32xf32, #tpu.memory_space<vmem>>, vector<8x32xf32>
    %c337 = arith.constant 337 : index
    %c0_63 = arith.constant 0 : index
    %106 = tpu.strided_load %arg11[%c337, %c0_63] {strides = array<i32: 2, 1>} : memref<512x32xf32, #tpu.memory_space<vmem>>, vector<8x32xf32>
    %107 = arith.maximumf %105, %106 : vector<8x32xf32>
    %108 = arith.maximumf %104, %107 : vector<8x32xf32>
    %109 = arith.truncf %108 : vector<8x32xf32> to vector<8x32xbf16>
    %c232 = arith.constant 232 : index
    %c0_64 = arith.constant 0 : index
    %110 = vector.load %arg12[%c232, %c0_64] : memref<352x32xbf16, #tpu.memory_space<vmem>>, vector<8x32xbf16>
    tpu.vector_store %arg12[%c232, %c0_64], %109 {strides = array<i32>} : memref<352x32xbf16, #tpu.memory_space<vmem>>, vector<8x32xbf16>,
    %c352 = arith.constant 352 : index
    %c0_65 = arith.constant 0 : index
    %111 = tpu.strided_load %arg11[%c352, %c0_65] {strides = array<i32: 2, 1>} : memref<512x32xf32, #tpu.memory_space<vmem>>, vector<8x32xf32>
    %c353 = arith.constant 353 : index
    %c0_66 = arith.constant 0 : index
    %112 = tpu.strided_load %arg11[%c353, %c0_66] {strides = array<i32: 2, 1>} : memref<512x32xf32, #tpu.memory_space<vmem>>, vector<8x32xf32>
    %113 = arith.maximumf %111, %112 : vector<8x32xf32>
    %c368 = arith.constant 368 : index
    %c0_67 = arith.constant 0 : index
    %114 = tpu.strided_load %arg11[%c368, %c0_67] {strides = array<i32: 2, 1>} : memref<512x32xf32, #tpu.memory_space<vmem>>, vector<8x32xf32>
    %c369 = arith.constant 369 : index
    %c0_68 = arith.constant 0 : index
    %115 = tpu.strided_load %arg11[%c369, %c0_68] {strides = array<i32: 2, 1>} : memref<512x32xf32, #tpu.memory_space<vmem>>, vector<8x32xf32>
    %116 = arith.maximumf %114, %115 : vector<8x32xf32>
    %117 = arith.maximumf %113, %116 : vector<8x32xf32>
    %118 = arith.truncf %117 : vector<8x32xf32> to vector<8x32xbf16>
    %c248 = arith.constant 248 : index
    %c0_69 = arith.constant 0 : index
    %119 = vector.load %arg12[%c248, %c0_69] : memref<352x32xbf16, #tpu.memory_space<vmem>>, vector<8x32xbf16>
    tpu.vector_store %arg12[%c248, %c0_69], %118 {strides = array<i32>} : memref<352x32xbf16, #tpu.memory_space<vmem>>, vector<8x32xbf16>,
    %c384 = arith.constant 384 : index
    %c0_70 = arith.constant 0 : index
    %120 = tpu.strided_load %arg11[%c384, %c0_70] {strides = array<i32: 2, 1>} : memref<512x32xf32, #tpu.memory_space<vmem>>, vector<8x32xf32>
    %c385 = arith.constant 385 : index
    %c0_71 = arith.constant 0 : index
    %121 = tpu.strided_load %arg11[%c385, %c0_71] {strides = array<i32: 2, 1>} : memref<512x32xf32, #tpu.memory_space<vmem>>, vector<8x32xf32>
    %122 = arith.maximumf %120, %121 : vector<8x32xf32>
    %c400 = arith.constant 400 : index
    %c0_72 = arith.constant 0 : index
    %123 = tpu.strided_load %arg11[%c400, %c0_72] {strides = array<i32: 2, 1>} : memref<512x32xf32, #tpu.memory_space<vmem>>, vector<8x32xf32>
    %c401 = arith.constant 401 : index
    %c0_73 = arith.constant 0 : index
    %124 = tpu.strided_load %arg11[%c401, %c0_73] {strides = array<i32: 2, 1>} : memref<512x32xf32, #tpu.memory_space<vmem>>, vector<8x32xf32>
    %125 = arith.maximumf %123, %124 : vector<8x32xf32>
    %126 = arith.maximumf %122, %125 : vector<8x32xf32>
    %127 = arith.truncf %126 : vector<8x32xf32> to vector<8x32xbf16>
    %c264 = arith.constant 264 : index
    %c0_74 = arith.constant 0 : index
    %128 = vector.load %arg12[%c264, %c0_74] : memref<352x32xbf16, #tpu.memory_space<vmem>>, vector<8x32xbf16>
    tpu.vector_store %arg12[%c264, %c0_74], %127 {strides = array<i32>} : memref<352x32xbf16, #tpu.memory_space<vmem>>, vector<8x32xbf16>,
    %c416 = arith.constant 416 : index
    %c0_75 = arith.constant 0 : index
    %129 = tpu.strided_load %arg11[%c416, %c0_75] {strides = array<i32: 2, 1>} : memref<512x32xf32, #tpu.memory_space<vmem>>, vector<8x32xf32>
    %c417 = arith.constant 417 : index
    %c0_76 = arith.constant 0 : index
    %130 = tpu.strided_load %arg11[%c417, %c0_76] {strides = array<i32: 2, 1>} : memref<512x32xf32, #tpu.memory_space<vmem>>, vector<8x32xf32>
    %131 = arith.maximumf %129, %130 : vector<8x32xf32>
    %c432 = arith.constant 432 : index
    %c0_77 = arith.constant 0 : index
    %132 = tpu.strided_load %arg11[%c432, %c0_77] {strides = array<i32: 2, 1>} : memref<512x32xf32, #tpu.memory_space<vmem>>, vector<8x32xf32>
    %c433 = arith.constant 433 : index
    %c0_78 = arith.constant 0 : index
    %133 = tpu.strided_load %arg11[%c433, %c0_78] {strides = array<i32: 2, 1>} : memref<512x32xf32, #tpu.memory_space<vmem>>, vector<8x32xf32>
    %134 = arith.maximumf %132, %133 : vector<8x32xf32>
    %135 = arith.maximumf %131, %134 : vector<8x32xf32>
    %136 = arith.truncf %135 : vector<8x32xf32> to vector<8x32xbf16>
    %c280 = arith.constant 280 : index
    %c0_79 = arith.constant 0 : index
    %137 = vector.load %arg12[%c280, %c0_79] : memref<352x32xbf16, #tpu.memory_space<vmem>>, vector<8x32xbf16>
    tpu.vector_store %arg12[%c280, %c0_79], %136 {strides = array<i32>} : memref<352x32xbf16, #tpu.memory_space<vmem>>, vector<8x32xbf16>,
    %c448 = arith.constant 448 : index
    %c0_80 = arith.constant 0 : index
    %138 = tpu.strided_load %arg11[%c448, %c0_80] {strides = array<i32: 2, 1>} : memref<512x32xf32, #tpu.memory_space<vmem>>, vector<8x32xf32>
    %c449 = arith.constant 449 : index
    %c0_81 = arith.constant 0 : index
    %139 = tpu.strided_load %arg11[%c449, %c0_81] {strides = array<i32: 2, 1>} : memref<512x32xf32, #tpu.memory_space<vmem>>, vector<8x32xf32>
    %140 = arith.maximumf %138, %139 : vector<8x32xf32>
    %c464 = arith.constant 464 : index
    %c0_82 = arith.constant 0 : index
    %141 = tpu.strided_load %arg11[%c464, %c0_82] {strides = array<i32: 2, 1>} : memref<512x32xf32, #tpu.memory_space<vmem>>, vector<8x32xf32>
    %c465 = arith.constant 465 : index
    %c0_83 = arith.constant 0 : index
    %142 = tpu.strided_load %arg11[%c465, %c0_83] {strides = array<i32: 2, 1>} : memref<512x32xf32, #tpu.memory_space<vmem>>, vector<8x32xf32>
    %143 = arith.maximumf %141, %142 : vector<8x32xf32>
    %144 = arith.maximumf %140, %143 : vector<8x32xf32>
    %145 = arith.truncf %144 : vector<8x32xf32> to vector<8x32xbf16>
    %c296 = arith.constant 296 : index
    %c0_84 = arith.constant 0 : index
    %146 = vector.load %arg12[%c296, %c0_84] : memref<352x32xbf16, #tpu.memory_space<vmem>>, vector<8x32xbf16>
    tpu.vector_store %arg12[%c296, %c0_84], %145 {strides = array<i32>} : memref<352x32xbf16, #tpu.memory_space<vmem>>, vector<8x32xbf16>,
    %c480 = arith.constant 480 : index
    %c0_85 = arith.constant 0 : index
    %147 = tpu.strided_load %arg11[%c480, %c0_85] {strides = array<i32: 2, 1>} : memref<512x32xf32, #tpu.memory_space<vmem>>, vector<8x32xf32>
    %c481 = arith.constant 481 : index
    %c0_86 = arith.constant 0 : index
    %148 = tpu.strided_load %arg11[%c481, %c0_86] {strides = array<i32: 2, 1>} : memref<512x32xf32, #tpu.memory_space<vmem>>, vector<8x32xf32>
    %149 = arith.maximumf %147, %148 : vector<8x32xf32>
    %c496 = arith.constant 496 : index
    %c0_87 = arith.constant 0 : index
    %150 = tpu.strided_load %arg11[%c496, %c0_87] {strides = array<i32: 2, 1>} : memref<512x32xf32, #tpu.memory_space<vmem>>, vector<8x32xf32>
    %c497 = arith.constant 497 : index
    %c0_88 = arith.constant 0 : index
    %151 = tpu.strided_load %arg11[%c497, %c0_88] {strides = array<i32: 2, 1>} : memref<512x32xf32, #tpu.memory_space<vmem>>, vector<8x32xf32>
    %152 = arith.maximumf %150, %151 : vector<8x32xf32>
    %153 = arith.maximumf %149, %152 : vector<8x32xf32>
    %154 = arith.truncf %153 : vector<8x32xf32> to vector<8x32xbf16>
    %c312 = arith.constant 312 : index
    %c0_89 = arith.constant 0 : index
    %155 = vector.load %arg12[%c312, %c0_89] : memref<352x32xbf16, #tpu.memory_space<vmem>>, vector<8x32xbf16>
    tpu.vector_store %arg12[%c312, %c0_89], %154 {strides = array<i32>} : memref<352x32xbf16, #tpu.memory_space<vmem>>, vector<8x32xbf16>,
    %c7 = arith.constant 7 : index
    %c0_90 = arith.constant 0 : index
    %156 = vector.load %arg12[%c7, %c0_90] : memref<352x32xbf16, #tpu.memory_space<vmem>>, vector<304x32xbf16>
    %c0_91 = arith.constant 0 : index
    %c0_92 = arith.constant 0 : index
    %c0_93 = arith.constant 0 : index
    %157 = vector.load %arg4[%c0_91, %c0_92, %c0_93] : memref<9x32x64xbf16, #tpu.memory_space<vmem>>, vector<1x32x64xbf16>
    %158 = vector.shape_cast %157 : vector<1x32x64xbf16> to vector<32x64xbf16>
    %cst_94 = arith.constant dense<0.000000e+00> : vector<304x64xf32>
    %159 = tpu.matmul %156, %158, %cst_94 {dimension_numbers = #tpu.dot_dimension_numbers<[1], [0], [0], [1], [0, 0, 1, 1], [], []>} : vector<304x32xbf16>, vector<32x64xbf16>, vector<304x64xf32> -> vector<304x64xf32>
    %c8 = arith.constant 8 : index
    %c0_95 = arith.constant 0 : index
    %160 = vector.load %arg12[%c8, %c0_95] : memref<352x32xbf16, #tpu.memory_space<vmem>>, vector<304x32xbf16>
    %c1_96 = arith.constant 1 : index
    %c0_97 = arith.constant 0 : index
    %c0_98 = arith.constant 0 : index
    %161 = vector.load %arg4[%c1_96, %c0_97, %c0_98] : memref<9x32x64xbf16, #tpu.memory_space<vmem>>, vector<1x32x64xbf16>
    %162 = vector.shape_cast %161 : vector<1x32x64xbf16> to vector<32x64xbf16>
    %cst_99 = arith.constant dense<0.000000e+00> : vector<304x64xf32>
    %163 = tpu.matmul %160, %162, %cst_99 {dimension_numbers = #tpu.dot_dimension_numbers<[1], [0], [0], [1], [0, 0, 1, 1], [], []>} : vector<304x32xbf16>, vector<32x64xbf16>, vector<304x64xf32> -> vector<304x64xf32>
    %164 = arith.addf %159, %163 : vector<304x64xf32>
    %c9 = arith.constant 9 : index
    %c0_100 = arith.constant 0 : index
    %165 = vector.load %arg12[%c9, %c0_100] : memref<352x32xbf16, #tpu.memory_space<vmem>>, vector<304x32xbf16>
    %c2 = arith.constant 2 : index
    %c0_101 = arith.constant 0 : index
    %c0_102 = arith.constant 0 : index
    %166 = vector.load %arg4[%c2, %c0_101, %c0_102] : memref<9x32x64xbf16, #tpu.memory_space<vmem>>, vector<1x32x64xbf16>
    %167 = vector.shape_cast %166 : vector<1x32x64xbf16> to vector<32x64xbf16>
    %cst_103 = arith.constant dense<0.000000e+00> : vector<304x64xf32>
    %168 = tpu.matmul %165, %167, %cst_103 {dimension_numbers = #tpu.dot_dimension_numbers<[1], [0], [0], [1], [0, 0, 1, 1], [], []>} : vector<304x32xbf16>, vector<32x64xbf16>, vector<304x64xf32> -> vector<304x64xf32>
    %169 = arith.addf %164, %168 : vector<304x64xf32>
    %c23 = arith.constant 23 : index
    %c0_104 = arith.constant 0 : index
    %170 = vector.load %arg12[%c23, %c0_104] : memref<352x32xbf16, #tpu.memory_space<vmem>>, vector<304x32xbf16>
    %c3 = arith.constant 3 : index
    %c0_105 = arith.constant 0 : index
    %c0_106 = arith.constant 0 : index
    %171 = vector.load %arg4[%c3, %c0_105, %c0_106] : memref<9x32x64xbf16, #tpu.memory_space<vmem>>, vector<1x32x64xbf16>
    %172 = vector.shape_cast %171 : vector<1x32x64xbf16> to vector<32x64xbf16>
    %cst_107 = arith.constant dense<0.000000e+00> : vector<304x64xf32>
    %173 = tpu.matmul %170, %172, %cst_107 {dimension_numbers = #tpu.dot_dimension_numbers<[1], [0], [0], [1], [0, 0, 1, 1], [], []>} : vector<304x32xbf16>, vector<32x64xbf16>, vector<304x64xf32> -> vector<304x64xf32>
    %174 = arith.addf %169, %173 : vector<304x64xf32>
    %c24_108 = arith.constant 24 : index
    %c0_109 = arith.constant 0 : index
    %175 = vector.load %arg12[%c24_108, %c0_109] : memref<352x32xbf16, #tpu.memory_space<vmem>>, vector<304x32xbf16>
    %c4 = arith.constant 4 : index
    %c0_110 = arith.constant 0 : index
    %c0_111 = arith.constant 0 : index
    %176 = vector.load %arg4[%c4, %c0_110, %c0_111] : memref<9x32x64xbf16, #tpu.memory_space<vmem>>, vector<1x32x64xbf16>
    %177 = vector.shape_cast %176 : vector<1x32x64xbf16> to vector<32x64xbf16>
    %cst_112 = arith.constant dense<0.000000e+00> : vector<304x64xf32>
    %178 = tpu.matmul %175, %177, %cst_112 {dimension_numbers = #tpu.dot_dimension_numbers<[1], [0], [0], [1], [0, 0, 1, 1], [], []>} : vector<304x32xbf16>, vector<32x64xbf16>, vector<304x64xf32> -> vector<304x64xf32>
    %179 = arith.addf %174, %178 : vector<304x64xf32>
    %c25 = arith.constant 25 : index
    %c0_113 = arith.constant 0 : index
    %180 = vector.load %arg12[%c25, %c0_113] : memref<352x32xbf16, #tpu.memory_space<vmem>>, vector<304x32xbf16>
    %c5 = arith.constant 5 : index
    %c0_114 = arith.constant 0 : index
    %c0_115 = arith.constant 0 : index
    %181 = vector.load %arg4[%c5, %c0_114, %c0_115] : memref<9x32x64xbf16, #tpu.memory_space<vmem>>, vector<1x32x64xbf16>
    %182 = vector.shape_cast %181 : vector<1x32x64xbf16> to vector<32x64xbf16>
    %cst_116 = arith.constant dense<0.000000e+00> : vector<304x64xf32>
    %183 = tpu.matmul %180, %182, %cst_116 {dimension_numbers = #tpu.dot_dimension_numbers<[1], [0], [0], [1], [0, 0, 1, 1], [], []>} : vector<304x32xbf16>, vector<32x64xbf16>, vector<304x64xf32> -> vector<304x64xf32>
    %184 = arith.addf %179, %183 : vector<304x64xf32>
    %c39 = arith.constant 39 : index
    %c0_117 = arith.constant 0 : index
    %185 = vector.load %arg12[%c39, %c0_117] : memref<352x32xbf16, #tpu.memory_space<vmem>>, vector<304x32xbf16>
    %c6 = arith.constant 6 : index
    %c0_118 = arith.constant 0 : index
    %c0_119 = arith.constant 0 : index
    %186 = vector.load %arg4[%c6, %c0_118, %c0_119] : memref<9x32x64xbf16, #tpu.memory_space<vmem>>, vector<1x32x64xbf16>
    %187 = vector.shape_cast %186 : vector<1x32x64xbf16> to vector<32x64xbf16>
    %cst_120 = arith.constant dense<0.000000e+00> : vector<304x64xf32>
    %188 = tpu.matmul %185, %187, %cst_120 {dimension_numbers = #tpu.dot_dimension_numbers<[1], [0], [0], [1], [0, 0, 1, 1], [], []>} : vector<304x32xbf16>, vector<32x64xbf16>, vector<304x64xf32> -> vector<304x64xf32>
    %189 = arith.addf %184, %188 : vector<304x64xf32>
    %c40_121 = arith.constant 40 : index
    %c0_122 = arith.constant 0 : index
    %190 = vector.load %arg12[%c40_121, %c0_122] : memref<352x32xbf16, #tpu.memory_space<vmem>>, vector<304x32xbf16>
    %c7_123 = arith.constant 7 : index
    %c0_124 = arith.constant 0 : index
    %c0_125 = arith.constant 0 : index
    %191 = vector.load %arg4[%c7_123, %c0_124, %c0_125] : memref<9x32x64xbf16, #tpu.memory_space<vmem>>, vector<1x32x64xbf16>
    %192 = vector.shape_cast %191 : vector<1x32x64xbf16> to vector<32x64xbf16>
    %cst_126 = arith.constant dense<0.000000e+00> : vector<304x64xf32>
    %193 = tpu.matmul %190, %192, %cst_126 {dimension_numbers = #tpu.dot_dimension_numbers<[1], [0], [0], [1], [0, 0, 1, 1], [], []>} : vector<304x32xbf16>, vector<32x64xbf16>, vector<304x64xf32> -> vector<304x64xf32>
    %194 = arith.addf %189, %193 : vector<304x64xf32>
    %c41 = arith.constant 41 : index
    %c0_127 = arith.constant 0 : index
    %195 = vector.load %arg12[%c41, %c0_127] : memref<352x32xbf16, #tpu.memory_space<vmem>>, vector<304x32xbf16>
    %c8_128 = arith.constant 8 : index
    %c0_129 = arith.constant 0 : index
    %c0_130 = arith.constant 0 : index
    %196 = vector.load %arg4[%c8_128, %c0_129, %c0_130] : memref<9x32x64xbf16, #tpu.memory_space<vmem>>, vector<1x32x64xbf16>
    %197 = vector.shape_cast %196 : vector<1x32x64xbf16> to vector<32x64xbf16>
    %cst_131 = arith.constant dense<0.000000e+00> : vector<304x64xf32>
    %198 = tpu.matmul %195, %197, %cst_131 {dimension_numbers = #tpu.dot_dimension_numbers<[1], [0], [0], [1], [0, 0, 1, 1], [], []>} : vector<304x32xbf16>, vector<32x64xbf16>, vector<304x64xf32> -> vector<304x64xf32>
    %199 = arith.addf %194, %198 : vector<304x64xf32>
    %c0_132 = arith.constant 0 : index
    %c0_133 = arith.constant 0 : index
    %200 = vector.load %arg5[%c0_132, %c0_133] : memref<1x64xf32, #tpu.memory_space<vmem>>, vector<1x64xf32>
    %201 = vector.broadcast %200 : vector<1x64xf32> to vector<304x64xf32>
    %202 = arith.addf %199, %201 : vector<304x64xf32>
    %cst_134 = arith.constant 0.000000e+00 : f32
    %203 = vector.broadcast %cst_134 : f32 to vector<304x64xf32>
    %204 = arith.maximumf %202, %203 : vector<304x64xf32>
    %c0_135 = arith.constant 0 : index
    %c0_136 = arith.constant 0 : index
    %205 = vector.load %arg13[%c0_135, %c0_136] : memref<304x64xf32, #tpu.memory_space<vmem>>, vector<304x64xf32>
    tpu.vector_store %arg13[%c0_135, %c0_136], %204 {strides = array<i32>} : memref<304x64xf32, #tpu.memory_space<vmem>>, vector<304x64xf32>,
    %c0_137 = arith.constant 0 : index
    %c0_138 = arith.constant 0 : index
    %206 = tpu.strided_load %arg13[%c0_137, %c0_138] {strides = array<i32: 2, 1>} : memref<304x64xf32, #tpu.memory_space<vmem>>, vector<4x64xf32>
    %c1_139 = arith.constant 1 : index
    %c0_140 = arith.constant 0 : index
    %207 = tpu.strided_load %arg13[%c1_139, %c0_140] {strides = array<i32: 2, 1>} : memref<304x64xf32, #tpu.memory_space<vmem>>, vector<4x64xf32>
    %208 = arith.maximumf %206, %207 : vector<4x64xf32>
    %c16_141 = arith.constant 16 : index
    %c0_142 = arith.constant 0 : index
    %209 = tpu.strided_load %arg13[%c16_141, %c0_142] {strides = array<i32: 2, 1>} : memref<304x64xf32, #tpu.memory_space<vmem>>, vector<4x64xf32>
    %c17_143 = arith.constant 17 : index
    %c0_144 = arith.constant 0 : index
    %210 = tpu.strided_load %arg13[%c17_143, %c0_144] {strides = array<i32: 2, 1>} : memref<304x64xf32, #tpu.memory_space<vmem>>, vector<4x64xf32>
    %211 = arith.maximumf %209, %210 : vector<4x64xf32>
    %212 = arith.maximumf %208, %211 : vector<4x64xf32>
    %213 = arith.truncf %212 : vector<4x64xf32> to vector<4x64xbf16>
    %c16_145 = arith.constant 16 : index
    %c0_146 = arith.constant 0 : index
    %214 = vector.load %arg14[%c16_145, %c0_146] : memref<128x64xbf16, #tpu.memory_space<vmem>>, vector<4x64xbf16>
    tpu.vector_store %arg14[%c16_145, %c0_146], %213 {strides = array<i32>} : memref<128x64xbf16, #tpu.memory_space<vmem>>, vector<4x64xbf16>,
    %c32_147 = arith.constant 32 : index
    %c0_148 = arith.constant 0 : index
    %215 = tpu.strided_load %arg13[%c32_147, %c0_148] {strides = array<i32: 2, 1>} : memref<304x64xf32, #tpu.memory_space<vmem>>, vector<4x64xf32>
    %c33_149 = arith.constant 33 : index
    %c0_150 = arith.constant 0 : index
    %216 = tpu.strided_load %arg13[%c33_149, %c0_150] {strides = array<i32: 2, 1>} : memref<304x64xf32, #tpu.memory_space<vmem>>, vector<4x64xf32>
    %217 = arith.maximumf %215, %216 : vector<4x64xf32>
    %c48_151 = arith.constant 48 : index
    %c0_152 = arith.constant 0 : index
    %218 = tpu.strided_load %arg13[%c48_151, %c0_152] {strides = array<i32: 2, 1>} : memref<304x64xf32, #tpu.memory_space<vmem>>, vector<4x64xf32>
    %c49_153 = arith.constant 49 : index
    %c0_154 = arith.constant 0 : index
    %219 = tpu.strided_load %arg13[%c49_153, %c0_154] {strides = array<i32: 2, 1>} : memref<304x64xf32, #tpu.memory_space<vmem>>, vector<4x64xf32>
    %220 = arith.maximumf %218, %219 : vector<4x64xf32>
    %221 = arith.maximumf %217, %220 : vector<4x64xf32>
    %222 = arith.truncf %221 : vector<4x64xf32> to vector<4x64xbf16>
    %c24_155 = arith.constant 24 : index
    %c0_156 = arith.constant 0 : index
    %223 = vector.load %arg14[%c24_155, %c0_156] : memref<128x64xbf16, #tpu.memory_space<vmem>>, vector<4x64xbf16>
    tpu.vector_store %arg14[%c24_155, %c0_156], %222 {strides = array<i32>} : memref<128x64xbf16, #tpu.memory_space<vmem>>, vector<4x64xbf16>,
    %c64_157 = arith.constant 64 : index
    %c0_158 = arith.constant 0 : index
    %224 = tpu.strided_load %arg13[%c64_157, %c0_158] {strides = array<i32: 2, 1>} : memref<304x64xf32, #tpu.memory_space<vmem>>, vector<4x64xf32>
    %c65_159 = arith.constant 65 : index
    %c0_160 = arith.constant 0 : index
    %225 = tpu.strided_load %arg13[%c65_159, %c0_160] {strides = array<i32: 2, 1>} : memref<304x64xf32, #tpu.memory_space<vmem>>, vector<4x64xf32>
    %226 = arith.maximumf %224, %225 : vector<4x64xf32>
    %c80_161 = arith.constant 80 : index
    %c0_162 = arith.constant 0 : index
    %227 = tpu.strided_load %arg13[%c80_161, %c0_162] {strides = array<i32: 2, 1>} : memref<304x64xf32, #tpu.memory_space<vmem>>, vector<4x64xf32>
    %c81_163 = arith.constant 81 : index
    %c0_164 = arith.constant 0 : index
    %228 = tpu.strided_load %arg13[%c81_163, %c0_164] {strides = array<i32: 2, 1>} : memref<304x64xf32, #tpu.memory_space<vmem>>, vector<4x64xf32>
    %229 = arith.maximumf %227, %228 : vector<4x64xf32>
    %230 = arith.maximumf %226, %229 : vector<4x64xf32>
    %231 = arith.truncf %230 : vector<4x64xf32> to vector<4x64xbf16>
    %c32_165 = arith.constant 32 : index
    %c0_166 = arith.constant 0 : index
    %232 = vector.load %arg14[%c32_165, %c0_166] : memref<128x64xbf16, #tpu.memory_space<vmem>>, vector<4x64xbf16>
    tpu.vector_store %arg14[%c32_165, %c0_166], %231 {strides = array<i32>} : memref<128x64xbf16, #tpu.memory_space<vmem>>, vector<4x64xbf16>,
    %c96_167 = arith.constant 96 : index
    %c0_168 = arith.constant 0 : index
    %233 = tpu.strided_load %arg13[%c96_167, %c0_168] {strides = array<i32: 2, 1>} : memref<304x64xf32, #tpu.memory_space<vmem>>, vector<4x64xf32>
    %c97_169 = arith.constant 97 : index
    %c0_170 = arith.constant 0 : index
    %234 = tpu.strided_load %arg13[%c97_169, %c0_170] {strides = array<i32: 2, 1>} : memref<304x64xf32, #tpu.memory_space<vmem>>, vector<4x64xf32>
    %235 = arith.maximumf %233, %234 : vector<4x64xf32>
    %c112_171 = arith.constant 112 : index
    %c0_172 = arith.constant 0 : index
    %236 = tpu.strided_load %arg13[%c112_171, %c0_172] {strides = array<i32: 2, 1>} : memref<304x64xf32, #tpu.memory_space<vmem>>, vector<4x64xf32>
    %c113_173 = arith.constant 113 : index
    %c0_174 = arith.constant 0 : index
    %237 = tpu.strided_load %arg13[%c113_173, %c0_174] {strides = array<i32: 2, 1>} : memref<304x64xf32, #tpu.memory_space<vmem>>, vector<4x64xf32>
    %238 = arith.maximumf %236, %237 : vector<4x64xf32>
    %239 = arith.maximumf %235, %238 : vector<4x64xf32>
    %240 = arith.truncf %239 : vector<4x64xf32> to vector<4x64xbf16>
    %c40_175 = arith.constant 40 : index
    %c0_176 = arith.constant 0 : index
    %241 = vector.load %arg14[%c40_175, %c0_176] : memref<128x64xbf16, #tpu.memory_space<vmem>>, vector<4x64xbf16>
    tpu.vector_store %arg14[%c40_175, %c0_176], %240 {strides = array<i32>} : memref<128x64xbf16, #tpu.memory_space<vmem>>, vector<4x64xbf16>,
    %c176_177 = arith.constant 176 : index
    %c0_178 = arith.constant 0 : index
    %242 = tpu.strided_load %arg13[%c176_177, %c0_178] {strides = array<i32: 2, 1>} : memref<304x64xf32, #tpu.memory_space<vmem>>, vector<4x64xf32>
    %c177_179 = arith.constant 177 : index
    %c0_180 = arith.constant 0 : index
    %243 = tpu.strided_load %arg13[%c177_179, %c0_180] {strides = array<i32: 2, 1>} : memref<304x64xf32, #tpu.memory_space<vmem>>, vector<4x64xf32>
    %244 = arith.maximumf %242, %243 : vector<4x64xf32>
    %c192_181 = arith.constant 192 : index
    %c0_182 = arith.constant 0 : index
    %245 = tpu.strided_load %arg13[%c192_181, %c0_182] {strides = array<i32: 2, 1>} : memref<304x64xf32, #tpu.memory_space<vmem>>, vector<4x64xf32>
    %c193_183 = arith.constant 193 : index
    %c0_184 = arith.constant 0 : index
    %246 = tpu.strided_load %arg13[%c193_183, %c0_184] {strides = array<i32: 2, 1>} : memref<304x64xf32, #tpu.memory_space<vmem>>, vector<4x64xf32>
    %247 = arith.maximumf %245, %246 : vector<4x64xf32>
    %248 = arith.maximumf %244, %247 : vector<4x64xf32>
    %249 = arith.truncf %248 : vector<4x64xf32> to vector<4x64xbf16>
    %c80_185 = arith.constant 80 : index
    %c0_186 = arith.constant 0 : index
    %250 = vector.load %arg14[%c80_185, %c0_186] : memref<128x64xbf16, #tpu.memory_space<vmem>>, vector<4x64xbf16>
    tpu.vector_store %arg14[%c80_185, %c0_186], %249 {strides = array<i32>} : memref<128x64xbf16, #tpu.memory_space<vmem>>, vector<4x64xbf16>,
    %c208_187 = arith.constant 208 : index
    %c0_188 = arith.constant 0 : index
    %251 = tpu.strided_load %arg13[%c208_187, %c0_188] {strides = array<i32: 2, 1>} : memref<304x64xf32, #tpu.memory_space<vmem>>, vector<4x64xf32>
    %c209_189 = arith.constant 209 : index
    %c0_190 = arith.constant 0 : index
    %252 = tpu.strided_load %arg13[%c209_189, %c0_190] {strides = array<i32: 2, 1>} : memref<304x64xf32, #tpu.memory_space<vmem>>, vector<4x64xf32>
    %253 = arith.maximumf %251, %252 : vector<4x64xf32>
    %c224_191 = arith.constant 224 : index
    %c0_192 = arith.constant 0 : index
    %254 = tpu.strided_load %arg13[%c224_191, %c0_192] {strides = array<i32: 2, 1>} : memref<304x64xf32, #tpu.memory_space<vmem>>, vector<4x64xf32>
    %c225_193 = arith.constant 225 : index
    %c0_194 = arith.constant 0 : index
    %255 = tpu.strided_load %arg13[%c225_193, %c0_194] {strides = array<i32: 2, 1>} : memref<304x64xf32, #tpu.memory_space<vmem>>, vector<4x64xf32>
    %256 = arith.maximumf %254, %255 : vector<4x64xf32>
    %257 = arith.maximumf %253, %256 : vector<4x64xf32>
    %258 = arith.truncf %257 : vector<4x64xf32> to vector<4x64xbf16>
    %c88_195 = arith.constant 88 : index
    %c0_196 = arith.constant 0 : index
    %259 = vector.load %arg14[%c88_195, %c0_196] : memref<128x64xbf16, #tpu.memory_space<vmem>>, vector<4x64xbf16>
    tpu.vector_store %arg14[%c88_195, %c0_196], %258 {strides = array<i32>} : memref<128x64xbf16, #tpu.memory_space<vmem>>, vector<4x64xbf16>,
    %c240_197 = arith.constant 240 : index
    %c0_198 = arith.constant 0 : index
    %260 = tpu.strided_load %arg13[%c240_197, %c0_198] {strides = array<i32: 2, 1>} : memref<304x64xf32, #tpu.memory_space<vmem>>, vector<4x64xf32>
    %c241_199 = arith.constant 241 : index
    %c0_200 = arith.constant 0 : index
    %261 = tpu.strided_load %arg13[%c241_199, %c0_200] {strides = array<i32: 2, 1>} : memref<304x64xf32, #tpu.memory_space<vmem>>, vector<4x64xf32>
    %262 = arith.maximumf %260, %261 : vector<4x64xf32>
    %c256_201 = arith.constant 256 : index
    %c0_202 = arith.constant 0 : index
    %263 = tpu.strided_load %arg13[%c256_201, %c0_202] {strides = array<i32: 2, 1>} : memref<304x64xf32, #tpu.memory_space<vmem>>, vector<4x64xf32>
    %c257_203 = arith.constant 257 : index
    %c0_204 = arith.constant 0 : index
    %264 = tpu.strided_load %arg13[%c257_203, %c0_204] {strides = array<i32: 2, 1>} : memref<304x64xf32, #tpu.memory_space<vmem>>, vector<4x64xf32>
    %265 = arith.maximumf %263, %264 : vector<4x64xf32>
    %266 = arith.maximumf %262, %265 : vector<4x64xf32>
    %267 = arith.truncf %266 : vector<4x64xf32> to vector<4x64xbf16>
    %c96_205 = arith.constant 96 : index
    %c0_206 = arith.constant 0 : index
    %268 = vector.load %arg14[%c96_205, %c0_206] : memref<128x64xbf16, #tpu.memory_space<vmem>>, vector<4x64xbf16>
    tpu.vector_store %arg14[%c96_205, %c0_206], %267 {strides = array<i32>} : memref<128x64xbf16, #tpu.memory_space<vmem>>, vector<4x64xbf16>,
    %c272_207 = arith.constant 272 : index
    %c0_208 = arith.constant 0 : index
    %269 = tpu.strided_load %arg13[%c272_207, %c0_208] {strides = array<i32: 2, 1>} : memref<304x64xf32, #tpu.memory_space<vmem>>, vector<4x64xf32>
    %c273_209 = arith.constant 273 : index
    %c0_210 = arith.constant 0 : index
    %270 = tpu.strided_load %arg13[%c273_209, %c0_210] {strides = array<i32: 2, 1>} : memref<304x64xf32, #tpu.memory_space<vmem>>, vector<4x64xf32>
    %271 = arith.maximumf %269, %270 : vector<4x64xf32>
    %c288_211 = arith.constant 288 : index
    %c0_212 = arith.constant 0 : index
    %272 = tpu.strided_load %arg13[%c288_211, %c0_212] {strides = array<i32: 2, 1>} : memref<304x64xf32, #tpu.memory_space<vmem>>, vector<4x64xf32>
    %c289_213 = arith.constant 289 : index
    %c0_214 = arith.constant 0 : index
    %273 = tpu.strided_load %arg13[%c289_213, %c0_214] {strides = array<i32: 2, 1>} : memref<304x64xf32, #tpu.memory_space<vmem>>, vector<4x64xf32>
    %274 = arith.maximumf %272, %273 : vector<4x64xf32>
    %275 = arith.maximumf %271, %274 : vector<4x64xf32>
    %276 = arith.truncf %275 : vector<4x64xf32> to vector<4x64xbf16>
    %c104_215 = arith.constant 104 : index
    %c0_216 = arith.constant 0 : index
    %277 = vector.load %arg14[%c104_215, %c0_216] : memref<128x64xbf16, #tpu.memory_space<vmem>>, vector<4x64xbf16>
    tpu.vector_store %arg14[%c104_215, %c0_216], %276 {strides = array<i32>} : memref<128x64xbf16, #tpu.memory_space<vmem>>, vector<4x64xbf16>,
    %c7_217 = arith.constant 7 : index
    %c0_218 = arith.constant 0 : index
    %278 = vector.load %arg14[%c7_217, %c0_218] : memref<128x64xbf16, #tpu.memory_space<vmem>>, vector<96x64xbf16>
    %c0_219 = arith.constant 0 : index
    %c0_220 = arith.constant 0 : index
    %c0_221 = arith.constant 0 : index
    %279 = vector.load %arg6[%c0_219, %c0_220, %c0_221] : memref<9x64x128xbf16, #tpu.memory_space<vmem>>, vector<1x64x128xbf16>
    %280 = vector.shape_cast %279 : vector<1x64x128xbf16> to vector<64x128xbf16>
    %cst_222 = arith.constant dense<0.000000e+00> : vector<96x128xf32>
    %281 = tpu.matmul %278, %280, %cst_222 {dimension_numbers = #tpu.dot_dimension_numbers<[1], [0], [0], [1], [0, 0, 1, 1], [], []>} : vector<96x64xbf16>, vector<64x128xbf16>, vector<96x128xf32> -> vector<96x128xf32>
    %c8_223 = arith.constant 8 : index
    %c0_224 = arith.constant 0 : index
    %282 = vector.load %arg14[%c8_223, %c0_224] : memref<128x64xbf16, #tpu.memory_space<vmem>>, vector<96x64xbf16>
    %c1_225 = arith.constant 1 : index
    %c0_226 = arith.constant 0 : index
    %c0_227 = arith.constant 0 : index
    %283 = vector.load %arg6[%c1_225, %c0_226, %c0_227] : memref<9x64x128xbf16, #tpu.memory_space<vmem>>, vector<1x64x128xbf16>
    %284 = vector.shape_cast %283 : vector<1x64x128xbf16> to vector<64x128xbf16>
    %cst_228 = arith.constant dense<0.000000e+00> : vector<96x128xf32>
    %285 = tpu.matmul %282, %284, %cst_228 {dimension_numbers = #tpu.dot_dimension_numbers<[1], [0], [0], [1], [0, 0, 1, 1], [], []>} : vector<96x64xbf16>, vector<64x128xbf16>, vector<96x128xf32> -> vector<96x128xf32>
    %286 = arith.addf %281, %285 : vector<96x128xf32>
    %c9_229 = arith.constant 9 : index
    %c0_230 = arith.constant 0 : index
    %287 = vector.load %arg14[%c9_229, %c0_230] : memref<128x64xbf16, #tpu.memory_space<vmem>>, vector<96x64xbf16>
    %c2_231 = arith.constant 2 : index
    %c0_232 = arith.constant 0 : index
    %c0_233 = arith.constant 0 : index
    %288 = vector.load %arg6[%c2_231, %c0_232, %c0_233] : memref<9x64x128xbf16, #tpu.memory_space<vmem>>, vector<1x64x128xbf16>
    %289 = vector.shape_cast %288 : vector<1x64x128xbf16> to vector<64x128xbf16>
    %cst_234 = arith.constant dense<0.000000e+00> : vector<96x128xf32>
    %290 = tpu.matmul %287, %289, %cst_234 {dimension_numbers = #tpu.dot_dimension_numbers<[1], [0], [0], [1], [0, 0, 1, 1], [], []>} : vector<96x64xbf16>, vector<64x128xbf16>, vector<96x128xf32> -> vector<96x128xf32>
    %291 = arith.addf %286, %290 : vector<96x128xf32>
    %c15 = arith.constant 15 : index
    %c0_235 = arith.constant 0 : index
    %292 = vector.load %arg14[%c15, %c0_235] : memref<128x64xbf16, #tpu.memory_space<vmem>>, vector<96x64xbf16>
    %c3_236 = arith.constant 3 : index
    %c0_237 = arith.constant 0 : index
    %c0_238 = arith.constant 0 : index
    %293 = vector.load %arg6[%c3_236, %c0_237, %c0_238] : memref<9x64x128xbf16, #tpu.memory_space<vmem>>, vector<1x64x128xbf16>
    %294 = vector.shape_cast %293 : vector<1x64x128xbf16> to vector<64x128xbf16>
    %cst_239 = arith.constant dense<0.000000e+00> : vector<96x128xf32>
    %295 = tpu.matmul %292, %294, %cst_239 {dimension_numbers = #tpu.dot_dimension_numbers<[1], [0], [0], [1], [0, 0, 1, 1], [], []>} : vector<96x64xbf16>, vector<64x128xbf16>, vector<96x128xf32> -> vector<96x128xf32>
    %296 = arith.addf %291, %295 : vector<96x128xf32>
    %c16_240 = arith.constant 16 : index
    %c0_241 = arith.constant 0 : index
    %297 = vector.load %arg14[%c16_240, %c0_241] : memref<128x64xbf16, #tpu.memory_space<vmem>>, vector<96x64xbf16>
    %c4_242 = arith.constant 4 : index
    %c0_243 = arith.constant 0 : index
    %c0_244 = arith.constant 0 : index
    %298 = vector.load %arg6[%c4_242, %c0_243, %c0_244] : memref<9x64x128xbf16, #tpu.memory_space<vmem>>, vector<1x64x128xbf16>
    %299 = vector.shape_cast %298 : vector<1x64x128xbf16> to vector<64x128xbf16>
    %cst_245 = arith.constant dense<0.000000e+00> : vector<96x128xf32>
    %300 = tpu.matmul %297, %299, %cst_245 {dimension_numbers = #tpu.dot_dimension_numbers<[1], [0], [0], [1], [0, 0, 1, 1], [], []>} : vector<96x64xbf16>, vector<64x128xbf16>, vector<96x128xf32> -> vector<96x128xf32>
    %301 = arith.addf %296, %300 : vector<96x128xf32>
    %c17_246 = arith.constant 17 : index
    %c0_247 = arith.constant 0 : index
    %302 = vector.load %arg14[%c17_246, %c0_247] : memref<128x64xbf16, #tpu.memory_space<vmem>>, vector<96x64xbf16>
    %c5_248 = arith.constant 5 : index
    %c0_249 = arith.constant 0 : index
    %c0_250 = arith.constant 0 : index
    %303 = vector.load %arg6[%c5_248, %c0_249, %c0_250] : memref<9x64x128xbf16, #tpu.memory_space<vmem>>, vector<1x64x128xbf16>
    %304 = vector.shape_cast %303 : vector<1x64x128xbf16> to vector<64x128xbf16>
    %cst_251 = arith.constant dense<0.000000e+00> : vector<96x128xf32>
    %305 = tpu.matmul %302, %304, %cst_251 {dimension_numbers = #tpu.dot_dimension_numbers<[1], [0], [0], [1], [0, 0, 1, 1], [], []>} : vector<96x64xbf16>, vector<64x128xbf16>, vector<96x128xf32> -> vector<96x128xf32>
    %306 = arith.addf %301, %305 : vector<96x128xf32>
    %c23_252 = arith.constant 23 : index
    %c0_253 = arith.constant 0 : index
    %307 = vector.load %arg14[%c23_252, %c0_253] : memref<128x64xbf16, #tpu.memory_space<vmem>>, vector<96x64xbf16>
    %c6_254 = arith.constant 6 : index
    %c0_255 = arith.constant 0 : index
    %c0_256 = arith.constant 0 : index
    %308 = vector.load %arg6[%c6_254, %c0_255, %c0_256] : memref<9x64x128xbf16, #tpu.memory_space<vmem>>, vector<1x64x128xbf16>
    %309 = vector.shape_cast %308 : vector<1x64x128xbf16> to vector<64x128xbf16>
    %cst_257 = arith.constant dense<0.000000e+00> : vector<96x128xf32>
    %310 = tpu.matmul %307, %309, %cst_257 {dimension_numbers = #tpu.dot_dimension_numbers<[1], [0], [0], [1], [0, 0, 1, 1], [], []>} : vector<96x64xbf16>, vector<64x128xbf16>, vector<96x128xf32> -> vector<96x128xf32>
    %311 = arith.addf %306, %310 : vector<96x128xf32>
    %c24_258 = arith.constant 24 : index
    %c0_259 = arith.constant 0 : index
    %312 = vector.load %arg14[%c24_258, %c0_259] : memref<128x64xbf16, #tpu.memory_space<vmem>>, vector<96x64xbf16>
    %c7_260 = arith.constant 7 : index
    %c0_261 = arith.constant 0 : index
    %c0_262 = arith.constant 0 : index
    %313 = vector.load %arg6[%c7_260, %c0_261, %c0_262] : memref<9x64x128xbf16, #tpu.memory_space<vmem>>, vector<1x64x128xbf16>
    %314 = vector.shape_cast %313 : vector<1x64x128xbf16> to vector<64x128xbf16>
    %cst_263 = arith.constant dense<0.000000e+00> : vector<96x128xf32>
    %315 = tpu.matmul %312, %314, %cst_263 {dimension_numbers = #tpu.dot_dimension_numbers<[1], [0], [0], [1], [0, 0, 1, 1], [], []>} : vector<96x64xbf16>, vector<64x128xbf16>, vector<96x128xf32> -> vector<96x128xf32>
    %316 = arith.addf %311, %315 : vector<96x128xf32>
    %c25_264 = arith.constant 25 : index
    %c0_265 = arith.constant 0 : index
    %317 = vector.load %arg14[%c25_264, %c0_265] : memref<128x64xbf16, #tpu.memory_space<vmem>>, vector<96x64xbf16>
    %c8_266 = arith.constant 8 : index
    %c0_267 = arith.constant 0 : index
    %c0_268 = arith.constant 0 : index
    %318 = vector.load %arg6[%c8_266, %c0_267, %c0_268] : memref<9x64x128xbf16, #tpu.memory_space<vmem>>, vector<1x64x128xbf16>
    %319 = vector.shape_cast %318 : vector<1x64x128xbf16> to vector<64x128xbf16>
    %cst_269 = arith.constant dense<0.000000e+00> : vector<96x128xf32>
    %320 = tpu.matmul %317, %319, %cst_269 {dimension_numbers = #tpu.dot_dimension_numbers<[1], [0], [0], [1], [0, 0, 1, 1], [], []>} : vector<96x64xbf16>, vector<64x128xbf16>, vector<96x128xf32> -> vector<96x128xf32>
    %321 = arith.addf %316, %320 : vector<96x128xf32>
    %c0_270 = arith.constant 0 : index
    %c0_271 = arith.constant 0 : index
    %322 = vector.load %arg7[%c0_270, %c0_271] : memref<1x128xf32, #tpu.memory_space<vmem>>, vector<1x128xf32>
    %323 = vector.broadcast %322 : vector<1x128xf32> to vector<96x128xf32>
    %324 = arith.addf %321, %323 : vector<96x128xf32>
    %cst_272 = arith.constant 0.000000e+00 : f32
    %325 = vector.broadcast %cst_272 : f32 to vector<96x128xf32>
    %326 = arith.maximumf %324, %325 : vector<96x128xf32>
    %c0_273 = arith.constant 0 : index
    %c0_274 = arith.constant 0 : index
    %327 = vector.load %arg15[%c0_273, %c0_274] : memref<96x128xf32, #tpu.memory_space<vmem>>, vector<96x128xf32>
    tpu.vector_store %arg15[%c0_273, %c0_274], %326 {strides = array<i32>} : memref<96x128xf32, #tpu.memory_space<vmem>>, vector<96x128xf32>,
    %c0_275 = arith.constant 0 : index
    %c0_276 = arith.constant 0 : index
    %328 = tpu.strided_load %arg15[%c0_275, %c0_276] {strides = array<i32: 2, 1>} : memref<96x128xf32, #tpu.memory_space<vmem>>, vector<2x128xf32>
    %c1_277 = arith.constant 1 : index
    %c0_278 = arith.constant 0 : index
    %329 = tpu.strided_load %arg15[%c1_277, %c0_278] {strides = array<i32: 2, 1>} : memref<96x128xf32, #tpu.memory_space<vmem>>, vector<2x128xf32>
    %330 = arith.maximumf %328, %329 : vector<2x128xf32>
    %c8_279 = arith.constant 8 : index
    %c0_280 = arith.constant 0 : index
    %331 = tpu.strided_load %arg15[%c8_279, %c0_280] {strides = array<i32: 2, 1>} : memref<96x128xf32, #tpu.memory_space<vmem>>, vector<2x128xf32>
    %c9_281 = arith.constant 9 : index
    %c0_282 = arith.constant 0 : index
    %332 = tpu.strided_load %arg15[%c9_281, %c0_282] {strides = array<i32: 2, 1>} : memref<96x128xf32, #tpu.memory_space<vmem>>, vector<2x128xf32>
    %333 = arith.maximumf %331, %332 : vector<2x128xf32>
    %334 = arith.maximumf %330, %333 : vector<2x128xf32>
    %335 = arith.truncf %334 : vector<2x128xf32> to vector<2x128xbf16>
    %c16_283 = arith.constant 16 : index
    %c0_284 = arith.constant 0 : index
    %336 = vector.load %arg16[%c16_283, %c0_284] : memref<96x128xbf16, #tpu.memory_space<vmem>>, vector<2x128xbf16>
    tpu.vector_store %arg16[%c16_283, %c0_284], %335 {strides = array<i32>} : memref<96x128xbf16, #tpu.memory_space<vmem>>, vector<2x128xbf16>,
    %c16_285 = arith.constant 16 : index
    %c0_286 = arith.constant 0 : index
    %337 = tpu.strided_load %arg15[%c16_285, %c0_286] {strides = array<i32: 2, 1>} : memref<96x128xf32, #tpu.memory_space<vmem>>, vector<2x128xf32>
    %c17_287 = arith.constant 17 : index
    %c0_288 = arith.constant 0 : index
    %338 = tpu.strided_load %arg15[%c17_287, %c0_288] {strides = array<i32: 2, 1>} : memref<96x128xf32, #tpu.memory_space<vmem>>, vector<2x128xf32>
    %339 = arith.maximumf %337, %338 : vector<2x128xf32>
    %c24_289 = arith.constant 24 : index
    %c0_290 = arith.constant 0 : index
    %340 = tpu.strided_load %arg15[%c24_289, %c0_290] {strides = array<i32: 2, 1>} : memref<96x128xf32, #tpu.memory_space<vmem>>, vector<2x128xf32>
    %c25_291 = arith.constant 25 : index
    %c0_292 = arith.constant 0 : index
    %341 = tpu.strided_load %arg15[%c25_291, %c0_292] {strides = array<i32: 2, 1>} : memref<96x128xf32, #tpu.memory_space<vmem>>, vector<2x128xf32>
    %342 = arith.maximumf %340, %341 : vector<2x128xf32>
    %343 = arith.maximumf %339, %342 : vector<2x128xf32>
    %344 = arith.truncf %343 : vector<2x128xf32> to vector<2x128xbf16>
    %c24_293 = arith.constant 24 : index
    %c0_294 = arith.constant 0 : index
    %345 = vector.load %arg16[%c24_293, %c0_294] : memref<96x128xbf16, #tpu.memory_space<vmem>>, vector<2x128xbf16>
    tpu.vector_store %arg16[%c24_293, %c0_294], %344 {strides = array<i32>} : memref<96x128xbf16, #tpu.memory_space<vmem>>, vector<2x128xbf16>,
    %c64_295 = arith.constant 64 : index
    %c0_296 = arith.constant 0 : index
    %346 = tpu.strided_load %arg15[%c64_295, %c0_296] {strides = array<i32: 2, 1>} : memref<96x128xf32, #tpu.memory_space<vmem>>, vector<2x128xf32>
    %c65_297 = arith.constant 65 : index
    %c0_298 = arith.constant 0 : index
    %347 = tpu.strided_load %arg15[%c65_297, %c0_298] {strides = array<i32: 2, 1>} : memref<96x128xf32, #tpu.memory_space<vmem>>, vector<2x128xf32>
    %348 = arith.maximumf %346, %347 : vector<2x128xf32>
    %c72_299 = arith.constant 72 : index
    %c0_300 = arith.constant 0 : index
    %349 = tpu.strided_load %arg15[%c72_299, %c0_300] {strides = array<i32: 2, 1>} : memref<96x128xf32, #tpu.memory_space<vmem>>, vector<2x128xf32>
    %c73 = arith.constant 73 : index
    %c0_301 = arith.constant 0 : index
    %350 = tpu.strided_load %arg15[%c73, %c0_301] {strides = array<i32: 2, 1>} : memref<96x128xf32, #tpu.memory_space<vmem>>, vector<2x128xf32>
    %351 = arith.maximumf %349, %350 : vector<2x128xf32>
    %352 = arith.maximumf %348, %351 : vector<2x128xf32>
    %353 = arith.truncf %352 : vector<2x128xf32> to vector<2x128xbf16>
    %c64_302 = arith.constant 64 : index
    %c0_303 = arith.constant 0 : index
    %354 = vector.load %arg16[%c64_302, %c0_303] : memref<96x128xbf16, #tpu.memory_space<vmem>>, vector<2x128xbf16>
    tpu.vector_store %arg16[%c64_302, %c0_303], %353 {strides = array<i32>} : memref<96x128xbf16, #tpu.memory_space<vmem>>, vector<2x128xbf16>,
    %c80_304 = arith.constant 80 : index
    %c0_305 = arith.constant 0 : index
    %355 = tpu.strided_load %arg15[%c80_304, %c0_305] {strides = array<i32: 2, 1>} : memref<96x128xf32, #tpu.memory_space<vmem>>, vector<2x128xf32>
    %c81_306 = arith.constant 81 : index
    %c0_307 = arith.constant 0 : index
    %356 = tpu.strided_load %arg15[%c81_306, %c0_307] {strides = array<i32: 2, 1>} : memref<96x128xf32, #tpu.memory_space<vmem>>, vector<2x128xf32>
    %357 = arith.maximumf %355, %356 : vector<2x128xf32>
    %c88_308 = arith.constant 88 : index
    %c0_309 = arith.constant 0 : index
    %358 = tpu.strided_load %arg15[%c88_308, %c0_309] {strides = array<i32: 2, 1>} : memref<96x128xf32, #tpu.memory_space<vmem>>, vector<2x128xf32>
    %c89 = arith.constant 89 : index
    %c0_310 = arith.constant 0 : index
    %359 = tpu.strided_load %arg15[%c89, %c0_310] {strides = array<i32: 2, 1>} : memref<96x128xf32, #tpu.memory_space<vmem>>, vector<2x128xf32>
    %360 = arith.maximumf %358, %359 : vector<2x128xf32>
    %361 = arith.maximumf %357, %360 : vector<2x128xf32>
    %362 = arith.truncf %361 : vector<2x128xf32> to vector<2x128xbf16>
    %c72_311 = arith.constant 72 : index
    %c0_312 = arith.constant 0 : index
    %363 = vector.load %arg16[%c72_311, %c0_312] : memref<96x128xbf16, #tpu.memory_space<vmem>>, vector<2x128xbf16>
    tpu.vector_store %arg16[%c72_311, %c0_312], %362 {strides = array<i32>} : memref<96x128xbf16, #tpu.memory_space<vmem>>, vector<2x128xbf16>,
    %c7_313 = arith.constant 7 : index
    %c0_314 = arith.constant 0 : index
    %364 = vector.load %arg16[%c7_313, %c0_314] : memref<96x128xbf16, #tpu.memory_space<vmem>>, vector<64x128xbf16>
    %c0_315 = arith.constant 0 : index
    %c0_316 = arith.constant 0 : index
    %c0_317 = arith.constant 0 : index
    %365 = vector.load %arg8[%c0_315, %c0_316, %c0_317] : memref<9x128x256xbf16, #tpu.memory_space<vmem>>, vector<1x128x256xbf16>
    %366 = vector.shape_cast %365 : vector<1x128x256xbf16> to vector<128x256xbf16>
    %cst_318 = arith.constant dense<0.000000e+00> : vector<64x256xf32>
    %367 = tpu.matmul %364, %366, %cst_318 {dimension_numbers = #tpu.dot_dimension_numbers<[1], [0], [0], [1], [0, 0, 1, 1], [], []>} : vector<64x128xbf16>, vector<128x256xbf16>, vector<64x256xf32> -> vector<64x256xf32>
    %c8_319 = arith.constant 8 : index
    %c0_320 = arith.constant 0 : index
    %368 = vector.load %arg16[%c8_319, %c0_320] : memref<96x128xbf16, #tpu.memory_space<vmem>>, vector<64x128xbf16>
    %c1_321 = arith.constant 1 : index
    %c0_322 = arith.constant 0 : index
    %c0_323 = arith.constant 0 : index
    %369 = vector.load %arg8[%c1_321, %c0_322, %c0_323] : memref<9x128x256xbf16, #tpu.memory_space<vmem>>, vector<1x128x256xbf16>
    %370 = vector.shape_cast %369 : vector<1x128x256xbf16> to vector<128x256xbf16>
    %cst_324 = arith.constant dense<0.000000e+00> : vector<64x256xf32>
    %371 = tpu.matmul %368, %370, %cst_324 {dimension_numbers = #tpu.dot_dimension_numbers<[1], [0], [0], [1], [0, 0, 1, 1], [], []>} : vector<64x128xbf16>, vector<128x256xbf16>, vector<64x256xf32> -> vector<64x256xf32>
    %372 = arith.addf %367, %371 : vector<64x256xf32>
    %c9_325 = arith.constant 9 : index
    %c0_326 = arith.constant 0 : index
    %373 = vector.load %arg16[%c9_325, %c0_326] : memref<96x128xbf16, #tpu.memory_space<vmem>>, vector<64x128xbf16>
    %c2_327 = arith.constant 2 : index
    %c0_328 = arith.constant 0 : index
    %c0_329 = arith.constant 0 : index
    %374 = vector.load %arg8[%c2_327, %c0_328, %c0_329] : memref<9x128x256xbf16, #tpu.memory_space<vmem>>, vector<1x128x256xbf16>
    %375 = vector.shape_cast %374 : vector<1x128x256xbf16> to vector<128x256xbf16>
    %cst_330 = arith.constant dense<0.000000e+00> : vector<64x256xf32>
    %376 = tpu.matmul %373, %375, %cst_330 {dimension_numbers = #tpu.dot_dimension_numbers<[1], [0], [0], [1], [0, 0, 1, 1], [], []>} : vector<64x128xbf16>, vector<128x256xbf16>, vector<64x256xf32> -> vector<64x256xf32>
    %377 = arith.addf %372, %376 : vector<64x256xf32>
    %c15_331 = arith.constant 15 : index
    %c0_332 = arith.constant 0 : index
    %378 = vector.load %arg16[%c15_331, %c0_332] : memref<96x128xbf16, #tpu.memory_space<vmem>>, vector<64x128xbf16>
    %c3_333 = arith.constant 3 : index
    %c0_334 = arith.constant 0 : index
    %c0_335 = arith.constant 0 : index
    %379 = vector.load %arg8[%c3_333, %c0_334, %c0_335] : memref<9x128x256xbf16, #tpu.memory_space<vmem>>, vector<1x128x256xbf16>
    %380 = vector.shape_cast %379 : vector<1x128x256xbf16> to vector<128x256xbf16>
    %cst_336 = arith.constant dense<0.000000e+00> : vector<64x256xf32>
    %381 = tpu.matmul %378, %380, %cst_336 {dimension_numbers = #tpu.dot_dimension_numbers<[1], [0], [0], [1], [0, 0, 1, 1], [], []>} : vector<64x128xbf16>, vector<128x256xbf16>, vector<64x256xf32> -> vector<64x256xf32>
    %382 = arith.addf %377, %381 : vector<64x256xf32>
    %c16_337 = arith.constant 16 : index
    %c0_338 = arith.constant 0 : index
    %383 = vector.load %arg16[%c16_337, %c0_338] : memref<96x128xbf16, #tpu.memory_space<vmem>>, vector<64x128xbf16>
    %c4_339 = arith.constant 4 : index
    %c0_340 = arith.constant 0 : index
    %c0_341 = arith.constant 0 : index
    %384 = vector.load %arg8[%c4_339, %c0_340, %c0_341] : memref<9x128x256xbf16, #tpu.memory_space<vmem>>, vector<1x128x256xbf16>
    %385 = vector.shape_cast %384 : vector<1x128x256xbf16> to vector<128x256xbf16>
    %cst_342 = arith.constant dense<0.000000e+00> : vector<64x256xf32>
    %386 = tpu.matmul %383, %385, %cst_342 {dimension_numbers = #tpu.dot_dimension_numbers<[1], [0], [0], [1], [0, 0, 1, 1], [], []>} : vector<64x128xbf16>, vector<128x256xbf16>, vector<64x256xf32> -> vector<64x256xf32>
    %387 = arith.addf %382, %386 : vector<64x256xf32>
    %c17_343 = arith.constant 17 : index
    %c0_344 = arith.constant 0 : index
    %388 = vector.load %arg16[%c17_343, %c0_344] : memref<96x128xbf16, #tpu.memory_space<vmem>>, vector<64x128xbf16>
    %c5_345 = arith.constant 5 : index
    %c0_346 = arith.constant 0 : index
    %c0_347 = arith.constant 0 : index
    %389 = vector.load %arg8[%c5_345, %c0_346, %c0_347] : memref<9x128x256xbf16, #tpu.memory_space<vmem>>, vector<1x128x256xbf16>
    %390 = vector.shape_cast %389 : vector<1x128x256xbf16> to vector<128x256xbf16>
    %cst_348 = arith.constant dense<0.000000e+00> : vector<64x256xf32>
    %391 = tpu.matmul %388, %390, %cst_348 {dimension_numbers = #tpu.dot_dimension_numbers<[1], [0], [0], [1], [0, 0, 1, 1], [], []>} : vector<64x128xbf16>, vector<128x256xbf16>, vector<64x256xf32> -> vector<64x256xf32>
    %392 = arith.addf %387, %391 : vector<64x256xf32>
    %c23_349 = arith.constant 23 : index
    %c0_350 = arith.constant 0 : index
    %393 = vector.load %arg16[%c23_349, %c0_350] : memref<96x128xbf16, #tpu.memory_space<vmem>>, vector<64x128xbf16>
    %c6_351 = arith.constant 6 : index
    %c0_352 = arith.constant 0 : index
    %c0_353 = arith.constant 0 : index
    %394 = vector.load %arg8[%c6_351, %c0_352, %c0_353] : memref<9x128x256xbf16, #tpu.memory_space<vmem>>, vector<1x128x256xbf16>
    %395 = vector.shape_cast %394 : vector<1x128x256xbf16> to vector<128x256xbf16>
    %cst_354 = arith.constant dense<0.000000e+00> : vector<64x256xf32>
    %396 = tpu.matmul %393, %395, %cst_354 {dimension_numbers = #tpu.dot_dimension_numbers<[1], [0], [0], [1], [0, 0, 1, 1], [], []>} : vector<64x128xbf16>, vector<128x256xbf16>, vector<64x256xf32> -> vector<64x256xf32>
    %397 = arith.addf %392, %396 : vector<64x256xf32>
    %c24_355 = arith.constant 24 : index
    %c0_356 = arith.constant 0 : index
    %398 = vector.load %arg16[%c24_355, %c0_356] : memref<96x128xbf16, #tpu.memory_space<vmem>>, vector<64x128xbf16>
    %c7_357 = arith.constant 7 : index
    %c0_358 = arith.constant 0 : index
    %c0_359 = arith.constant 0 : index
    %399 = vector.load %arg8[%c7_357, %c0_358, %c0_359] : memref<9x128x256xbf16, #tpu.memory_space<vmem>>, vector<1x128x256xbf16>
    %400 = vector.shape_cast %399 : vector<1x128x256xbf16> to vector<128x256xbf16>
    %cst_360 = arith.constant dense<0.000000e+00> : vector<64x256xf32>
    %401 = tpu.matmul %398, %400, %cst_360 {dimension_numbers = #tpu.dot_dimension_numbers<[1], [0], [0], [1], [0, 0, 1, 1], [], []>} : vector<64x128xbf16>, vector<128x256xbf16>, vector<64x256xf32> -> vector<64x256xf32>
    %402 = arith.addf %397, %401 : vector<64x256xf32>
    %c25_361 = arith.constant 25 : index
    %c0_362 = arith.constant 0 : index
    %403 = vector.load %arg16[%c25_361, %c0_362] : memref<96x128xbf16, #tpu.memory_space<vmem>>, vector<64x128xbf16>
    %c8_363 = arith.constant 8 : index
    %c0_364 = arith.constant 0 : index
    %c0_365 = arith.constant 0 : index
    %404 = vector.load %arg8[%c8_363, %c0_364, %c0_365] : memref<9x128x256xbf16, #tpu.memory_space<vmem>>, vector<1x128x256xbf16>
    %405 = vector.shape_cast %404 : vector<1x128x256xbf16> to vector<128x256xbf16>
    %cst_366 = arith.constant dense<0.000000e+00> : vector<64x256xf32>
    %406 = tpu.matmul %403, %405, %cst_366 {dimension_numbers = #tpu.dot_dimension_numbers<[1], [0], [0], [1], [0, 0, 1, 1], [], []>} : vector<64x128xbf16>, vector<128x256xbf16>, vector<64x256xf32> -> vector<64x256xf32>
    %407 = arith.addf %402, %406 : vector<64x256xf32>
    %c0_367 = arith.constant 0 : index
    %c0_368 = arith.constant 0 : index
    %408 = vector.load %arg9[%c0_367, %c0_368] : memref<1x256xf32, #tpu.memory_space<vmem>>, vector<1x256xf32>
    %409 = vector.broadcast %408 : vector<1x256xf32> to vector<64x256xf32>
    %410 = arith.addf %407, %409 : vector<64x256xf32>
    %cst_369 = arith.constant 0.000000e+00 : f32
    %411 = vector.broadcast %cst_369 : f32 to vector<64x256xf32>
    %412 = arith.maximumf %410, %411 : vector<64x256xf32>
    %c0_370 = arith.constant 0 : index
    %c0_371 = arith.constant 0 : index
    %413 = vector.load %arg17[%c0_370, %c0_371] : memref<64x256xf32, #tpu.memory_space<vmem>>, vector<64x256xf32>
    tpu.vector_store %arg17[%c0_370, %c0_371], %412 {strides = array<i32>} : memref<64x256xf32, #tpu.memory_space<vmem>>, vector<64x256xf32>,
    %c0_372 = arith.constant 0 : index
    %c0_373 = arith.constant 0 : index
    %414 = vector.load %arg17[%c0_372, %c0_373] : memref<64x256xf32, #tpu.memory_space<vmem>>, vector<1x256xf32>
    %c1_374 = arith.constant 1 : index
    %c0_375 = arith.constant 0 : index
    %415 = vector.load %arg17[%c1_374, %c0_375] : memref<64x256xf32, #tpu.memory_space<vmem>>, vector<1x256xf32>
    %416 = arith.maximumf %414, %415 : vector<1x256xf32>
    %c8_376 = arith.constant 8 : index
    %c0_377 = arith.constant 0 : index
    %417 = vector.load %arg17[%c8_376, %c0_377] : memref<64x256xf32, #tpu.memory_space<vmem>>, vector<1x256xf32>
    %c9_378 = arith.constant 9 : index
    %c0_379 = arith.constant 0 : index
    %418 = vector.load %arg17[%c9_378, %c0_379] : memref<64x256xf32, #tpu.memory_space<vmem>>, vector<1x256xf32>
    %419 = arith.maximumf %417, %418 : vector<1x256xf32>
    %420 = arith.maximumf %416, %419 : vector<1x256xf32>
    %c0_380 = arith.constant 0 : index
    %c0_381 = arith.constant 0 : index
    %c0_382 = arith.constant 0 : index
    %421 = vector.load %arg10[%c0_380, %c0_381, %c0_382] : memref<2x1x256xf32, #tpu.memory_space<vmem>>, vector<1x1x256xf32>
    %422 = vector.shape_cast %421 : vector<1x1x256xf32> to vector<1x256xf32>
    %423 = vector.shape_cast %420 : vector<1x256xf32> to vector<1x1x256xf32>
    tpu.vector_store %arg10[%c0_380, %c0_381, %c0_382], %423 {strides = array<i32>} : memref<2x1x256xf32, #tpu.memory_space<vmem>>, vector<1x1x256xf32>,
    %c48_383 = arith.constant 48 : index
    %c0_384 = arith.constant 0 : index
    %424 = vector.load %arg17[%c48_383, %c0_384] : memref<64x256xf32, #tpu.memory_space<vmem>>, vector<1x256xf32>
    %c49_385 = arith.constant 49 : index
    %c0_386 = arith.constant 0 : index
    %425 = vector.load %arg17[%c49_385, %c0_386] : memref<64x256xf32, #tpu.memory_space<vmem>>, vector<1x256xf32>
    %426 = arith.maximumf %424, %425 : vector<1x256xf32>
    %c56_387 = arith.constant 56 : index
    %c0_388 = arith.constant 0 : index
    %427 = vector.load %arg17[%c56_387, %c0_388] : memref<64x256xf32, #tpu.memory_space<vmem>>, vector<1x256xf32>
    %c57 = arith.constant 57 : index
    %c0_389 = arith.constant 0 : index
    %428 = vector.load %arg17[%c57, %c0_389] : memref<64x256xf32, #tpu.memory_space<vmem>>, vector<1x256xf32>
    %429 = arith.maximumf %427, %428 : vector<1x256xf32>
    %430 = arith.maximumf %426, %429 : vector<1x256xf32>
    %c1_390 = arith.constant 1 : index
    %c0_391 = arith.constant 0 : index
    %c0_392 = arith.constant 0 : index
    %431 = vector.load %arg10[%c1_390, %c0_391, %c0_392] : memref<2x1x256xf32, #tpu.memory_space<vmem>>, vector<1x1x256xf32>
    %432 = vector.shape_cast %431 : vector<1x1x256xf32> to vector<1x256xf32>
    %433 = vector.shape_cast %430 : vector<1x256xf32> to vector<1x1x256xf32>
    tpu.vector_store %arg10[%c1_390, %c0_391, %c0_392], %433 {strides = array<i32>} : memref<2x1x256xf32, #tpu.memory_space<vmem>>, vector<1x1x256xf32>,
    return
  }
  func.func @transform_0(%arg0: i32) -> (i32, i32) {
    %c0_i32 = arith.constant 0 : i32
    %c0_i32_0 = arith.constant 0 : i32
    return %arg0, %c0_i32 : i32, i32
  }
  func.func @transform_1(%arg0: i32) -> (i32, i32) {
    %c0_i32 = arith.constant 0 : i32
    %c0_i32_0 = arith.constant 0 : i32
    %c0_i32_1 = arith.constant 0 : i32
    return %c0_i32, %c0_i32_0 : i32, i32
  }
  func.func @transform_2(%arg0: i32) -> (i32, i32) {
    %c0_i32 = arith.constant 0 : i32
    %c0_i32_0 = arith.constant 0 : i32
    %c0_i32_1 = arith.constant 0 : i32
    return %c0_i32, %c0_i32_0 : i32, i32
  }
  func.func @transform_3(%arg0: i32) -> (i32, i32, i32) {
    %c0_i32 = arith.constant 0 : i32
    %c0_i32_0 = arith.constant 0 : i32
    %c0_i32_1 = arith.constant 0 : i32
    %c0_i32_2 = arith.constant 0 : i32
    return %c0_i32, %c0_i32_0, %c0_i32_1 : i32, i32, i32
  }
  func.func @transform_4(%arg0: i32) -> (i32, i32) {
    %c0_i32 = arith.constant 0 : i32
    %c0_i32_0 = arith.constant 0 : i32
    %c0_i32_1 = arith.constant 0 : i32
    return %c0_i32, %c0_i32_0 : i32, i32
  }
  func.func @transform_5(%arg0: i32) -> (i32, i32, i32) {
    %c0_i32 = arith.constant 0 : i32
    %c0_i32_0 = arith.constant 0 : i32
    %c0_i32_1 = arith.constant 0 : i32
    %c0_i32_2 = arith.constant 0 : i32
    return %c0_i32, %c0_i32_0, %c0_i32_1 : i32, i32, i32
  }
  func.func @transform_6(%arg0: i32) -> (i32, i32) {
    %c0_i32 = arith.constant 0 : i32
    %c0_i32_0 = arith.constant 0 : i32
    %c0_i32_1 = arith.constant 0 : i32
    return %c0_i32, %c0_i32_0 : i32, i32
  }
  func.func @transform_7(%arg0: i32) -> (i32, i32, i32) {
    %c0_i32 = arith.constant 0 : i32
    %c0_i32_0 = arith.constant 0 : i32
    %c0_i32_1 = arith.constant 0 : i32
    %c0_i32_2 = arith.constant 0 : i32
    return %c0_i32, %c0_i32_0, %c0_i32_1 : i32, i32, i32
  }
  func.func @transform_8(%arg0: i32) -> (i32, i32) {
    %c0_i32 = arith.constant 0 : i32
    %c0_i32_0 = arith.constant 0 : i32
    %c0_i32_1 = arith.constant 0 : i32
    return %c0_i32, %c0_i32_0 : i32, i32
  }
  func.func @transform_9(%arg0: i32) -> (i32, i32, i32) {
    %c0_i32 = arith.constant 0 : i32
    %c0_i32_0 = arith.constant 0 : i32
    %c0_i32_1 = arith.constant 0 : i32
    return %arg0, %c0_i32, %c0_i32_0 : i32, i32, i32
  }
}

</mosaic_0001>

<llo_original>
// kernel: tpu_custom_call.1
$region0: #{tpu_custom_call.1}
  #allocation0 [shape = 'u32[]', space=smem, size = 0x4, offset = 0x4, fixed_abs, tag = 'smem constant byte address 0x4 - core index']
  #allocation1 [shape = 'u32[144,128]{1,0:T(1,128)}', space=vmem, size = 0x12000, scoped, tag = 'internal scratch']
  #allocation2 [shape = 'f32[512,32]{1,0:T(8,128)}', space=vmem, size = 0x40000, scoped, tag = 'scratch operand']
  #allocation3 [shape = 'bf16[352,32]{1,0:T(8,128)(2,1)}', space=vmem, size = 0x16000, scoped, tag = 'scratch operand']
  #allocation4 [shape = 'f32[304,64]{1,0:T(8,128)}', space=vmem, size = 0x26000, scoped, tag = 'scratch operand']
  #allocation5 [shape = 'bf16[128,64]{1,0:T(8,128)(2,1)}', space=vmem, size = 0x8000, scoped, tag = 'scratch operand']
  #allocation6 [shape = 'f32[96,128]{1,0:T(8,128)}', space=vmem, size = 0xc000, scoped, tag = 'scratch operand']
  #allocation7 [shape = 'bf16[96,128]{1,0:T(8,128)(2,1)}', space=vmem, size = 0x6000, scoped, tag = 'scratch operand']
  #allocation8 [shape = 'f32[64,256]{1,0:T(8,128)}', space=vmem, size = 0x10000, scoped, tag = 'scratch operand']
  %s0 = inlined_call_operand.vmem [shape: bf16[512,32], index: 0, kind: input, shape index: {}]
  %s1 = inlined_call_operand.vmem [shape: bf16[32,32], index: 1, kind: input, shape index: {}]
  %s2 = inlined_call_operand.vmem [shape: f32[1,32], index: 2, kind: input, shape index: {}]
  %s3 = inlined_call_operand.hbm [shape: bf16[9,32,64], index: 3, kind: input, shape index: {}]
  %s4 = inlined_call_operand.vmem [shape: f32[1,64], index: 4, kind: input, shape index: {}]
  %s5 = inlined_call_operand.vmem [shape: bf16[9,64,128], index: 5, kind: input, shape index: {}]
  %s6 = inlined_call_operand.vmem [shape: f32[1,128], index: 6, kind: input, shape index: {}]
  %s7 = inlined_call_operand.hbm [shape: bf16[9,128,256], index: 7, kind: input, shape index: {}]
  %s8 = inlined_call_operand.vmem [shape: f32[1,256], index: 8, kind: input, shape index: {}]
  %s9 = inlined_call_operand.hbm [shape: f32[2,1,256], index: 9, kind: output, shape index: {}]
  %s10 = sld [smem:[#allocation0]]
  $region58: #{tpu_custom_call.1} parent=0
    _
  %s12 = ssub.s32 1, %s10
  %s13 = scalar_select 0, %s12, %s10
  $region1: #{tpu_custom_call.1} parent=0
    #allocation9 [shape = 'u8[73728]{0}', space=vmem, size = 0x12000, scoped, tag = 'input window, operand 3, single buffered']
    #allocation10 [shape = 's32[1]{0}', space=sflag, size = 0x4, scoped, tag = 'scoped memory for tpu_custom_call.1']
    #allocation11 [shape = 's32[1]{0}', space=sflag, size = 0x4, scoped, tag = 'scoped memory for tpu_custom_call.1']
    #allocation12 [shape = 'u8[589824]{0}', space=vmem, size = 0x90000, scoped, tag = 'input window, operand 7, single buffered']
    #allocation13 [shape = 's32[1]{0}', space=sflag, size = 0x4, scoped, tag = 'scoped memory for tpu_custom_call.1']
    #allocation14 [shape = 'u8[2048]{0}', space=vmem, size = 0x800, scoped, tag = 'output window, operand 0, single buffered']
    %14 = vsyncpa [#allocation10], 0
    %15 = vsyncpa [#allocation13], 0
    %16 = vsyncpa [#allocation11], 0
    // Predicated region
    $region2: #{tpu_custom_call.1} parent=1 // pred_check
      _
    $region3: #{tpu_custom_call.1} parent=1 // pred_check_branch
      %18 = sbr.rel (0) target = $region5
    $region4: #{tpu_custom_call.1} parent=1 // pred_region
      _
    $region5: #{tpu_custom_call.1} parent=1 // pred_fallthru
      _
    // Predicated region
    $region6: #{tpu_custom_call.1} parent=1 // pred_check
      _
    $region7: #{tpu_custom_call.1} parent=1 // pred_check_branch
      %20 = sbr.rel (0) target = $region9
    $region8: #{tpu_custom_call.1} parent=1 // pred_region
      _
    $region9: #{tpu_custom_call.1} parent=1 // pred_fallthru
      _
    // Predicated region
    $region10: #{tpu_custom_call.1} parent=1 // pred_check
      _
    $region11: #{tpu_custom_call.1} parent=1 // pred_check_branch
      %22 = sbr.rel (0) target = $region13
    $region12: #{tpu_custom_call.1} parent=1 // pred_region
      _
    $region13: #{tpu_custom_call.1} parent=1 // pred_fallthru
      _
    // Predicated region
    $region14: #{tpu_custom_call.1} parent=1 // pred_check
      _
    $region15: #{tpu_custom_call.1} parent=1 // pred_check_branch
      %24 = sbr.rel (0) target = $region17
    $region16: #{tpu_custom_call.1} parent=1 // pred_region
      %s26 = ssub.s32 2304, 2304
      %27 = vsyncadd [#allocation10], %s26
      %s28 = sshll.u32 [#allocation9], 4
      %s29 = int_to_ptr.vmem [resolvable:$true] %s28
      %34 = dma.hbm_to_vmem [thread:$0]  %s3, 2304, %s29, [#allocation10], 64, 64, 4
    $region17: #{tpu_custom_call.1} parent=1 // pred_fallthru
      _
    // Predicated region
    $region18: #{tpu_custom_call.1} parent=1 // pred_check
      _
    $region19: #{tpu_custom_call.1} parent=1 // pred_check_branch
      %36 = sbr.rel (0) target = $region21
    $region20: #{tpu_custom_call.1} parent=1 // pred_region
      _
    $region21: #{tpu_custom_call.1} parent=1 // pred_fallthru
      _
    // Predicated region
    $region22: #{tpu_custom_call.1} parent=1 // pred_check
      _
    $region23: #{tpu_custom_call.1} parent=1 // pred_check_branch
      %38 = sbr.rel (0) target = $region25
    $region24: #{tpu_custom_call.1} parent=1 // pred_region
      _
    $region25: #{tpu_custom_call.1} parent=1 // pred_fallthru
      _
    // Predicated region
    $region26: #{tpu_custom_call.1} parent=1 // pred_check
      _
    $region27: #{tpu_custom_call.1} parent=1 // pred_check_branch
      %40 = sbr.rel (0) target = $region29
    $region28: #{tpu_custom_call.1} parent=1 // pred_region
      _
    $region29: #{tpu_custom_call.1} parent=1 // pred_fallthru
      _
    // Predicated region
    $region30: #{tpu_custom_call.1} parent=1 // pred_check
      _
    $region31: #{tpu_custom_call.1} parent=1 // pred_check_branch
      %42 = sbr.rel (0) target = $region33
    $region32: #{tpu_custom_call.1} parent=1 // pred_region
      %s44 = ssub.s32 18432, 18432
      %45 = vsyncadd [#allocation13], %s44
      %s46 = sshll.u32 [#allocation12], 4
      %s47 = int_to_ptr.vmem [resolvable:$true] %s46
      %52 = dma.hbm_to_vmem [thread:$0]  %s7, 18432, %s47, [#allocation13], 128, 128, 8
    $region33: #{tpu_custom_call.1} parent=1 // pred_fallthru
      _
    // Predicated region
    $region34: #{tpu_custom_call.1} parent=1 // pred_check
      _
    $region35: #{tpu_custom_call.1} parent=1 // pred_check_branch
      %54 = sbr.rel (0) target = $region37
    $region36: #{tpu_custom_call.1} parent=1 // pred_region
      _
    $region37: #{tpu_custom_call.1} parent=1 // pred_fallthru
      _
    // Predicated region
    $region38: #{tpu_custom_call.1} parent=1 // pred_check
      _
    $region39: #{tpu_custom_call.1} parent=1 // pred_check_branch
      %56 = sbr.rel (0) target = $region41
    $region40: #{tpu_custom_call.1} parent=1 // pred_region
      %57 = dma.done [#allocation10], 2304
    $region41: #{tpu_custom_call.1} parent=1 // pred_fallthru
      _
    // Predicated region
    $region42: #{tpu_custom_call.1} parent=1 // pred_check
      _
    $region43: #{tpu_custom_call.1} parent=1 // pred_check_branch
      %59 = sbr.rel (0) target = $region45
    $region44: #{tpu_custom_call.1} parent=1 // pred_region
      %60 = dma.done [#allocation13], 18432
    $region45: #{tpu_custom_call.1} parent=1 // pred_fallthru
      _
    %p62 = scmp.eq.s32.totalorder 0, 0
    // Predicated region
    $region46: #{tpu_custom_call.1} parent=1 // pred_check
      %p63 = pneg %p62
    $region47: #{tpu_custom_call.1} parent=1 // pred_check_branch
      %65 = sbr.rel (%p63) target = $region49
    $region48: #{tpu_custom_call.1} parent=1 // pred_region
      %vm66 = vcmask 257024
      %67 = vst.msk [vmem:[#allocation3] sm:$0xf] %vm66, 0
      %68 = vst.msk [vmem:[#allocation3 + $0x4] sm:$0xf] %vm66, 0
      %69 = vst.msk [vmem:[#allocation3 + $0x8] sm:$0xf] %vm66, 0
      %70 = vst.msk [vmem:[#allocation3 + $0xc] sm:$0xf] %vm66, 0
      %71 = vst.msk [vmem:[#allocation3 + $0x10] sm:$0xf] %vm66, 0
      %72 = vst.msk [vmem:[#allocation3 + $0x14] sm:$0xf] %vm66, 0
      %73 = vst.msk [vmem:[#allocation3 + $0x18] sm:$0xf] %vm66, 0
      %74 = vst.msk [vmem:[#allocation3 + $0x1c] sm:$0xf] %vm66, 0
      %75 = vst.msk [vmem:[#allocation3 + $0x20] sm:$0xf] %vm66, 0
      %76 = vst.msk [vmem:[#allocation3 + $0x24] sm:$0xf] %vm66, 0
      %77 = vst.msk [vmem:[#allocation3 + $0x28] sm:$0xf] %vm66, 0
      %78 = vst.msk [vmem:[#allocation3 + $0x2c] sm:$0xf] %vm66, 0
      %79 = vst.msk [vmem:[#allocation3 + $0x30] sm:$0xf] %vm66, 0
      %80 = vst.msk [vmem:[#allocation3 + $0x34] sm:$0xf] %vm66, 0
      %81 = vst.msk [vmem:[#allocation3 + $0x38] sm:$0xf] %vm66, 0
      %82 = vst.msk [vmem:[#allocation3 + $0x3c] sm:$0xf] %vm66, 0
      %83 = vst.msk [vmem:[#allocation3 + $0x40] sm:$0xf] %vm66, 0
      %84 = vst.msk [vmem:[#allocation3 + $0x44] sm:$0xf] %vm66, 0
      %85 = vst.msk [vmem:[#allocation3 + $0x48] sm:$0xf] %vm66, 0
      %86 = vst.msk [vmem:[#allocation3 + $0x4c] sm:$0xf] %vm66, 0
      %87 = vst.msk [vmem:[#allocation3 + $0x50] sm:$0xf] %vm66, 0
      %88 = vst.msk [vmem:[#allocation3 + $0x54] sm:$0xf] %vm66, 0
      %89 = vst.msk [vmem:[#allocation3 + $0x58] sm:$0xf] %vm66, 0
      %90 = vst.msk [vmem:[#allocation3 + $0x5c] sm:$0xf] %vm66, 0
      %91 = vst.msk [vmem:[#allocation3 + $0x60] sm:$0xf] %vm66, 0
      %92 = vst.msk [vmem:[#allocation3 + $0x64] sm:$0xf] %vm66, 0
      %93 = vst.msk [vmem:[#allocation3 + $0x68] sm:$0xf] %vm66, 0
      %94 = vst.msk [vmem:[#allocation3 + $0x6c] sm:$0xf] %vm66, 0
      %95 = vst.msk [vmem:[#allocation3 + $0x70] sm:$0xf] %vm66, 0
      %96 = vst.msk [vmem:[#allocation3 + $0x74] sm:$0xf] %vm66, 0
      %97 = vst.msk [vmem:[#allocation3 + $0x78] sm:$0xf] %vm66, 0
      %98 = vst.msk [vmem:[#allocation3 + $0x7c] sm:$0xf] %vm66, 0
      %99 = vst.msk [vmem:[#allocation3 + $0x80] sm:$0xf] %vm66, 0
      %100 = vst.msk [vmem:[#allocation3 + $0x84] sm:$0xf] %vm66, 0
      %101 = vst.msk [vmem:[#allocation3 + $0x88] sm:$0xf] %vm66, 0
      %102 = vst.msk [vmem:[#allocation3 + $0x8c] sm:$0xf] %vm66, 0
      %103 = vst.msk [vmem:[#allocation3 + $0x90] sm:$0xf] %vm66, 0
      %104 = vst.msk [vmem:[#allocation3 + $0x94] sm:$0xf] %vm66, 0
      %105 = vst.msk [vmem:[#allocation3 + $0x98] sm:$0xf] %vm66, 0
      %106 = vst.msk [vmem:[#allocation3 + $0x9c] sm:$0xf] %vm66, 0
      %107 = vst.msk [vmem:[#allocation3 + $0xa0] sm:$0xf] %vm66, 0
      %108 = vst.msk [vmem:[#allocation3 + $0xa4] sm:$0xf] %vm66, 0
      %109 = vst.msk [vmem:[#allocation3 + $0xa8] sm:$0xf] %vm66, 0
      %110 = vst.msk [vmem:[#allocation3 + $0xac] sm:$0xf] %vm66, 0
      %vm111 = vcmask 519168
      %112 = vst.msk [vmem:[#allocation5] sm:$0xf] %vm111, 0
      %113 = vst.msk [vmem:[#allocation5 + $0x4] sm:$0xf] %vm111, 0
      %114 = vst.msk [vmem:[#allocation5 + $0x8] sm:$0xf] %vm111, 0
      %115 = vst.msk [vmem:[#allocation5 + $0xc] sm:$0xf] %vm111, 0
      %116 = vst.msk [vmem:[#allocation5 + $0x10] sm:$0xf] %vm111, 0
      %117 = vst.msk [vmem:[#allocation5 + $0x14] sm:$0xf] %vm111, 0
      %118 = vst.msk [vmem:[#allocation5 + $0x18] sm:$0xf] %vm111, 0
      %119 = vst.msk [vmem:[#allocation5 + $0x1c] sm:$0xf] %vm111, 0
      %120 = vst.msk [vmem:[#allocation5 + $0x20] sm:$0xf] %vm111, 0
      %121 = vst.msk [vmem:[#allocation5 + $0x24] sm:$0xf] %vm111, 0
      %122 = vst.msk [vmem:[#allocation5 + $0x28] sm:$0xf] %vm111, 0
      %123 = vst.msk [vmem:[#allocation5 + $0x2c] sm:$0xf] %vm111, 0
      %124 = vst.msk [vmem:[#allocation5 + $0x30] sm:$0xf] %vm111, 0
      %125 = vst.msk [vmem:[#allocation5 + $0x34] sm:$0xf] %vm111, 0
      %126 = vst.msk [vmem:[#allocation5 + $0x38] sm:$0xf] %vm111, 0
      %127 = vst.msk [vmem:[#allocation5 + $0x3c] sm:$0xf] %vm111, 0
      %128 = vst [vmem:[#allocation7] sm:$0xf] 0
      %129 = vst [vmem:[#allocation7 + $0x4] sm:$0xf] 0
      %130 = vst [vmem:[#allocation7 + $0x8] sm:$0xf] 0
      %131 = vst [vmem:[#allocation7 + $0xc] sm:$0xf] 0
      %132 = vst [vmem:[#allocation7 + $0x10] sm:$0xf] 0
      %133 = vst [vmem:[#allocation7 + $0x14] sm:$0xf] 0
      %134 = vst [vmem:[#allocation7 + $0x18] sm:$0xf] 0
      %135 = vst [vmem:[#allocation7 + $0x1c] sm:$0xf] 0
      %136 = vst [vmem:[#allocation7 + $0x20] sm:$0xf] 0
      %137 = vst [vmem:[#allocation7 + $0x24] sm:$0xf] 0
      %138 = vst [vmem:[#allocation7 + $0x28] sm:$0xf] 0
      %139 = vst [vmem:[#allocation7 + $0x2c] sm:$0xf] 0
    $region49: #{tpu_custom_call.1} parent=1 // pred_fallthru
      _
    %v140 = vld [vmem:[%s0] sm:$0xf]
    %v141 = vld [vmem:[%s0 + $0x4] sm:$0xf]
    %v142 = vld [vmem:[%s0 + $0x8] sm:$0xf]
    %v143 = vld [vmem:[%s0 + $0xc] sm:$0xf]
    %v144 = vld [vmem:[%s0 + $0x10] sm:$0xf]
    %v145 = vld [vmem:[%s0 + $0x14] sm:$0xf]
    %v146 = vld [vmem:[%s0 + $0x18] sm:$0xf]
    %v147 = vld [vmem:[%s0 + $0x1c] sm:$0xf]
    %v148 = vld [vmem:[%s0 + $0x20] sm:$0xf]
    %v149 = vld [vmem:[%s0 + $0x24] sm:$0xf]
    %v150 = vld [vmem:[%s0 + $0x28] sm:$0xf]
    %v151 = vld [vmem:[%s0 + $0x2c] sm:$0xf]
    %v152 = vld [vmem:[%s0 + $0x30] sm:$0xf]
    %v153 = vld [vmem:[%s0 + $0x34] sm:$0xf]
    %v154 = vld [vmem:[%s0 + $0x38] sm:$0xf]
    %v155 = vld [vmem:[%s0 + $0x3c] sm:$0xf]
    %v156 = vld [vmem:[%s0 + $0x40] sm:$0xf]
    %v157 = vld [vmem:[%s0 + $0x44] sm:$0xf]
    %v158 = vld [vmem:[%s0 + $0x48] sm:$0xf]
    %v159 = vld [vmem:[%s0 + $0x4c] sm:$0xf]
    %v160 = vld [vmem:[%s0 + $0x50] sm:$0xf]
    %v161 = vld [vmem:[%s0 + $0x54] sm:$0xf]
    %v162 = vld [vmem:[%s0 + $0x58] sm:$0xf]
    %v163 = vld [vmem:[%s0 + $0x5c] sm:$0xf]
    %v164 = vld [vmem:[%s0 + $0x60] sm:$0xf]
    %v165 = vld [vmem:[%s0 + $0x64] sm:$0xf]
    %v166 = vld [vmem:[%s0 + $0x68] sm:$0xf]
    %v167 = vld [vmem:[%s0 + $0x6c] sm:$0xf]
    %v168 = vld [vmem:[%s0 + $0x70] sm:$0xf]
    %v169 = vld [vmem:[%s0 + $0x74] sm:$0xf]
    %v170 = vld [vmem:[%s0 + $0x78] sm:$0xf]
    %v171 = vld [vmem:[%s0 + $0x7c] sm:$0xf]
    %v172 = vld [vmem:[%s0 + $0x80] sm:$0xf]
    %v173 = vld [vmem:[%s0 + $0x84] sm:$0xf]
    %v174 = vld [vmem:[%s0 + $0x88] sm:$0xf]
    %v175 = vld [vmem:[%s0 + $0x8c] sm:$0xf]
    %v176 = vld [vmem:[%s0 + $0x90] sm:$0xf]
    %v177 = vld [vmem:[%s0 + $0x94] sm:$0xf]
    %v178 = vld [vmem:[%s0 + $0x98] sm:$0xf]
    %v179 = vld [vmem:[%s0 + $0x9c] sm:$0xf]
    %v180 = vld [vmem:[%s0 + $0xa0] sm:$0xf]
    %v181 = vld [vmem:[%s0 + $0xa4] sm:$0xf]
    %v182 = vld [vmem:[%s0 + $0xa8] sm:$0xf]
    %v183 = vld [vmem:[%s0 + $0xac] sm:$0xf]
    %v184 = vld [vmem:[%s0 + $0xb0] sm:$0xf]
    %v185 = vld [vmem:[%s0 + $0xb4] sm:$0xf]
    %v186 = vld [vmem:[%s0 + $0xb8] sm:$0xf]
    %v187 = vld [vmem:[%s0 + $0xbc] sm:$0xf]
    %v188 = vld [vmem:[%s0 + $0xc0] sm:$0xf]
    %v189 = vld [vmem:[%s0 + $0xc4] sm:$0xf]
    %v190 = vld [vmem:[%s0 + $0xc8] sm:$0xf]
    %v191 = vld [vmem:[%s0 + $0xcc] sm:$0xf]
    %v192 = vld [vmem:[%s0 + $0xd0] sm:$0xf]
    %v193 = vld [vmem:[%s0 + $0xd4] sm:$0xf]
    %v194 = vld [vmem:[%s0 + $0xd8] sm:$0xf]
    %v195 = vld [vmem:[%s0 + $0xdc] sm:$0xf]
    %v196 = vld [vmem:[%s0 + $0xe0] sm:$0xf]
    %v197 = vld [vmem:[%s0 + $0xe4] sm:$0xf]
    %v198 = vld [vmem:[%s0 + $0xe8] sm:$0xf]
    %v199 = vld [vmem:[%s0 + $0xec] sm:$0xf]
    %v200 = vld [vmem:[%s0 + $0xf0] sm:$0xf]
    %v201 = vld [vmem:[%s0 + $0xf4] sm:$0xf]
    %v202 = vld [vmem:[%s0 + $0xf8] sm:$0xf]
    %v203 = vld [vmem:[%s0 + $0xfc] sm:$0xf]
    %v204 = vld [vmem:[%s1] sm:$0xf]
    %v205 = vld [vmem:[%s1 + $0x4] sm:$0xf]
    %v206 = vld [vmem:[%s1 + $0x8] sm:$0xf]
    %v207 = vld [vmem:[%s1 + $0xc] sm:$0xf]
    %v208 = vld [vmem:[%s2] sm:$0x1]
    %v210 = vlaneseq
    %v211 = vshrl.u32 %v210, 7
    %v212 = vsub.s32 0, %v211
    %v213 = vrot.slane %v208, %v212
    %v279 = vunpack.c.l.b16 %v140
    %v280 = vunpack.c.l.b16 %v141
    %v281 = vunpack.c.l.b16 %v142
    %v282 = vunpack.c.l.b16 %v143
    %v283 = vunpack.c.l.b16 %v144
    %v284 = vunpack.c.l.b16 %v145
    %v285 = vunpack.c.l.b16 %v146
    %v286 = vunpack.c.l.b16 %v147
    %v287 = vunpack.c.l.b16 %v148
    %v288 = vunpack.c.l.b16 %v149
    %v289 = vunpack.c.l.b16 %v150
    %v290 = vunpack.c.l.b16 %v151
    %v291 = vunpack.c.l.b16 %v152
    %v292 = vunpack.c.l.b16 %v153
    %v293 = vunpack.c.l.b16 %v154
    %v294 = vunpack.c.l.b16 %v155
    %v295 = vunpack.c.l.b16 %v156
    %v296 = vunpack.c.l.b16 %v157
    %v297 = vunpack.c.l.b16 %v158
    %v298 = vunpack.c.l.b16 %v159
    %v299 = vunpack.c.l.b16 %v160
    %v300 = vunpack.c.l.b16 %v161
    %v301 = vunpack.c.l.b16 %v162
    %v302 = vunpack.c.l.b16 %v163
    %v303 = vunpack.c.l.b16 %v164
    %v304 = vunpack.c.l.b16 %v165
    %v305 = vunpack.c.l.b16 %v166
    %v306 = vunpack.c.l.b16 %v167
    %v307 = vunpack.c.l.b16 %v168
    %v308 = vunpack.c.l.b16 %v169
    %v309 = vunpack.c.l.b16 %v170
    %v310 = vunpack.c.l.b16 %v171
    %v311 = vunpack.c.l.b16 %v172
    %v312 = vunpack.c.l.b16 %v173
    %v313 = vunpack.c.l.b16 %v174
    %v314 = vunpack.c.l.b16 %v175
    %v315 = vunpack.c.l.b16 %v176
    %v316 = vunpack.c.l.b16 %v177
    %v317 = vunpack.c.l.b16 %v178
    %v318 = vunpack.c.l.b16 %v179
    %v319 = vunpack.c.l.b16 %v180
    %v320 = vunpack.c.l.b16 %v181
    %v321 = vunpack.c.l.b16 %v182
    %v322 = vunpack.c.l.b16 %v183
    %v323 = vunpack.c.l.b16 %v184
    %v324 = vunpack.c.l.b16 %v185
    %v325 = vunpack.c.l.b16 %v186
    %v326 = vunpack.c.l.b16 %v187
    %v327 = vunpack.c.l.b16 %v188
    %v328 = vunpack.c.l.b16 %v189
    %v329 = vunpack.c.l.b16 %v190
    %v330 = vunpack.c.l.b16 %v191
    %v331 = vunpack.c.l.b16 %v192
    %v332 = vunpack.c.l.b16 %v193
    %v333 = vunpack.c.l.b16 %v194
    %v334 = vunpack.c.l.b16 %v195
    %v335 = vunpack.c.l.b16 %v196
    %v336 = vunpack.c.l.b16 %v197
    %v337 = vunpack.c.l.b16 %v198
    %v338 = vunpack.c.l.b16 %v199
    %v339 = vunpack.c.l.b16 %v200
    %v340 = vunpack.c.l.b16 %v201
    %v341 = vunpack.c.l.b16 %v202
    %v342 = vunpack.c.l.b16 %v203
    %v343 = vpack.c.b16 %v280, %v279
    %v344 = vpack.c.b16 %v282, %v281
    %v345 = vpack.c.b16 %v284, %v283
    %v346 = vpack.c.b16 %v286, %v285
    %v347 = vpack.c.b16 %v288, %v287
    %v348 = vpack.c.b16 %v290, %v289
    %v349 = vpack.c.b16 %v292, %v291
    %v350 = vpack.c.b16 %v294, %v293
    %v351 = vpack.c.b16 %v296, %v295
    %v352 = vpack.c.b16 %v298, %v297
    %v353 = vpack.c.b16 %v300, %v299
    %v354 = vpack.c.b16 %v302, %v301
    %v355 = vpack.c.b16 %v304, %v303
    %v356 = vpack.c.b16 %v306, %v305
    %v357 = vpack.c.b16 %v308, %v307
    %v358 = vpack.c.b16 %v310, %v309
    %v359 = vpack.c.b16 %v312, %v311
    %v360 = vpack.c.b16 %v314, %v313
    %v361 = vpack.c.b16 %v316, %v315
    %v362 = vpack.c.b16 %v318, %v317
    %v363 = vpack.c.b16 %v320, %v319
    %v364 = vpack.c.b16 %v322, %v321
    %v365 = vpack.c.b16 %v324, %v323
    %v366 = vpack.c.b16 %v326, %v325
    %v367 = vpack.c.b16 %v328, %v327
    %v368 = vpack.c.b16 %v330, %v329
    %v369 = vpack.c.b16 %v332, %v331
    %v370 = vpack.c.b16 %v334, %v333
    %v371 = vpack.c.b16 %v336, %v335
    %v372 = vpack.c.b16 %v338, %v337
    %v373 = vpack.c.b16 %v340, %v339
    %v374 = vpack.c.b16 %v342, %v341
    %v379 = vunpack.c.l.b16 %v204
    %v380 = vunpack.c.l.b16 %v205
    %v381 = vunpack.c.l.b16 %v206
    %v382 = vunpack.c.l.b16 %v207
    %v383 = vpack.c.b16 %v380, %v379
    %v384 = vpack.c.b16 %v382, %v381
    %vm387 = vcmask 261120
    %v389 = vsel %vm387, %v343, 0
    %v392 = vsel %vm387, %v344, 0
    %v395 = vsel %vm387, %v345, 0
    %v398 = vsel %vm387, %v346, 0
    %v401 = vsel %vm387, %v347, 0
    %v404 = vsel %vm387, %v348, 0
    %v407 = vsel %vm387, %v349, 0
    %v410 = vsel %vm387, %v350, 0
    %v413 = vsel %vm387, %v351, 0
    %v416 = vsel %vm387, %v352, 0
    %v419 = vsel %vm387, %v353, 0
    %v422 = vsel %vm387, %v354, 0
    %v425 = vsel %vm387, %v355, 0
    %v428 = vsel %vm387, %v356, 0
    %v431 = vsel %vm387, %v357, 0
    %v434 = vsel %vm387, %v358, 0
    %v437 = vsel %vm387, %v359, 0
    %v440 = vsel %vm387, %v360, 0
    %v443 = vsel %vm387, %v361, 0
    %v446 = vsel %vm387, %v362, 0
    %v449 = vsel %vm387, %v363, 0
    %v452 = vsel %vm387, %v364, 0
    %v455 = vsel %vm387, %v365, 0
    %v458 = vsel %vm387, %v366, 0
    %v461 = vsel %vm387, %v367, 0
    %v464 = vsel %vm387, %v368, 0
    %v467 = vsel %vm387, %v369, 0
    %v470 = vsel %vm387, %v370, 0
    %v473 = vsel %vm387, %v371, 0
    %v476 = vsel %vm387, %v372, 0
    %v479 = vsel %vm387, %v373, 0
    %v482 = vsel %vm387, %v374, 0
    %484 = vmatprep.subr.bf16.mxu0 0
    %485 = vmatpush1.bf16.msra.mxu0 0
    %486 = vmatprep.subr.bf16.mxu0 0
    %487 = vmatpush1.bf16.msra.mxu0 0
    %488 = vmatprep.subr.bf16.mxu0 0
    %489 = vmatpush1.bf16.msra.mxu0 0
    %490 = vmatprep.subr.bf16.mxu0 0
    %491 = vmatpush1.bf16.msra.mxu0 0
    %492 = vmatprep.subr.bf16.mxu0 0
    %493 = vmatpush1.bf16.msra.mxu0 0
    %494 = vmatprep.subr.bf16.mxu0 0
    %495 = vmatpush1.bf16.msra.mxu0 0
    %496 = vmatprep.subr.bf16.mxu0 0
    %497 = vmatpush1.bf16.msra.mxu0 %v384
    %498 = vmatprep.subr.bf16.mxu0 0
    %499 = vmatpush1.bf16.msra.mxu0 %v383
    %500 = vmatprep.subr.bf16.mxu0 0
    %501 = vmatpush2.bf16.msra.mxu0 0
    %502 = vmatprep.subr.bf16.mxu0 0
    %503 = vmatpush2.bf16.msra.mxu0 0
    %504 = vmatprep.subr.bf16.mxu0 0
    %505 = vmatpush2.bf16.msra.mxu0 0
    %506 = vmatprep.subr.bf16.mxu0 0
    %507 = vmatpush2.bf16.msra.mxu0 0
    %508 = vmatprep.subr.bf16.mxu0 0
    %509 = vmatpush2.bf16.msra.mxu0 0
    %510 = vmatprep.subr.bf16.mxu0 0
    %511 = vmatpush2.bf16.msra.mxu0 0
    %512 = vmatprep.subr.bf16.mxu0 0
    %513 = vmatpush2.bf16.msra.mxu0 0
    %514 = vmatprep.subr.bf16.mxu0 0
    %515 = vmatpush2.bf16.msra.mxu0 0
    %516 = vmatprep.mubr.bf16.mxu0 0
    %517 = vmatmul.mubr.bf16.gmra.mxu0 %v389
    %v518 = vpop.f32.mrf.mxu0
    %v519 = vadd.f32 %v213, %v518
    %v520 = vpop.f32.mrf.mxu0
    %v521 = vpop.f32.mrf.mxu0
    %v522 = vadd.f32 %v213, %v521
    %v523 = vpop.f32.mrf.mxu0
    %524 = vmatprep.mubr.bf16.mxu0 0
    %525 = vmatmul.mubr.bf16.gmra.mxu0 %v392
    %v526 = vpop.f32.mrf.mxu0
    %v527 = vadd.f32 %v213, %v526
    %v528 = vpop.f32.mrf.mxu0
    %v529 = vpop.f32.mrf.mxu0
    %v530 = vadd.f32 %v213, %v529
    %v531 = vpop.f32.mrf.mxu0
    %532 = vmatprep.mubr.bf16.mxu0 0
    %533 = vmatmul.mubr.bf16.gmra.mxu0 %v395
    %v534 = vpop.f32.mrf.mxu0
    %v535 = vadd.f32 %v213, %v534
    %v536 = vpop.f32.mrf.mxu0
    %v537 = vpop.f32.mrf.mxu0
    %v538 = vadd.f32 %v213, %v537
    %v539 = vpop.f32.mrf.mxu0
    %540 = vmatprep.mubr.bf16.mxu0 0
    %541 = vmatmul.mubr.bf16.gmra.mxu0 %v398
    %v542 = vpop.f32.mrf.mxu0
    %v543 = vadd.f32 %v213, %v542
    %v544 = vpop.f32.mrf.mxu0
    %v545 = vpop.f32.mrf.mxu0
    %v546 = vadd.f32 %v213, %v545
    %v547 = vpop.f32.mrf.mxu0
    %548 = vmatprep.mubr.bf16.mxu0 0
    %549 = vmatmul.mubr.bf16.gmra.mxu0 %v401
    %v550 = vpop.f32.mrf.mxu0
    %v551 = vadd.f32 %v213, %v550
    %v552 = vpop.f32.mrf.mxu0
    %v553 = vpop.f32.mrf.mxu0
    %v554 = vadd.f32 %v213, %v553
    %v555 = vpop.f32.mrf.mxu0
    %556 = vmatprep.mubr.bf16.mxu0 0
    %557 = vmatmul.mubr.bf16.gmra.mxu0 %v404
    %v558 = vpop.f32.mrf.mxu0
    %v559 = vadd.f32 %v213, %v558
    %v560 = vpop.f32.mrf.mxu0
    %v561 = vpop.f32.mrf.mxu0
    %v562 = vadd.f32 %v213, %v561
    %v563 = vpop.f32.mrf.mxu0
    %564 = vmatprep.mubr.bf16.mxu0 0
    %565 = vmatmul.mubr.bf16.gmra.mxu0 %v407
    %v566 = vpop.f32.mrf.mxu0
    %v567 = vadd.f32 %v213, %v566
    %v568 = vpop.f32.mrf.mxu0
    %v569 = vpop.f32.mrf.mxu0
    %v570 = vadd.f32 %v213, %v569
    %v571 = vpop.f32.mrf.mxu0
    %572 = vmatprep.mubr.bf16.mxu0 0
    %573 = vmatmul.mubr.bf16.gmra.mxu0 %v410
    %v574 = vpop.f32.mrf.mxu0
    %v575 = vadd.f32 %v213, %v574
    %v576 = vpop.f32.mrf.mxu0
    %v577 = vpop.f32.mrf.mxu0
    %v578 = vadd.f32 %v213, %v577
    %v579 = vpop.f32.mrf.mxu0
    %580 = vmatprep.mubr.bf16.mxu0 0
    %581 = vmatmul.mubr.bf16.gmra.mxu0 %v413
    %v582 = vpop.f32.mrf.mxu0
    %v583 = vadd.f32 %v213, %v582
    %v584 = vpop.f32.mrf.mxu0
    %v585 = vpop.f32.mrf.mxu0
    %v586 = vadd.f32 %v213, %v585
    %v587 = vpop.f32.mrf.mxu0
    %588 = vmatprep.mubr.bf16.mxu0 0
    %589 = vmatmul.mubr.bf16.gmra.mxu0 %v416
    %v590 = vpop.f32.mrf.mxu0
    %v591 = vadd.f32 %v213, %v590
    %v592 = vpop.f32.mrf.mxu0
    %v593 = vpop.f32.mrf.mxu0
    %v594 = vadd.f32 %v213, %v593
    %v595 = vpop.f32.mrf.mxu0
    %596 = vmatprep.mubr.bf16.mxu0 0
    %597 = vmatmul.mubr.bf16.gmra.mxu0 %v419
    %v598 = vpop.f32.mrf.mxu0
    %v599 = vadd.f32 %v213, %v598
    %v600 = vpop.f32.mrf.mxu0
    %v601 = vpop.f32.mrf.mxu0
    %v602 = vadd.f32 %v213, %v601
    %v603 = vpop.f32.mrf.mxu0
    %604 = vmatprep.mubr.bf16.mxu0 0
    %605 = vmatmul.mubr.bf16.gmra.mxu0 %v422
    %v606 = vpop.f32.mrf.mxu0
    %v607 = vadd.f32 %v213, %v606
    %v608 = vpop.f32.mrf.mxu0
    %v609 = vpop.f32.mrf.mxu0
    %v610 = vadd.f32 %v213, %v609
    %v611 = vpop.f32.mrf.mxu0
    %612 = vmatprep.mubr.bf16.mxu0 0
    %613 = vmatmul.mubr.bf16.gmra.mxu0 %v425
    %v614 = vpop.f32.mrf.mxu0
    %v615 = vadd.f32 %v213, %v614
    %v616 = vpop.f32.mrf.mxu0
    %v617 = vpop.f32.mrf.mxu0
    %v618 = vadd.f32 %v213, %v617
    %v619 = vpop.f32.mrf.mxu0
    %620 = vmatprep.mubr.bf16.mxu0 0
    %621 = vmatmul.mubr.bf16.gmra.mxu0 %v428
    %v622 = vpop.f32.mrf.mxu0
    %v623 = vadd.f32 %v213, %v622
    %v624 = vpop.f32.mrf.mxu0
    %v625 = vpop.f32.mrf.mxu0
    %v626 = vadd.f32 %v213, %v625
    %v627 = vpop.f32.mrf.mxu0
    %628 = vmatprep.mubr.bf16.mxu0 0
    %629 = vmatmul.mubr.bf16.gmra.mxu0 %v431
    %v630 = vpop.f32.mrf.mxu0
    %v631 = vadd.f32 %v213, %v630
    %v632 = vpop.f32.mrf.mxu0
    %v633 = vpop.f32.mrf.mxu0
    %v634 = vadd.f32 %v213, %v633
    %v635 = vpop.f32.mrf.mxu0
    %636 = vmatprep.mubr.bf16.mxu0 0
    %637 = vmatmul.mubr.bf16.gmra.mxu0 %v434
    %v638 = vpop.f32.mrf.mxu0
    %v639 = vadd.f32 %v213, %v638
    %v640 = vpop.f32.mrf.mxu0
    %v641 = vpop.f32.mrf.mxu0
    %v642 = vadd.f32 %v213, %v641
    %v643 = vpop.f32.mrf.mxu0
    %644 = vmatprep.mubr.bf16.mxu0 0
    %645 = vmatmul.mubr.bf16.gmra.mxu0 %v437
    %v646 = vpop.f32.mrf.mxu0
    %v647 = vadd.f32 %v213, %v646
    %v648 = vpop.f32.mrf.mxu0
    %v649 = vpop.f32.mrf.mxu0
    %v650 = vadd.f32 %v213, %v649
    %v651 = vpop.f32.mrf.mxu0
    %652 = vmatprep.mubr.bf16.mxu0 0
    %653 = vmatmul.mubr.bf16.gmra.mxu0 %v440
    %v654 = vpop.f32.mrf.mxu0
    %v655 = vadd.f32 %v213, %v654
    %v656 = vpop.f32.mrf.mxu0
    %v657 = vpop.f32.mrf.mxu0
    %v658 = vadd.f32 %v213, %v657
    %v659 = vpop.f32.mrf.mxu0
    %660 = vmatprep.mubr.bf16.mxu0 0
    %661 = vmatmul.mubr.bf16.gmra.mxu0 %v443
    %v662 = vpop.f32.mrf.mxu0
    %v663 = vadd.f32 %v213, %v662
    %v664 = vpop.f32.mrf.mxu0
    %v665 = vpop.f32.mrf.mxu0
    %v666 = vadd.f32 %v213, %v665
    %v667 = vpop.f32.mrf.mxu0
    %668 = vmatprep.mubr.bf16.mxu0 0
    %669 = vmatmul.mubr.bf16.gmra.mxu0 %v446
    %v670 = vpop.f32.mrf.mxu0
    %v671 = vadd.f32 %v213, %v670
    %v672 = vpop.f32.mrf.mxu0
    %v673 = vpop.f32.mrf.mxu0
    %v674 = vadd.f32 %v213, %v673
    %v675 = vpop.f32.mrf.mxu0
    %676 = vmatprep.mubr.bf16.mxu0 0
    %677 = vmatmul.mubr.bf16.gmra.mxu0 %v449
    %v678 = vpop.f32.mrf.mxu0
    %v679 = vadd.f32 %v213, %v678
    %v680 = vpop.f32.mrf.mxu0
    %v681 = vpop.f32.mrf.mxu0
    %v682 = vadd.f32 %v213, %v681
    %v683 = vpop.f32.mrf.mxu0
    %684 = vmatprep.mubr.bf16.mxu0 0
    %685 = vmatmul.mubr.bf16.gmra.mxu0 %v452
    %v686 = vpop.f32.mrf.mxu0
    %v687 = vadd.f32 %v213, %v686
    %v688 = vpop.f32.mrf.mxu0
    %v689 = vpop.f32.mrf.mxu0
    %v690 = vadd.f32 %v213, %v689
    %v691 = vpop.f32.mrf.mxu0
    %692 = vmatprep.mubr.bf16.mxu0 0
    %693 = vmatmul.mubr.bf16.gmra.mxu0 %v455
    %v694 = vpop.f32.mrf.mxu0
    %v695 = vadd.f32 %v213, %v694
    %v696 = vpop.f32.mrf.mxu0
    %v697 = vpop.f32.mrf.mxu0
    %v698 = vadd.f32 %v213, %v697
    %v699 = vpop.f32.mrf.mxu0
    %700 = vmatprep.mubr.bf16.mxu0 0
    %701 = vmatmul.mubr.bf16.gmra.mxu0 %v458
    %v702 = vpop.f32.mrf.mxu0
    %v703 = vadd.f32 %v213, %v702
    %v704 = vpop.f32.mrf.mxu0
    %v705 = vpop.f32.mrf.mxu0
    %v706 = vadd.f32 %v213, %v705
    %v707 = vpop.f32.mrf.mxu0
    %708 = vmatprep.mubr.bf16.mxu0 0
    %709 = vmatmul.mubr.bf16.gmra.mxu0 %v461
    %v710 = vpop.f32.mrf.mxu0
    %v711 = vadd.f32 %v213, %v710
    %v712 = vpop.f32.mrf.mxu0
    %v713 = vpop.f32.mrf.mxu0
    %v714 = vadd.f32 %v213, %v713
    %v715 = vpop.f32.mrf.mxu0
    %716 = vmatprep.mubr.bf16.mxu0 0
    %717 = vmatmul.mubr.bf16.gmra.mxu0 %v464
    %v718 = vpop.f32.mrf.mxu0
    %v719 = vadd.f32 %v213, %v718
    %v720 = vpop.f32.mrf.mxu0
    %v721 = vpop.f32.mrf.mxu0
    %v722 = vadd.f32 %v213, %v721
    %v723 = vpop.f32.mrf.mxu0
    %724 = vmatprep.mubr.bf16.mxu0 0
    %725 = vmatmul.mubr.bf16.gmra.mxu0 %v467
    %v726 = vpop.f32.mrf.mxu0
    %v727 = vadd.f32 %v213, %v726
    %v728 = vpop.f32.mrf.mxu0
    %v729 = vpop.f32.mrf.mxu0
    %v730 = vadd.f32 %v213, %v729
    %v731 = vpop.f32.mrf.mxu0
    %732 = vmatprep.mubr.bf16.mxu0 0
    %733 = vmatmul.mubr.bf16.gmra.mxu0 %v470
    %v734 = vpop.f32.mrf.mxu0
    %v735 = vadd.f32 %v213, %v734
    %v736 = vpop.f32.mrf.mxu0
    %v737 = vpop.f32.mrf.mxu0
    %v738 = vadd.f32 %v213, %v737
    %v739 = vpop.f32.mrf.mxu0
    %740 = vmatprep.mubr.bf16.mxu0 0
    %741 = vmatmul.mubr.bf16.gmra.mxu0 %v473
    %v742 = vpop.f32.mrf.mxu0
    %v743 = vadd.f32 %v213, %v742
    %v744 = vpop.f32.mrf.mxu0
    %v745 = vpop.f32.mrf.mxu0
    %v746 = vadd.f32 %v213, %v745
    %v747 = vpop.f32.mrf.mxu0
    %748 = vmatprep.mubr.bf16.mxu0 0
    %749 = vmatmul.mubr.bf16.gmra.mxu0 %v476
    %v750 = vpop.f32.mrf.mxu0
    %v751 = vadd.f32 %v213, %v750
    %v752 = vpop.f32.mrf.mxu0
    %v753 = vpop.f32.mrf.mxu0
    %v754 = vadd.f32 %v213, %v753
    %v755 = vpop.f32.mrf.mxu0
    %756 = vmatprep.mubr.bf16.mxu0 0
    %757 = vmatmul.mubr.bf16.gmra.mxu0 %v479
    %v758 = vpop.f32.mrf.mxu0
    %v759 = vadd.f32 %v213, %v758
    %v760 = vpop.f32.mrf.mxu0
    %v761 = vpop.f32.mrf.mxu0
    %v762 = vadd.f32 %v213, %v761
    %v763 = vpop.f32.mrf.mxu0
    %764 = vmatprep.mubr.bf16.mxu0 0
    %765 = vmatmul.mubr.bf16.gmra.mxu0 %v482
    %v766 = vpop.f32.mrf.mxu0
    %v767 = vadd.f32 %v213, %v766
    %v768 = vpop.f32.mrf.mxu0
    %v769 = vpop.f32.mrf.mxu0
    %v770 = vadd.f32 %v213, %v769
    %v771 = vpop.f32.mrf.mxu0
    %772 = vdwg.mxu0
    %v773 = vmax.f32 %v519, 0.0
    %v774 = vmax.f32 %v522, 0.0
    %v775 = vmax.f32 %v527, 0.0
    %v776 = vmax.f32 %v530, 0.0
    %v777 = vmax.f32 %v535, 0.0
    %v778 = vmax.f32 %v538, 0.0
    %v779 = vmax.f32 %v543, 0.0
    %v780 = vmax.f32 %v546, 0.0
    %v781 = vmax.f32 %v551, 0.0
    %v782 = vmax.f32 %v554, 0.0
    %v783 = vmax.f32 %v559, 0.0
    %v784 = vmax.f32 %v562, 0.0
    %v785 = vmax.f32 %v567, 0.0
    %v786 = vmax.f32 %v570, 0.0
    %v787 = vmax.f32 %v575, 0.0
    %v788 = vmax.f32 %v578, 0.0
    %v789 = vmax.f32 %v583, 0.0
    %v790 = vmax.f32 %v586, 0.0
    %v791 = vmax.f32 %v591, 0.0
    %v792 = vmax.f32 %v594, 0.0
    %v793 = vmax.f32 %v599, 0.0
    %v794 = vmax.f32 %v602, 0.0
    %v795 = vmax.f32 %v607, 0.0
    %v796 = vmax.f32 %v610, 0.0
    %v797 = vmax.f32 %v615, 0.0
    %v798 = vmax.f32 %v618, 0.0
    %v799 = vmax.f32 %v623, 0.0
    %v800 = vmax.f32 %v626, 0.0
    %v801 = vmax.f32 %v631, 0.0
    %v802 = vmax.f32 %v634, 0.0
    %v803 = vmax.f32 %v639, 0.0
    %v804 = vmax.f32 %v642, 0.0
    %v805 = vmax.f32 %v647, 0.0
    %v806 = vmax.f32 %v650, 0.0
    %v807 = vmax.f32 %v655, 0.0
    %v808 = vmax.f32 %v658, 0.0
    %v809 = vmax.f32 %v663, 0.0
    %v810 = vmax.f32 %v666, 0.0
    %v811 = vmax.f32 %v671, 0.0
    %v812 = vmax.f32 %v674, 0.0
    %v813 = vmax.f32 %v679, 0.0
    %v814 = vmax.f32 %v682, 0.0
    %v815 = vmax.f32 %v687, 0.0
    %v816 = vmax.f32 %v690, 0.0
    %v817 = vmax.f32 %v695, 0.0
    %v818 = vmax.f32 %v698, 0.0
    %v819 = vmax.f32 %v703, 0.0
    %v820 = vmax.f32 %v706, 0.0
    %v821 = vmax.f32 %v711, 0.0
    %v822 = vmax.f32 %v714, 0.0
    %v823 = vmax.f32 %v719, 0.0
    %v824 = vmax.f32 %v722, 0.0
    %v825 = vmax.f32 %v727, 0.0
    %v826 = vmax.f32 %v730, 0.0
    %v827 = vmax.f32 %v735, 0.0
    %v828 = vmax.f32 %v738, 0.0
    %v829 = vmax.f32 %v743, 0.0
    %v830 = vmax.f32 %v746, 0.0
    %v831 = vmax.f32 %v751, 0.0
    %v832 = vmax.f32 %v754, 0.0
    %v833 = vmax.f32 %v759, 0.0
    %v834 = vmax.f32 %v762, 0.0
    %v835 = vmax.f32 %v767, 0.0
    %v836 = vmax.f32 %v770, 0.0
    %837 = vst.msk [vmem:[#allocation2] sm:$0xff] %vm387, %v773
    %838 = vst.msk [vmem:[#allocation2 + $0x8] sm:$0xff] %vm387, %v774
    %839 = vst.msk [vmem:[#allocation2 + $0x10] sm:$0xff] %vm387, %v775
    %840 = vst.msk [vmem:[#allocation2 + $0x18] sm:$0xff] %vm387, %v776
    %841 = vst.msk [vmem:[#allocation2 + $0x20] sm:$0xff] %vm387, %v777
    %842 = vst.msk [vmem:[#allocation2 + $0x28] sm:$0xff] %vm387, %v778
    %843 = vst.msk [vmem:[#allocation2 + $0x30] sm:$0xff] %vm387, %v779
    %844 = vst.msk [vmem:[#allocation2 + $0x38] sm:$0xff] %vm387, %v780
    %845 = vst.msk [vmem:[#allocation2 + $0x40] sm:$0xff] %vm387, %v781
    %846 = vst.msk [vmem:[#allocation2 + $0x48] sm:$0xff] %vm387, %v782
    %847 = vst.msk [vmem:[#allocation2 + $0x50] sm:$0xff] %vm387, %v783
    %848 = vst.msk [vmem:[#allocation2 + $0x58] sm:$0xff] %vm387, %v784
    %849 = vst.msk [vmem:[#allocation2 + $0x60] sm:$0xff] %vm387, %v785
    %850 = vst.msk [vmem:[#allocation2 + $0x68] sm:$0xff] %vm387, %v786
    %851 = vst.msk [vmem:[#allocation2 + $0x70] sm:$0xff] %vm387, %v787
    %852 = vst.msk [vmem:[#allocation2 + $0x78] sm:$0xff] %vm387, %v788
    %853 = vst.msk [vmem:[#allocation2 + $0x80] sm:$0xff] %vm387, %v789
    %854 = vst.msk [vmem:[#allocation2 + $0x88] sm:$0xff] %vm387, %v790
    %855 = vst.msk [vmem:[#allocation2 + $0x90] sm:$0xff] %vm387, %v791
    %856 = vst.msk [vmem:[#allocation2 + $0x98] sm:$0xff] %vm387, %v792
    %857 = vst.msk [vmem:[#allocation2 + $0xa0] sm:$0xff] %vm387, %v793
    %858 = vst.msk [vmem:[#allocation2 + $0xa8] sm:$0xff] %vm387, %v794
    %859 = vst.msk [vmem:[#allocation2 + $0xb0] sm:$0xff] %vm387, %v795
    %860 = vst.msk [vmem:[#allocation2 + $0xb8] sm:$0xff] %vm387, %v796
    %861 = vst.msk [vmem:[#allocation2 + $0xc0] sm:$0xff] %vm387, %v797
    %862 = vst.msk [vmem:[#allocation2 + $0xc8] sm:$0xff] %vm387, %v798
    %863 = vst.msk [vmem:[#allocation2 + $0xd0] sm:$0xff] %vm387, %v799
    %864 = vst.msk [vmem:[#allocation2 + $0xd8] sm:$0xff] %vm387, %v800
    %865 = vst.msk [vmem:[#allocation2 + $0xe0] sm:$0xff] %vm387, %v801
    %866 = vst.msk [vmem:[#allocation2 + $0xe8] sm:$0xff] %vm387, %v802
    %867 = vst.msk [vmem:[#allocation2 + $0xf0] sm:$0xff] %vm387, %v803
    %868 = vst.msk [vmem:[#allocation2 + $0xf8] sm:$0xff] %vm387, %v804
    %869 = vst.msk [vmem:[#allocation2 + $0x100] sm:$0xff] %vm387, %v805
    %870 = vst.msk [vmem:[#allocation2 + $0x108] sm:$0xff] %vm387, %v806
    %871 = vst.msk [vmem:[#allocation2 + $0x110] sm:$0xff] %vm387, %v807
    %872 = vst.msk [vmem:[#allocation2 + $0x118] sm:$0xff] %vm387, %v808
    %873 = vst.msk [vmem:[#allocation2 + $0x120] sm:$0xff] %vm387, %v809
    %874 = vst.msk [vmem:[#allocation2 + $0x128] sm:$0xff] %vm387, %v810
    %875 = vst.msk [vmem:[#allocation2 + $0x130] sm:$0xff] %vm387, %v811
    %876 = vst.msk [vmem:[#allocation2 + $0x138] sm:$0xff] %vm387, %v812
    %877 = vst.msk [vmem:[#allocation2 + $0x140] sm:$0xff] %vm387, %v813
    %878 = vst.msk [vmem:[#allocation2 + $0x148] sm:$0xff] %vm387, %v814
    %879 = vst.msk [vmem:[#allocation2 + $0x150] sm:$0xff] %vm387, %v815
    %880 = vst.msk [vmem:[#allocation2 + $0x158] sm:$0xff] %vm387, %v816
    %881 = vst.msk [vmem:[#allocation2 + $0x160] sm:$0xff] %vm387, %v817
    %882 = vst.msk [vmem:[#allocation2 + $0x168] sm:$0xff] %vm387, %v818
    %883 = vst.msk [vmem:[#allocation2 + $0x170] sm:$0xff] %vm387, %v819
    %884 = vst.msk [vmem:[#allocation2 + $0x178] sm:$0xff] %vm387, %v820
    %885 = vst.msk [vmem:[#allocation2 + $0x180] sm:$0xff] %vm387, %v821
    %886 = vst.msk [vmem:[#allocation2 + $0x188] sm:$0xff] %vm387, %v822
    %887 = vst.msk [vmem:[#allocation2 + $0x190] sm:$0xff] %vm387, %v823
    %888 = vst.msk [vmem:[#allocation2 + $0x198] sm:$0xff] %vm387, %v824
    %889 = vst.msk [vmem:[#allocation2 + $0x1a0] sm:$0xff] %vm387, %v825
    %890 = vst.msk [vmem:[#allocation2 + $0x1a8] sm:$0xff] %vm387, %v826
    %891 = vst.msk [vmem:[#allocation2 + $0x1b0] sm:$0xff] %vm387, %v827
    %892 = vst.msk [vmem:[#allocation2 + $0x1b8] sm:$0xff] %vm387, %v828
    %893 = vst.msk [vmem:[#allocation2 + $0x1c0] sm:$0xff] %vm387, %v829
    %894 = vst.msk [vmem:[#allocation2 + $0x1c8] sm:$0xff] %vm387, %v830
    %895 = vst.msk [vmem:[#allocation2 + $0x1d0] sm:$0xff] %vm387, %v831
    %896 = vst.msk [vmem:[#allocation2 + $0x1d8] sm:$0xff] %vm387, %v832
    %897 = vst.msk [vmem:[#allocation2 + $0x1e0] sm:$0xff] %vm387, %v833
    %898 = vst.msk [vmem:[#allocation2 + $0x1e8] sm:$0xff] %vm387, %v834
    %899 = vst.msk [vmem:[#allocation2 + $0x1f0] sm:$0xff] %vm387, %v835
    %900 = vst.msk [vmem:[#allocation2 + $0x1f8] sm:$0xff] %vm387, %v836
    %v901 = vld [vmem:[#allocation2] ss:$2 sm:$0xff]
    %s902 = scalar_lea.vmem [#allocation2], 1
    %v903 = vld [vmem:[%s902] ss:$2 sm:$0xff]
    %v904 = vmax.f32 %v901, %v903
    %s905 = scalar_lea.vmem [#allocation2], 16
    %v906 = vld [vmem:[%s905] ss:$2 sm:$0xff]
    %s907 = scalar_lea.vmem [#allocation2], 17
    %v908 = vld [vmem:[%s907] ss:$2 sm:$0xff]
    %v909 = vmax.f32 %v906, %v908
    %v910 = vmax.f32 %v904, %v909
    %v911 = vpack.c.bf16 %v910, %v910
    %vm912 = vcmask 257024
    %913 = vst.msk [vmem:[#allocation3 + $0xc] sm:$0xf] %vm912, %v911
    %s914 = scalar_lea.vmem [#allocation2], 32
    %v915 = vld [vmem:[%s914] ss:$2 sm:$0xff]
    %s916 = scalar_lea.vmem [#allocation2], 33
    %v917 = vld [vmem:[%s916] ss:$2 sm:$0xff]
    %v918 = vmax.f32 %v915, %v917
    %s919 = scalar_lea.vmem [#allocation2], 48
    %v920 = vld [vmem:[%s919] ss:$2 sm:$0xff]
    %s921 = scalar_lea.vmem [#allocation2], 49
    %v922 = vld [vmem:[%s921] ss:$2 sm:$0xff]
    %v923 = vmax.f32 %v920, %v922
    %v924 = vmax.f32 %v918, %v923
    %v925 = vpack.c.bf16 %v924, %v924
    %926 = vst.msk [vmem:[#allocation3 + $0x14] sm:$0xf] %vm912, %v925
    %s927 = scalar_lea.vmem [#allocation2], 64
    %v928 = vld [vmem:[%s927] ss:$2 sm:$0xff]
    %s929 = scalar_lea.vmem [#allocation2], 65
    %v930 = vld [vmem:[%s929] ss:$2 sm:$0xff]
    %v931 = vmax.f32 %v928, %v930
    %s932 = scalar_lea.vmem [#allocation2], 80
    %v933 = vld [vmem:[%s932] ss:$2 sm:$0xff]
    %s934 = scalar_lea.vmem [#allocation2], 81
    %v935 = vld [vmem:[%s934] ss:$2 sm:$0xff]
    %v936 = vmax.f32 %v933, %v935
    %v937 = vmax.f32 %v931, %v936
    %v938 = vpack.c.bf16 %v937, %v937
    %939 = vst.msk [vmem:[#allocation3 + $0x1c] sm:$0xf] %vm912, %v938
    %s940 = scalar_lea.vmem [#allocation2], 96
    %v941 = vld [vmem:[%s940] ss:$2 sm:$0xff]
    %s942 = scalar_lea.vmem [#allocation2], 97
    %v943 = vld [vmem:[%s942] ss:$2 sm:$0xff]
    %v944 = vmax.f32 %v941, %v943
    %s945 = scalar_lea.vmem [#allocation2], 112
    %v946 = vld [vmem:[%s945] ss:$2 sm:$0xff]
    %s947 = scalar_lea.vmem [#allocation2], 113
    %v948 = vld [vmem:[%s947] ss:$2 sm:$0xff]
    %v949 = vmax.f32 %v946, %v948
    %v950 = vmax.f32 %v944, %v949
    %v951 = vpack.c.bf16 %v950, %v950
    %952 = vst.msk [vmem:[#allocation3 + $0x24] sm:$0xf] %vm912, %v951
    %s953 = scalar_lea.vmem [#allocation2], 128
    %v954 = vld [vmem:[%s953] ss:$2 sm:$0xff]
    %s955 = scalar_lea.vmem [#allocation2], 129
    %v956 = vld [vmem:[%s955] ss:$2 sm:$0xff]
    %v957 = vmax.f32 %v954, %v956
    %s958 = scalar_lea.vmem [#allocation2], 144
    %v959 = vld [vmem:[%s958] ss:$2 sm:$0xff]
    %s960 = scalar_lea.vmem [#allocation2], 145
    %v961 = vld [vmem:[%s960] ss:$2 sm:$0xff]
    %v962 = vmax.f32 %v959, %v961
    %v963 = vmax.f32 %v957, %v962
    %v964 = vpack.c.bf16 %v963, %v963
    %965 = vst.msk [vmem:[#allocation3 + $0x2c] sm:$0xf] %vm912, %v964
    %s966 = scalar_lea.vmem [#allocation2], 160
    %v967 = vld [vmem:[%s966] ss:$2 sm:$0xff]
    %s968 = scalar_lea.vmem [#allocation2], 161
    %v969 = vld [vmem:[%s968] ss:$2 sm:$0xff]
    %v970 = vmax.f32 %v967, %v969
    %s971 = scalar_lea.vmem [#allocation2], 176
    %v972 = vld [vmem:[%s971] ss:$2 sm:$0xff]
    %s973 = scalar_lea.vmem [#allocation2], 177
    %v974 = vld [vmem:[%s973] ss:$2 sm:$0xff]
    %v975 = vmax.f32 %v972, %v974
    %v976 = vmax.f32 %v970, %v975
    %v977 = vpack.c.bf16 %v976, %v976
    %978 = vst.msk [vmem:[#allocation3 + $0x34] sm:$0xf] %vm912, %v977
    %s979 = scalar_lea.vmem [#allocation2], 192
    %v980 = vld [vmem:[%s979] ss:$2 sm:$0xff]
    %s981 = scalar_lea.vmem [#allocation2], 193
    %v982 = vld [vmem:[%s981] ss:$2 sm:$0xff]
    %v983 = vmax.f32 %v980, %v982
    %s984 = scalar_lea.vmem [#allocation2], 208
    %v985 = vld [vmem:[%s984] ss:$2 sm:$0xff]
    %s986 = scalar_lea.vmem [#allocation2], 209
    %v987 = vld [vmem:[%s986] ss:$2 sm:$0xff]
    %v988 = vmax.f32 %v985, %v987
    %v989 = vmax.f32 %v983, %v988
    %v990 = vpack.c.bf16 %v989, %v989
    %991 = vst.msk [vmem:[#allocation3 + $0x3c] sm:$0xf] %vm912, %v990
    %s992 = scalar_lea.vmem [#allocation2], 224
    %v993 = vld [vmem:[%s992] ss:$2 sm:$0xff]
    %s994 = scalar_lea.vmem [#allocation2], 225
    %v995 = vld [vmem:[%s994] ss:$2 sm:$0xff]
    %v996 = vmax.f32 %v993, %v995
    %s997 = scalar_lea.vmem [#allocation2], 240
    %v998 = vld [vmem:[%s997] ss:$2 sm:$0xff]
    %s999 = scalar_lea.vmem [#allocation2], 241
    %v1000 = vld [vmem:[%s999] ss:$2 sm:$0xff]
    %v1001 = vmax.f32 %v998, %v1000
    %v1002 = vmax.f32 %v996, %v1001
    %v1003 = vpack.c.bf16 %v1002, %v1002
    %1004 = vst.msk [vmem:[#allocation3 + $0x44] sm:$0xf] %vm912, %v1003
    %s1005 = scalar_lea.vmem [#allocation2], 256
    %v1006 = vld [vmem:[%s1005] ss:$2 sm:$0xff]
    %s1007 = scalar_lea.vmem [#allocation2], 257
    %v1008 = vld [vmem:[%s1007] ss:$2 sm:$0xff]
    %v1009 = vmax.f32 %v1006, %v1008
    %s1010 = scalar_lea.vmem [#allocation2], 272
    %v1011 = vld [vmem:[%s1010] ss:$2 sm:$0xff]
    %s1012 = scalar_lea.vmem [#allocation2], 273
    %v1013 = vld [vmem:[%s1012] ss:$2 sm:$0xff]
    %v1014 = vmax.f32 %v1011, %v1013
    %v1015 = vmax.f32 %v1009, %v1014
    %v1016 = vpack.c.bf16 %v1015, %v1015
    %1017 = vst.msk [vmem:[#allocation3 + $0x64] sm:$0xf] %vm912, %v1016
    %s1018 = scalar_lea.vmem [#allocation2], 288
    %v1019 = vld [vmem:[%s1018] ss:$2 sm:$0xff]
    %s1020 = scalar_lea.vmem [#allocation2], 289
    %v1021 = vld [vmem:[%s1020] ss:$2 sm:$0xff]
    %v1022 = vmax.f32 %v1019, %v1021
    %s1023 = scalar_lea.vmem [#allocation2], 304
    %v1024 = vld [vmem:[%s1023] ss:$2 sm:$0xff]
    %s1025 = scalar_lea.vmem [#allocation2], 305
    %v1026 = vld [vmem:[%s1025] ss:$2 sm:$0xff]
    %v1027 = vmax.f32 %v1024, %v1026
    %v1028 = vmax.f32 %v1022, %v1027
    %v1029 = vpack.c.bf16 %v1028, %v1028
    %1030 = vst.msk [vmem:[#allocation3 + $0x6c] sm:$0xf] %vm912, %v1029
    %s1031 = scalar_lea.vmem [#allocation2], 320
    %v1032 = vld [vmem:[%s1031] ss:$2 sm:$0xff]
    %s1033 = scalar_lea.vmem [#allocation2], 321
    %v1034 = vld [vmem:[%s1033] ss:$2 sm:$0xff]
    %v1035 = vmax.f32 %v1032, %v1034
    %s1036 = scalar_lea.vmem [#allocation2], 336
    %v1037 = vld [vmem:[%s1036] ss:$2 sm:$0xff]
    %s1038 = scalar_lea.vmem [#allocation2], 337
    %v1039 = vld [vmem:[%s1038] ss:$2 sm:$0xff]
    %v1040 = vmax.f32 %v1037, %v1039
    %v1041 = vmax.f32 %v1035, %v1040
    %v1042 = vpack.c.bf16 %v1041, %v1041
    %1043 = vst.msk [vmem:[#allocation3 + $0x74] sm:$0xf] %vm912, %v1042
    %s1044 = scalar_lea.vmem [#allocation2], 352
    %v1045 = vld [vmem:[%s1044] ss:$2 sm:$0xff]
    %s1046 = scalar_lea.vmem [#allocation2], 353
    %v1047 = vld [vmem:[%s1046] ss:$2 sm:$0xff]
    %v1048 = vmax.f32 %v1045, %v1047
    %s1049 = scalar_lea.vmem [#allocation2], 368
    %v1050 = vld [vmem:[%s1049] ss:$2 sm:$0xff]
    %s1051 = scalar_lea.vmem [#allocation2], 369
    %v1052 = vld [vmem:[%s1051] ss:$2 sm:$0xff]
    %v1053 = vmax.f32 %v1050, %v1052
    %v1054 = vmax.f32 %v1048, %v1053
    %v1055 = vpack.c.bf16 %v1054, %v1054
    %1056 = vst.msk [vmem:[#allocation3 + $0x7c] sm:$0xf] %vm912, %v1055
    %s1057 = scalar_lea.vmem [#allocation2], 384
    %v1058 = vld [vmem:[%s1057] ss:$2 sm:$0xff]
    %s1059 = scalar_lea.vmem [#allocation2], 385
    %v1060 = vld [vmem:[%s1059] ss:$2 sm:$0xff]
    %v1061 = vmax.f32 %v1058, %v1060
    %s1062 = scalar_lea.vmem [#allocation2], 400
    %v1063 = vld [vmem:[%s1062] ss:$2 sm:$0xff]
    %s1064 = scalar_lea.vmem [#allocation2], 401
    %v1065 = vld [vmem:[%s1064] ss:$2 sm:$0xff]
    %v1066 = vmax.f32 %v1063, %v1065
    %v1067 = vmax.f32 %v1061, %v1066
    %v1068 = vpack.c.bf16 %v1067, %v1067
    %1069 = vst.msk [vmem:[#allocation3 + $0x84] sm:$0xf] %vm912, %v1068
    %s1070 = scalar_lea.vmem [#allocation2], 416
    %v1071 = vld [vmem:[%s1070] ss:$2 sm:$0xff]
    %s1072 = scalar_lea.vmem [#allocation2], 417
    %v1073 = vld [vmem:[%s1072] ss:$2 sm:$0xff]
    %v1074 = vmax.f32 %v1071, %v1073
    %s1075 = scalar_lea.vmem [#allocation2], 432
    %v1076 = vld [vmem:[%s1075] ss:$2 sm:$0xff]
    %s1077 = scalar_lea.vmem [#allocation2], 433
    %v1078 = vld [vmem:[%s1077] ss:$2 sm:$0xff]
    %v1079 = vmax.f32 %v1076, %v1078
    %v1080 = vmax.f32 %v1074, %v1079
    %v1081 = vpack.c.bf16 %v1080, %v1080
    %1082 = vst.msk [vmem:[#allocation3 + $0x8c] sm:$0xf] %vm912, %v1081
    %s1083 = scalar_lea.vmem [#allocation2], 448
    %v1084 = vld [vmem:[%s1083] ss:$2 sm:$0xff]
    %s1085 = scalar_lea.vmem [#allocation2], 449
    %v1086 = vld [vmem:[%s1085] ss:$2 sm:$0xff]
    %v1087 = vmax.f32 %v1084, %v1086
    %s1088 = scalar_lea.vmem [#allocation2], 464
    %v1089 = vld [vmem:[%s1088] ss:$2 sm:$0xff]
    %s1090 = scalar_lea.vmem [#allocation2], 465
    %v1091 = vld [vmem:[%s1090] ss:$2 sm:$0xff]
    %v1092 = vmax.f32 %v1089, %v1091
    %v1093 = vmax.f32 %v1087, %v1092
    %v1094 = vpack.c.bf16 %v1093, %v1093
    %1095 = vst.msk [vmem:[#allocation3 + $0x94] sm:$0xf] %vm912, %v1094
    %s1096 = scalar_lea.vmem [#allocation2], 480
    %v1097 = vld [vmem:[%s1096] ss:$2 sm:$0xff]
    %s1098 = scalar_lea.vmem [#allocation2], 481
    %v1099 = vld [vmem:[%s1098] ss:$2 sm:$0xff]
    %v1100 = vmax.f32 %v1097, %v1099
    %s1101 = scalar_lea.vmem [#allocation2], 496
    %v1102 = vld [vmem:[%s1101] ss:$2 sm:$0xff]
    %s1103 = scalar_lea.vmem [#allocation2], 497
    %v1104 = vld [vmem:[%s1103] ss:$2 sm:$0xff]
    %v1105 = vmax.f32 %v1102, %v1104
    %v1106 = vmax.f32 %v1100, %v1105
    %v1107 = vpack.c.bf16 %v1106, %v1106
    %1108 = vst.msk [vmem:[#allocation3 + $0x9c] sm:$0xf] %vm912, %v1107
    %v1109 = vld [vmem:[#allocation3] sm:$0x8]
    %v1110 = vld [vmem:[#allocation3 + $0x4] sm:$0xf]
    %v1111 = vld [vmem:[#allocation3 + $0x8] sm:$0xf]
    %v1112 = vld [vmem:[#allocation3 + $0xc] sm:$0xf]
    %v1113 = vld [vmem:[#allocation3 + $0x10] sm:$0xf]
    %v1114 = vld [vmem:[#allocation3 + $0x14] sm:$0xf]
    %v1115 = vld [vmem:[#allocation3 + $0x18] sm:$0xf]
    %v1116 = vld [vmem:[#allocation3 + $0x1c] sm:$0xf]
    %v1117 = vld [vmem:[#allocation3 + $0x20] sm:$0xf]
    %v1118 = vld [vmem:[#allocation3 + $0x24] sm:$0xf]
    %v1119 = vld [vmem:[#allocation3 + $0x28] sm:$0xf]
    %v1120 = vld [vmem:[#allocation3 + $0x2c] sm:$0xf]
    %v1121 = vld [vmem:[#allocation3 + $0x30] sm:$0xf]
    %v1122 = vld [vmem:[#allocation3 + $0x34] sm:$0xf]
    %v1123 = vld [vmem:[#allocation3 + $0x38] sm:$0xf]
    %v1124 = vld [vmem:[#allocation3 + $0x3c] sm:$0xf]
    %v1125 = vld [vmem:[#allocation3 + $0x40] sm:$0xf]
    %v1126 = vld [vmem:[#allocation3 + $0x44] sm:$0xf]
    %v1127 = vld [vmem:[#allocation3 + $0x48] sm:$0xf]
    %v1128 = vld [vmem:[#allocation3 + $0x4c] sm:$0xf]
    %v1129 = vld [vmem:[#allocation3 + $0x50] sm:$0xf]
    %v1130 = vld [vmem:[#allocation3 + $0x54] sm:$0xf]
    %v1131 = vld [vmem:[#allocation3 + $0x58] sm:$0xf]
    %v1132 = vld [vmem:[#allocation3 + $0x5c] sm:$0xf]
    %v1133 = vld [vmem:[#allocation3 + $0x60] sm:$0xf]
    %v1134 = vld [vmem:[#allocation3 + $0x64] sm:$0xf]
    %v1135 = vld [vmem:[#allocation3 + $0x68] sm:$0xf]
    %v1136 = vld [vmem:[#allocation3 + $0x6c] sm:$0xf]
    %v1137 = vld [vmem:[#allocation3 + $0x70] sm:$0xf]
    %v1138 = vld [vmem:[#allocation3 + $0x74] sm:$0xf]
    %v1139 = vld [vmem:[#allocation3 + $0x78] sm:$0xf]
    %v1140 = vld [vmem:[#allocation3 + $0x7c] sm:$0xf]
    %v1141 = vld [vmem:[#allocation3 + $0x80] sm:$0xf]
    %v1142 = vld [vmem:[#allocation3 + $0x84] sm:$0xf]
    %v1143 = vld [vmem:[#allocation3 + $0x88] sm:$0xf]
    %v1144 = vld [vmem:[#allocation3 + $0x8c] sm:$0xf]
    %v1145 = vld [vmem:[#allocation3 + $0x90] sm:$0xf]
    %v1146 = vld [vmem:[#allocation3 + $0x94] sm:$0xf]
    %v1147 = vld [vmem:[#allocation3 + $0x98] sm:$0xf]
    %v1148 = vld [vmem:[#allocation9] sm:$0xf]
    %v1149 = vld [vmem:[#allocation9 + $0x4] sm:$0xf]
    %v1150 = vld [vmem:[#allocation9 + $0x8] sm:$0xf]
    %v1151 = vld [vmem:[#allocation9 + $0xc] sm:$0xf]
    %s1152 = scalar_lea.vmem [#allocation9], 16
    %v1153 = vld [vmem:[%s1152] sm:$0xf]
    %v1154 = vld [vmem:[%s1152 + $0x4] sm:$0xf]
    %v1155 = vld [vmem:[%s1152 + $0x8] sm:$0xf]
    %v1156 = vld [vmem:[%s1152 + $0xc] sm:$0xf]
    %v1195 = vunpack.c.l.b16 %v1110
    %v1196 = vunpack.c.l.b16 %v1111
    %v1197 = vunpack.c.l.b16 %v1112
    %v1198 = vunpack.c.l.b16 %v1113
    %v1199 = vunpack.c.l.b16 %v1114
    %v1200 = vunpack.c.l.b16 %v1115
    %v1201 = vunpack.c.l.b16 %v1116
    %v1202 = vunpack.c.l.b16 %v1117
    %v1203 = vunpack.c.l.b16 %v1118
    %v1204 = vunpack.c.l.b16 %v1119
    %v1205 = vunpack.c.l.b16 %v1120
    %v1206 = vunpack.c.l.b16 %v1121
    %v1207 = vunpack.c.l.b16 %v1122
    %v1208 = vunpack.c.l.b16 %v1123
    %v1209 = vunpack.c.l.b16 %v1124
    %v1210 = vunpack.c.l.b16 %v1125
    %v1211 = vunpack.c.l.b16 %v1126
    %v1212 = vunpack.c.l.b16 %v1127
    %v1213 = vunpack.c.l.b16 %v1128
    %v1214 = vunpack.c.l.b16 %v1129
    %v1215 = vunpack.c.l.b16 %v1130
    %v1216 = vunpack.c.l.b16 %v1131
    %v1217 = vunpack.c.l.b16 %v1132
    %v1218 = vunpack.c.l.b16 %v1133
    %v1219 = vunpack.c.l.b16 %v1134
    %v1220 = vunpack.c.l.b16 %v1135
    %v1221 = vunpack.c.l.b16 %v1136
    %v1222 = vunpack.c.l.b16 %v1137
    %v1223 = vunpack.c.l.b16 %v1138
    %v1224 = vunpack.c.l.b16 %v1139
    %v1225 = vunpack.c.l.b16 %v1140
    %v1226 = vunpack.c.l.b16 %v1141
    %v1227 = vunpack.c.l.b16 %v1142
    %v1228 = vunpack.c.l.b16 %v1143
    %v1229 = vunpack.c.l.b16 %v1144
    %v1230 = vunpack.c.l.b16 %v1145
    %v1231 = vunpack.c.l.b16 %v1146
    %v1232 = vunpack.c.l.b16 %v1147
    %v1233 = vpack.c.b16 %v1196, %v1195
    %v1234 = vpack.c.b16 %v1198, %v1197
    %v1235 = vpack.c.b16 %v1200, %v1199
    %v1236 = vpack.c.b16 %v1202, %v1201
    %v1237 = vpack.c.b16 %v1204, %v1203
    %v1238 = vpack.c.b16 %v1206, %v1205
    %v1239 = vpack.c.b16 %v1208, %v1207
    %v1240 = vpack.c.b16 %v1210, %v1209
    %v1241 = vpack.c.b16 %v1212, %v1211
    %v1242 = vpack.c.b16 %v1214, %v1213
    %v1243 = vpack.c.b16 %v1216, %v1215
    %v1244 = vpack.c.b16 %v1218, %v1217
    %v1245 = vpack.c.b16 %v1220, %v1219
    %v1246 = vpack.c.b16 %v1222, %v1221
    %v1247 = vpack.c.b16 %v1224, %v1223
    %v1248 = vpack.c.b16 %v1226, %v1225
    %v1249 = vpack.c.b16 %v1228, %v1227
    %v1250 = vpack.c.b16 %v1230, %v1229
    %v1251 = vpack.c.b16 %v1232, %v1231
    %v1256 = vunpack.c.l.b16 %v1153
    %v1257 = vunpack.c.l.b16 %v1154
    %v1258 = vunpack.c.l.b16 %v1155
    %v1259 = vunpack.c.l.b16 %v1156
    %v1260 = vpack.c.b16 %v1257, %v1256
    %v1261 = vpack.c.b16 %v1259, %v1258
    %v1265 = vsel %vm387, %v1233, 0
    %v1268 = vsel %vm387, %v1234, 0
    %v1271 = vsel %vm387, %v1235, 0
    %v1274 = vsel %vm387, %v1236, 0
    %v1277 = vsel %vm387, %v1237, 0
    %v1280 = vsel %vm387, %v1238, 0
    %v1283 = vsel %vm387, %v1239, 0
    %v1286 = vsel %vm387, %v1240, 0
    %v1289 = vsel %vm387, %v1241, 0
    %v1292 = vsel %vm387, %v1242, 0
    %v1295 = vsel %vm387, %v1243, 0
    %v1298 = vsel %vm387, %v1244, 0
    %v1301 = vsel %vm387, %v1245, 0
    %v1304 = vsel %vm387, %v1246, 0
    %v1307 = vsel %vm387, %v1247, 0
    %v1310 = vsel %vm387, %v1248, 0
    %v1313 = vsel %vm387, %v1249, 0
    %v1316 = vsel %vm387, %v1250, 0
    %v1319 = vsel %vm387, %v1251, 0
    %1321 = vmatprep.subr.bf16.mxu0 0
    %1322 = vmatpush1.bf16.msra.mxu0 0
    %1323 = vmatprep.subr.bf16.mxu0 0
    %1324 = vmatpush1.bf16.msra.mxu0 0
    %1325 = vmatprep.subr.bf16.mxu0 0
    %1326 = vmatpush1.bf16.msra.mxu0 0
    %1327 = vmatprep.subr.bf16.mxu0 0
    %1328 = vmatpush1.bf16.msra.mxu0 0
    %1329 = vmatprep.subr.bf16.mxu0 0
    %1330 = vmatpush1.bf16.msra.mxu0 0
    %1331 = vmatprep.subr.bf16.mxu0 0
    %1332 = vmatpush1.bf16.msra.mxu0 0
    %1333 = vmatprep.subr.bf16.mxu0 0
    %1334 = vmatpush1.bf16.msra.mxu0 %v1261
    %1335 = vmatprep.subr.bf16.mxu0 0
    %1336 = vmatpush1.bf16.msra.mxu0 %v1260
    %1337 = vmatprep.subr.bf16.mxu0 0
    %1338 = vmatpush2.bf16.msra.mxu0 0
    %1339 = vmatprep.subr.bf16.mxu0 0
    %1340 = vmatpush2.bf16.msra.mxu0 0
    %1341 = vmatprep.subr.bf16.mxu0 0
    %1342 = vmatpush2.bf16.msra.mxu0 0
    %1343 = vmatprep.subr.bf16.mxu0 0
    %1344 = vmatpush2.bf16.msra.mxu0 0
    %1345 = vmatprep.subr.bf16.mxu0 0
    %1346 = vmatpush2.bf16.msra.mxu0 0
    %1347 = vmatprep.subr.bf16.mxu0 0
    %1348 = vmatpush2.bf16.msra.mxu0 0
    %1349 = vmatprep.subr.bf16.mxu0 0
    %1350 = vmatpush2.bf16.msra.mxu0 0
    %1351 = vmatprep.subr.bf16.mxu0 0
    %1352 = vmatpush2.bf16.msra.mxu0 0
    %1353 = vmatprep.mubr.bf16.mxu0 0
    %1354 = vmatmul.mubr.bf16.gmra.mxu0 %v1265
    %v1355 = vpop.f32.mrf.mxu0
    %v1356 = vadd.f32 0.0, %v1355
    %v1357 = vpop.f32.mrf.mxu0
    %v1358 = vpop.f32.mrf.mxu0
    %v1359 = vadd.f32 0.0, %v1358
    %v1360 = vpop.f32.mrf.mxu0
    %1361 = vmatprep.mubr.bf16.mxu0 0
    %1362 = vmatmul.mubr.bf16.gmra.mxu0 %v1268
    %v1363 = vpop.f32.mrf.mxu0
    %v1364 = vadd.f32 0.0, %v1363
    %v1365 = vpop.f32.mrf.mxu0
    %v1366 = vpop.f32.mrf.mxu0
    %v1367 = vadd.f32 0.0, %v1366
    %v1368 = vpop.f32.mrf.mxu0
    %1369 = vmatprep.mubr.bf16.mxu0 0
    %1370 = vmatmul.mubr.bf16.gmra.mxu0 %v1271
    %v1371 = vpop.f32.mrf.mxu0
    %v1372 = vadd.f32 0.0, %v1371
    %v1373 = vpop.f32.mrf.mxu0
    %v1374 = vpop.f32.mrf.mxu0
    %v1375 = vadd.f32 0.0, %v1374
    %v1376 = vpop.f32.mrf.mxu0
    %1377 = vmatprep.mubr.bf16.mxu0 0
    %1378 = vmatmul.mubr.bf16.gmra.mxu0 %v1274
    %v1379 = vpop.f32.mrf.mxu0
    %v1380 = vadd.f32 0.0, %v1379
    %v1381 = vpop.f32.mrf.mxu0
    %v1382 = vpop.f32.mrf.mxu0
    %v1383 = vadd.f32 0.0, %v1382
    %v1384 = vpop.f32.mrf.mxu0
    %1385 = vmatprep.mubr.bf16.mxu0 0
    %1386 = vmatmul.mubr.bf16.gmra.mxu0 %v1277
    %v1387 = vpop.f32.mrf.mxu0
    %v1388 = vadd.f32 0.0, %v1387
    %v1389 = vpop.f32.mrf.mxu0
    %v1390 = vpop.f32.mrf.mxu0
    %v1391 = vadd.f32 0.0, %v1390
    %v1392 = vpop.f32.mrf.mxu0
    %1393 = vmatprep.mubr.bf16.mxu0 0
    %1394 = vmatmul.mubr.bf16.gmra.mxu0 %v1280
    %v1395 = vpop.f32.mrf.mxu0
    %v1396 = vadd.f32 0.0, %v1395
    %v1397 = vpop.f32.mrf.mxu0
    %v1398 = vpop.f32.mrf.mxu0
    %v1399 = vadd.f32 0.0, %v1398
    %v1400 = vpop.f32.mrf.mxu0
    %1401 = vmatprep.mubr.bf16.mxu0 0
    %1402 = vmatmul.mubr.bf16.gmra.mxu0 %v1283
    %v1403 = vpop.f32.mrf.mxu0
    %v1404 = vadd.f32 0.0, %v1403
    %v1405 = vpop.f32.mrf.mxu0
    %v1406 = vpop.f32.mrf.mxu0
    %v1407 = vadd.f32 0.0, %v1406
    %v1408 = vpop.f32.mrf.mxu0
    %1409 = vmatprep.mubr.bf16.mxu0 0
    %1410 = vmatmul.mubr.bf16.gmra.mxu0 %v1286
    %v1411 = vpop.f32.mrf.mxu0
    %v1412 = vadd.f32 0.0, %v1411
    %v1413 = vpop.f32.mrf.mxu0
    %v1414 = vpop.f32.mrf.mxu0
    %v1415 = vadd.f32 0.0, %v1414
    %v1416 = vpop.f32.mrf.mxu0
    %1417 = vmatprep.mubr.bf16.mxu0 0
    %1418 = vmatmul.mubr.bf16.gmra.mxu0 %v1289
    %v1419 = vpop.f32.mrf.mxu0
    %v1420 = vadd.f32 0.0, %v1419
    %v1421 = vpop.f32.mrf.mxu0
    %v1422 = vpop.f32.mrf.mxu0
    %v1423 = vadd.f32 0.0, %v1422
    %v1424 = vpop.f32.mrf.mxu0
    %1425 = vmatprep.mubr.bf16.mxu0 0
    %1426 = vmatmul.mubr.bf16.gmra.mxu0 %v1292
    %v1427 = vpop.f32.mrf.mxu0
    %v1428 = vadd.f32 0.0, %v1427
    %v1429 = vpop.f32.mrf.mxu0
    %v1430 = vpop.f32.mrf.mxu0
    %v1431 = vadd.f32 0.0, %v1430
    %v1432 = vpop.f32.mrf.mxu0
    %1433 = vmatprep.mubr.bf16.mxu0 0
    %1434 = vmatmul.mubr.bf16.gmra.mxu0 %v1295
    %v1435 = vpop.f32.mrf.mxu0
    %v1436 = vadd.f32 0.0, %v1435
    %v1437 = vpop.f32.mrf.mxu0
    %v1438 = vpop.f32.mrf.mxu0
    %v1439 = vadd.f32 0.0, %v1438
    %v1440 = vpop.f32.mrf.mxu0
    %1441 = vmatprep.mubr.bf16.mxu0 0
    %1442 = vmatmul.mubr.bf16.gmra.mxu0 %v1298
    %v1443 = vpop.f32.mrf.mxu0
    %v1444 = vadd.f32 0.0, %v1443
    %v1445 = vpop.f32.mrf.mxu0
    %v1446 = vpop.f32.mrf.mxu0
    %v1447 = vadd.f32 0.0, %v1446
    %v1448 = vpop.f32.mrf.mxu0
    %1449 = vmatprep.mubr.bf16.mxu0 0
    %1450 = vmatmul.mubr.bf16.gmra.mxu0 %v1301
    %v1451 = vpop.f32.mrf.mxu0
    %v1452 = vadd.f32 0.0, %v1451
    %v1453 = vpop.f32.mrf.mxu0
    %v1454 = vpop.f32.mrf.mxu0
    %v1455 = vadd.f32 0.0, %v1454
    %v1456 = vpop.f32.mrf.mxu0
    %1457 = vmatprep.mubr.bf16.mxu0 0
    %1458 = vmatmul.mubr.bf16.gmra.mxu0 %v1304
    %v1459 = vpop.f32.mrf.mxu0
    %v1460 = vadd.f32 0.0, %v1459
    %v1461 = vpop.f32.mrf.mxu0
    %v1462 = vpop.f32.mrf.mxu0
    %v1463 = vadd.f32 0.0, %v1462
    %v1464 = vpop.f32.mrf.mxu0
    %1465 = vmatprep.mubr.bf16.mxu0 0
    %1466 = vmatmul.mubr.bf16.gmra.mxu0 %v1307
    %v1467 = vpop.f32.mrf.mxu0
    %v1468 = vadd.f32 0.0, %v1467
    %v1469 = vpop.f32.mrf.mxu0
    %v1470 = vpop.f32.mrf.mxu0
    %v1471 = vadd.f32 0.0, %v1470
    %v1472 = vpop.f32.mrf.mxu0
    %1473 = vmatprep.mubr.bf16.mxu0 0
    %1474 = vmatmul.mubr.bf16.gmra.mxu0 %v1310
    %v1475 = vpop.f32.mrf.mxu0
    %v1476 = vadd.f32 0.0, %v1475
    %v1477 = vpop.f32.mrf.mxu0
    %v1478 = vpop.f32.mrf.mxu0
    %v1479 = vadd.f32 0.0, %v1478
    %v1480 = vpop.f32.mrf.mxu0
    %1481 = vmatprep.mubr.bf16.mxu0 0
    %1482 = vmatmul.mubr.bf16.gmra.mxu0 %v1313
    %v1483 = vpop.f32.mrf.mxu0
    %v1484 = vadd.f32 0.0, %v1483
    %v1485 = vpop.f32.mrf.mxu0
    %v1486 = vpop.f32.mrf.mxu0
    %v1487 = vadd.f32 0.0, %v1486
    %v1488 = vpop.f32.mrf.mxu0
    %1489 = vmatprep.mubr.bf16.mxu0 0
    %1490 = vmatmul.mubr.bf16.gmra.mxu0 %v1316
    %v1491 = vpop.f32.mrf.mxu0
    %v1492 = vadd.f32 0.0, %v1491
    %v1493 = vpop.f32.mrf.mxu0
    %v1494 = vpop.f32.mrf.mxu0
    %v1495 = vadd.f32 0.0, %v1494
    %v1496 = vpop.f32.mrf.mxu0
    %1497 = vmatprep.mubr.bf16.mxu0 0
    %1498 = vmatmul.mubr.bf16.gmra.mxu0 %v1319
    %v1499 = vpop.f32.mrf.mxu0
    %v1500 = vadd.f32 0.0, %v1499
    %v1501 = vpop.f32.mrf.mxu0
    %v1502 = vpop.f32.mrf.mxu0
    %v1503 = vadd.f32 0.0, %v1502
    %v1504 = vpop.f32.mrf.mxu0
    %1505 = vdwg.mxu0
    %v1507 = vunpack.c.l.b16 %v1109
    %v1508 = vpack.c.b16 %v1195, %v1507
    %v1509 = vpack.c.b16 %v1197, %v1196
    %v1510 = vpack.c.b16 %v1199, %v1198
    %v1511 = vpack.c.b16 %v1201, %v1200
    %v1512 = vpack.c.b16 %v1203, %v1202
    %v1513 = vpack.c.b16 %v1205, %v1204
    %v1514 = vpack.c.b16 %v1207, %v1206
    %v1515 = vpack.c.b16 %v1209, %v1208
    %v1516 = vpack.c.b16 %v1211, %v1210
    %v1517 = vpack.c.b16 %v1213, %v1212
    %v1518 = vpack.c.b16 %v1215, %v1214
    %v1519 = vpack.c.b16 %v1217, %v1216
    %v1520 = vpack.c.b16 %v1219, %v1218
    %v1521 = vpack.c.b16 %v1221, %v1220
    %v1522 = vpack.c.b16 %v1223, %v1222
    %v1523 = vpack.c.b16 %v1225, %v1224
    %v1524 = vpack.c.b16 %v1227, %v1226
    %v1525 = vpack.c.b16 %v1229, %v1228
    %v1526 = vpack.c.b16 %v1231, %v1230
    %v1527 = vpack.c.b16 %v1232, %v1232
    %vm1528 = vsmask.f32 4352
    %v1530 = vshrl.u32 %v1508, 16
    %v1532 = vrot.slane %v1530, 3
    %v1533 = vshll.u32 %v1508, 16
    %v1535 = vrot.slane %v1533, 4
    %v1536 = vor.u32 %v1532, %v1535
    %v1538 = vshrl.u32 %v1509, 16
    %v1540 = vrot.slane %v1538, 3
    %v1541 = vshll.u32 %v1509, 16
    %v1543 = vrot.slane %v1541, 4
    %v1544 = vor.u32 %v1540, %v1543
    %v1545 = vsel %vm1528, %v1536, %v1544
    %v1547 = vshrl.u32 %v1510, 16
    %v1549 = vrot.slane %v1547, 3
    %v1550 = vshll.u32 %v1510, 16
    %v1552 = vrot.slane %v1550, 4
    %v1553 = vor.u32 %v1549, %v1552
    %v1554 = vsel %vm1528, %v1544, %v1553
    %v1556 = vshrl.u32 %v1511, 16
    %v1558 = vrot.slane %v1556, 3
    %v1559 = vshll.u32 %v1511, 16
    %v1561 = vrot.slane %v1559, 4
    %v1562 = vor.u32 %v1558, %v1561
    %v1563 = vsel %vm1528, %v1553, %v1562
    %v1565 = vshrl.u32 %v1512, 16
    %v1567 = vrot.slane %v1565, 3
    %v1568 = vshll.u32 %v1512, 16
    %v1570 = vrot.slane %v1568, 4
    %v1571 = vor.u32 %v1567, %v1570
    %v1572 = vsel %vm1528, %v1562, %v1571
    %v1574 = vshrl.u32 %v1513, 16
    %v1576 = vrot.slane %v1574, 3
    %v1577 = vshll.u32 %v1513, 16
    %v1579 = vrot.slane %v1577, 4
    %v1580 = vor.u32 %v1576, %v1579
    %v1581 = vsel %vm1528, %v1571, %v1580
    %v1583 = vshrl.u32 %v1514, 16
    %v1585 = vrot.slane %v1583, 3
    %v1586 = vshll.u32 %v1514, 16
    %v1588 = vrot.slane %v1586, 4
    %v1589 = vor.u32 %v1585, %v1588
    %v1590 = vsel %vm1528, %v1580, %v1589
    %v1592 = vshrl.u32 %v1515, 16
    %v1594 = vrot.slane %v1592, 3
    %v1595 = vshll.u32 %v1515, 16
    %v1597 = vrot.slane %v1595, 4
    %v1598 = vor.u32 %v1594, %v1597
    %v1599 = vsel %vm1528, %v1589, %v1598
    %v1601 = vshrl.u32 %v1516, 16
    %v1603 = vrot.slane %v1601, 3
    %v1604 = vshll.u32 %v1516, 16
    %v1606 = vrot.slane %v1604, 4
    %v1607 = vor.u32 %v1603, %v1606
    %v1608 = vsel %vm1528, %v1598, %v1607
    %v1610 = vshrl.u32 %v1517, 16
    %v1612 = vrot.slane %v1610, 3
    %v1613 = vshll.u32 %v1517, 16
    %v1615 = vrot.slane %v1613, 4
    %v1616 = vor.u32 %v1612, %v1615
    %v1617 = vsel %vm1528, %v1607, %v1616
    %v1619 = vshrl.u32 %v1518, 16
    %v1621 = vrot.slane %v1619, 3
    %v1622 = vshll.u32 %v1518, 16
    %v1624 = vrot.slane %v1622, 4
    %v1625 = vor.u32 %v1621, %v1624
    %v1626 = vsel %vm1528, %v1616, %v1625
    %v1628 = vshrl.u32 %v1519, 16
    %v1630 = vrot.slane %v1628, 3
    %v1631 = vshll.u32 %v1519, 16
    %v1633 = vrot.slane %v1631, 4
    %v1634 = vor.u32 %v1630, %v1633
    %v1635 = vsel %vm1528, %v1625, %v1634
    %v1637 = vshrl.u32 %v1520, 16
    %v1639 = vrot.slane %v1637, 3
    %v1640 = vshll.u32 %v1520, 16
    %v1642 = vrot.slane %v1640, 4
    %v1643 = vor.u32 %v1639, %v1642
    %v1644 = vsel %vm1528, %v1634, %v1643
    %v1646 = vshrl.u32 %v1521, 16
    %v1648 = vrot.slane %v1646, 3
    %v1649 = vshll.u32 %v1521, 16
    %v1651 = vrot.slane %v1649, 4
    %v1652 = vor.u32 %v1648, %v1651
    %v1653 = vsel %vm1528, %v1643, %v1652
    %v1655 = vshrl.u32 %v1522, 16
    %v1657 = vrot.slane %v1655, 3
    %v1658 = vshll.u32 %v1522, 16
    %v1660 = vrot.slane %v1658, 4
    %v1661 = vor.u32 %v1657, %v1660
    %v1662 = vsel %vm1528, %v1652, %v1661
    %v1664 = vshrl.u32 %v1523, 16
    %v1666 = vrot.slane %v1664, 3
    %v1667 = vshll.u32 %v1523, 16
    %v1669 = vrot.slane %v1667, 4
    %v1670 = vor.u32 %v1666, %v1669
    %v1671 = vsel %vm1528, %v1661, %v1670
    %v1673 = vshrl.u32 %v1524, 16
    %v1675 = vrot.slane %v1673, 3
    %v1676 = vshll.u32 %v1524, 16
    %v1678 = vrot.slane %v1676, 4
    %v1679 = vor.u32 %v1675, %v1678
    %v1680 = vsel %vm1528, %v1670, %v1679
    %v1682 = vshrl.u32 %v1525, 16
    %v1684 = vrot.slane %v1682, 3
    %v1685 = vshll.u32 %v1525, 16
    %v1687 = vrot.slane %v1685, 4
    %v1688 = vor.u32 %v1684, %v1687
    %v1689 = vsel %vm1528, %v1679, %v1688
    %v1691 = vshrl.u32 %v1526, 16
    %v1693 = vrot.slane %v1691, 3
    %v1694 = vshll.u32 %v1526, 16
    %v1696 = vrot.slane %v1694, 4
    %v1697 = vor.u32 %v1693, %v1696
    %v1698 = vsel %vm1528, %v1688, %v1697
    %v1700 = vshrl.u32 %v1527, 16
    %v1702 = vrot.slane %v1700, 3
    %v1703 = vshll.u32 %v1527, 16
    %v1705 = vrot.slane %v1703, 4
    %v1706 = vor.u32 %v1702, %v1705
    %v1707 = vsel %vm1528, %v1697, %v1706
    %v1712 = vunpack.c.l.b16 %v1148
    %v1713 = vunpack.c.l.b16 %v1149
    %v1714 = vunpack.c.l.b16 %v1150
    %v1715 = vunpack.c.l.b16 %v1151
    %v1716 = vpack.c.b16 %v1713, %v1712
    %v1717 = vpack.c.b16 %v1715, %v1714
    %v1721 = vsel %vm387, %v1545, 0
    %v1724 = vsel %vm387, %v1554, 0
    %v1727 = vsel %vm387, %v1563, 0
    %v1730 = vsel %vm387, %v1572, 0
    %v1733 = vsel %vm387, %v1581, 0
    %v1736 = vsel %vm387, %v1590, 0
    %v1739 = vsel %vm387, %v1599, 0
    %v1742 = vsel %vm387, %v1608, 0
    %v1745 = vsel %vm387, %v1617, 0
    %v1748 = vsel %vm387, %v1626, 0
    %v1751 = vsel %vm387, %v1635, 0
    %v1754 = vsel %vm387, %v1644, 0
    %v1757 = vsel %vm387, %v1653, 0
    %v1760 = vsel %vm387, %v1662, 0
    %v1763 = vsel %vm387, %v1671, 0
    %v1766 = vsel %vm387, %v1680, 0
    %v1769 = vsel %vm387, %v1689, 0
    %v1772 = vsel %vm387, %v1698, 0
    %v1775 = vsel %vm387, %v1707, 0
    %1777 = vmatprep.subr.bf16.mxu0 0
    %1778 = vmatpush1.bf16.msra.mxu0 0
    %1779 = vmatprep.subr.bf16.mxu0 0
    %1780 = vmatpush1.bf16.msra.mxu0 0
    %1781 = vmatprep.subr.bf16.mxu0 0
    %1782 = vmatpush1.bf16.msra.mxu0 0
    %1783 = vmatprep.subr.bf16.mxu0 0
    %1784 = vmatpush1.bf16.msra.mxu0 0
    %1785 = vmatprep.subr.bf16.mxu0 0
    %1786 = vmatpush1.bf16.msra.mxu0 0
    %1787 = vmatprep.subr.bf16.mxu0 0
    %1788 = vmatpush1.bf16.msra.mxu0 0
    %1789 = vmatprep.subr.bf16.mxu0 0
    %1790 = vmatpush1.bf16.msra.mxu0 %v1717
    %1791 = vmatprep.subr.bf16.mxu0 0
    %1792 = vmatpush1.bf16.msra.mxu0 %v1716
    %1793 = vmatprep.subr.bf16.mxu0 0
    %1794 = vmatpush2.bf16.msra.mxu0 0
    %1795 = vmatprep.subr.bf16.mxu0 0
    %1796 = vmatpush2.bf16.msra.mxu0 0
    %1797 = vmatprep.subr.bf16.mxu0 0
    %1798 = vmatpush2.bf16.msra.mxu0 0
    %1799 = vmatprep.subr.bf16.mxu0 0
    %1800 = vmatpush2.bf16.msra.mxu0 0
    %1801 = vmatprep.subr.bf16.mxu0 0
    %1802 = vmatpush2.bf16.msra.mxu0 0
    %1803 = vmatprep.subr.bf16.mxu0 0
    %1804 = vmatpush2.bf16.msra.mxu0 0
    %1805 = vmatprep.subr.bf16.mxu0 0
    %1806 = vmatpush2.bf16.msra.mxu0 0
    %1807 = vmatprep.subr.bf16.mxu0 0
    %1808 = vmatpush2.bf16.msra.mxu0 0
    %1809 = vmatprep.mubr.bf16.mxu0 0
    %1810 = vmatmul.mubr.bf16.gmra.mxu0 %v1721
    %v1811 = vpop.f32.mrf.mxu0
    %v1812 = vadd.f32 %v1356, %v1811
    %v1813 = vpop.f32.mrf.mxu0
    %v1814 = vpop.f32.mrf.mxu0
    %v1815 = vadd.f32 %v1359, %v1814
    %v1816 = vpop.f32.mrf.mxu0
    %1817 = vmatprep.mubr.bf16.mxu0 0
    %1818 = vmatmul.mubr.bf16.gmra.mxu0 %v1724
    %v1819 = vpop.f32.mrf.mxu0
    %v1820 = vadd.f32 %v1364, %v1819
    %v1821 = vpop.f32.mrf.mxu0
    %v1822 = vpop.f32.mrf.mxu0
    %v1823 = vadd.f32 %v1367, %v1822
    %v1824 = vpop.f32.mrf.mxu0
    %1825 = vmatprep.mubr.bf16.mxu0 0
    %1826 = vmatmul.mubr.bf16.gmra.mxu0 %v1727
    %v1827 = vpop.f32.mrf.mxu0
    %v1828 = vadd.f32 %v1372, %v1827
    %v1829 = vpop.f32.mrf.mxu0
    %v1830 = vpop.f32.mrf.mxu0
    %v1831 = vadd.f32 %v1375, %v1830
    %v1832 = vpop.f32.mrf.mxu0
    %1833 = vmatprep.mubr.bf16.mxu0 0
    %1834 = vmatmul.mubr.bf16.gmra.mxu0 %v1730
    %v1835 = vpop.f32.mrf.mxu0
    %v1836 = vadd.f32 %v1380, %v1835
    %v1837 = vpop.f32.mrf.mxu0
    %v1838 = vpop.f32.mrf.mxu0
    %v1839 = vadd.f32 %v1383, %v1838
    %v1840 = vpop.f32.mrf.mxu0
    %1841 = vmatprep.mubr.bf16.mxu0 0
    %1842 = vmatmul.mubr.bf16.gmra.mxu0 %v1733
    %v1843 = vpop.f32.mrf.mxu0
    %v1844 = vadd.f32 %v1388, %v1843
    %v1845 = vpop.f32.mrf.mxu0
    %v1846 = vpop.f32.mrf.mxu0
    %v1847 = vadd.f32 %v1391, %v1846
    %v1848 = vpop.f32.mrf.mxu0
    %1849 = vmatprep.mubr.bf16.mxu0 0
    %1850 = vmatmul.mubr.bf16.gmra.mxu0 %v1736
    %v1851 = vpop.f32.mrf.mxu0
    %v1852 = vadd.f32 %v1396, %v1851
    %v1853 = vpop.f32.mrf.mxu0
    %v1854 = vpop.f32.mrf.mxu0
    %v1855 = vadd.f32 %v1399, %v1854
    %v1856 = vpop.f32.mrf.mxu0
    %1857 = vmatprep.mubr.bf16.mxu0 0
    %1858 = vmatmul.mubr.bf16.gmra.mxu0 %v1739
    %v1859 = vpop.f32.mrf.mxu0
    %v1860 = vadd.f32 %v1404, %v1859
    %v1861 = vpop.f32.mrf.mxu0
    %v1862 = vpop.f32.mrf.mxu0
    %v1863 = vadd.f32 %v1407, %v1862
    %v1864 = vpop.f32.mrf.mxu0
    %1865 = vmatprep.mubr.bf16.mxu0 0
    %1866 = vmatmul.mubr.bf16.gmra.mxu0 %v1742
    %v1867 = vpop.f32.mrf.mxu0
    %v1868 = vadd.f32 %v1412, %v1867
    %v1869 = vpop.f32.mrf.mxu0
    %v1870 = vpop.f32.mrf.mxu0
    %v1871 = vadd.f32 %v1415, %v1870
    %v1872 = vpop.f32.mrf.mxu0
    %1873 = vmatprep.mubr.bf16.mxu0 0
    %1874 = vmatmul.mubr.bf16.gmra.mxu0 %v1745
    %v1875 = vpop.f32.mrf.mxu0
    %v1876 = vadd.f32 %v1420, %v1875
    %v1877 = vpop.f32.mrf.mxu0
    %v1878 = vpop.f32.mrf.mxu0
    %v1879 = vadd.f32 %v1423, %v1878
    %v1880 = vpop.f32.mrf.mxu0
    %1881 = vmatprep.mubr.bf16.mxu0 0
    %1882 = vmatmul.mubr.bf16.gmra.mxu0 %v1748
    %v1883 = vpop.f32.mrf.mxu0
    %v1884 = vadd.f32 %v1428, %v1883
    %v1885 = vpop.f32.mrf.mxu0
    %v1886 = vpop.f32.mrf.mxu0
    %v1887 = vadd.f32 %v1431, %v1886
    %v1888 = vpop.f32.mrf.mxu0
    %1889 = vmatprep.mubr.bf16.mxu0 0
    %1890 = vmatmul.mubr.bf16.gmra.mxu0 %v1751
    %v1891 = vpop.f32.mrf.mxu0
    %v1892 = vadd.f32 %v1436, %v1891
    %v1893 = vpop.f32.mrf.mxu0
    %v1894 = vpop.f32.mrf.mxu0
    %v1895 = vadd.f32 %v1439, %v1894
    %v1896 = vpop.f32.mrf.mxu0
    %1897 = vmatprep.mubr.bf16.mxu0 0
    %1898 = vmatmul.mubr.bf16.gmra.mxu0 %v1754
    %v1899 = vpop.f32.mrf.mxu0
    %v1900 = vadd.f32 %v1444, %v1899
    %v1901 = vpop.f32.mrf.mxu0
    %v1902 = vpop.f32.mrf.mxu0
    %v1903 = vadd.f32 %v1447, %v1902
    %v1904 = vpop.f32.mrf.mxu0
    %1905 = vmatprep.mubr.bf16.mxu0 0
    %1906 = vmatmul.mubr.bf16.gmra.mxu0 %v1757
    %v1907 = vpop.f32.mrf.mxu0
    %v1908 = vadd.f32 %v1452, %v1907
    %v1909 = vpop.f32.mrf.mxu0
    %v1910 = vpop.f32.mrf.mxu0
    %v1911 = vadd.f32 %v1455, %v1910
    %v1912 = vpop.f32.mrf.mxu0
    %1913 = vmatprep.mubr.bf16.mxu0 0
    %1914 = vmatmul.mubr.bf16.gmra.mxu0 %v1760
    %v1915 = vpop.f32.mrf.mxu0
    %v1916 = vadd.f32 %v1460, %v1915
    %v1917 = vpop.f32.mrf.mxu0
    %v1918 = vpop.f32.mrf.mxu0
    %v1919 = vadd.f32 %v1463, %v1918
    %v1920 = vpop.f32.mrf.mxu0
    %1921 = vmatprep.mubr.bf16.mxu0 0
    %1922 = vmatmul.mubr.bf16.gmra.mxu0 %v1763
    %v1923 = vpop.f32.mrf.mxu0
    %v1924 = vadd.f32 %v1468, %v1923
    %v1925 = vpop.f32.mrf.mxu0
    %v1926 = vpop.f32.mrf.mxu0
    %v1927 = vadd.f32 %v1471, %v1926
    %v1928 = vpop.f32.mrf.mxu0
    %1929 = vmatprep.mubr.bf16.mxu0 0
    %1930 = vmatmul.mubr.bf16.gmra.mxu0 %v1766
    %v1931 = vpop.f32.mrf.mxu0
    %v1932 = vadd.f32 %v1476, %v1931
    %v1933 = vpop.f32.mrf.mxu0
    %v1934 = vpop.f32.mrf.mxu0
    %v1935 = vadd.f32 %v1479, %v1934
    %v1936 = vpop.f32.mrf.mxu0
    %1937 = vmatprep.mubr.bf16.mxu0 0
    %1938 = vmatmul.mubr.bf16.gmra.mxu0 %v1769
    %v1939 = vpop.f32.mrf.mxu0
    %v1940 = vadd.f32 %v1484, %v1939
    %v1941 = vpop.f32.mrf.mxu0
    %v1942 = vpop.f32.mrf.mxu0
    %v1943 = vadd.f32 %v1487, %v1942
    %v1944 = vpop.f32.mrf.mxu0
    %1945 = vmatprep.mubr.bf16.mxu0 0
    %1946 = vmatmul.mubr.bf16.gmra.mxu0 %v1772
    %v1947 = vpop.f32.mrf.mxu0
    %v1948 = vadd.f32 %v1492, %v1947
    %v1949 = vpop.f32.mrf.mxu0
    %v1950 = vpop.f32.mrf.mxu0
    %v1951 = vadd.f32 %v1495, %v1950
    %v1952 = vpop.f32.mrf.mxu0
    %1953 = vmatprep.mubr.bf16.mxu0 0
    %1954 = vmatmul.mubr.bf16.gmra.mxu0 %v1775
    %v1955 = vpop.f32.mrf.mxu0
    %v1956 = vadd.f32 %v1500, %v1955
    %v1957 = vpop.f32.mrf.mxu0
    %v1958 = vpop.f32.mrf.mxu0
    %v1959 = vadd.f32 %v1503, %v1958
    %v1960 = vpop.f32.mrf.mxu0
    %1961 = vdwg.mxu0
    %v1962 = vld [vmem:[#allocation3 + $0x4] sm:$0xf]
    %v1963 = vld [vmem:[#allocation3 + $0x8] sm:$0xf]
    %v1964 = vld [vmem:[#allocation3 + $0xc] sm:$0xf]
    %v1965 = vld [vmem:[#allocation3 + $0x10] sm:$0xf]
    %v1966 = vld [vmem:[#allocation3 + $0x14] sm:$0xf]
    %v1967 = vld [vmem:[#allocation3 + $0x18] sm:$0xf]
    %v1968 = vld [vmem:[#allocation3 + $0x1c] sm:$0xf]
    %v1969 = vld [vmem:[#allocation3 + $0x20] sm:$0xf]
    %v1970 = vld [vmem:[#allocation3 + $0x24] sm:$0xf]
    %v1971 = vld [vmem:[#allocation3 + $0x28] sm:$0xf]
    %v1972 = vld [vmem:[#allocation3 + $0x2c] sm:$0xf]
    %v1973 = vld [vmem:[#allocation3 + $0x30] sm:$0xf]
    %v1974 = vld [vmem:[#allocation3 + $0x34] sm:$0xf]
    %v1975 = vld [vmem:[#allocation3 + $0x38] sm:$0xf]
    %v1976 = vld [vmem:[#allocation3 + $0x3c] sm:$0xf]
    %v1977 = vld [vmem:[#allocation3 + $0x40] sm:$0xf]
    %v1978 = vld [vmem:[#allocation3 + $0x44] sm:$0xf]
    %v1979 = vld [vmem:[#allocation3 + $0x48] sm:$0xf]
    %v1980 = vld [vmem:[#allocation3 + $0x4c] sm:$0xf]
    %v1981 = vld [vmem:[#allocation3 + $0x50] sm:$0xf]
    %v1982 = vld [vmem:[#allocation3 + $0x54] sm:$0xf]
    %v1983 = vld [vmem:[#allocation3 + $0x58] sm:$0xf]
    %v1984 = vld [vmem:[#allocation3 + $0x5c] sm:$0xf]
    %v1985 = vld [vmem:[#allocation3 + $0x60] sm:$0xf]
    %v1986 = vld [vmem:[#allocation3 + $0x64] sm:$0xf]
    %v1987 = vld [vmem:[#allocation3 + $0x68] sm:$0xf]
    %v1988 = vld [vmem:[#allocation3 + $0x6c] sm:$0xf]
    %v1989 = vld [vmem:[#allocation3 + $0x70] sm:$0xf]
    %v1990 = vld [vmem:[#allocation3 + $0x74] sm:$0xf]
    %v1991 = vld [vmem:[#allocation3 + $0x78] sm:$0xf]
    %v1992 = vld [vmem:[#allocation3 + $0x7c] sm:$0xf]
    %v1993 = vld [vmem:[#allocation3 + $0x80] sm:$0xf]
    %v1994 = vld [vmem:[#allocation3 + $0x84] sm:$0xf]
    %v1995 = vld [vmem:[#allocation3 + $0x88] sm:$0xf]
    %v1996 = vld [vmem:[#allocation3 + $0x8c] sm:$0xf]
    %v1997 = vld [vmem:[#allocation3 + $0x90] sm:$0xf]
    %v1998 = vld [vmem:[#allocation3 + $0x94] sm:$0xf]
    %v1999 = vld [vmem:[#allocation3 + $0x98] sm:$0xf]
    %v2000 = vld [vmem:[#allocation3 + $0x9c] sm:$0x1]
    %s2001 = scalar_lea.vmem [#allocation9], 32
    %v2002 = vld [vmem:[%s2001] sm:$0xf]
    %v2003 = vld [vmem:[%s2001 + $0x4] sm:$0xf]
    %v2004 = vld [vmem:[%s2001 + $0x8] sm:$0xf]
    %v2005 = vld [vmem:[%s2001 + $0xc] sm:$0xf]
    %v2045 = vunpack.c.l.b16 %v1962
    %v2046 = vunpack.c.l.b16 %v1963
    %v2047 = vunpack.c.l.b16 %v1964
    %v2048 = vunpack.c.l.b16 %v1965
    %v2049 = vunpack.c.l.b16 %v1966
    %v2050 = vunpack.c.l.b16 %v1967
    %v2051 = vunpack.c.l.b16 %v1968
    %v2052 = vunpack.c.l.b16 %v1969
    %v2053 = vunpack.c.l.b16 %v1970
    %v2054 = vunpack.c.l.b16 %v1971
    %v2055 = vunpack.c.l.b16 %v1972
    %v2056 = vunpack.c.l.b16 %v1973
    %v2057 = vunpack.c.l.b16 %v1974
    %v2058 = vunpack.c.l.b16 %v1975
    %v2059 = vunpack.c.l.b16 %v1976
    %v2060 = vunpack.c.l.b16 %v1977
    %v2061 = vunpack.c.l.b16 %v1978
    %v2062 = vunpack.c.l.b16 %v1979
    %v2063 = vunpack.c.l.b16 %v1980
    %v2064 = vunpack.c.l.b16 %v1981
    %v2065 = vunpack.c.l.b16 %v1982
    %v2066 = vunpack.c.l.b16 %v1983
    %v2067 = vunpack.c.l.b16 %v1984
    %v2068 = vunpack.c.l.b16 %v1985
    %v2069 = vunpack.c.l.b16 %v1986
    %v2070 = vunpack.c.l.b16 %v1987
    %v2071 = vunpack.c.l.b16 %v1988
    %v2072 = vunpack.c.l.b16 %v1989
    %v2073 = vunpack.c.l.b16 %v1990
    %v2074 = vunpack.c.l.b16 %v1991
    %v2075 = vunpack.c.l.b16 %v1992
    %v2076 = vunpack.c.l.b16 %v1993
    %v2077 = vunpack.c.l.b16 %v1994
    %v2078 = vunpack.c.l.b16 %v1995
    %v2079 = vunpack.c.l.b16 %v1996
    %v2080 = vunpack.c.l.b16 %v1997
    %v2081 = vunpack.c.l.b16 %v1998
    %v2082 = vunpack.c.l.b16 %v1999
    %v2083 = vunpack.c.l.b16 %v2000
    %v2084 = vpack.c.b16 %v2046, %v2045
    %v2085 = vpack.c.b16 %v2048, %v2047
    %v2086 = vpack.c.b16 %v2050, %v2049
    %v2087 = vpack.c.b16 %v2052, %v2051
    %v2088 = vpack.c.b16 %v2054, %v2053
    %v2089 = vpack.c.b16 %v2056, %v2055
    %v2090 = vpack.c.b16 %v2058, %v2057
    %v2091 = vpack.c.b16 %v2060, %v2059
    %v2092 = vpack.c.b16 %v2062, %v2061
    %v2093 = vpack.c.b16 %v2064, %v2063
    %v2094 = vpack.c.b16 %v2066, %v2065
    %v2095 = vpack.c.b16 %v2068, %v2067
    %v2096 = vpack.c.b16 %v2070, %v2069
    %v2097 = vpack.c.b16 %v2072, %v2071
    %v2098 = vpack.c.b16 %v2074, %v2073
    %v2099 = vpack.c.b16 %v2076, %v2075
    %v2100 = vpack.c.b16 %v2078, %v2077
    %v2101 = vpack.c.b16 %v2080, %v2079
    %v2102 = vpack.c.b16 %v2082, %v2081
    %v2103 = vpack.c.b16 %v2083, %v2083
    %vm2104 = vsmask.f32 7424
    %v2106 = vshrl.u32 %v2084, 16
    %v2108 = vshll.u32 %v2084, 16
    %v2110 = vrot.slane %v2108, 1
    %v2111 = vor.u32 %v2106, %v2110
    %v2113 = vshll.u32 %v2085, 16
    %v2115 = vrot.slane %v2113, 1
    %v2116 = vsel %vm2104, %v2111, %v2115
    %v2117 = vshrl.u32 %v2085, 16
    %v2119 = vor.u32 %v2117, %v2115
    %v2121 = vshll.u32 %v2086, 16
    %v2123 = vrot.slane %v2121, 1
    %v2124 = vsel %vm2104, %v2119, %v2123
    %v2125 = vshrl.u32 %v2086, 16
    %v2127 = vor.u32 %v2125, %v2123
    %v2129 = vshll.u32 %v2087, 16
    %v2131 = vrot.slane %v2129, 1
    %v2132 = vsel %vm2104, %v2127, %v2131
    %v2133 = vshrl.u32 %v2087, 16
    %v2135 = vor.u32 %v2133, %v2131
    %v2137 = vshll.u32 %v2088, 16
    %v2139 = vrot.slane %v2137, 1
    %v2140 = vsel %vm2104, %v2135, %v2139
    %v2141 = vshrl.u32 %v2088, 16
    %v2143 = vor.u32 %v2141, %v2139
    %v2145 = vshll.u32 %v2089, 16
    %v2147 = vrot.slane %v2145, 1
    %v2148 = vsel %vm2104, %v2143, %v2147
    %v2149 = vshrl.u32 %v2089, 16
    %v2151 = vor.u32 %v2149, %v2147
    %v2153 = vshll.u32 %v2090, 16
    %v2155 = vrot.slane %v2153, 1
    %v2156 = vsel %vm2104, %v2151, %v2155
    %v2157 = vshrl.u32 %v2090, 16
    %v2159 = vor.u32 %v2157, %v2155
    %v2161 = vshll.u32 %v2091, 16
    %v2163 = vrot.slane %v2161, 1
    %v2164 = vsel %vm2104, %v2159, %v2163
    %v2165 = vshrl.u32 %v2091, 16
    %v2167 = vor.u32 %v2165, %v2163
    %v2169 = vshll.u32 %v2092, 16
    %v2171 = vrot.slane %v2169, 1
    %v2172 = vsel %vm2104, %v2167, %v2171
    %v2173 = vshrl.u32 %v2092, 16
    %v2175 = vor.u32 %v2173, %v2171
    %v2177 = vshll.u32 %v2093, 16
    %v2179 = vrot.slane %v2177, 1
    %v2180 = vsel %vm2104, %v2175, %v2179
    %v2181 = vshrl.u32 %v2093, 16
    %v2183 = vor.u32 %v2181, %v2179
    %v2185 = vshll.u32 %v2094, 16
    %v2187 = vrot.slane %v2185, 1
    %v2188 = vsel %vm2104, %v2183, %v2187
    %v2189 = vshrl.u32 %v2094, 16
    %v2191 = vor.u32 %v2189, %v2187
    %v2193 = vshll.u32 %v2095, 16
    %v2195 = vrot.slane %v2193, 1
    %v2196 = vsel %vm2104, %v2191, %v2195
    %v2197 = vshrl.u32 %v2095, 16
    %v2199 = vor.u32 %v2197, %v2195
    %v2201 = vshll.u32 %v2096, 16
    %v2203 = vrot.slane %v2201, 1
    %v2204 = vsel %vm2104, %v2199, %v2203
    %v2205 = vshrl.u32 %v2096, 16
    %v2207 = vor.u32 %v2205, %v2203
    %v2209 = vshll.u32 %v2097, 16
    %v2211 = vrot.slane %v2209, 1
    %v2212 = vsel %vm2104, %v2207, %v2211
    %v2213 = vshrl.u32 %v2097, 16
    %v2215 = vor.u32 %v2213, %v2211
    %v2217 = vshll.u32 %v2098, 16
    %v2219 = vrot.slane %v2217, 1
    %v2220 = vsel %vm2104, %v2215, %v2219
    %v2221 = vshrl.u32 %v2098, 16
    %v2223 = vor.u32 %v2221, %v2219
    %v2225 = vshll.u32 %v2099, 16
    %v2227 = vrot.slane %v2225, 1
    %v2228 = vsel %vm2104, %v2223, %v2227
    %v2229 = vshrl.u32 %v2099, 16
    %v2231 = vor.u32 %v2229, %v2227
    %v2233 = vshll.u32 %v2100, 16
    %v2235 = vrot.slane %v2233, 1
    %v2236 = vsel %vm2104, %v2231, %v2235
    %v2237 = vshrl.u32 %v2100, 16
    %v2239 = vor.u32 %v2237, %v2235
    %v2241 = vshll.u32 %v2101, 16
    %v2243 = vrot.slane %v2241, 1
    %v2244 = vsel %vm2104, %v2239, %v2243
    %v2245 = vshrl.u32 %v2101, 16
    %v2247 = vor.u32 %v2245, %v2243
    %v2249 = vshll.u32 %v2102, 16
    %v2251 = vrot.slane %v2249, 1
    %v2252 = vsel %vm2104, %v2247, %v2251
    %v2253 = vshrl.u32 %v2102, 16
    %v2255 = vor.u32 %v2253, %v2251
    %v2257 = vshll.u32 %v2103, 16
    %v2259 = vrot.slane %v2257, 1
    %v2260 = vsel %vm2104, %v2255, %v2259
    %v2265 = vunpack.c.l.b16 %v2002
    %v2266 = vunpack.c.l.b16 %v2003
    %v2267 = vunpack.c.l.b16 %v2004
    %v2268 = vunpack.c.l.b16 %v2005
    %v2269 = vpack.c.b16 %v2266, %v2265
    %v2270 = vpack.c.b16 %v2268, %v2267
    %v2274 = vsel %vm387, %v2116, 0
    %v2277 = vsel %vm387, %v2124, 0
    %v2280 = vsel %vm387, %v2132, 0
    %v2283 = vsel %vm387, %v2140, 0
    %v2286 = vsel %vm387, %v2148, 0
    %v2289 = vsel %vm387, %v2156, 0
    %v2292 = vsel %vm387, %v2164, 0
    %v2295 = vsel %vm387, %v2172, 0
    %v2298 = vsel %vm387, %v2180, 0
    %v2301 = vsel %vm387, %v2188, 0
    %v2304 = vsel %vm387, %v2196, 0
    %v2307 = vsel %vm387, %v2204, 0
    %v2310 = vsel %vm387, %v2212, 0
    %v2313 = vsel %vm387, %v2220, 0
    %v2316 = vsel %vm387, %v2228, 0
    %v2319 = vsel %vm387, %v2236, 0
    %v2322 = vsel %vm387, %v2244, 0
    %v2325 = vsel %vm387, %v2252, 0
    %v2328 = vsel %vm387, %v2260, 0
    %2330 = vmatprep.subr.bf16.mxu0 0
    %2331 = vmatpush1.bf16.msra.mxu0 0
    %2332 = vmatprep.subr.bf16.mxu0 0
    %2333 = vmatpush1.bf16.msra.mxu0 0
    %2334 = vmatprep.subr.bf16.mxu0 0
    %2335 = vmatpush1.bf16.msra.mxu0 0
    %2336 = vmatprep.subr.bf16.mxu0 0
    %2337 = vmatpush1.bf16.msra.mxu0 0
    %2338 = vmatprep.subr.bf16.mxu0 0
    %2339 = vmatpush1.bf16.msra.mxu0 0
    %2340 = vmatprep.subr.bf16.mxu0 0
    %2341 = vmatpush1.bf16.msra.mxu0 0
    %2342 = vmatprep.subr.bf16.mxu0 0
    %2343 = vmatpush1.bf16.msra.mxu0 %v2270
    %2344 = vmatprep.subr.bf16.mxu0 0
    %2345 = vmatpush1.bf16.msra.mxu0 %v2269
    %2346 = vmatprep.subr.bf16.mxu0 0
    %2347 = vmatpush2.bf16.msra.mxu0 0
    %2348 = vmatprep.subr.bf16.mxu0 0
    %2349 = vmatpush2.bf16.msra.mxu0 0
    %2350 = vmatprep.subr.bf16.mxu0 0
    %2351 = vmatpush2.bf16.msra.mxu0 0
    %2352 = vmatprep.subr.bf16.mxu0 0
    %2353 = vmatpush2.bf16.msra.mxu0 0
    %2354 = vmatprep.subr.bf16.mxu0 0
    %2355 = vmatpush2.bf16.msra.mxu0 0
    %2356 = vmatprep.subr.bf16.mxu0 0
    %2357 = vmatpush2.bf16.msra.mxu0 0
    %2358 = vmatprep.subr.bf16.mxu0 0
    %2359 = vmatpush2.bf16.msra.mxu0 0
    %2360 = vmatprep.subr.bf16.mxu0 0
    %2361 = vmatpush2.bf16.msra.mxu0 0
    %2362 = vmatprep.mubr.bf16.mxu0 0
    %2363 = vmatmul.mubr.bf16.gmra.mxu0 %v2274
    %v2364 = vpop.f32.mrf.mxu0
    %v2365 = vadd.f32 0.0, %v2364
    %v2366 = vpop.f32.mrf.mxu0
    %v2367 = vpop.f32.mrf.mxu0
    %v2368 = vadd.f32 0.0, %v2367
    %v2369 = vpop.f32.mrf.mxu0
    %2370 = vmatprep.mubr.bf16.mxu0 0
    %2371 = vmatmul.mubr.bf16.gmra.mxu0 %v2277
    %v2372 = vpop.f32.mrf.mxu0
    %v2373 = vadd.f32 0.0, %v2372
    %v2374 = vpop.f32.mrf.mxu0
    %v2375 = vpop.f32.mrf.mxu0
    %v2376 = vadd.f32 0.0, %v2375
    %v2377 = vpop.f32.mrf.mxu0
    %2378 = vmatprep.mubr.bf16.mxu0 0
    %2379 = vmatmul.mubr.bf16.gmra.mxu0 %v2280
    %v2380 = vpop.f32.mrf.mxu0
    %v2381 = vadd.f32 0.0, %v2380
    %v2382 = vpop.f32.mrf.mxu0
    %v2383 = vpop.f32.mrf.mxu0
    %v2384 = vadd.f32 0.0, %v2383
    %v2385 = vpop.f32.mrf.mxu0
    %2386 = vmatprep.mubr.bf16.mxu0 0
    %2387 = vmatmul.mubr.bf16.gmra.mxu0 %v2283
    %v2388 = vpop.f32.mrf.mxu0
    %v2389 = vadd.f32 0.0, %v2388
    %v2390 = vpop.f32.mrf.mxu0
    %v2391 = vpop.f32.mrf.mxu0
    %v2392 = vadd.f32 0.0, %v2391
    %v2393 = vpop.f32.mrf.mxu0
    %2394 = vmatprep.mubr.bf16.mxu0 0
    %2395 = vmatmul.mubr.bf16.gmra.mxu0 %v2286
    %v2396 = vpop.f32.mrf.mxu0
    %v2397 = vadd.f32 0.0, %v2396
    %v2398 = vpop.f32.mrf.mxu0
    %v2399 = vpop.f32.mrf.mxu0
    %v2400 = vadd.f32 0.0, %v2399
    %v2401 = vpop.f32.mrf.mxu0
    %2402 = vmatprep.mubr.bf16.mxu0 0
    %2403 = vmatmul.mubr.bf16.gmra.mxu0 %v2289
    %v2404 = vpop.f32.mrf.mxu0
    %v2405 = vadd.f32 0.0, %v2404
    %v2406 = vpop.f32.mrf.mxu0
    %v2407 = vpop.f32.mrf.mxu0
    %v2408 = vadd.f32 0.0, %v2407
    %v2409 = vpop.f32.mrf.mxu0
    %2410 = vmatprep.mubr.bf16.mxu0 0
    %2411 = vmatmul.mubr.bf16.gmra.mxu0 %v2292
    %v2412 = vpop.f32.mrf.mxu0
    %v2413 = vadd.f32 0.0, %v2412
    %v2414 = vpop.f32.mrf.mxu0
    %v2415 = vpop.f32.mrf.mxu0
    %v2416 = vadd.f32 0.0, %v2415
    %v2417 = vpop.f32.mrf.mxu0
    %2418 = vmatprep.mubr.bf16.mxu0 0
    %2419 = vmatmul.mubr.bf16.gmra.mxu0 %v2295
    %v2420 = vpop.f32.mrf.mxu0
    %v2421 = vadd.f32 0.0, %v2420
    %v2422 = vpop.f32.mrf.mxu0
    %v2423 = vpop.f32.mrf.mxu0
    %v2424 = vadd.f32 0.0, %v2423
    %v2425 = vpop.f32.mrf.mxu0
    %2426 = vmatprep.mubr.bf16.mxu0 0
    %2427 = vmatmul.mubr.bf16.gmra.mxu0 %v2298
    %v2428 = vpop.f32.mrf.mxu0
    %v2429 = vadd.f32 0.0, %v2428
    %v2430 = vpop.f32.mrf.mxu0
    %v2431 = vpop.f32.mrf.mxu0
    %v2432 = vadd.f32 0.0, %v2431
    %v2433 = vpop.f32.mrf.mxu0
    %2434 = vmatprep.mubr.bf16.mxu0 0
    %2435 = vmatmul.mubr.bf16.gmra.mxu0 %v2301
    %v2436 = vpop.f32.mrf.mxu0
    %v2437 = vadd.f32 0.0, %v2436
    %v2438 = vpop.f32.mrf.mxu0
    %v2439 = vpop.f32.mrf.mxu0
    %v2440 = vadd.f32 0.0, %v2439
    %v2441 = vpop.f32.mrf.mxu0
    %2442 = vmatprep.mubr.bf16.mxu0 0
    %2443 = vmatmul.mubr.bf16.gmra.mxu0 %v2304
    %v2444 = vpop.f32.mrf.mxu0
    %v2445 = vadd.f32 0.0, %v2444
    %v2446 = vpop.f32.mrf.mxu0
    %v2447 = vpop.f32.mrf.mxu0
    %v2448 = vadd.f32 0.0, %v2447
    %v2449 = vpop.f32.mrf.mxu0
    %2450 = vmatprep.mubr.bf16.mxu0 0
    %2451 = vmatmul.mubr.bf16.gmra.mxu0 %v2307
    %v2452 = vpop.f32.mrf.mxu0
    %v2453 = vadd.f32 0.0, %v2452
    %v2454 = vpop.f32.mrf.mxu0
    %v2455 = vpop.f32.mrf.mxu0
    %v2456 = vadd.f32 0.0, %v2455
    %v2457 = vpop.f32.mrf.mxu0
    %2458 = vmatprep.mubr.bf16.mxu0 0
    %2459 = vmatmul.mubr.bf16.gmra.mxu0 %v2310
    %v2460 = vpop.f32.mrf.mxu0
    %v2461 = vadd.f32 0.0, %v2460
    %v2462 = vpop.f32.mrf.mxu0
    %v2463 = vpop.f32.mrf.mxu0
    %v2464 = vadd.f32 0.0, %v2463
    %v2465 = vpop.f32.mrf.mxu0
    %2466 = vmatprep.mubr.bf16.mxu0 0
    %2467 = vmatmul.mubr.bf16.gmra.mxu0 %v2313
    %v2468 = vpop.f32.mrf.mxu0
    %v2469 = vadd.f32 0.0, %v2468
    %v2470 = vpop.f32.mrf.mxu0
    %v2471 = vpop.f32.mrf.mxu0
    %v2472 = vadd.f32 0.0, %v2471
    %v2473 = vpop.f32.mrf.mxu0
    %2474 = vmatprep.mubr.bf16.mxu0 0
    %2475 = vmatmul.mubr.bf16.gmra.mxu0 %v2316
    %v2476 = vpop.f32.mrf.mxu0
    %v2477 = vadd.f32 0.0, %v2476
    %v2478 = vpop.f32.mrf.mxu0
    %v2479 = vpop.f32.mrf.mxu0
    %v2480 = vadd.f32 0.0, %v2479
    %v2481 = vpop.f32.mrf.mxu0
    %2482 = vmatprep.mubr.bf16.mxu0 0
    %2483 = vmatmul.mubr.bf16.gmra.mxu0 %v2319
    %v2484 = vpop.f32.mrf.mxu0
    %v2485 = vadd.f32 0.0, %v2484
    %v2486 = vpop.f32.mrf.mxu0
    %v2487 = vpop.f32.mrf.mxu0
    %v2488 = vadd.f32 0.0, %v2487
    %v2489 = vpop.f32.mrf.mxu0
    %2490 = vmatprep.mubr.bf16.mxu0 0
    %2491 = vmatmul.mubr.bf16.gmra.mxu0 %v2322
    %v2492 = vpop.f32.mrf.mxu0
    %v2493 = vadd.f32 0.0, %v2492
    %v2494 = vpop.f32.mrf.mxu0
    %v2495 = vpop.f32.mrf.mxu0
    %v2496 = vadd.f32 0.0, %v2495
    %v2497 = vpop.f32.mrf.mxu0
    %2498 = vmatprep.mubr.bf16.mxu0 0
    %2499 = vmatmul.mubr.bf16.gmra.mxu0 %v2325
    %v2500 = vpop.f32.mrf.mxu0
    %v2501 = vadd.f32 0.0, %v2500
    %v2502 = vpop.f32.mrf.mxu0
    %v2503 = vpop.f32.mrf.mxu0
    %v2504 = vadd.f32 0.0, %v2503
    %v2505 = vpop.f32.mrf.mxu0
    %2506 = vmatprep.mubr.bf16.mxu0 0
    %2507 = vmatmul.mubr.bf16.gmra.mxu0 %v2328
    %v2508 = vpop.f32.mrf.mxu0
    %v2509 = vadd.f32 0.0, %v2508
    %v2510 = vpop.f32.mrf.mxu0
    %v2511 = vpop.f32.mrf.mxu0
    %v2512 = vadd.f32 0.0, %v2511
    %v2513 = vpop.f32.mrf.mxu0
    %2514 = vdwg.mxu0
    %v2515 = vadd.f32 %v1812, %v2365
    %v2516 = vadd.f32 %v1815, %v2368
    %v2517 = vadd.f32 %v1820, %v2373
    %v2518 = vadd.f32 %v1823, %v2376
    %v2519 = vadd.f32 %v1828, %v2381
    %v2520 = vadd.f32 %v1831, %v2384
    %v2521 = vadd.f32 %v1836, %v2389
    %v2522 = vadd.f32 %v1839, %v2392
    %v2523 = vadd.f32 %v1844, %v2397
    %v2524 = vadd.f32 %v1847, %v2400
    %v2525 = vadd.f32 %v1852, %v2405
    %v2526 = vadd.f32 %v1855, %v2408
    %v2527 = vadd.f32 %v1860, %v2413
    %v2528 = vadd.f32 %v1863, %v2416
    %v2529 = vadd.f32 %v1868, %v2421
    %v2530 = vadd.f32 %v1871, %v2424
    %v2531 = vadd.f32 %v1876, %v2429
    %v2532 = vadd.f32 %v1879, %v2432
    %v2533 = vadd.f32 %v1884, %v2437
    %v2534 = vadd.f32 %v1887, %v2440
    %v2535 = vadd.f32 %v1892, %v2445
    %v2536 = vadd.f32 %v1895, %v2448
    %v2537 = vadd.f32 %v1900, %v2453
    %v2538 = vadd.f32 %v1903, %v2456
    %v2539 = vadd.f32 %v1908, %v2461
    %v2540 = vadd.f32 %v1911, %v2464
    %v2541 = vadd.f32 %v1916, %v2469
    %v2542 = vadd.f32 %v1919, %v2472
    %v2543 = vadd.f32 %v1924, %v2477
    %v2544 = vadd.f32 %v1927, %v2480
    %v2545 = vadd.f32 %v1932, %v2485
    %v2546 = vadd.f32 %v1935, %v2488
    %v2547 = vadd.f32 %v1940, %v2493
    %v2548 = vadd.f32 %v1943, %v2496
    %v2549 = vadd.f32 %v1948, %v2501
    %v2550 = vadd.f32 %v1951, %v2504
    %v2551 = vadd.f32 %v1956, %v2509
    %v2552 = vadd.f32 %v1959, %v2512
    %v2553 = vld [vmem:[#allocation3 + $0x8] sm:$0x8]
    %v2554 = vld [vmem:[#allocation3 + $0xc] sm:$0xf]
    %v2555 = vld [vmem:[#allocation3 + $0x10] sm:$0xf]
    %v2556 = vld [vmem:[#allocation3 + $0x14] sm:$0xf]
    %v2557 = vld [vmem:[#allocation3 + $0x18] sm:$0xf]
    %v2558 = vld [vmem:[#allocation3 + $0x1c] sm:$0xf]
    %v2559 = vld [vmem:[#allocation3 + $0x20] sm:$0xf]
    %v2560 = vld [vmem:[#allocation3 + $0x24] sm:$0xf]
    %v2561 = vld [vmem:[#allocation3 + $0x28] sm:$0xf]
    %v2562 = vld [vmem:[#allocation3 + $0x2c] sm:$0xf]
    %v2563 = vld [vmem:[#allocation3 + $0x30] sm:$0xf]
    %v2564 = vld [vmem:[#allocation3 + $0x34] sm:$0xf]
    %v2565 = vld [vmem:[#allocation3 + $0x38] sm:$0xf]
    %v2566 = vld [vmem:[#allocation3 + $0x3c] sm:$0xf]
    %v2567 = vld [vmem:[#allocation3 + $0x40] sm:$0xf]
    %v2568 = vld [vmem:[#allocation3 + $0x44] sm:$0xf]
    %v2569 = vld [vmem:[#allocation3 + $0x48] sm:$0xf]
    %v2570 = vld [vmem:[#allocation3 + $0x4c] sm:$0xf]
    %v2571 = vld [vmem:[#allocation3 + $0x50] sm:$0xf]
    %v2572 = vld [vmem:[#allocation3 + $0x54] sm:$0xf]
    %v2573 = vld [vmem:[#allocation3 + $0x58] sm:$0xf]
    %v2574 = vld [vmem:[#allocation3 + $0x5c] sm:$0xf]
    %v2575 = vld [vmem:[#allocation3 + $0x60] sm:$0xf]
    %v2576 = vld [vmem:[#allocation3 + $0x64] sm:$0xf]
    %v2577 = vld [vmem:[#allocation3 + $0x68] sm:$0xf]
    %v2578 = vld [vmem:[#allocation3 + $0x6c] sm:$0xf]
    %v2579 = vld [vmem:[#allocation3 + $0x70] sm:$0xf]
    %v2580 = vld [vmem:[#allocation3 + $0x74] sm:$0xf]
    %v2581 = vld [vmem:[#allocation3 + $0x78] sm:$0xf]
    %v2582 = vld [vmem:[#allocation3 + $0x7c] sm:$0xf]
    %v2583 = vld [vmem:[#allocation3 + $0x80] sm:$0xf]
    %v2584 = vld [vmem:[#allocation3 + $0x84] sm:$0xf]
    %v2585 = vld [vmem:[#allocation3 + $0x88] sm:$0xf]
    %v2586 = vld [vmem:[#allocation3 + $0x8c] sm:$0xf]
    %v2587 = vld [vmem:[#allocation3 + $0x90] sm:$0xf]
    %v2588 = vld [vmem:[#allocation3 + $0x94] sm:$0xf]
    %v2589 = vld [vmem:[#allocation3 + $0x98] sm:$0xf]
    %v2590 = vld [vmem:[#allocation3 + $0x9c] sm:$0xf]
    %v2591 = vld [vmem:[#allocation3 + $0xa0] sm:$0xf]
    %s2592 = scalar_lea.vmem [#allocation9], 48
    %v2593 = vld [vmem:[%s2592] sm:$0xf]
    %v2594 = vld [vmem:[%s2592 + $0x4] sm:$0xf]
    %v2595 = vld [vmem:[%s2592 + $0x8] sm:$0xf]
    %v2596 = vld [vmem:[%s2592 + $0xc] sm:$0xf]
    %v2636 = vunpack.c.l.b16 %v2553
    %v2637 = vunpack.c.l.b16 %v2554
    %v2638 = vunpack.c.l.b16 %v2555
    %v2639 = vunpack.c.l.b16 %v2556
    %v2640 = vunpack.c.l.b16 %v2557
    %v2641 = vunpack.c.l.b16 %v2558
    %v2642 = vunpack.c.l.b16 %v2559
    %v2643 = vunpack.c.l.b16 %v2560
    %v2644 = vunpack.c.l.b16 %v2561
    %v2645 = vunpack.c.l.b16 %v2562
    %v2646 = vunpack.c.l.b16 %v2563
    %v2647 = vunpack.c.l.b16 %v2564
    %v2648 = vunpack.c.l.b16 %v2565
    %v2649 = vunpack.c.l.b16 %v2566
    %v2650 = vunpack.c.l.b16 %v2567
    %v2651 = vunpack.c.l.b16 %v2568
    %v2652 = vunpack.c.l.b16 %v2569
    %v2653 = vunpack.c.l.b16 %v2570
    %v2654 = vunpack.c.l.b16 %v2571
    %v2655 = vunpack.c.l.b16 %v2572
    %v2656 = vunpack.c.l.b16 %v2573
    %v2657 = vunpack.c.l.b16 %v2574
    %v2658 = vunpack.c.l.b16 %v2575
    %v2659 = vunpack.c.l.b16 %v2576
    %v2660 = vunpack.c.l.b16 %v2577
    %v2661 = vunpack.c.l.b16 %v2578
    %v2662 = vunpack.c.l.b16 %v2579
    %v2663 = vunpack.c.l.b16 %v2580
    %v2664 = vunpack.c.l.b16 %v2581
    %v2665 = vunpack.c.l.b16 %v2582
    %v2666 = vunpack.c.l.b16 %v2583
    %v2667 = vunpack.c.l.b16 %v2584
    %v2668 = vunpack.c.l.b16 %v2585
    %v2669 = vunpack.c.l.b16 %v2586
    %v2670 = vunpack.c.l.b16 %v2587
    %v2671 = vunpack.c.l.b16 %v2588
    %v2672 = vunpack.c.l.b16 %v2589
    %v2673 = vunpack.c.l.b16 %v2590
    %v2674 = vunpack.c.l.b16 %v2591
    %v2675 = vpack.c.b16 %v2637, %v2636
    %v2676 = vpack.c.b16 %v2639, %v2638
    %v2677 = vpack.c.b16 %v2641, %v2640
    %v2678 = vpack.c.b16 %v2643, %v2642
    %v2679 = vpack.c.b16 %v2645, %v2644
    %v2680 = vpack.c.b16 %v2647, %v2646
    %v2681 = vpack.c.b16 %v2649, %v2648
    %v2682 = vpack.c.b16 %v2651, %v2650
    %v2683 = vpack.c.b16 %v2653, %v2652
    %v2684 = vpack.c.b16 %v2655, %v2654
    %v2685 = vpack.c.b16 %v2657, %v2656
    %v2686 = vpack.c.b16 %v2659, %v2658
    %v2687 = vpack.c.b16 %v2661, %v2660
    %v2688 = vpack.c.b16 %v2663, %v2662
    %v2689 = vpack.c.b16 %v2665, %v2664
    %v2690 = vpack.c.b16 %v2667, %v2666
    %v2691 = vpack.c.b16 %v2669, %v2668
    %v2692 = vpack.c.b16 %v2671, %v2670
    %v2693 = vpack.c.b16 %v2673, %v2672
    %v2694 = vpack.c.b16 %v2674, %v2674
    %v2696 = vshrl.u32 %v2675, 16
    %v2698 = vrot.slane %v2696, 3
    %v2699 = vshll.u32 %v2675, 16
    %v2701 = vrot.slane %v2699, 4
    %v2702 = vor.u32 %v2698, %v2701
    %v2704 = vshrl.u32 %v2676, 16
    %v2706 = vrot.slane %v2704, 3
    %v2707 = vshll.u32 %v2676, 16
    %v2709 = vrot.slane %v2707, 4
    %v2710 = vor.u32 %v2706, %v2709
    %v2711 = vsel %vm1528, %v2702, %v2710
    %v2713 = vshrl.u32 %v2677, 16
    %v2715 = vrot.slane %v2713, 3
    %v2716 = vshll.u32 %v2677, 16
    %v2718 = vrot.slane %v2716, 4
    %v2719 = vor.u32 %v2715, %v2718
    %v2720 = vsel %vm1528, %v2710, %v2719
    %v2722 = vshrl.u32 %v2678, 16
    %v2724 = vrot.slane %v2722, 3
    %v2725 = vshll.u32 %v2678, 16
    %v2727 = vrot.slane %v2725, 4
    %v2728 = vor.u32 %v2724, %v2727
    %v2729 = vsel %vm1528, %v2719, %v2728
    %v2731 = vshrl.u32 %v2679, 16
    %v2733 = vrot.slane %v2731, 3
    %v2734 = vshll.u32 %v2679, 16
    %v2736 = vrot.slane %v2734, 4
    %v2737 = vor.u32 %v2733, %v2736
    %v2738 = vsel %vm1528, %v2728, %v2737
    %v2740 = vshrl.u32 %v2680, 16
    %v2742 = vrot.slane %v2740, 3
    %v2743 = vshll.u32 %v2680, 16
    %v2745 = vrot.slane %v2743, 4
    %v2746 = vor.u32 %v2742, %v2745
    %v2747 = vsel %vm1528, %v2737, %v2746
    %v2749 = vshrl.u32 %v2681, 16
    %v2751 = vrot.slane %v2749, 3
    %v2752 = vshll.u32 %v2681, 16
    %v2754 = vrot.slane %v2752, 4
    %v2755 = vor.u32 %v2751, %v2754
    %v2756 = vsel %vm1528, %v2746, %v2755
    %v2758 = vshrl.u32 %v2682, 16
    %v2760 = vrot.slane %v2758, 3
    %v2761 = vshll.u32 %v2682, 16
    %v2763 = vrot.slane %v2761, 4
    %v2764 = vor.u32 %v2760, %v2763
    %v2765 = vsel %vm1528, %v2755, %v2764
    %v2767 = vshrl.u32 %v2683, 16
    %v2769 = vrot.slane %v2767, 3
    %v2770 = vshll.u32 %v2683, 16
    %v2772 = vrot.slane %v2770, 4
    %v2773 = vor.u32 %v2769, %v2772
    %v2774 = vsel %vm1528, %v2764, %v2773
    %v2776 = vshrl.u32 %v2684, 16
    %v2778 = vrot.slane %v2776, 3
    %v2779 = vshll.u32 %v2684, 16
    %v2781 = vrot.slane %v2779, 4
    %v2782 = vor.u32 %v2778, %v2781
    %v2783 = vsel %vm1528, %v2773, %v2782
    %v2785 = vshrl.u32 %v2685, 16
    %v2787 = vrot.slane %v2785, 3
    %v2788 = vshll.u32 %v2685, 16
    %v2790 = vrot.slane %v2788, 4
    %v2791 = vor.u32 %v2787, %v2790
    %v2792 = vsel %vm1528, %v2782, %v2791
    %v2794 = vshrl.u32 %v2686, 16
    %v2796 = vrot.slane %v2794, 3
    %v2797 = vshll.u32 %v2686, 16
    %v2799 = vrot.slane %v2797, 4
    %v2800 = vor.u32 %v2796, %v2799
    %v2801 = vsel %vm1528, %v2791, %v2800
    %v2803 = vshrl.u32 %v2687, 16
    %v2805 = vrot.slane %v2803, 3
    %v2806 = vshll.u32 %v2687, 16
    %v2808 = vrot.slane %v2806, 4
    %v2809 = vor.u32 %v2805, %v2808
    %v2810 = vsel %vm1528, %v2800, %v2809
    %v2812 = vshrl.u32 %v2688, 16
    %v2814 = vrot.slane %v2812, 3
    %v2815 = vshll.u32 %v2688, 16
    %v2817 = vrot.slane %v2815, 4
    %v2818 = vor.u32 %v2814, %v2817
    %v2819 = vsel %vm1528, %v2809, %v2818
    %v2821 = vshrl.u32 %v2689, 16
    %v2823 = vrot.slane %v2821, 3
    %v2824 = vshll.u32 %v2689, 16
    %v2826 = vrot.slane %v2824, 4
    %v2827 = vor.u32 %v2823, %v2826
    %v2828 = vsel %vm1528, %v2818, %v2827
    %v2830 = vshrl.u32 %v2690, 16
    %v2832 = vrot.slane %v2830, 3
    %v2833 = vshll.u32 %v2690, 16
    %v2835 = vrot.slane %v2833, 4
    %v2836 = vor.u32 %v2832, %v2835
    %v2837 = vsel %vm1528, %v2827, %v2836
    %v2839 = vshrl.u32 %v2691, 16
    %v2841 = vrot.slane %v2839, 3
    %v2842 = vshll.u32 %v2691, 16
    %v2844 = vrot.slane %v2842, 4
    %v2845 = vor.u32 %v2841, %v2844
    %v2846 = vsel %vm1528, %v2836, %v2845
    %v2848 = vshrl.u32 %v2692, 16
    %v2850 = vrot.slane %v2848, 3
    %v2851 = vshll.u32 %v2692, 16
    %v2853 = vrot.slane %v2851, 4
    %v2854 = vor.u32 %v2850, %v2853
    %v2855 = vsel %vm1528, %v2845, %v2854
    %v2857 = vshrl.u32 %v2693, 16
    %v2859 = vrot.slane %v2857, 3
    %v2860 = vshll.u32 %v2693, 16
    %v2862 = vrot.slane %v2860, 4
    %v2863 = vor.u32 %v2859, %v2862
    %v2864 = vsel %vm1528, %v2854, %v2863
    %v2866 = vshrl.u32 %v2694, 16
    %v2868 = vrot.slane %v2866, 3
    %v2869 = vshll.u32 %v2694, 16
    %v2871 = vrot.slane %v2869, 4
    %v2872 = vor.u32 %v2868, %v2871
    %v2873 = vsel %vm1528, %v2863, %v2872
    %v2878 = vunpack.c.l.b16 %v2593
    %v2879 = vunpack.c.l.b16 %v2594
    %v2880 = vunpack.c.l.b16 %v2595
    %v2881 = vunpack.c.l.b16 %v2596
    %v2882 = vpack.c.b16 %v2879, %v2878
    %v2883 = vpack.c.b16 %v2881, %v2880
    %v2887 = vsel %vm387, %v2711, 0
    %v2890 = vsel %vm387, %v2720, 0
    %v2893 = vsel %vm387, %v2729, 0
    %v2896 = vsel %vm387, %v2738, 0
    %v2899 = vsel %vm387, %v2747, 0
    %v2902 = vsel %vm387, %v2756, 0
    %v2905 = vsel %vm387, %v2765, 0
    %v2908 = vsel %vm387, %v2774, 0
    %v2911 = vsel %vm387, %v2783, 0
    %v2914 = vsel %vm387, %v2792, 0
    %v2917 = vsel %vm387, %v2801, 0
    %v2920 = vsel %vm387, %v2810, 0
    %v2923 = vsel %vm387, %v2819, 0
    %v2926 = vsel %vm387, %v2828, 0
    %v2929 = vsel %vm387, %v2837, 0
    %v2932 = vsel %vm387, %v2846, 0
    %v2935 = vsel %vm387, %v2855, 0
    %v2938 = vsel %vm387, %v2864, 0
    %v2941 = vsel %vm387, %v2873, 0
    %2943 = vmatprep.subr.bf16.mxu0 0
    %2944 = vmatpush1.bf16.msra.mxu0 0
    %2945 = vmatprep.subr.bf16.mxu0 0
    %2946 = vmatpush1.bf16.msra.mxu0 0
    %2947 = vmatprep.subr.bf16.mxu0 0
    %2948 = vmatpush1.bf16.msra.mxu0 0
    %2949 = vmatprep.subr.bf16.mxu0 0
    %2950 = vmatpush1.bf16.msra.mxu0 0
    %2951 = vmatprep.subr.bf16.mxu0 0
    %2952 = vmatpush1.bf16.msra.mxu0 0
    %2953 = vmatprep.subr.bf16.mxu0 0
    %2954 = vmatpush1.bf16.msra.mxu0 0
    %2955 = vmatprep.subr.bf16.mxu0 0
    %2956 = vmatpush1.bf16.msra.mxu0 %v2883
    %2957 = vmatprep.subr.bf16.mxu0 0
    %2958 = vmatpush1.bf16.msra.mxu0 %v2882
    %2959 = vmatprep.subr.bf16.mxu0 0
    %2960 = vmatpush2.bf16.msra.mxu0 0
    %2961 = vmatprep.subr.bf16.mxu0 0
    %2962 = vmatpush2.bf16.msra.mxu0 0
    %2963 = vmatprep.subr.bf16.mxu0 0
    %2964 = vmatpush2.bf16.msra.mxu0 0
    %2965 = vmatprep.subr.bf16.mxu0 0
    %2966 = vmatpush2.bf16.msra.mxu0 0
    %2967 = vmatprep.subr.bf16.mxu0 0
    %2968 = vmatpush2.bf16.msra.mxu0 0
    %2969 = vmatprep.subr.bf16.mxu0 0
    %2970 = vmatpush2.bf16.msra.mxu0 0
    %2971 = vmatprep.subr.bf16.mxu0 0
    %2972 = vmatpush2.bf16.msra.mxu0 0
    %2973 = vmatprep.subr.bf16.mxu0 0
    %2974 = vmatpush2.bf16.msra.mxu0 0
    %2975 = vmatprep.mubr.bf16.mxu0 0
    %2976 = vmatmul.mubr.bf16.gmra.mxu0 %v2887
    %v2977 = vpop.f32.mrf.mxu0
    %v2978 = vadd.f32 0.0, %v2977
    %v2979 = vpop.f32.mrf.mxu0
    %v2980 = vpop.f32.mrf.mxu0
    %v2981 = vadd.f32 0.0, %v2980
    %v2982 = vpop.f32.mrf.mxu0
    %2983 = vmatprep.mubr.bf16.mxu0 0
    %2984 = vmatmul.mubr.bf16.gmra.mxu0 %v2890
    %v2985 = vpop.f32.mrf.mxu0
    %v2986 = vadd.f32 0.0, %v2985
    %v2987 = vpop.f32.mrf.mxu0
    %v2988 = vpop.f32.mrf.mxu0
    %v2989 = vadd.f32 0.0, %v2988
    %v2990 = vpop.f32.mrf.mxu0
    %2991 = vmatprep.mubr.bf16.mxu0 0
    %2992 = vmatmul.mubr.bf16.gmra.mxu0 %v2893
    %v2993 = vpop.f32.mrf.mxu0
    %v2994 = vadd.f32 0.0, %v2993
    %v2995 = vpop.f32.mrf.mxu0
    %v2996 = vpop.f32.mrf.mxu0
    %v2997 = vadd.f32 0.0, %v2996
    %v2998 = vpop.f32.mrf.mxu0
    %2999 = vmatprep.mubr.bf16.mxu0 0
    %3000 = vmatmul.mubr.bf16.gmra.mxu0 %v2896
    %v3001 = vpop.f32.mrf.mxu0
    %v3002 = vadd.f32 0.0, %v3001
    %v3003 = vpop.f32.mrf.mxu0
    %v3004 = vpop.f32.mrf.mxu0
    %v3005 = vadd.f32 0.0, %v3004
    %v3006 = vpop.f32.mrf.mxu0
    %3007 = vmatprep.mubr.bf16.mxu0 0
    %3008 = vmatmul.mubr.bf16.gmra.mxu0 %v2899
    %v3009 = vpop.f32.mrf.mxu0
    %v3010 = vadd.f32 0.0, %v3009
    %v3011 = vpop.f32.mrf.mxu0
    %v3012 = vpop.f32.mrf.mxu0
    %v3013 = vadd.f32 0.0, %v3012
    %v3014 = vpop.f32.mrf.mxu0
    %3015 = vmatprep.mubr.bf16.mxu0 0
    %3016 = vmatmul.mubr.bf16.gmra.mxu0 %v2902
    %v3017 = vpop.f32.mrf.mxu0
    %v3018 = vadd.f32 0.0, %v3017
    %v3019 = vpop.f32.mrf.mxu0
    %v3020 = vpop.f32.mrf.mxu0
    %v3021 = vadd.f32 0.0, %v3020
    %v3022 = vpop.f32.mrf.mxu0
    %3023 = vmatprep.mubr.bf16.mxu0 0
    %3024 = vmatmul.mubr.bf16.gmra.mxu0 %v2905
    %v3025 = vpop.f32.mrf.mxu0
    %v3026 = vadd.f32 0.0, %v3025
    %v3027 = vpop.f32.mrf.mxu0
    %v3028 = vpop.f32.mrf.mxu0
    %v3029 = vadd.f32 0.0, %v3028
    %v3030 = vpop.f32.mrf.mxu0
    %3031 = vmatprep.mubr.bf16.mxu0 0
    %3032 = vmatmul.mubr.bf16.gmra.mxu0 %v2908
    %v3033 = vpop.f32.mrf.mxu0
    %v3034 = vadd.f32 0.0, %v3033
    %v3035 = vpop.f32.mrf.mxu0
    %v3036 = vpop.f32.mrf.mxu0
    %v3037 = vadd.f32 0.0, %v3036
    %v3038 = vpop.f32.mrf.mxu0
    %3039 = vmatprep.mubr.bf16.mxu0 0
    %3040 = vmatmul.mubr.bf16.gmra.mxu0 %v2911
    %v3041 = vpop.f32.mrf.mxu0
    %v3042 = vadd.f32 0.0, %v3041
    %v3043 = vpop.f32.mrf.mxu0
    %v3044 = vpop.f32.mrf.mxu0
    %v3045 = vadd.f32 0.0, %v3044
    %v3046 = vpop.f32.mrf.mxu0
    %3047 = vmatprep.mubr.bf16.mxu0 0
    %3048 = vmatmul.mubr.bf16.gmra.mxu0 %v2914
    %v3049 = vpop.f32.mrf.mxu0
    %v3050 = vadd.f32 0.0, %v3049
    %v3051 = vpop.f32.mrf.mxu0
    %v3052 = vpop.f32.mrf.mxu0
    %v3053 = vadd.f32 0.0, %v3052
    %v3054 = vpop.f32.mrf.mxu0
    %3055 = vmatprep.mubr.bf16.mxu0 0
    %3056 = vmatmul.mubr.bf16.gmra.mxu0 %v2917
    %v3057 = vpop.f32.mrf.mxu0
    %v3058 = vadd.f32 0.0, %v3057
    %v3059 = vpop.f32.mrf.mxu0
    %v3060 = vpop.f32.mrf.mxu0
    %v3061 = vadd.f32 0.0, %v3060
    %v3062 = vpop.f32.mrf.mxu0
    %3063 = vmatprep.mubr.bf16.mxu0 0
    %3064 = vmatmul.mubr.bf16.gmra.mxu0 %v2920
    %v3065 = vpop.f32.mrf.mxu0
    %v3066 = vadd.f32 0.0, %v3065
    %v3067 = vpop.f32.mrf.mxu0
    %v3068 = vpop.f32.mrf.mxu0
    %v3069 = vadd.f32 0.0, %v3068
    %v3070 = vpop.f32.mrf.mxu0
    %3071 = vmatprep.mubr.bf16.mxu0 0
    %3072 = vmatmul.mubr.bf16.gmra.mxu0 %v2923
    %v3073 = vpop.f32.mrf.mxu0
    %v3074 = vadd.f32 0.0, %v3073
    %v3075 = vpop.f32.mrf.mxu0
    %v3076 = vpop.f32.mrf.mxu0
    %v3077 = vadd.f32 0.0, %v3076
    %v3078 = vpop.f32.mrf.mxu0
    %3079 = vmatprep.mubr.bf16.mxu0 0
    %3080 = vmatmul.mubr.bf16.gmra.mxu0 %v2926
    %v3081 = vpop.f32.mrf.mxu0
    %v3082 = vadd.f32 0.0, %v3081
    %v3083 = vpop.f32.mrf.mxu0
    %v3084 = vpop.f32.mrf.mxu0
    %v3085 = vadd.f32 0.0, %v3084
    %v3086 = vpop.f32.mrf.mxu0
    %3087 = vmatprep.mubr.bf16.mxu0 0
    %3088 = vmatmul.mubr.bf16.gmra.mxu0 %v2929
    %v3089 = vpop.f32.mrf.mxu0
    %v3090 = vadd.f32 0.0, %v3089
    %v3091 = vpop.f32.mrf.mxu0
    %v3092 = vpop.f32.mrf.mxu0
    %v3093 = vadd.f32 0.0, %v3092
    %v3094 = vpop.f32.mrf.mxu0
    %3095 = vmatprep.mubr.bf16.mxu0 0
    %3096 = vmatmul.mubr.bf16.gmra.mxu0 %v2932
    %v3097 = vpop.f32.mrf.mxu0
    %v3098 = vadd.f32 0.0, %v3097
    %v3099 = vpop.f32.mrf.mxu0
    %v3100 = vpop.f32.mrf.mxu0
    %v3101 = vadd.f32 0.0, %v3100
    %v3102 = vpop.f32.mrf.mxu0
    %3103 = vmatprep.mubr.bf16.mxu0 0
    %3104 = vmatmul.mubr.bf16.gmra.mxu0 %v2935
    %v3105 = vpop.f32.mrf.mxu0
    %v3106 = vadd.f32 0.0, %v3105
    %v3107 = vpop.f32.mrf.mxu0
    %v3108 = vpop.f32.mrf.mxu0
    %v3109 = vadd.f32 0.0, %v3108
    %v3110 = vpop.f32.mrf.mxu0
    %3111 = vmatprep.mubr.bf16.mxu0 0
    %3112 = vmatmul.mubr.bf16.gmra.mxu0 %v2938
    %v3113 = vpop.f32.mrf.mxu0
    %v3114 = vadd.f32 0.0, %v3113
    %v3115 = vpop.f32.mrf.mxu0
    %v3116 = vpop.f32.mrf.mxu0
    %v3117 = vadd.f32 0.0, %v3116
    %v3118 = vpop.f32.mrf.mxu0
    %3119 = vmatprep.mubr.bf16.mxu0 0
    %3120 = vmatmul.mubr.bf16.gmra.mxu0 %v2941
    %v3121 = vpop.f32.mrf.mxu0
    %v3122 = vadd.f32 0.0, %v3121
    %v3123 = vpop.f32.mrf.mxu0
    %v3124 = vpop.f32.mrf.mxu0
    %v3125 = vadd.f32 0.0, %v3124
    %v3126 = vpop.f32.mrf.mxu0
    %3127 = vdwg.mxu0
    %v3128 = vadd.f32 %v2515, %v2978
    %v3129 = vadd.f32 %v2516, %v2981
    %v3130 = vadd.f32 %v2517, %v2986
    %v3131 = vadd.f32 %v2518, %v2989
    %v3132 = vadd.f32 %v2519, %v2994
    %v3133 = vadd.f32 %v2520, %v2997
    %v3134 = vadd.f32 %v2521, %v3002
    %v3135 = vadd.f32 %v2522, %v3005
    %v3136 = vadd.f32 %v2523, %v3010
    %v3137 = vadd.f32 %v2524, %v3013
    %v3138 = vadd.f32 %v2525, %v3018
    %v3139 = vadd.f32 %v2526, %v3021
    %v3140 = vadd.f32 %v2527, %v3026
    %v3141 = vadd.f32 %v2528, %v3029
    %v3142 = vadd.f32 %v2529, %v3034
    %v3143 = vadd.f32 %v2530, %v3037
    %v3144 = vadd.f32 %v2531, %v3042
    %v3145 = vadd.f32 %v2532, %v3045
    %v3146 = vadd.f32 %v2533, %v3050
    %v3147 = vadd.f32 %v2534, %v3053
    %v3148 = vadd.f32 %v2535, %v3058
    %v3149 = vadd.f32 %v2536, %v3061
    %v3150 = vadd.f32 %v2537, %v3066
    %v3151 = vadd.f32 %v2538, %v3069
    %v3152 = vadd.f32 %v2539, %v3074
    %v3153 = vadd.f32 %v2540, %v3077
    %v3154 = vadd.f32 %v2541, %v3082
    %v3155 = vadd.f32 %v2542, %v3085
    %v3156 = vadd.f32 %v2543, %v3090
    %v3157 = vadd.f32 %v2544, %v3093
    %v3158 = vadd.f32 %v2545, %v3098
    %v3159 = vadd.f32 %v2546, %v3101
    %v3160 = vadd.f32 %v2547, %v3106
    %v3161 = vadd.f32 %v2548, %v3109
    %v3162 = vadd.f32 %v2549, %v3114
    %v3163 = vadd.f32 %v2550, %v3117
    %v3164 = vadd.f32 %v2551, %v3122
    %v3165 = vadd.f32 %v2552, %v3125
    %s3166 = scalar_lea.vmem [#allocation9], 64
    %v3167 = vld [vmem:[%s3166] sm:$0xf]
    %v3168 = vld [vmem:[%s3166 + $0x4] sm:$0xf]
    %v3169 = vld [vmem:[%s3166 + $0x8] sm:$0xf]
    %v3170 = vld [vmem:[%s3166 + $0xc] sm:$0xf]
    %v3171 = vpack.c.b16 %v2638, %v2637
    %v3172 = vpack.c.b16 %v2640, %v2639
    %v3173 = vpack.c.b16 %v2642, %v2641
    %v3174 = vpack.c.b16 %v2644, %v2643
    %v3175 = vpack.c.b16 %v2646, %v2645
    %v3176 = vpack.c.b16 %v2648, %v2647
    %v3177 = vpack.c.b16 %v2650, %v2649
    %v3178 = vpack.c.b16 %v2652, %v2651
    %v3179 = vpack.c.b16 %v2654, %v2653
    %v3180 = vpack.c.b16 %v2656, %v2655
    %v3181 = vpack.c.b16 %v2658, %v2657
    %v3182 = vpack.c.b16 %v2660, %v2659
    %v3183 = vpack.c.b16 %v2662, %v2661
    %v3184 = vpack.c.b16 %v2664, %v2663
    %v3185 = vpack.c.b16 %v2666, %v2665
    %v3186 = vpack.c.b16 %v2668, %v2667
    %v3187 = vpack.c.b16 %v2670, %v2669
    %v3188 = vpack.c.b16 %v2672, %v2671
    %v3189 = vpack.c.b16 %v2674, %v2673
    %v3194 = vunpack.c.l.b16 %v3167
    %v3195 = vunpack.c.l.b16 %v3168
    %v3196 = vunpack.c.l.b16 %v3169
    %v3197 = vunpack.c.l.b16 %v3170
    %v3198 = vpack.c.b16 %v3195, %v3194
    %v3199 = vpack.c.b16 %v3197, %v3196
    %v3203 = vsel %vm387, %v3171, 0
    %v3206 = vsel %vm387, %v3172, 0
    %v3209 = vsel %vm387, %v3173, 0
    %v3212 = vsel %vm387, %v3174, 0
    %v3215 = vsel %vm387, %v3175, 0
    %v3218 = vsel %vm387, %v3176, 0
    %v3221 = vsel %vm387, %v3177, 0
    %v3224 = vsel %vm387, %v3178, 0
    %v3227 = vsel %vm387, %v3179, 0
    %v3230 = vsel %vm387, %v3180, 0
    %v3233 = vsel %vm387, %v3181, 0
    %v3236 = vsel %vm387, %v3182, 0
    %v3239 = vsel %vm387, %v3183, 0
    %v3242 = vsel %vm387, %v3184, 0
    %v3245 = vsel %vm387, %v3185, 0
    %v3248 = vsel %vm387, %v3186, 0
    %v3251 = vsel %vm387, %v3187, 0
    %v3254 = vsel %vm387, %v3188, 0
    %v3257 = vsel %vm387, %v3189, 0
    %3259 = vmatprep.subr.bf16.mxu0 0
    %3260 = vmatpush1.bf16.msra.mxu0 0
    %3261 = vmatprep.subr.bf16.mxu0 0
    %3262 = vmatpush1.bf16.msra.mxu0 0
    %3263 = vmatprep.subr.bf16.mxu0 0
    %3264 = vmatpush1.bf16.msra.mxu0 0
    %3265 = vmatprep.subr.bf16.mxu0 0
    %3266 = vmatpush1.bf16.msra.mxu0 0
    %3267 = vmatprep.subr.bf16.mxu0 0
    %3268 = vmatpush1.bf16.msra.mxu0 0
    %3269 = vmatprep.subr.bf16.mxu0 0
    %3270 = vmatpush1.bf16.msra.mxu0 0
    %3271 = vmatprep.subr.bf16.mxu0 0
    %3272 = vmatpush1.bf16.msra.mxu0 %v3199
    %3273 = vmatprep.subr.bf16.mxu0 0
    %3274 = vmatpush1.bf16.msra.mxu0 %v3198
    %3275 = vmatprep.subr.bf16.mxu0 0
    %3276 = vmatpush2.bf16.msra.mxu0 0
    %3277 = vmatprep.subr.bf16.mxu0 0
    %3278 = vmatpush2.bf16.msra.mxu0 0
    %3279 = vmatprep.subr.bf16.mxu0 0
    %3280 = vmatpush2.bf16.msra.mxu0 0
    %3281 = vmatprep.subr.bf16.mxu0 0
    %3282 = vmatpush2.bf16.msra.mxu0 0
    %3283 = vmatprep.subr.bf16.mxu0 0
    %3284 = vmatpush2.bf16.msra.mxu0 0
    %3285 = vmatprep.subr.bf16.mxu0 0
    %3286 = vmatpush2.bf16.msra.mxu0 0
    %3287 = vmatprep.subr.bf16.mxu0 0
    %3288 = vmatpush2.bf16.msra.mxu0 0
    %3289 = vmatprep.subr.bf16.mxu0 0
    %3290 = vmatpush2.bf16.msra.mxu0 0
    %3291 = vmatprep.mubr.bf16.mxu0 0
    %3292 = vmatmul.mubr.bf16.gmra.mxu0 %v3203
    %v3293 = vpop.f32.mrf.mxu0
    %v3294 = vadd.f32 0.0, %v3293
    %v3295 = vpop.f32.mrf.mxu0
    %v3296 = vpop.f32.mrf.mxu0
    %v3297 = vadd.f32 0.0, %v3296
    %v3298 = vpop.f32.mrf.mxu0
    %3299 = vmatprep.mubr.bf16.mxu0 0
    %3300 = vmatmul.mubr.bf16.gmra.mxu0 %v3206
    %v3301 = vpop.f32.mrf.mxu0
    %v3302 = vadd.f32 0.0, %v3301
    %v3303 = vpop.f32.mrf.mxu0
    %v3304 = vpop.f32.mrf.mxu0
    %v3305 = vadd.f32 0.0, %v3304
    %v3306 = vpop.f32.mrf.mxu0
    %3307 = vmatprep.mubr.bf16.mxu0 0
    %3308 = vmatmul.mubr.bf16.gmra.mxu0 %v3209
    %v3309 = vpop.f32.mrf.mxu0
    %v3310 = vadd.f32 0.0, %v3309
    %v3311 = vpop.f32.mrf.mxu0
    %v3312 = vpop.f32.mrf.mxu0
    %v3313 = vadd.f32 0.0, %v3312
    %v3314 = vpop.f32.mrf.mxu0
    %3315 = vmatprep.mubr.bf16.mxu0 0
    %3316 = vmatmul.mubr.bf16.gmra.mxu0 %v3212
    %v3317 = vpop.f32.mrf.mxu0
    %v3318 = vadd.f32 0.0, %v3317
    %v3319 = vpop.f32.mrf.mxu0
    %v3320 = vpop.f32.mrf.mxu0
    %v3321 = vadd.f32 0.0, %v3320
    %v3322 = vpop.f32.mrf.mxu0
    %3323 = vmatprep.mubr.bf16.mxu0 0
    %3324 = vmatmul.mubr.bf16.gmra.mxu0 %v3215
    %v3325 = vpop.f32.mrf.mxu0
    %v3326 = vadd.f32 0.0, %v3325
    %v3327 = vpop.f32.mrf.mxu0
    %v3328 = vpop.f32.mrf.mxu0
    %v3329 = vadd.f32 0.0, %v3328
    %v3330 = vpop.f32.mrf.mxu0
    %3331 = vmatprep.mubr.bf16.mxu0 0
    %3332 = vmatmul.mubr.bf16.gmra.mxu0 %v3218
    %v3333 = vpop.f32.mrf.mxu0
    %v3334 = vadd.f32 0.0, %v3333
    %v3335 = vpop.f32.mrf.mxu0
    %v3336 = vpop.f32.mrf.mxu0
    %v3337 = vadd.f32 0.0, %v3336
    %v3338 = vpop.f32.mrf.mxu0
    %3339 = vmatprep.mubr.bf16.mxu0 0
    %3340 = vmatmul.mubr.bf16.gmra.mxu0 %v3221
    %v3341 = vpop.f32.mrf.mxu0
    %v3342 = vadd.f32 0.0, %v3341
    %v3343 = vpop.f32.mrf.mxu0
    %v3344 = vpop.f32.mrf.mxu0
    %v3345 = vadd.f32 0.0, %v3344
    %v3346 = vpop.f32.mrf.mxu0
    %3347 = vmatprep.mubr.bf16.mxu0 0
    %3348 = vmatmul.mubr.bf16.gmra.mxu0 %v3224
    %v3349 = vpop.f32.mrf.mxu0
    %v3350 = vadd.f32 0.0, %v3349
    %v3351 = vpop.f32.mrf.mxu0
    %v3352 = vpop.f32.mrf.mxu0
    %v3353 = vadd.f32 0.0, %v3352
    %v3354 = vpop.f32.mrf.mxu0
    %3355 = vmatprep.mubr.bf16.mxu0 0
    %3356 = vmatmul.mubr.bf16.gmra.mxu0 %v3227
    %v3357 = vpop.f32.mrf.mxu0
    %v3358 = vadd.f32 0.0, %v3357
    %v3359 = vpop.f32.mrf.mxu0
    %v3360 = vpop.f32.mrf.mxu0
    %v3361 = vadd.f32 0.0, %v3360
    %v3362 = vpop.f32.mrf.mxu0
    %3363 = vmatprep.mubr.bf16.mxu0 0
    %3364 = vmatmul.mubr.bf16.gmra.mxu0 %v3230
    %v3365 = vpop.f32.mrf.mxu0
    %v3366 = vadd.f32 0.0, %v3365
    %v3367 = vpop.f32.mrf.mxu0
    %v3368 = vpop.f32.mrf.mxu0
    %v3369 = vadd.f32 0.0, %v3368
    %v3370 = vpop.f32.mrf.mxu0
    %3371 = vmatprep.mubr.bf16.mxu0 0
    %3372 = vmatmul.mubr.bf16.gmra.mxu0 %v3233
    %v3373 = vpop.f32.mrf.mxu0
    %v3374 = vadd.f32 0.0, %v3373
    %v3375 = vpop.f32.mrf.mxu0
    %v3376 = vpop.f32.mrf.mxu0
    %v3377 = vadd.f32 0.0, %v3376
    %v3378 = vpop.f32.mrf.mxu0
    %3379 = vmatprep.mubr.bf16.mxu0 0
    %3380 = vmatmul.mubr.bf16.gmra.mxu0 %v3236
    %v3381 = vpop.f32.mrf.mxu0
    %v3382 = vadd.f32 0.0, %v3381
    %v3383 = vpop.f32.mrf.mxu0
    %v3384 = vpop.f32.mrf.mxu0
    %v3385 = vadd.f32 0.0, %v3384
    %v3386 = vpop.f32.mrf.mxu0
    %3387 = vmatprep.mubr.bf16.mxu0 0
    %3388 = vmatmul.mubr.bf16.gmra.mxu0 %v3239
    %v3389 = vpop.f32.mrf.mxu0
    %v3390 = vadd.f32 0.0, %v3389
    %v3391 = vpop.f32.mrf.mxu0
    %v3392 = vpop.f32.mrf.mxu0
    %v3393 = vadd.f32 0.0, %v3392
    %v3394 = vpop.f32.mrf.mxu0
    %3395 = vmatprep.mubr.bf16.mxu0 0
    %3396 = vmatmul.mubr.bf16.gmra.mxu0 %v3242
    %v3397 = vpop.f32.mrf.mxu0
    %v3398 = vadd.f32 0.0, %v3397
    %v3399 = vpop.f32.mrf.mxu0
    %v3400 = vpop.f32.mrf.mxu0
    %v3401 = vadd.f32 0.0, %v3400
    %v3402 = vpop.f32.mrf.mxu0
    %3403 = vmatprep.mubr.bf16.mxu0 0
    %3404 = vmatmul.mubr.bf16.gmra.mxu0 %v3245
    %v3405 = vpop.f32.mrf.mxu0
    %v3406 = vadd.f32 0.0, %v3405
    %v3407 = vpop.f32.mrf.mxu0
    %v3408 = vpop.f32.mrf.mxu0
    %v3409 = vadd.f32 0.0, %v3408
    %v3410 = vpop.f32.mrf.mxu0
    %3411 = vmatprep.mubr.bf16.mxu0 0
    %3412 = vmatmul.mubr.bf16.gmra.mxu0 %v3248
    %v3413 = vpop.f32.mrf.mxu0
    %v3414 = vadd.f32 0.0, %v3413
    %v3415 = vpop.f32.mrf.mxu0
    %v3416 = vpop.f32.mrf.mxu0
    %v3417 = vadd.f32 0.0, %v3416
    %v3418 = vpop.f32.mrf.mxu0
    %3419 = vmatprep.mubr.bf16.mxu0 0
    %3420 = vmatmul.mubr.bf16.gmra.mxu0 %v3251
    %v3421 = vpop.f32.mrf.mxu0
    %v3422 = vadd.f32 0.0, %v3421
    %v3423 = vpop.f32.mrf.mxu0
    %v3424 = vpop.f32.mrf.mxu0
    %v3425 = vadd.f32 0.0, %v3424
    %v3426 = vpop.f32.mrf.mxu0
    %3427 = vmatprep.mubr.bf16.mxu0 0
    %3428 = vmatmul.mubr.bf16.gmra.mxu0 %v3254
    %v3429 = vpop.f32.mrf.mxu0
    %v3430 = vadd.f32 0.0, %v3429
    %v3431 = vpop.f32.mrf.mxu0
    %v3432 = vpop.f32.mrf.mxu0
    %v3433 = vadd.f32 0.0, %v3432
    %v3434 = vpop.f32.mrf.mxu0
    %3435 = vmatprep.mubr.bf16.mxu0 0
    %3436 = vmatmul.mubr.bf16.gmra.mxu0 %v3257
    %v3437 = vpop.f32.mrf.mxu0
    %v3438 = vadd.f32 0.0, %v3437
    %v3439 = vpop.f32.mrf.mxu0
    %v3440 = vpop.f32.mrf.mxu0
    %v3441 = vadd.f32 0.0, %v3440
    %v3442 = vpop.f32.mrf.mxu0
    %3443 = vdwg.mxu0
    %v3444 = vadd.f32 %v3128, %v3294
    %v3445 = vadd.f32 %v3129, %v3297
    %v3446 = vadd.f32 %v3130, %v3302
    %v3447 = vadd.f32 %v3131, %v3305
    %v3448 = vadd.f32 %v3132, %v3310
    %v3449 = vadd.f32 %v3133, %v3313
    %v3450 = vadd.f32 %v3134, %v3318
    %v3451 = vadd.f32 %v3135, %v3321
    %v3452 = vadd.f32 %v3136, %v3326
    %v3453 = vadd.f32 %v3137, %v3329
    %v3454 = vadd.f32 %v3138, %v3334
    %v3455 = vadd.f32 %v3139, %v3337
    %v3456 = vadd.f32 %v3140, %v3342
    %v3457 = vadd.f32 %v3141, %v3345
    %v3458 = vadd.f32 %v3142, %v3350
    %v3459 = vadd.f32 %v3143, %v3353
    %v3460 = vadd.f32 %v3144, %v3358
    %v3461 = vadd.f32 %v3145, %v3361
    %v3462 = vadd.f32 %v3146, %v3366
    %v3463 = vadd.f32 %v3147, %v3369
    %v3464 = vadd.f32 %v3148, %v3374
    %v3465 = vadd.f32 %v3149, %v3377
    %v3466 = vadd.f32 %v3150, %v3382
    %v3467 = vadd.f32 %v3151, %v3385
    %v3468 = vadd.f32 %v3152, %v3390
    %v3469 = vadd.f32 %v3153, %v3393
    %v3470 = vadd.f32 %v3154, %v3398
    %v3471 = vadd.f32 %v3155, %v3401
    %v3472 = vadd.f32 %v3156, %v3406
    %v3473 = vadd.f32 %v3157, %v3409
    %v3474 = vadd.f32 %v3158, %v3414
    %v3475 = vadd.f32 %v3159, %v3417
    %v3476 = vadd.f32 %v3160, %v3422
    %v3477 = vadd.f32 %v3161, %v3425
    %v3478 = vadd.f32 %v3162, %v3430
    %v3479 = vadd.f32 %v3163, %v3433
    %v3480 = vadd.f32 %v3164, %v3438
    %v3481 = vadd.f32 %v3165, %v3441
    %v3482 = vld [vmem:[#allocation3 + $0xc] sm:$0xf]
    %v3483 = vld [vmem:[#allocation3 + $0x10] sm:$0xf]
    %v3484 = vld [vmem:[#allocation3 + $0x14] sm:$0xf]
    %v3485 = vld [vmem:[#allocation3 + $0x18] sm:$0xf]
    %v3486 = vld [vmem:[#allocation3 + $0x1c] sm:$0xf]
    %v3487 = vld [vmem:[#allocation3 + $0x20] sm:$0xf]
    %v3488 = vld [vmem:[#allocation3 + $0x24] sm:$0xf]
    %v3489 = vld [vmem:[#allocation3 + $0x28] sm:$0xf]
    %v3490 = vld [vmem:[#allocation3 + $0x2c] sm:$0xf]
    %v3491 = vld [vmem:[#allocation3 + $0x30] sm:$0xf]
    %v3492 = vld [vmem:[#allocation3 + $0x34] sm:$0xf]
    %v3493 = vld [vmem:[#allocation3 + $0x38] sm:$0xf]
    %v3494 = vld [vmem:[#allocation3 + $0x3c] sm:$0xf]
    %v3495 = vld [vmem:[#allocation3 + $0x40] sm:$0xf]
    %v3496 = vld [vmem:[#allocation3 + $0x44] sm:$0xf]
    %v3497 = vld [vmem:[#allocation3 + $0x48] sm:$0xf]
    %v3498 = vld [vmem:[#allocation3 + $0x4c] sm:$0xf]
    %v3499 = vld [vmem:[#allocation3 + $0x50] sm:$0xf]
    %v3500 = vld [vmem:[#allocation3 + $0x54] sm:$0xf]
    %v3501 = vld [vmem:[#allocation3 + $0x58] sm:$0xf]
    %v3502 = vld [vmem:[#allocation3 + $0x5c] sm:$0xf]
    %v3503 = vld [vmem:[#allocation3 + $0x60] sm:$0xf]
    %v3504 = vld [vmem:[#allocation3 + $0x64] sm:$0xf]
    %v3505 = vld [vmem:[#allocation3 + $0x68] sm:$0xf]
    %v3506 = vld [vmem:[#allocation3 + $0x6c] sm:$0xf]
    %v3507 = vld [vmem:[#allocation3 + $0x70] sm:$0xf]
    %v3508 = vld [vmem:[#allocation3 + $0x74] sm:$0xf]
    %v3509 = vld [vmem:[#allocation3 + $0x78] sm:$0xf]
    %v3510 = vld [vmem:[#allocation3 + $0x7c] sm:$0xf]
    %v3511 = vld [vmem:[#allocation3 + $0x80] sm:$0xf]
    %v3512 = vld [vmem:[#allocation3 + $0x84] sm:$0xf]
    %v3513 = vld [vmem:[#allocation3 + $0x88] sm:$0xf]
    %v3514 = vld [vmem:[#allocation3 + $0x8c] sm:$0xf]
    %v3515 = vld [vmem:[#allocation3 + $0x90] sm:$0xf]
    %v3516 = vld [vmem:[#allocation3 + $0x94] sm:$0xf]
    %v3517 = vld [vmem:[#allocation3 + $0x98] sm:$0xf]
    %v3518 = vld [vmem:[#allocation3 + $0x9c] sm:$0xf]
    %v3519 = vld [vmem:[#allocation3 + $0xa0] sm:$0xf]
    %v3520 = vld [vmem:[#allocation3 + $0xa4] sm:$0x1]
    %s3521 = scalar_lea.vmem [#allocation9], 80
    %v3522 = vld [vmem:[%s3521] sm:$0xf]
    %v3523 = vld [vmem:[%s3521 + $0x4] sm:$0xf]
    %v3524 = vld [vmem:[%s3521 + $0x8] sm:$0xf]
    %v3525 = vld [vmem:[%s3521 + $0xc] sm:$0xf]
    %v3565 = vunpack.c.l.b16 %v3482
    %v3566 = vunpack.c.l.b16 %v3483
    %v3567 = vunpack.c.l.b16 %v3484
    %v3568 = vunpack.c.l.b16 %v3485
    %v3569 = vunpack.c.l.b16 %v3486
    %v3570 = vunpack.c.l.b16 %v3487
    %v3571 = vunpack.c.l.b16 %v3488
    %v3572 = vunpack.c.l.b16 %v3489
    %v3573 = vunpack.c.l.b16 %v3490
    %v3574 = vunpack.c.l.b16 %v3491
    %v3575 = vunpack.c.l.b16 %v3492
    %v3576 = vunpack.c.l.b16 %v3493
    %v3577 = vunpack.c.l.b16 %v3494
    %v3578 = vunpack.c.l.b16 %v3495
    %v3579 = vunpack.c.l.b16 %v3496
    %v3580 = vunpack.c.l.b16 %v3497
    %v3581 = vunpack.c.l.b16 %v3498
    %v3582 = vunpack.c.l.b16 %v3499
    %v3583 = vunpack.c.l.b16 %v3500
    %v3584 = vunpack.c.l.b16 %v3501
    %v3585 = vunpack.c.l.b16 %v3502
    %v3586 = vunpack.c.l.b16 %v3503
    %v3587 = vunpack.c.l.b16 %v3504
    %v3588 = vunpack.c.l.b16 %v3505
    %v3589 = vunpack.c.l.b16 %v3506
    %v3590 = vunpack.c.l.b16 %v3507
    %v3591 = vunpack.c.l.b16 %v3508
    %v3592 = vunpack.c.l.b16 %v3509
    %v3593 = vunpack.c.l.b16 %v3510
    %v3594 = vunpack.c.l.b16 %v3511
    %v3595 = vunpack.c.l.b16 %v3512
    %v3596 = vunpack.c.l.b16 %v3513
    %v3597 = vunpack.c.l.b16 %v3514
    %v3598 = vunpack.c.l.b16 %v3515
    %v3599 = vunpack.c.l.b16 %v3516
    %v3600 = vunpack.c.l.b16 %v3517
    %v3601 = vunpack.c.l.b16 %v3518
    %v3602 = vunpack.c.l.b16 %v3519
    %v3603 = vunpack.c.l.b16 %v3520
    %v3604 = vpack.c.b16 %v3566, %v3565
    %v3605 = vpack.c.b16 %v3568, %v3567
    %v3606 = vpack.c.b16 %v3570, %v3569
    %v3607 = vpack.c.b16 %v3572, %v3571
    %v3608 = vpack.c.b16 %v3574, %v3573
    %v3609 = vpack.c.b16 %v3576, %v3575
    %v3610 = vpack.c.b16 %v3578, %v3577
    %v3611 = vpack.c.b16 %v3580, %v3579
    %v3612 = vpack.c.b16 %v3582, %v3581
    %v3613 = vpack.c.b16 %v3584, %v3583
    %v3614 = vpack.c.b16 %v3586, %v3585
    %v3615 = vpack.c.b16 %v3588, %v3587
    %v3616 = vpack.c.b16 %v3590, %v3589
    %v3617 = vpack.c.b16 %v3592, %v3591
    %v3618 = vpack.c.b16 %v3594, %v3593
    %v3619 = vpack.c.b16 %v3596, %v3595
    %v3620 = vpack.c.b16 %v3598, %v3597
    %v3621 = vpack.c.b16 %v3600, %v3599
    %v3622 = vpack.c.b16 %v3602, %v3601
    %v3623 = vpack.c.b16 %v3603, %v3603
    %v3625 = vshrl.u32 %v3604, 16
    %v3627 = vshll.u32 %v3604, 16
    %v3629 = vrot.slane %v3627, 1
    %v3630 = vor.u32 %v3625, %v3629
    %v3632 = vshll.u32 %v3605, 16
    %v3634 = vrot.slane %v3632, 1
    %v3635 = vsel %vm2104, %v3630, %v3634
    %v3636 = vshrl.u32 %v3605, 16
    %v3638 = vor.u32 %v3636, %v3634
    %v3640 = vshll.u32 %v3606, 16
    %v3642 = vrot.slane %v3640, 1
    %v3643 = vsel %vm2104, %v3638, %v3642
    %v3644 = vshrl.u32 %v3606, 16
    %v3646 = vor.u32 %v3644, %v3642
    %v3648 = vshll.u32 %v3607, 16
    %v3650 = vrot.slane %v3648, 1
    %v3651 = vsel %vm2104, %v3646, %v3650
    %v3652 = vshrl.u32 %v3607, 16
    %v3654 = vor.u32 %v3652, %v3650
    %v3656 = vshll.u32 %v3608, 16
    %v3658 = vrot.slane %v3656, 1
    %v3659 = vsel %vm2104, %v3654, %v3658
    %v3660 = vshrl.u32 %v3608, 16
    %v3662 = vor.u32 %v3660, %v3658
    %v3664 = vshll.u32 %v3609, 16
    %v3666 = vrot.slane %v3664, 1
    %v3667 = vsel %vm2104, %v3662, %v3666
    %v3668 = vshrl.u32 %v3609, 16
    %v3670 = vor.u32 %v3668, %v3666
    %v3672 = vshll.u32 %v3610, 16
    %v3674 = vrot.slane %v3672, 1
    %v3675 = vsel %vm2104, %v3670, %v3674
    %v3676 = vshrl.u32 %v3610, 16
    %v3678 = vor.u32 %v3676, %v3674
    %v3680 = vshll.u32 %v3611, 16
    %v3682 = vrot.slane %v3680, 1
    %v3683 = vsel %vm2104, %v3678, %v3682
    %v3684 = vshrl.u32 %v3611, 16
    %v3686 = vor.u32 %v3684, %v3682
    %v3688 = vshll.u32 %v3612, 16
    %v3690 = vrot.slane %v3688, 1
    %v3691 = vsel %vm2104, %v3686, %v3690
    %v3692 = vshrl.u32 %v3612, 16
    %v3694 = vor.u32 %v3692, %v3690
    %v3696 = vshll.u32 %v3613, 16
    %v3698 = vrot.slane %v3696, 1
    %v3699 = vsel %vm2104, %v3694, %v3698
    %v3700 = vshrl.u32 %v3613, 16
    %v3702 = vor.u32 %v3700, %v3698
    %v3704 = vshll.u32 %v3614, 16
    %v3706 = vrot.slane %v3704, 1
    %v3707 = vsel %vm2104, %v3702, %v3706
    %v3708 = vshrl.u32 %v3614, 16
    %v3710 = vor.u32 %v3708, %v3706
    %v3712 = vshll.u32 %v3615, 16
    %v3714 = vrot.slane %v3712, 1
    %v3715 = vsel %vm2104, %v3710, %v3714
    %v3716 = vshrl.u32 %v3615, 16
    %v3718 = vor.u32 %v3716, %v3714
    %v3720 = vshll.u32 %v3616, 16
    %v3722 = vrot.slane %v3720, 1
    %v3723 = vsel %vm2104, %v3718, %v3722
    %v3724 = vshrl.u32 %v3616, 16
    %v3726 = vor.u32 %v3724, %v3722
    %v3728 = vshll.u32 %v3617, 16
    %v3730 = vrot.slane %v3728, 1
    %v3731 = vsel %vm2104, %v3726, %v3730
    %v3732 = vshrl.u32 %v3617, 16
    %v3734 = vor.u32 %v3732, %v3730
    %v3736 = vshll.u32 %v3618, 16
    %v3738 = vrot.slane %v3736, 1
    %v3739 = vsel %vm2104, %v3734, %v3738
    %v3740 = vshrl.u32 %v3618, 16
    %v3742 = vor.u32 %v3740, %v3738
    %v3744 = vshll.u32 %v3619, 16
    %v3746 = vrot.slane %v3744, 1
    %v3747 = vsel %vm2104, %v3742, %v3746
    %v3748 = vshrl.u32 %v3619, 16
    %v3750 = vor.u32 %v3748, %v3746
    %v3752 = vshll.u32 %v3620, 16
    %v3754 = vrot.slane %v3752, 1
    %v3755 = vsel %vm2104, %v3750, %v3754
    %v3756 = vshrl.u32 %v3620, 16
    %v3758 = vor.u32 %v3756, %v3754
    %v3760 = vshll.u32 %v3621, 16
    %v3762 = vrot.slane %v3760, 1
    %v3763 = vsel %vm2104, %v3758, %v3762
    %v3764 = vshrl.u32 %v3621, 16
    %v3766 = vor.u32 %v3764, %v3762
    %v3768 = vshll.u32 %v3622, 16
    %v3770 = vrot.slane %v3768, 1
    %v3771 = vsel %vm2104, %v3766, %v3770
    %v3772 = vshrl.u32 %v3622, 16
    %v3774 = vor.u32 %v3772, %v3770
    %v3776 = vshll.u32 %v3623, 16
    %v3778 = vrot.slane %v3776, 1
    %v3779 = vsel %vm2104, %v3774, %v3778
    %v3784 = vunpack.c.l.b16 %v3522
    %v3785 = vunpack.c.l.b16 %v3523
    %v3786 = vunpack.c.l.b16 %v3524
    %v3787 = vunpack.c.l.b16 %v3525
    %v3788 = vpack.c.b16 %v3785, %v3784
    %v3789 = vpack.c.b16 %v3787, %v3786
    %v3793 = vsel %vm387, %v3635, 0
    %v3796 = vsel %vm387, %v3643, 0
    %v3799 = vsel %vm387, %v3651, 0
    %v3802 = vsel %vm387, %v3659, 0
    %v3805 = vsel %vm387, %v3667, 0
    %v3808 = vsel %vm387, %v3675, 0
    %v3811 = vsel %vm387, %v3683, 0
    %v3814 = vsel %vm387, %v3691, 0
    %v3817 = vsel %vm387, %v3699, 0
    %v3820 = vsel %vm387, %v3707, 0
    %v3823 = vsel %vm387, %v3715, 0
    %v3826 = vsel %vm387, %v3723, 0
    %v3829 = vsel %vm387, %v3731, 0
    %v3832 = vsel %vm387, %v3739, 0
    %v3835 = vsel %vm387, %v3747, 0
    %v3838 = vsel %vm387, %v3755, 0
    %v3841 = vsel %vm387, %v3763, 0
    %v3844 = vsel %vm387, %v3771, 0
    %v3847 = vsel %vm387, %v3779, 0
    %3849 = vmatprep.subr.bf16.mxu0 0
    %3850 = vmatpush1.bf16.msra.mxu0 0
    %3851 = vmatprep.subr.bf16.mxu0 0
    %3852 = vmatpush1.bf16.msra.mxu0 0
    %3853 = vmatprep.subr.bf16.mxu0 0
    %3854 = vmatpush1.bf16.msra.mxu0 0
    %3855 = vmatprep.subr.bf16.mxu0 0
    %3856 = vmatpush1.bf16.msra.mxu0 0
    %3857 = vmatprep.subr.bf16.mxu0 0
    %3858 = vmatpush1.bf16.msra.mxu0 0
    %3859 = vmatprep.subr.bf16.mxu0 0
    %3860 = vmatpush1.bf16.msra.mxu0 0
    %3861 = vmatprep.subr.bf16.mxu0 0
    %3862 = vmatpush1.bf16.msra.mxu0 %v3789
    %3863 = vmatprep.subr.bf16.mxu0 0
    %3864 = vmatpush1.bf16.msra.mxu0 %v3788
    %3865 = vmatprep.subr.bf16.mxu0 0
    %3866 = vmatpush2.bf16.msra.mxu0 0
    %3867 = vmatprep.subr.bf16.mxu0 0
    %3868 = vmatpush2.bf16.msra.mxu0 0
    %3869 = vmatprep.subr.bf16.mxu0 0
    %3870 = vmatpush2.bf16.msra.mxu0 0
    %3871 = vmatprep.subr.bf16.mxu0 0
    %3872 = vmatpush2.bf16.msra.mxu0 0
    %3873 = vmatprep.subr.bf16.mxu0 0
    %3874 = vmatpush2.bf16.msra.mxu0 0
    %3875 = vmatprep.subr.bf16.mxu0 0
    %3876 = vmatpush2.bf16.msra.mxu0 0
    %3877 = vmatprep.subr.bf16.mxu0 0
    %3878 = vmatpush2.bf16.msra.mxu0 0
    %3879 = vmatprep.subr.bf16.mxu0 0
    %3880 = vmatpush2.bf16.msra.mxu0 0
    %3881 = vmatprep.mubr.bf16.mxu0 0
    %3882 = vmatmul.mubr.bf16.gmra.mxu0 %v3793
    %v3883 = vpop.f32.mrf.mxu0
    %v3884 = vadd.f32 0.0, %v3883
    %v3885 = vpop.f32.mrf.mxu0
    %v3886 = vpop.f32.mrf.mxu0
    %v3887 = vadd.f32 0.0, %v3886
    %v3888 = vpop.f32.mrf.mxu0
    %3889 = vmatprep.mubr.bf16.mxu0 0
    %3890 = vmatmul.mubr.bf16.gmra.mxu0 %v3796
    %v3891 = vpop.f32.mrf.mxu0
    %v3892 = vadd.f32 0.0, %v3891
    %v3893 = vpop.f32.mrf.mxu0
    %v3894 = vpop.f32.mrf.mxu0
    %v3895 = vadd.f32 0.0, %v3894
    %v3896 = vpop.f32.mrf.mxu0
    %3897 = vmatprep.mubr.bf16.mxu0 0
    %3898 = vmatmul.mubr.bf16.gmra.mxu0 %v3799
    %v3899 = vpop.f32.mrf.mxu0
    %v3900 = vadd.f32 0.0, %v3899
    %v3901 = vpop.f32.mrf.mxu0
    %v3902 = vpop.f32.mrf.mxu0
    %v3903 = vadd.f32 0.0, %v3902
    %v3904 = vpop.f32.mrf.mxu0
    %3905 = vmatprep.mubr.bf16.mxu0 0
    %3906 = vmatmul.mubr.bf16.gmra.mxu0 %v3802
    %v3907 = vpop.f32.mrf.mxu0
    %v3908 = vadd.f32 0.0, %v3907
    %v3909 = vpop.f32.mrf.mxu0
    %v3910 = vpop.f32.mrf.mxu0
    %v3911 = vadd.f32 0.0, %v3910
    %v3912 = vpop.f32.mrf.mxu0
    %3913 = vmatprep.mubr.bf16.mxu0 0
    %3914 = vmatmul.mubr.bf16.gmra.mxu0 %v3805
    %v3915 = vpop.f32.mrf.mxu0
    %v3916 = vadd.f32 0.0, %v3915
    %v3917 = vpop.f32.mrf.mxu0
    %v3918 = vpop.f32.mrf.mxu0
    %v3919 = vadd.f32 0.0, %v3918
    %v3920 = vpop.f32.mrf.mxu0
    %3921 = vmatprep.mubr.bf16.mxu0 0
    %3922 = vmatmul.mubr.bf16.gmra.mxu0 %v3808
    %v3923 = vpop.f32.mrf.mxu0
    %v3924 = vadd.f32 0.0, %v3923
    %v3925 = vpop.f32.mrf.mxu0
    %v3926 = vpop.f32.mrf.mxu0
    %v3927 = vadd.f32 0.0, %v3926
    %v3928 = vpop.f32.mrf.mxu0
    %3929 = vmatprep.mubr.bf16.mxu0 0
    %3930 = vmatmul.mubr.bf16.gmra.mxu0 %v3811
    %v3931 = vpop.f32.mrf.mxu0
    %v3932 = vadd.f32 0.0, %v3931
    %v3933 = vpop.f32.mrf.mxu0
    %v3934 = vpop.f32.mrf.mxu0
    %v3935 = vadd.f32 0.0, %v3934
    %v3936 = vpop.f32.mrf.mxu0
    %3937 = vmatprep.mubr.bf16.mxu0 0
    %3938 = vmatmul.mubr.bf16.gmra.mxu0 %v3814
    %v3939 = vpop.f32.mrf.mxu0
    %v3940 = vadd.f32 0.0, %v3939
    %v3941 = vpop.f32.mrf.mxu0
    %v3942 = vpop.f32.mrf.mxu0
    %v3943 = vadd.f32 0.0, %v3942
    %v3944 = vpop.f32.mrf.mxu0
    %3945 = vmatprep.mubr.bf16.mxu0 0
    %3946 = vmatmul.mubr.bf16.gmra.mxu0 %v3817
    %v3947 = vpop.f32.mrf.mxu0
    %v3948 = vadd.f32 0.0, %v3947
    %v3949 = vpop.f32.mrf.mxu0
    %v3950 = vpop.f32.mrf.mxu0
    %v3951 = vadd.f32 0.0, %v3950
    %v3952 = vpop.f32.mrf.mxu0
    %3953 = vmatprep.mubr.bf16.mxu0 0
    %3954 = vmatmul.mubr.bf16.gmra.mxu0 %v3820
    %v3955 = vpop.f32.mrf.mxu0
    %v3956 = vadd.f32 0.0, %v3955
    %v3957 = vpop.f32.mrf.mxu0
    %v3958 = vpop.f32.mrf.mxu0
    %v3959 = vadd.f32 0.0, %v3958
    %v3960 = vpop.f32.mrf.mxu0
    %3961 = vmatprep.mubr.bf16.mxu0 0
    %3962 = vmatmul.mubr.bf16.gmra.mxu0 %v3823
    %v3963 = vpop.f32.mrf.mxu0
    %v3964 = vadd.f32 0.0, %v3963
    %v3965 = vpop.f32.mrf.mxu0
    %v3966 = vpop.f32.mrf.mxu0
    %v3967 = vadd.f32 0.0, %v3966
    %v3968 = vpop.f32.mrf.mxu0
    %3969 = vmatprep.mubr.bf16.mxu0 0
    %3970 = vmatmul.mubr.bf16.gmra.mxu0 %v3826
    %v3971 = vpop.f32.mrf.mxu0
    %v3972 = vadd.f32 0.0, %v3971
    %v3973 = vpop.f32.mrf.mxu0
    %v3974 = vpop.f32.mrf.mxu0
    %v3975 = vadd.f32 0.0, %v3974
    %v3976 = vpop.f32.mrf.mxu0
    %3977 = vmatprep.mubr.bf16.mxu0 0
    %3978 = vmatmul.mubr.bf16.gmra.mxu0 %v3829
    %v3979 = vpop.f32.mrf.mxu0
    %v3980 = vadd.f32 0.0, %v3979
    %v3981 = vpop.f32.mrf.mxu0
    %v3982 = vpop.f32.mrf.mxu0
    %v3983 = vadd.f32 0.0, %v3982
    %v3984 = vpop.f32.mrf.mxu0
    %3985 = vmatprep.mubr.bf16.mxu0 0
    %3986 = vmatmul.mubr.bf16.gmra.mxu0 %v3832
    %v3987 = vpop.f32.mrf.mxu0
    %v3988 = vadd.f32 0.0, %v3987
    %v3989 = vpop.f32.mrf.mxu0
    %v3990 = vpop.f32.mrf.mxu0
    %v3991 = vadd.f32 0.0, %v3990
    %v3992 = vpop.f32.mrf.mxu0
    %3993 = vmatprep.mubr.bf16.mxu0 0
    %3994 = vmatmul.mubr.bf16.gmra.mxu0 %v3835
    %v3995 = vpop.f32.mrf.mxu0
    %v3996 = vadd.f32 0.0, %v3995
    %v3997 = vpop.f32.mrf.mxu0
    %v3998 = vpop.f32.mrf.mxu0
    %v3999 = vadd.f32 0.0, %v3998
    %v4000 = vpop.f32.mrf.mxu0
    %4001 = vmatprep.mubr.bf16.mxu0 0
    %4002 = vmatmul.mubr.bf16.gmra.mxu0 %v3838
    %v4003 = vpop.f32.mrf.mxu0
    %v4004 = vadd.f32 0.0, %v4003
    %v4005 = vpop.f32.mrf.mxu0
    %v4006 = vpop.f32.mrf.mxu0
    %v4007 = vadd.f32 0.0, %v4006
    %v4008 = vpop.f32.mrf.mxu0
    %4009 = vmatprep.mubr.bf16.mxu0 0
    %4010 = vmatmul.mubr.bf16.gmra.mxu0 %v3841
    %v4011 = vpop.f32.mrf.mxu0
    %v4012 = vadd.f32 0.0, %v4011
    %v4013 = vpop.f32.mrf.mxu0
    %v4014 = vpop.f32.mrf.mxu0
    %v4015 = vadd.f32 0.0, %v4014
    %v4016 = vpop.f32.mrf.mxu0
    %4017 = vmatprep.mubr.bf16.mxu0 0
    %4018 = vmatmul.mubr.bf16.gmra.mxu0 %v3844
    %v4019 = vpop.f32.mrf.mxu0
    %v4020 = vadd.f32 0.0, %v4019
    %v4021 = vpop.f32.mrf.mxu0
    %v4022 = vpop.f32.mrf.mxu0
    %v4023 = vadd.f32 0.0, %v4022
    %v4024 = vpop.f32.mrf.mxu0
    %4025 = vmatprep.mubr.bf16.mxu0 0
    %4026 = vmatmul.mubr.bf16.gmra.mxu0 %v3847
    %v4027 = vpop.f32.mrf.mxu0
    %v4028 = vadd.f32 0.0, %v4027
    %v4029 = vpop.f32.mrf.mxu0
    %v4030 = vpop.f32.mrf.mxu0
    %v4031 = vadd.f32 0.0, %v4030
    %v4032 = vpop.f32.mrf.mxu0
    %4033 = vdwg.mxu0
    %v4034 = vadd.f32 %v3444, %v3884
    %v4035 = vadd.f32 %v3445, %v3887
    %v4036 = vadd.f32 %v3446, %v3892
    %v4037 = vadd.f32 %v3447, %v3895
    %v4038 = vadd.f32 %v3448, %v3900
    %v4039 = vadd.f32 %v3449, %v3903
    %v4040 = vadd.f32 %v3450, %v3908
    %v4041 = vadd.f32 %v3451, %v3911
    %v4042 = vadd.f32 %v3452, %v3916
    %v4043 = vadd.f32 %v3453, %v3919
    %v4044 = vadd.f32 %v3454, %v3924
    %v4045 = vadd.f32 %v3455, %v3927
    %v4046 = vadd.f32 %v3456, %v3932
    %v4047 = vadd.f32 %v3457, %v3935
    %v4048 = vadd.f32 %v3458, %v3940
    %v4049 = vadd.f32 %v3459, %v3943
    %v4050 = vadd.f32 %v3460, %v3948
    %v4051 = vadd.f32 %v3461, %v3951
    %v4052 = vadd.f32 %v3462, %v3956
    %v4053 = vadd.f32 %v3463, %v3959
    %v4054 = vadd.f32 %v3464, %v3964
    %v4055 = vadd.f32 %v3465, %v3967
    %v4056 = vadd.f32 %v3466, %v3972
    %v4057 = vadd.f32 %v3467, %v3975
    %v4058 = vadd.f32 %v3468, %v3980
    %v4059 = vadd.f32 %v3469, %v3983
    %v4060 = vadd.f32 %v3470, %v3988
    %v4061 = vadd.f32 %v3471, %v3991
    %v4062 = vadd.f32 %v3472, %v3996
    %v4063 = vadd.f32 %v3473, %v3999
    %v4064 = vadd.f32 %v3474, %v4004
    %v4065 = vadd.f32 %v3475, %v4007
    %v4066 = vadd.f32 %v3476, %v4012
    %v4067 = vadd.f32 %v3477, %v4015
    %v4068 = vadd.f32 %v3478, %v4020
    %v4069 = vadd.f32 %v3479, %v4023
    %v4070 = vadd.f32 %v3480, %v4028
    %v4071 = vadd.f32 %v3481, %v4031
    %v4072 = vld [vmem:[#allocation3 + $0x10] sm:$0x8]
    %v4073 = vld [vmem:[#allocation3 + $0x14] sm:$0xf]
    %v4074 = vld [vmem:[#allocation3 + $0x18] sm:$0xf]
    %v4075 = vld [vmem:[#allocation3 + $0x1c] sm:$0xf]
    %v4076 = vld [vmem:[#allocation3 + $0x20] sm:$0xf]
    %v4077 = vld [vmem:[#allocation3 + $0x24] sm:$0xf]
    %v4078 = vld [vmem:[#allocation3 + $0x28] sm:$0xf]
    %v4079 = vld [vmem:[#allocation3 + $0x2c] sm:$0xf]
    %v4080 = vld [vmem:[#allocation3 + $0x30] sm:$0xf]
    %v4081 = vld [vmem:[#allocation3 + $0x34] sm:$0xf]
    %v4082 = vld [vmem:[#allocation3 + $0x38] sm:$0xf]
    %v4083 = vld [vmem:[#allocation3 + $0x3c] sm:$0xf]
    %v4084 = vld [vmem:[#allocation3 + $0x40] sm:$0xf]
    %v4085 = vld [vmem:[#allocation3 + $0x44] sm:$0xf]
    %v4086 = vld [vmem:[#allocation3 + $0x48] sm:$0xf]
    %v4087 = vld [vmem:[#allocation3 + $0x4c] sm:$0xf]
    %v4088 = vld [vmem:[#allocation3 + $0x50] sm:$0xf]
    %v4089 = vld [vmem:[#allocation3 + $0x54] sm:$0xf]
    %v4090 = vld [vmem:[#allocation3 + $0x58] sm:$0xf]
    %v4091 = vld [vmem:[#allocation3 + $0x5c] sm:$0xf]
    %v4092 = vld [vmem:[#allocation3 + $0x60] sm:$0xf]
    %v4093 = vld [vmem:[#allocation3 + $0x64] sm:$0xf]
    %v4094 = vld [vmem:[#allocation3 + $0x68] sm:$0xf]
    %v4095 = vld [vmem:[#allocation3 + $0x6c] sm:$0xf]
    %v4096 = vld [vmem:[#allocation3 + $0x70] sm:$0xf]
    %v4097 = vld [vmem:[#allocation3 + $0x74] sm:$0xf]
    %v4098 = vld [vmem:[#allocation3 + $0x78] sm:$0xf]
    %v4099 = vld [vmem:[#allocation3 + $0x7c] sm:$0xf]
    %v4100 = vld [vmem:[#allocation3 + $0x80] sm:$0xf]
    %v4101 = vld [vmem:[#allocation3 + $0x84] sm:$0xf]
    %v4102 = vld [vmem:[#allocation3 + $0x88] sm:$0xf]
    %v4103 = vld [vmem:[#allocation3 + $0x8c] sm:$0xf]
    %v4104 = vld [vmem:[#allocation3 + $0x90] sm:$0xf]
    %v4105 = vld [vmem:[#allocation3 + $0x94] sm:$0xf]
    %v4106 = vld [vmem:[#allocation3 + $0x98] sm:$0xf]
    %v4107 = vld [vmem:[#allocation3 + $0x9c] sm:$0xf]
    %v4108 = vld [vmem:[#allocation3 + $0xa0] sm:$0xf]
    %v4109 = vld [vmem:[#allocation3 + $0xa4] sm:$0xf]
    %v4110 = vld [vmem:[#allocation3 + $0xa8] sm:$0xf]
    %s4111 = scalar_lea.vmem [#allocation9], 96
    %v4112 = vld [vmem:[%s4111] sm:$0xf]
    %v4113 = vld [vmem:[%s4111 + $0x4] sm:$0xf]
    %v4114 = vld [vmem:[%s4111 + $0x8] sm:$0xf]
    %v4115 = vld [vmem:[%s4111 + $0xc] sm:$0xf]
    %v4155 = vunpack.c.l.b16 %v4072
    %v4156 = vunpack.c.l.b16 %v4073
    %v4157 = vunpack.c.l.b16 %v4074
    %v4158 = vunpack.c.l.b16 %v4075
    %v4159 = vunpack.c.l.b16 %v4076
    %v4160 = vunpack.c.l.b16 %v4077
    %v4161 = vunpack.c.l.b16 %v4078
    %v4162 = vunpack.c.l.b16 %v4079
    %v4163 = vunpack.c.l.b16 %v4080
    %v4164 = vunpack.c.l.b16 %v4081
    %v4165 = vunpack.c.l.b16 %v4082
    %v4166 = vunpack.c.l.b16 %v4083
    %v4167 = vunpack.c.l.b16 %v4084
    %v4168 = vunpack.c.l.b16 %v4085
    %v4169 = vunpack.c.l.b16 %v4086
    %v4170 = vunpack.c.l.b16 %v4087
    %v4171 = vunpack.c.l.b16 %v4088
    %v4172 = vunpack.c.l.b16 %v4089
    %v4173 = vunpack.c.l.b16 %v4090
    %v4174 = vunpack.c.l.b16 %v4091
    %v4175 = vunpack.c.l.b16 %v4092
    %v4176 = vunpack.c.l.b16 %v4093
    %v4177 = vunpack.c.l.b16 %v4094
    %v4178 = vunpack.c.l.b16 %v4095
    %v4179 = vunpack.c.l.b16 %v4096
    %v4180 = vunpack.c.l.b16 %v4097
    %v4181 = vunpack.c.l.b16 %v4098
    %v4182 = vunpack.c.l.b16 %v4099
    %v4183 = vunpack.c.l.b16 %v4100
    %v4184 = vunpack.c.l.b16 %v4101
    %v4185 = vunpack.c.l.b16 %v4102
    %v4186 = vunpack.c.l.b16 %v4103
    %v4187 = vunpack.c.l.b16 %v4104
    %v4188 = vunpack.c.l.b16 %v4105
    %v4189 = vunpack.c.l.b16 %v4106
    %v4190 = vunpack.c.l.b16 %v4107
    %v4191 = vunpack.c.l.b16 %v4108
    %v4192 = vunpack.c.l.b16 %v4109
    %v4193 = vunpack.c.l.b16 %v4110
    %v4194 = vpack.c.b16 %v4156, %v4155
    %v4195 = vpack.c.b16 %v4158, %v4157
    %v4196 = vpack.c.b16 %v4160, %v4159
    %v4197 = vpack.c.b16 %v4162, %v4161
    %v4198 = vpack.c.b16 %v4164, %v4163
    %v4199 = vpack.c.b16 %v4166, %v4165
    %v4200 = vpack.c.b16 %v4168, %v4167
    %v4201 = vpack.c.b16 %v4170, %v4169
    %v4202 = vpack.c.b16 %v4172, %v4171
    %v4203 = vpack.c.b16 %v4174, %v4173
    %v4204 = vpack.c.b16 %v4176, %v4175
    %v4205 = vpack.c.b16 %v4178, %v4177
    %v4206 = vpack.c.b16 %v4180, %v4179
    %v4207 = vpack.c.b16 %v4182, %v4181
    %v4208 = vpack.c.b16 %v4184, %v4183
    %v4209 = vpack.c.b16 %v4186, %v4185
    %v4210 = vpack.c.b16 %v4188, %v4187
    %v4211 = vpack.c.b16 %v4190, %v4189
    %v4212 = vpack.c.b16 %v4192, %v4191
    %v4213 = vpack.c.b16 %v4193, %v4193
    %v4215 = vshrl.u32 %v4194, 16
    %v4217 = vrot.slane %v4215, 3
    %v4218 = vshll.u32 %v4194, 16
    %v4220 = vrot.slane %v4218, 4
    %v4221 = vor.u32 %v4217, %v4220
    %v4223 = vshrl.u32 %v4195, 16
    %v4225 = vrot.slane %v4223, 3
    %v4226 = vshll.u32 %v4195, 16
    %v4228 = vrot.slane %v4226, 4
    %v4229 = vor.u32 %v4225, %v4228
    %v4230 = vsel %vm1528, %v4221, %v4229
    %v4232 = vshrl.u32 %v4196, 16
    %v4234 = vrot.slane %v4232, 3
    %v4235 = vshll.u32 %v4196, 16
    %v4237 = vrot.slane %v4235, 4
    %v4238 = vor.u32 %v4234, %v4237
    %v4239 = vsel %vm1528, %v4229, %v4238
    %v4241 = vshrl.u32 %v4197, 16
    %v4243 = vrot.slane %v4241, 3
    %v4244 = vshll.u32 %v4197, 16
    %v4246 = vrot.slane %v4244, 4
    %v4247 = vor.u32 %v4243, %v4246
    %v4248 = vsel %vm1528, %v4238, %v4247
    %v4250 = vshrl.u32 %v4198, 16
    %v4252 = vrot.slane %v4250, 3
    %v4253 = vshll.u32 %v4198, 16
    %v4255 = vrot.slane %v4253, 4
    %v4256 = vor.u32 %v4252, %v4255
    %v4257 = vsel %vm1528, %v4247, %v4256
    %v4259 = vshrl.u32 %v4199, 16
    %v4261 = vrot.slane %v4259, 3
    %v4262 = vshll.u32 %v4199, 16
    %v4264 = vrot.slane %v4262, 4
    %v4265 = vor.u32 %v4261, %v4264
    %v4266 = vsel %vm1528, %v4256, %v4265
    %v4268 = vshrl.u32 %v4200, 16
    %v4270 = vrot.slane %v4268, 3
    %v4271 = vshll.u32 %v4200, 16
    %v4273 = vrot.slane %v4271, 4
    %v4274 = vor.u32 %v4270, %v4273
    %v4275 = vsel %vm1528, %v4265, %v4274
    %v4277 = vshrl.u32 %v4201, 16
    %v4279 = vrot.slane %v4277, 3
    %v4280 = vshll.u32 %v4201, 16
    %v4282 = vrot.slane %v4280, 4
    %v4283 = vor.u32 %v4279, %v4282
    %v4284 = vsel %vm1528, %v4274, %v4283
    %v4286 = vshrl.u32 %v4202, 16
    %v4288 = vrot.slane %v4286, 3
    %v4289 = vshll.u32 %v4202, 16
    %v4291 = vrot.slane %v4289, 4
    %v4292 = vor.u32 %v4288, %v4291
    %v4293 = vsel %vm1528, %v4283, %v4292
    %v4295 = vshrl.u32 %v4203, 16
    %v4297 = vrot.slane %v4295, 3
    %v4298 = vshll.u32 %v4203, 16
    %v4300 = vrot.slane %v4298, 4
    %v4301 = vor.u32 %v4297, %v4300
    %v4302 = vsel %vm1528, %v4292, %v4301
    %v4304 = vshrl.u32 %v4204, 16
    %v4306 = vrot.slane %v4304, 3
    %v4307 = vshll.u32 %v4204, 16
    %v4309 = vrot.slane %v4307, 4
    %v4310 = vor.u32 %v4306, %v4309
    %v4311 = vsel %vm1528, %v4301, %v4310
    %v4313 = vshrl.u32 %v4205, 16
    %v4315 = vrot.slane %v4313, 3
    %v4316 = vshll.u32 %v4205, 16
    %v4318 = vrot.slane %v4316, 4
    %v4319 = vor.u32 %v4315, %v4318
    %v4320 = vsel %vm1528, %v4310, %v4319
    %v4322 = vshrl.u32 %v4206, 16
    %v4324 = vrot.slane %v4322, 3
    %v4325 = vshll.u32 %v4206, 16
    %v4327 = vrot.slane %v4325, 4
    %v4328 = vor.u32 %v4324, %v4327
    %v4329 = vsel %vm1528, %v4319, %v4328
    %v4331 = vshrl.u32 %v4207, 16
    %v4333 = vrot.slane %v4331, 3
    %v4334 = vshll.u32 %v4207, 16
    %v4336 = vrot.slane %v4334, 4
    %v4337 = vor.u32 %v4333, %v4336
    %v4338 = vsel %vm1528, %v4328, %v4337
    %v4340 = vshrl.u32 %v4208, 16
    %v4342 = vrot.slane %v4340, 3
    %v4343 = vshll.u32 %v4208, 16
    %v4345 = vrot.slane %v4343, 4
    %v4346 = vor.u32 %v4342, %v4345
    %v4347 = vsel %vm1528, %v4337, %v4346
    %v4349 = vshrl.u32 %v4209, 16
    %v4351 = vrot.slane %v4349, 3
    %v4352 = vshll.u32 %v4209, 16
    %v4354 = vrot.slane %v4352, 4
    %v4355 = vor.u32 %v4351, %v4354
    %v4356 = vsel %vm1528, %v4346, %v4355
    %v4358 = vshrl.u32 %v4210, 16
    %v4360 = vrot.slane %v4358, 3
    %v4361 = vshll.u32 %v4210, 16
    %v4363 = vrot.slane %v4361, 4
    %v4364 = vor.u32 %v4360, %v4363
    %v4365 = vsel %vm1528, %v4355, %v4364
    %v4367 = vshrl.u32 %v4211, 16
    %v4369 = vrot.slane %v4367, 3
    %v4370 = vshll.u32 %v4211, 16
    %v4372 = vrot.slane %v4370, 4
    %v4373 = vor.u32 %v4369, %v4372
    %v4374 = vsel %vm1528, %v4364, %v4373
    %v4376 = vshrl.u32 %v4212, 16
    %v4378 = vrot.slane %v4376, 3
    %v4379 = vshll.u32 %v4212, 16
    %v4381 = vrot.slane %v4379, 4
    %v4382 = vor.u32 %v4378, %v4381
    %v4383 = vsel %vm1528, %v4373, %v4382
    %v4385 = vshrl.u32 %v4213, 16
    %v4387 = vrot.slane %v4385, 3
    %v4388 = vshll.u32 %v4213, 16
    %v4390 = vrot.slane %v4388, 4
    %v4391 = vor.u32 %v4387, %v4390
    %v4392 = vsel %vm1528, %v4382, %v4391
    %v4397 = vunpack.c.l.b16 %v4112
    %v4398 = vunpack.c.l.b16 %v4113
    %v4399 = vunpack.c.l.b16 %v4114
    %v4400 = vunpack.c.l.b16 %v4115
    %v4401 = vpack.c.b16 %v4398, %v4397
    %v4402 = vpack.c.b16 %v4400, %v4399
    %v4406 = vsel %vm387, %v4230, 0
    %v4409 = vsel %vm387, %v4239, 0
    %v4412 = vsel %vm387, %v4248, 0
    %v4415 = vsel %vm387, %v4257, 0
    %v4418 = vsel %vm387, %v4266, 0
    %v4421 = vsel %vm387, %v4275, 0
    %v4424 = vsel %vm387, %v4284, 0
    %v4427 = vsel %vm387, %v4293, 0
    %v4430 = vsel %vm387, %v4302, 0
    %v4433 = vsel %vm387, %v4311, 0
    %v4436 = vsel %vm387, %v4320, 0
    %v4439 = vsel %vm387, %v4329, 0
    %v4442 = vsel %vm387, %v4338, 0
    %v4445 = vsel %vm387, %v4347, 0
    %v4448 = vsel %vm387, %v4356, 0
    %v4451 = vsel %vm387, %v4365, 0
    %v4454 = vsel %vm387, %v4374, 0
    %v4457 = vsel %vm387, %v4383, 0
    %v4460 = vsel %vm387, %v4392, 0
    %4462 = vmatprep.subr.bf16.mxu0 0
    %4463 = vmatpush1.bf16.msra.mxu0 0
    %4464 = vmatprep.subr.bf16.mxu0 0
    %4465 = vmatpush1.bf16.msra.mxu0 0
    %4466 = vmatprep.subr.bf16.mxu0 0
    %4467 = vmatpush1.bf16.msra.mxu0 0
    %4468 = vmatprep.subr.bf16.mxu0 0
    %4469 = vmatpush1.bf16.msra.mxu0 0
    %4470 = vmatprep.subr.bf16.mxu0 0
    %4471 = vmatpush1.bf16.msra.mxu0 0
    %4472 = vmatprep.subr.bf16.mxu0 0
    %4473 = vmatpush1.bf16.msra.mxu0 0
    %4474 = vmatprep.subr.bf16.mxu0 0
    %4475 = vmatpush1.bf16.msra.mxu0 %v4402
    %4476 = vmatprep.subr.bf16.mxu0 0
    %4477 = vmatpush1.bf16.msra.mxu0 %v4401
    %4478 = vmatprep.subr.bf16.mxu0 0
    %4479 = vmatpush2.bf16.msra.mxu0 0
    %4480 = vmatprep.subr.bf16.mxu0 0
    %4481 = vmatpush2.bf16.msra.mxu0 0
    %4482 = vmatprep.subr.bf16.mxu0 0
    %4483 = vmatpush2.bf16.msra.mxu0 0
    %4484 = vmatprep.subr.bf16.mxu0 0
    %4485 = vmatpush2.bf16.msra.mxu0 0
    %4486 = vmatprep.subr.bf16.mxu0 0
    %4487 = vmatpush2.bf16.msra.mxu0 0
    %4488 = vmatprep.subr.bf16.mxu0 0
    %4489 = vmatpush2.bf16.msra.mxu0 0
    %4490 = vmatprep.subr.bf16.mxu0 0
    %4491 = vmatpush2.bf16.msra.mxu0 0
    %4492 = vmatprep.subr.bf16.mxu0 0
    %4493 = vmatpush2.bf16.msra.mxu0 0
    %4494 = vmatprep.mubr.bf16.mxu0 0
    %4495 = vmatmul.mubr.bf16.gmra.mxu0 %v4406
    %v4496 = vpop.f32.mrf.mxu0
    %v4497 = vadd.f32 0.0, %v4496
    %v4498 = vpop.f32.mrf.mxu0
    %v4499 = vpop.f32.mrf.mxu0
    %v4500 = vadd.f32 0.0, %v4499
    %v4501 = vpop.f32.mrf.mxu0
    %4502 = vmatprep.mubr.bf16.mxu0 0
    %4503 = vmatmul.mubr.bf16.gmra.mxu0 %v4409
    %v4504 = vpop.f32.mrf.mxu0
    %v4505 = vadd.f32 0.0, %v4504
    %v4506 = vpop.f32.mrf.mxu0
    %v4507 = vpop.f32.mrf.mxu0
    %v4508 = vadd.f32 0.0, %v4507
    %v4509 = vpop.f32.mrf.mxu0
    %4510 = vmatprep.mubr.bf16.mxu0 0
    %4511 = vmatmul.mubr.bf16.gmra.mxu0 %v4412
    %v4512 = vpop.f32.mrf.mxu0
    %v4513 = vadd.f32 0.0, %v4512
    %v4514 = vpop.f32.mrf.mxu0
    %v4515 = vpop.f32.mrf.mxu0
    %v4516 = vadd.f32 0.0, %v4515
    %v4517 = vpop.f32.mrf.mxu0
    %4518 = vmatprep.mubr.bf16.mxu0 0
    %4519 = vmatmul.mubr.bf16.gmra.mxu0 %v4415
    %v4520 = vpop.f32.mrf.mxu0
    %v4521 = vadd.f32 0.0, %v4520
    %v4522 = vpop.f32.mrf.mxu0
    %v4523 = vpop.f32.mrf.mxu0
    %v4524 = vadd.f32 0.0, %v4523
    %v4525 = vpop.f32.mrf.mxu0
    %4526 = vmatprep.mubr.bf16.mxu0 0
    %4527 = vmatmul.mubr.bf16.gmra.mxu0 %v4418
    %v4528 = vpop.f32.mrf.mxu0
    %v4529 = vadd.f32 0.0, %v4528
    %v4530 = vpop.f32.mrf.mxu0
    %v4531 = vpop.f32.mrf.mxu0
    %v4532 = vadd.f32 0.0, %v4531
    %v4533 = vpop.f32.mrf.mxu0
    %4534 = vmatprep.mubr.bf16.mxu0 0
    %4535 = vmatmul.mubr.bf16.gmra.mxu0 %v4421
    %v4536 = vpop.f32.mrf.mxu0
    %v4537 = vadd.f32 0.0, %v4536
    %v4538 = vpop.f32.mrf.mxu0
    %v4539 = vpop.f32.mrf.mxu0
    %v4540 = vadd.f32 0.0, %v4539
    %v4541 = vpop.f32.mrf.mxu0
    %4542 = vmatprep.mubr.bf16.mxu0 0
    %4543 = vmatmul.mubr.bf16.gmra.mxu0 %v4424
    %v4544 = vpop.f32.mrf.mxu0
    %v4545 = vadd.f32 0.0, %v4544
    %v4546 = vpop.f32.mrf.mxu0
    %v4547 = vpop.f32.mrf.mxu0
    %v4548 = vadd.f32 0.0, %v4547
    %v4549 = vpop.f32.mrf.mxu0
    %4550 = vmatprep.mubr.bf16.mxu0 0
    %4551 = vmatmul.mubr.bf16.gmra.mxu0 %v4427
    %v4552 = vpop.f32.mrf.mxu0
    %v4553 = vadd.f32 0.0, %v4552
    %v4554 = vpop.f32.mrf.mxu0
    %v4555 = vpop.f32.mrf.mxu0
    %v4556 = vadd.f32 0.0, %v4555
    %v4557 = vpop.f32.mrf.mxu0
    %4558 = vmatprep.mubr.bf16.mxu0 0
    %4559 = vmatmul.mubr.bf16.gmra.mxu0 %v4430
    %v4560 = vpop.f32.mrf.mxu0
    %v4561 = vadd.f32 0.0, %v4560
    %v4562 = vpop.f32.mrf.mxu0
    %v4563 = vpop.f32.mrf.mxu0
    %v4564 = vadd.f32 0.0, %v4563
    %v4565 = vpop.f32.mrf.mxu0
    %4566 = vmatprep.mubr.bf16.mxu0 0
    %4567 = vmatmul.mubr.bf16.gmra.mxu0 %v4433
    %v4568 = vpop.f32.mrf.mxu0
    %v4569 = vadd.f32 0.0, %v4568
    %v4570 = vpop.f32.mrf.mxu0
    %v4571 = vpop.f32.mrf.mxu0
    %v4572 = vadd.f32 0.0, %v4571
    %v4573 = vpop.f32.mrf.mxu0
    %4574 = vmatprep.mubr.bf16.mxu0 0
    %4575 = vmatmul.mubr.bf16.gmra.mxu0 %v4436
    %v4576 = vpop.f32.mrf.mxu0
    %v4577 = vadd.f32 0.0, %v4576
    %v4578 = vpop.f32.mrf.mxu0
    %v4579 = vpop.f32.mrf.mxu0
    %v4580 = vadd.f32 0.0, %v4579
    %v4581 = vpop.f32.mrf.mxu0
    %4582 = vmatprep.mubr.bf16.mxu0 0
    %4583 = vmatmul.mubr.bf16.gmra.mxu0 %v4439
    %v4584 = vpop.f32.mrf.mxu0
    %v4585 = vadd.f32 0.0, %v4584
    %v4586 = vpop.f32.mrf.mxu0
    %v4587 = vpop.f32.mrf.mxu0
    %v4588 = vadd.f32 0.0, %v4587
    %v4589 = vpop.f32.mrf.mxu0
    %4590 = vmatprep.mubr.bf16.mxu0 0
    %4591 = vmatmul.mubr.bf16.gmra.mxu0 %v4442
    %v4592 = vpop.f32.mrf.mxu0
    %v4593 = vadd.f32 0.0, %v4592
    %v4594 = vpop.f32.mrf.mxu0
    %v4595 = vpop.f32.mrf.mxu0
    %v4596 = vadd.f32 0.0, %v4595
    %v4597 = vpop.f32.mrf.mxu0
    %4598 = vmatprep.mubr.bf16.mxu0 0
    %4599 = vmatmul.mubr.bf16.gmra.mxu0 %v4445
    %v4600 = vpop.f32.mrf.mxu0
    %v4601 = vadd.f32 0.0, %v4600
    %v4602 = vpop.f32.mrf.mxu0
    %v4603 = vpop.f32.mrf.mxu0
    %v4604 = vadd.f32 0.0, %v4603
    %v4605 = vpop.f32.mrf.mxu0
    %4606 = vmatprep.mubr.bf16.mxu0 0
    %4607 = vmatmul.mubr.bf16.gmra.mxu0 %v4448
    %v4608 = vpop.f32.mrf.mxu0
    %v4609 = vadd.f32 0.0, %v4608
    %v4610 = vpop.f32.mrf.mxu0
    %v4611 = vpop.f32.mrf.mxu0
    %v4612 = vadd.f32 0.0, %v4611
    %v4613 = vpop.f32.mrf.mxu0
    %4614 = vmatprep.mubr.bf16.mxu0 0
    %4615 = vmatmul.mubr.bf16.gmra.mxu0 %v4451
    %v4616 = vpop.f32.mrf.mxu0
    %v4617 = vadd.f32 0.0, %v4616
    %v4618 = vpop.f32.mrf.mxu0
    %v4619 = vpop.f32.mrf.mxu0
    %v4620 = vadd.f32 0.0, %v4619
    %v4621 = vpop.f32.mrf.mxu0
    %4622 = vmatprep.mubr.bf16.mxu0 0
    %4623 = vmatmul.mubr.bf16.gmra.mxu0 %v4454
    %v4624 = vpop.f32.mrf.mxu0
    %v4625 = vadd.f32 0.0, %v4624
    %v4626 = vpop.f32.mrf.mxu0
    %v4627 = vpop.f32.mrf.mxu0
    %v4628 = vadd.f32 0.0, %v4627
    %v4629 = vpop.f32.mrf.mxu0
    %4630 = vmatprep.mubr.bf16.mxu0 0
    %4631 = vmatmul.mubr.bf16.gmra.mxu0 %v4457
    %v4632 = vpop.f32.mrf.mxu0
    %v4633 = vadd.f32 0.0, %v4632
    %v4634 = vpop.f32.mrf.mxu0
    %v4635 = vpop.f32.mrf.mxu0
    %v4636 = vadd.f32 0.0, %v4635
    %v4637 = vpop.f32.mrf.mxu0
    %4638 = vmatprep.mubr.bf16.mxu0 0
    %4639 = vmatmul.mubr.bf16.gmra.mxu0 %v4460
    %v4640 = vpop.f32.mrf.mxu0
    %v4641 = vadd.f32 0.0, %v4640
    %v4642 = vpop.f32.mrf.mxu0
    %v4643 = vpop.f32.mrf.mxu0
    %v4644 = vadd.f32 0.0, %v4643
    %v4645 = vpop.f32.mrf.mxu0
    %4646 = vdwg.mxu0
    %v4647 = vadd.f32 %v4034, %v4497
    %v4648 = vadd.f32 %v4035, %v4500
    %v4649 = vadd.f32 %v4036, %v4505
    %v4650 = vadd.f32 %v4037, %v4508
    %v4651 = vadd.f32 %v4038, %v4513
    %v4652 = vadd.f32 %v4039, %v4516
    %v4653 = vadd.f32 %v4040, %v4521
    %v4654 = vadd.f32 %v4041, %v4524
    %v4655 = vadd.f32 %v4042, %v4529
    %v4656 = vadd.f32 %v4043, %v4532
    %v4657 = vadd.f32 %v4044, %v4537
    %v4658 = vadd.f32 %v4045, %v4540
    %v4659 = vadd.f32 %v4046, %v4545
    %v4660 = vadd.f32 %v4047, %v4548
    %v4661 = vadd.f32 %v4048, %v4553
    %v4662 = vadd.f32 %v4049, %v4556
    %v4663 = vadd.f32 %v4050, %v4561
    %v4664 = vadd.f32 %v4051, %v4564
    %v4665 = vadd.f32 %v4052, %v4569
    %v4666 = vadd.f32 %v4053, %v4572
    %v4667 = vadd.f32 %v4054, %v4577
    %v4668 = vadd.f32 %v4055, %v4580
    %v4669 = vadd.f32 %v4056, %v4585
    %v4670 = vadd.f32 %v4057, %v4588
    %v4671 = vadd.f32 %v4058, %v4593
    %v4672 = vadd.f32 %v4059, %v4596
    %v4673 = vadd.f32 %v4060, %v4601
    %v4674 = vadd.f32 %v4061, %v4604
    %v4675 = vadd.f32 %v4062, %v4609
    %v4676 = vadd.f32 %v4063, %v4612
    %v4677 = vadd.f32 %v4064, %v4617
    %v4678 = vadd.f32 %v4065, %v4620
    %v4679 = vadd.f32 %v4066, %v4625
    %v4680 = vadd.f32 %v4067, %v4628
    %v4681 = vadd.f32 %v4068, %v4633
    %v4682 = vadd.f32 %v4069, %v4636
    %v4683 = vadd.f32 %v4070, %v4641
    %v4684 = vadd.f32 %v4071, %v4644
    %s4685 = scalar_lea.vmem [#allocation9], 112
    %v4686 = vld [vmem:[%s4685] sm:$0xf]
    %v4687 = vld [vmem:[%s4685 + $0x4] sm:$0xf]
    %v4688 = vld [vmem:[%s4685 + $0x8] sm:$0xf]
    %v4689 = vld [vmem:[%s4685 + $0xc] sm:$0xf]
    %v4690 = vpack.c.b16 %v4157, %v4156
    %v4691 = vpack.c.b16 %v4159, %v4158
    %v4692 = vpack.c.b16 %v4161, %v4160
    %v4693 = vpack.c.b16 %v4163, %v4162
    %v4694 = vpack.c.b16 %v4165, %v4164
    %v4695 = vpack.c.b16 %v4167, %v4166
    %v4696 = vpack.c.b16 %v4169, %v4168
    %v4697 = vpack.c.b16 %v4171, %v4170
    %v4698 = vpack.c.b16 %v4173, %v4172
    %v4699 = vpack.c.b16 %v4175, %v4174
    %v4700 = vpack.c.b16 %v4177, %v4176
    %v4701 = vpack.c.b16 %v4179, %v4178
    %v4702 = vpack.c.b16 %v4181, %v4180
    %v4703 = vpack.c.b16 %v4183, %v4182
    %v4704 = vpack.c.b16 %v4185, %v4184
    %v4705 = vpack.c.b16 %v4187, %v4186
    %v4706 = vpack.c.b16 %v4189, %v4188
    %v4707 = vpack.c.b16 %v4191, %v4190
    %v4708 = vpack.c.b16 %v4193, %v4192
    %v4713 = vunpack.c.l.b16 %v4686
    %v4714 = vunpack.c.l.b16 %v4687
    %v4715 = vunpack.c.l.b16 %v4688
    %v4716 = vunpack.c.l.b16 %v4689
    %v4717 = vpack.c.b16 %v4714, %v4713
    %v4718 = vpack.c.b16 %v4716, %v4715
    %v4722 = vsel %vm387, %v4690, 0
    %v4725 = vsel %vm387, %v4691, 0
    %v4728 = vsel %vm387, %v4692, 0
    %v4731 = vsel %vm387, %v4693, 0
    %v4734 = vsel %vm387, %v4694, 0
    %v4737 = vsel %vm387, %v4695, 0
    %v4740 = vsel %vm387, %v4696, 0
    %v4743 = vsel %vm387, %v4697, 0
    %v4746 = vsel %vm387, %v4698, 0
    %v4749 = vsel %vm387, %v4699, 0
    %v4752 = vsel %vm387, %v4700, 0
    %v4755 = vsel %vm387, %v4701, 0
    %v4758 = vsel %vm387, %v4702, 0
    %v4761 = vsel %vm387, %v4703, 0
    %v4764 = vsel %vm387, %v4704, 0
    %v4767 = vsel %vm387, %v4705, 0
    %v4770 = vsel %vm387, %v4706, 0
    %v4773 = vsel %vm387, %v4707, 0
    %v4776 = vsel %vm387, %v4708, 0
    %4778 = vmatprep.subr.bf16.mxu0 0
    %4779 = vmatpush1.bf16.msra.mxu0 0
    %4780 = vmatprep.subr.bf16.mxu0 0
    %4781 = vmatpush1.bf16.msra.mxu0 0
    %4782 = vmatprep.subr.bf16.mxu0 0
    %4783 = vmatpush1.bf16.msra.mxu0 0
    %4784 = vmatprep.subr.bf16.mxu0 0
    %4785 = vmatpush1.bf16.msra.mxu0 0
    %4786 = vmatprep.subr.bf16.mxu0 0
    %4787 = vmatpush1.bf16.msra.mxu0 0
    %4788 = vmatprep.subr.bf16.mxu0 0
    %4789 = vmatpush1.bf16.msra.mxu0 0
    %4790 = vmatprep.subr.bf16.mxu0 0
    %4791 = vmatpush1.bf16.msra.mxu0 %v4718
    %4792 = vmatprep.subr.bf16.mxu0 0
    %4793 = vmatpush1.bf16.msra.mxu0 %v4717
    %4794 = vmatprep.subr.bf16.mxu0 0
    %4795 = vmatpush2.bf16.msra.mxu0 0
    %4796 = vmatprep.subr.bf16.mxu0 0
    %4797 = vmatpush2.bf16.msra.mxu0 0
    %4798 = vmatprep.subr.bf16.mxu0 0
    %4799 = vmatpush2.bf16.msra.mxu0 0
    %4800 = vmatprep.subr.bf16.mxu0 0
    %4801 = vmatpush2.bf16.msra.mxu0 0
    %4802 = vmatprep.subr.bf16.mxu0 0
    %4803 = vmatpush2.bf16.msra.mxu0 0
    %4804 = vmatprep.subr.bf16.mxu0 0
    %4805 = vmatpush2.bf16.msra.mxu0 0
    %4806 = vmatprep.subr.bf16.mxu0 0
    %4807 = vmatpush2.bf16.msra.mxu0 0
    %4808 = vmatprep.subr.bf16.mxu0 0
    %4809 = vmatpush2.bf16.msra.mxu0 0
    %4810 = vmatprep.mubr.bf16.mxu0 0
    %4811 = vmatmul.mubr.bf16.gmra.mxu0 %v4722
    %v4812 = vpop.f32.mrf.mxu0
    %v4813 = vadd.f32 0.0, %v4812
    %v4814 = vpop.f32.mrf.mxu0
    %v4815 = vpop.f32.mrf.mxu0
    %v4816 = vadd.f32 0.0, %v4815
    %v4817 = vpop.f32.mrf.mxu0
    %4818 = vmatprep.mubr.bf16.mxu0 0
    %4819 = vmatmul.mubr.bf16.gmra.mxu0 %v4725
    %v4820 = vpop.f32.mrf.mxu0
    %v4821 = vadd.f32 0.0, %v4820
    %v4822 = vpop.f32.mrf.mxu0
    %v4823 = vpop.f32.mrf.mxu0
    %v4824 = vadd.f32 0.0, %v4823
    %v4825 = vpop.f32.mrf.mxu0
    %4826 = vmatprep.mubr.bf16.mxu0 0
    %4827 = vmatmul.mubr.bf16.gmra.mxu0 %v4728
    %v4828 = vpop.f32.mrf.mxu0
    %v4829 = vadd.f32 0.0, %v4828
    %v4830 = vpop.f32.mrf.mxu0
    %v4831 = vpop.f32.mrf.mxu0
    %v4832 = vadd.f32 0.0, %v4831
    %v4833 = vpop.f32.mrf.mxu0
    %4834 = vmatprep.mubr.bf16.mxu0 0
    %4835 = vmatmul.mubr.bf16.gmra.mxu0 %v4731
    %v4836 = vpop.f32.mrf.mxu0
    %v4837 = vadd.f32 0.0, %v4836
    %v4838 = vpop.f32.mrf.mxu0
    %v4839 = vpop.f32.mrf.mxu0
    %v4840 = vadd.f32 0.0, %v4839
    %v4841 = vpop.f32.mrf.mxu0
    %4842 = vmatprep.mubr.bf16.mxu0 0
    %4843 = vmatmul.mubr.bf16.gmra.mxu0 %v4734
    %v4844 = vpop.f32.mrf.mxu0
    %v4845 = vadd.f32 0.0, %v4844
    %v4846 = vpop.f32.mrf.mxu0
    %v4847 = vpop.f32.mrf.mxu0
    %v4848 = vadd.f32 0.0, %v4847
    %v4849 = vpop.f32.mrf.mxu0
    %4850 = vmatprep.mubr.bf16.mxu0 0
    %4851 = vmatmul.mubr.bf16.gmra.mxu0 %v4737
    %v4852 = vpop.f32.mrf.mxu0
    %v4853 = vadd.f32 0.0, %v4852
    %v4854 = vpop.f32.mrf.mxu0
    %v4855 = vpop.f32.mrf.mxu0
    %v4856 = vadd.f32 0.0, %v4855
    %v4857 = vpop.f32.mrf.mxu0
    %4858 = vmatprep.mubr.bf16.mxu0 0
    %4859 = vmatmul.mubr.bf16.gmra.mxu0 %v4740
    %v4860 = vpop.f32.mrf.mxu0
    %v4861 = vadd.f32 0.0, %v4860
    %v4862 = vpop.f32.mrf.mxu0
    %v4863 = vpop.f32.mrf.mxu0
    %v4864 = vadd.f32 0.0, %v4863
    %v4865 = vpop.f32.mrf.mxu0
    %4866 = vmatprep.mubr.bf16.mxu0 0
    %4867 = vmatmul.mubr.bf16.gmra.mxu0 %v4743
    %v4868 = vpop.f32.mrf.mxu0
    %v4869 = vadd.f32 0.0, %v4868
    %v4870 = vpop.f32.mrf.mxu0
    %v4871 = vpop.f32.mrf.mxu0
    %v4872 = vadd.f32 0.0, %v4871
    %v4873 = vpop.f32.mrf.mxu0
    %4874 = vmatprep.mubr.bf16.mxu0 0
    %4875 = vmatmul.mubr.bf16.gmra.mxu0 %v4746
    %v4876 = vpop.f32.mrf.mxu0
    %v4877 = vadd.f32 0.0, %v4876
    %v4878 = vpop.f32.mrf.mxu0
    %v4879 = vpop.f32.mrf.mxu0
    %v4880 = vadd.f32 0.0, %v4879
    %v4881 = vpop.f32.mrf.mxu0
    %4882 = vmatprep.mubr.bf16.mxu0 0
    %4883 = vmatmul.mubr.bf16.gmra.mxu0 %v4749
    %v4884 = vpop.f32.mrf.mxu0
    %v4885 = vadd.f32 0.0, %v4884
    %v4886 = vpop.f32.mrf.mxu0
    %v4887 = vpop.f32.mrf.mxu0
    %v4888 = vadd.f32 0.0, %v4887
    %v4889 = vpop.f32.mrf.mxu0
    %4890 = vmatprep.mubr.bf16.mxu0 0
    %4891 = vmatmul.mubr.bf16.gmra.mxu0 %v4752
    %v4892 = vpop.f32.mrf.mxu0
    %v4893 = vadd.f32 0.0, %v4892
    %v4894 = vpop.f32.mrf.mxu0
    %v4895 = vpop.f32.mrf.mxu0
    %v4896 = vadd.f32 0.0, %v4895
    %v4897 = vpop.f32.mrf.mxu0
    %4898 = vmatprep.mubr.bf16.mxu0 0
    %4899 = vmatmul.mubr.bf16.gmra.mxu0 %v4755
    %v4900 = vpop.f32.mrf.mxu0
    %v4901 = vadd.f32 0.0, %v4900
    %v4902 = vpop.f32.mrf.mxu0
    %v4903 = vpop.f32.mrf.mxu0
    %v4904 = vadd.f32 0.0, %v4903
    %v4905 = vpop.f32.mrf.mxu0
    %4906 = vmatprep.mubr.bf16.mxu0 0
    %4907 = vmatmul.mubr.bf16.gmra.mxu0 %v4758
    %v4908 = vpop.f32.mrf.mxu0
    %v4909 = vadd.f32 0.0, %v4908
    %v4910 = vpop.f32.mrf.mxu0
    %v4911 = vpop.f32.mrf.mxu0
    %v4912 = vadd.f32 0.0, %v4911
    %v4913 = vpop.f32.mrf.mxu0
    %4914 = vmatprep.mubr.bf16.mxu0 0
    %4915 = vmatmul.mubr.bf16.gmra.mxu0 %v4761
    %v4916 = vpop.f32.mrf.mxu0
    %v4917 = vadd.f32 0.0, %v4916
    %v4918 = vpop.f32.mrf.mxu0
    %v4919 = vpop.f32.mrf.mxu0
    %v4920 = vadd.f32 0.0, %v4919
    %v4921 = vpop.f32.mrf.mxu0
    %4922 = vmatprep.mubr.bf16.mxu0 0
    %4923 = vmatmul.mubr.bf16.gmra.mxu0 %v4764
    %v4924 = vpop.f32.mrf.mxu0
    %v4925 = vadd.f32 0.0, %v4924
    %v4926 = vpop.f32.mrf.mxu0
    %v4927 = vpop.f32.mrf.mxu0
    %v4928 = vadd.f32 0.0, %v4927
    %v4929 = vpop.f32.mrf.mxu0
    %4930 = vmatprep.mubr.bf16.mxu0 0
    %4931 = vmatmul.mubr.bf16.gmra.mxu0 %v4767
    %v4932 = vpop.f32.mrf.mxu0
    %v4933 = vadd.f32 0.0, %v4932
    %v4934 = vpop.f32.mrf.mxu0
    %v4935 = vpop.f32.mrf.mxu0
    %v4936 = vadd.f32 0.0, %v4935
    %v4937 = vpop.f32.mrf.mxu0
    %4938 = vmatprep.mubr.bf16.mxu0 0
    %4939 = vmatmul.mubr.bf16.gmra.mxu0 %v4770
    %v4940 = vpop.f32.mrf.mxu0
    %v4941 = vadd.f32 0.0, %v4940
    %v4942 = vpop.f32.mrf.mxu0
    %v4943 = vpop.f32.mrf.mxu0
    %v4944 = vadd.f32 0.0, %v4943
    %v4945 = vpop.f32.mrf.mxu0
    %4946 = vmatprep.mubr.bf16.mxu0 0
    %4947 = vmatmul.mubr.bf16.gmra.mxu0 %v4773
    %v4948 = vpop.f32.mrf.mxu0
    %v4949 = vadd.f32 0.0, %v4948
    %v4950 = vpop.f32.mrf.mxu0
    %v4951 = vpop.f32.mrf.mxu0
    %v4952 = vadd.f32 0.0, %v4951
    %v4953 = vpop.f32.mrf.mxu0
    %4954 = vmatprep.mubr.bf16.mxu0 0
    %4955 = vmatmul.mubr.bf16.gmra.mxu0 %v4776
    %v4956 = vpop.f32.mrf.mxu0
    %v4957 = vadd.f32 0.0, %v4956
    %v4958 = vpop.f32.mrf.mxu0
    %v4959 = vpop.f32.mrf.mxu0
    %v4960 = vadd.f32 0.0, %v4959
    %v4961 = vpop.f32.mrf.mxu0
    %4962 = vdwg.mxu0
    %v4963 = vadd.f32 %v4647, %v4813
    %v4964 = vadd.f32 %v4648, %v4816
    %v4965 = vadd.f32 %v4649, %v4821
    %v4966 = vadd.f32 %v4650, %v4824
    %v4967 = vadd.f32 %v4651, %v4829
    %v4968 = vadd.f32 %v4652, %v4832
    %v4969 = vadd.f32 %v4653, %v4837
    %v4970 = vadd.f32 %v4654, %v4840
    %v4971 = vadd.f32 %v4655, %v4845
    %v4972 = vadd.f32 %v4656, %v4848
    %v4973 = vadd.f32 %v4657, %v4853
    %v4974 = vadd.f32 %v4658, %v4856
    %v4975 = vadd.f32 %v4659, %v4861
    %v4976 = vadd.f32 %v4660, %v4864
    %v4977 = vadd.f32 %v4661, %v4869
    %v4978 = vadd.f32 %v4662, %v4872
    %v4979 = vadd.f32 %v4663, %v4877
    %v4980 = vadd.f32 %v4664, %v4880
    %v4981 = vadd.f32 %v4665, %v4885
    %v4982 = vadd.f32 %v4666, %v4888
    %v4983 = vadd.f32 %v4667, %v4893
    %v4984 = vadd.f32 %v4668, %v4896
    %v4985 = vadd.f32 %v4669, %v4901
    %v4986 = vadd.f32 %v4670, %v4904
    %v4987 = vadd.f32 %v4671, %v4909
    %v4988 = vadd.f32 %v4672, %v4912
    %v4989 = vadd.f32 %v4673, %v4917
    %v4990 = vadd.f32 %v4674, %v4920
    %v4991 = vadd.f32 %v4675, %v4925
    %v4992 = vadd.f32 %v4676, %v4928
    %v4993 = vadd.f32 %v4677, %v4933
    %v4994 = vadd.f32 %v4678, %v4936
    %v4995 = vadd.f32 %v4679, %v4941
    %v4996 = vadd.f32 %v4680, %v4944
    %v4997 = vadd.f32 %v4681, %v4949
    %v4998 = vadd.f32 %v4682, %v4952
    %v4999 = vadd.f32 %v4683, %v4957
    %v5000 = vadd.f32 %v4684, %v4960
    %v5001 = vld [vmem:[#allocation3 + $0x14] sm:$0xf]
    %v5002 = vld [vmem:[#allocation3 + $0x18] sm:$0xf]
    %v5003 = vld [vmem:[#allocation3 + $0x1c] sm:$0xf]
    %v5004 = vld [vmem:[#allocation3 + $0x20] sm:$0xf]
    %v5005 = vld [vmem:[#allocation3 + $0x24] sm:$0xf]
    %v5006 = vld [vmem:[#allocation3 + $0x28] sm:$0xf]
    %v5007 = vld [vmem:[#allocation3 + $0x2c] sm:$0xf]
    %v5008 = vld [vmem:[#allocation3 + $0x30] sm:$0xf]
    %v5009 = vld [vmem:[#allocation3 + $0x34] sm:$0xf]
    %v5010 = vld [vmem:[#allocation3 + $0x38] sm:$0xf]
    %v5011 = vld [vmem:[#allocation3 + $0x3c] sm:$0xf]
    %v5012 = vld [vmem:[#allocation3 + $0x40] sm:$0xf]
    %v5013 = vld [vmem:[#allocation3 + $0x44] sm:$0xf]
    %v5014 = vld [vmem:[#allocation3 + $0x48] sm:$0xf]
    %v5015 = vld [vmem:[#allocation3 + $0x4c] sm:$0xf]
    %v5016 = vld [vmem:[#allocation3 + $0x50] sm:$0xf]
    %v5017 = vld [vmem:[#allocation3 + $0x54] sm:$0xf]
    %v5018 = vld [vmem:[#allocation3 + $0x58] sm:$0xf]
    %v5019 = vld [vmem:[#allocation3 + $0x5c] sm:$0xf]
    %v5020 = vld [vmem:[#allocation3 + $0x60] sm:$0xf]
    %v5021 = vld [vmem:[#allocation3 + $0x64] sm:$0xf]
    %v5022 = vld [vmem:[#allocation3 + $0x68] sm:$0xf]
    %v5023 = vld [vmem:[#allocation3 + $0x6c] sm:$0xf]
    %v5024 = vld [vmem:[#allocation3 + $0x70] sm:$0xf]
    %v5025 = vld [vmem:[#allocation3 + $0x74] sm:$0xf]
    %v5026 = vld [vmem:[#allocation3 + $0x78] sm:$0xf]
    %v5027 = vld [vmem:[#allocation3 + $0x7c] sm:$0xf]
    %v5028 = vld [vmem:[#allocation3 + $0x80] sm:$0xf]
    %v5029 = vld [vmem:[#allocation3 + $0x84] sm:$0xf]
    %v5030 = vld [vmem:[#allocation3 + $0x88] sm:$0xf]
    %v5031 = vld [vmem:[#allocation3 + $0x8c] sm:$0xf]
    %v5032 = vld [vmem:[#allocation3 + $0x90] sm:$0xf]
    %v5033 = vld [vmem:[#allocation3 + $0x94] sm:$0xf]
    %v5034 = vld [vmem:[#allocation3 + $0x98] sm:$0xf]
    %v5035 = vld [vmem:[#allocation3 + $0x9c] sm:$0xf]
    %v5036 = vld [vmem:[#allocation3 + $0xa0] sm:$0xf]
    %v5037 = vld [vmem:[#allocation3 + $0xa4] sm:$0xf]
    %v5038 = vld [vmem:[#allocation3 + $0xa8] sm:$0xf]
    %v5039 = vld [vmem:[#allocation3 + $0xac] sm:$0x1]
    %s5040 = scalar_lea.vmem [#allocation9], 128
    %v5041 = vld [vmem:[%s5040] sm:$0xf]
    %v5042 = vld [vmem:[%s5040 + $0x4] sm:$0xf]
    %v5043 = vld [vmem:[%s5040 + $0x8] sm:$0xf]
    %v5044 = vld [vmem:[%s5040 + $0xc] sm:$0xf]
    %v5084 = vunpack.c.l.b16 %v5001
    %v5085 = vunpack.c.l.b16 %v5002
    %v5086 = vunpack.c.l.b16 %v5003
    %v5087 = vunpack.c.l.b16 %v5004
    %v5088 = vunpack.c.l.b16 %v5005
    %v5089 = vunpack.c.l.b16 %v5006
    %v5090 = vunpack.c.l.b16 %v5007
    %v5091 = vunpack.c.l.b16 %v5008
    %v5092 = vunpack.c.l.b16 %v5009
    %v5093 = vunpack.c.l.b16 %v5010
    %v5094 = vunpack.c.l.b16 %v5011
    %v5095 = vunpack.c.l.b16 %v5012
    %v5096 = vunpack.c.l.b16 %v5013
    %v5097 = vunpack.c.l.b16 %v5014
    %v5098 = vunpack.c.l.b16 %v5015
    %v5099 = vunpack.c.l.b16 %v5016
    %v5100 = vunpack.c.l.b16 %v5017
    %v5101 = vunpack.c.l.b16 %v5018
    %v5102 = vunpack.c.l.b16 %v5019
    %v5103 = vunpack.c.l.b16 %v5020
    %v5104 = vunpack.c.l.b16 %v5021
    %v5105 = vunpack.c.l.b16 %v5022
    %v5106 = vunpack.c.l.b16 %v5023
    %v5107 = vunpack.c.l.b16 %v5024
    %v5108 = vunpack.c.l.b16 %v5025
    %v5109 = vunpack.c.l.b16 %v5026
    %v5110 = vunpack.c.l.b16 %v5027
    %v5111 = vunpack.c.l.b16 %v5028
    %v5112 = vunpack.c.l.b16 %v5029
    %v5113 = vunpack.c.l.b16 %v5030
    %v5114 = vunpack.c.l.b16 %v5031
    %v5115 = vunpack.c.l.b16 %v5032
    %v5116 = vunpack.c.l.b16 %v5033
    %v5117 = vunpack.c.l.b16 %v5034
    %v5118 = vunpack.c.l.b16 %v5035
    %v5119 = vunpack.c.l.b16 %v5036
    %v5120 = vunpack.c.l.b16 %v5037
    %v5121 = vunpack.c.l.b16 %v5038
    %v5122 = vunpack.c.l.b16 %v5039
    %v5123 = vpack.c.b16 %v5085, %v5084
    %v5124 = vpack.c.b16 %v5087, %v5086
    %v5125 = vpack.c.b16 %v5089, %v5088
    %v5126 = vpack.c.b16 %v5091, %v5090
    %v5127 = vpack.c.b16 %v5093, %v5092
    %v5128 = vpack.c.b16 %v5095, %v5094
    %v5129 = vpack.c.b16 %v5097, %v5096
    %v5130 = vpack.c.b16 %v5099, %v5098
    %v5131 = vpack.c.b16 %v5101, %v5100
    %v5132 = vpack.c.b16 %v5103, %v5102
    %v5133 = vpack.c.b16 %v5105, %v5104
    %v5134 = vpack.c.b16 %v5107, %v5106
    %v5135 = vpack.c.b16 %v5109, %v5108
    %v5136 = vpack.c.b16 %v5111, %v5110
    %v5137 = vpack.c.b16 %v5113, %v5112
    %v5138 = vpack.c.b16 %v5115, %v5114
    %v5139 = vpack.c.b16 %v5117, %v5116
    %v5140 = vpack.c.b16 %v5119, %v5118
    %v5141 = vpack.c.b16 %v5121, %v5120
    %v5142 = vpack.c.b16 %v5122, %v5122
    %v5144 = vshrl.u32 %v5123, 16
    %v5146 = vshll.u32 %v5123, 16
    %v5148 = vrot.slane %v5146, 1
    %v5149 = vor.u32 %v5144, %v5148
    %v5151 = vshll.u32 %v5124, 16
    %v5153 = vrot.slane %v5151, 1
    %v5154 = vsel %vm2104, %v5149, %v5153
    %v5155 = vshrl.u32 %v5124, 16
    %v5157 = vor.u32 %v5155, %v5153
    %v5159 = vshll.u32 %v5125, 16
    %v5161 = vrot.slane %v5159, 1
    %v5162 = vsel %vm2104, %v5157, %v5161
    %v5163 = vshrl.u32 %v5125, 16
    %v5165 = vor.u32 %v5163, %v5161
    %v5167 = vshll.u32 %v5126, 16
    %v5169 = vrot.slane %v5167, 1
    %v5170 = vsel %vm2104, %v5165, %v5169
    %v5171 = vshrl.u32 %v5126, 16
    %v5173 = vor.u32 %v5171, %v5169
    %v5175 = vshll.u32 %v5127, 16
    %v5177 = vrot.slane %v5175, 1
    %v5178 = vsel %vm2104, %v5173, %v5177
    %v5179 = vshrl.u32 %v5127, 16
    %v5181 = vor.u32 %v5179, %v5177
    %v5183 = vshll.u32 %v5128, 16
    %v5185 = vrot.slane %v5183, 1
    %v5186 = vsel %vm2104, %v5181, %v5185
    %v5187 = vshrl.u32 %v5128, 16
    %v5189 = vor.u32 %v5187, %v5185
    %v5191 = vshll.u32 %v5129, 16
    %v5193 = vrot.slane %v5191, 1
    %v5194 = vsel %vm2104, %v5189, %v5193
    %v5195 = vshrl.u32 %v5129, 16
    %v5197 = vor.u32 %v5195, %v5193
    %v5199 = vshll.u32 %v5130, 16
    %v5201 = vrot.slane %v5199, 1
    %v5202 = vsel %vm2104, %v5197, %v5201
    %v5203 = vshrl.u32 %v5130, 16
    %v5205 = vor.u32 %v5203, %v5201
    %v5207 = vshll.u32 %v5131, 16
    %v5209 = vrot.slane %v5207, 1
    %v5210 = vsel %vm2104, %v5205, %v5209
    %v5211 = vshrl.u32 %v5131, 16
    %v5213 = vor.u32 %v5211, %v5209
    %v5215 = vshll.u32 %v5132, 16
    %v5217 = vrot.slane %v5215, 1
    %v5218 = vsel %vm2104, %v5213, %v5217
    %v5219 = vshrl.u32 %v5132, 16
    %v5221 = vor.u32 %v5219, %v5217
    %v5223 = vshll.u32 %v5133, 16
    %v5225 = vrot.slane %v5223, 1
    %v5226 = vsel %vm2104, %v5221, %v5225
    %v5227 = vshrl.u32 %v5133, 16
    %v5229 = vor.u32 %v5227, %v5225
    %v5231 = vshll.u32 %v5134, 16
    %v5233 = vrot.slane %v5231, 1
    %v5234 = vsel %vm2104, %v5229, %v5233
    %v5235 = vshrl.u32 %v5134, 16
    %v5237 = vor.u32 %v5235, %v5233
    %v5239 = vshll.u32 %v5135, 16
    %v5241 = vrot.slane %v5239, 1
    %v5242 = vsel %vm2104, %v5237, %v5241
    %v5243 = vshrl.u32 %v5135, 16
    %v5245 = vor.u32 %v5243, %v5241
    %v5247 = vshll.u32 %v5136, 16
    %v5249 = vrot.slane %v5247, 1
    %v5250 = vsel %vm2104, %v5245, %v5249
    %v5251 = vshrl.u32 %v5136, 16
    %v5253 = vor.u32 %v5251, %v5249
    %v5255 = vshll.u32 %v5137, 16
    %v5257 = vrot.slane %v5255, 1
    %v5258 = vsel %vm2104, %v5253, %v5257
    %v5259 = vshrl.u32 %v5137, 16
    %v5261 = vor.u32 %v5259, %v5257
    %v5263 = vshll.u32 %v5138, 16
    %v5265 = vrot.slane %v5263, 1
    %v5266 = vsel %vm2104, %v5261, %v5265
    %v5267 = vshrl.u32 %v5138, 16
    %v5269 = vor.u32 %v5267, %v5265
    %v5271 = vshll.u32 %v5139, 16
    %v5273 = vrot.slane %v5271, 1
    %v5274 = vsel %vm2104, %v5269, %v5273
    %v5275 = vshrl.u32 %v5139, 16
    %v5277 = vor.u32 %v5275, %v5273
    %v5279 = vshll.u32 %v5140, 16
    %v5281 = vrot.slane %v5279, 1
    %v5282 = vsel %vm2104, %v5277, %v5281
    %v5283 = vshrl.u32 %v5140, 16
    %v5285 = vor.u32 %v5283, %v5281
    %v5287 = vshll.u32 %v5141, 16
    %v5289 = vrot.slane %v5287, 1
    %v5290 = vsel %vm2104, %v5285, %v5289
    %v5291 = vshrl.u32 %v5141, 16
    %v5293 = vor.u32 %v5291, %v5289
    %v5295 = vshll.u32 %v5142, 16
    %v5297 = vrot.slane %v5295, 1
    %v5298 = vsel %vm2104, %v5293, %v5297
    %v5303 = vunpack.c.l.b16 %v5041
    %v5304 = vunpack.c.l.b16 %v5042
    %v5305 = vunpack.c.l.b16 %v5043
    %v5306 = vunpack.c.l.b16 %v5044
    %v5307 = vpack.c.b16 %v5304, %v5303
    %v5308 = vpack.c.b16 %v5306, %v5305
    %v5312 = vsel %vm387, %v5154, 0
    %v5315 = vsel %vm387, %v5162, 0
    %v5318 = vsel %vm387, %v5170, 0
    %v5321 = vsel %vm387, %v5178, 0
    %v5324 = vsel %vm387, %v5186, 0
    %v5327 = vsel %vm387, %v5194, 0
    %v5330 = vsel %vm387, %v5202, 0
    %v5333 = vsel %vm387, %v5210, 0
    %v5336 = vsel %vm387, %v5218, 0
    %v5339 = vsel %vm387, %v5226, 0
    %v5342 = vsel %vm387, %v5234, 0
    %v5345 = vsel %vm387, %v5242, 0
    %v5348 = vsel %vm387, %v5250, 0
    %v5351 = vsel %vm387, %v5258, 0
    %v5354 = vsel %vm387, %v5266, 0
    %v5357 = vsel %vm387, %v5274, 0
    %v5360 = vsel %vm387, %v5282, 0
    %v5363 = vsel %vm387, %v5290, 0
    %v5366 = vsel %vm387, %v5298, 0
    %5368 = vmatprep.subr.bf16.mxu0 0
    %5369 = vmatpush1.bf16.msra.mxu0 0
    %5370 = vmatprep.subr.bf16.mxu0 0
    %5371 = vmatpush1.bf16.msra.mxu0 0
    %5372 = vmatprep.subr.bf16.mxu0 0
    %5373 = vmatpush1.bf16.msra.mxu0 0
    %5374 = vmatprep.subr.bf16.mxu0 0
    %5375 = vmatpush1.bf16.msra.mxu0 0
    %5376 = vmatprep.subr.bf16.mxu0 0
    %5377 = vmatpush1.bf16.msra.mxu0 0
    %5378 = vmatprep.subr.bf16.mxu0 0
    %5379 = vmatpush1.bf16.msra.mxu0 0
    %5380 = vmatprep.subr.bf16.mxu0 0
    %5381 = vmatpush1.bf16.msra.mxu0 %v5308
    %5382 = vmatprep.subr.bf16.mxu0 0
    %5383 = vmatpush1.bf16.msra.mxu0 %v5307
    %5384 = vmatprep.subr.bf16.mxu0 0
    %5385 = vmatpush2.bf16.msra.mxu0 0
    %5386 = vmatprep.subr.bf16.mxu0 0
    %5387 = vmatpush2.bf16.msra.mxu0 0
    %5388 = vmatprep.subr.bf16.mxu0 0
    %5389 = vmatpush2.bf16.msra.mxu0 0
    %5390 = vmatprep.subr.bf16.mxu0 0
    %5391 = vmatpush2.bf16.msra.mxu0 0
    %5392 = vmatprep.subr.bf16.mxu0 0
    %5393 = vmatpush2.bf16.msra.mxu0 0
    %5394 = vmatprep.subr.bf16.mxu0 0
    %5395 = vmatpush2.bf16.msra.mxu0 0
    %5396 = vmatprep.subr.bf16.mxu0 0
    %5397 = vmatpush2.bf16.msra.mxu0 0
    %5398 = vmatprep.subr.bf16.mxu0 0
    %5399 = vmatpush2.bf16.msra.mxu0 0
    %5400 = vmatprep.mubr.bf16.mxu0 0
    %5401 = vmatmul.mubr.bf16.gmra.mxu0 %v5312
    %v5402 = vpop.f32.mrf.mxu0
    %v5403 = vadd.f32 0.0, %v5402
    %v5404 = vpop.f32.mrf.mxu0
    %v5405 = vpop.f32.mrf.mxu0
    %v5406 = vadd.f32 0.0, %v5405
    %v5407 = vpop.f32.mrf.mxu0
    %5408 = vmatprep.mubr.bf16.mxu0 0
    %5409 = vmatmul.mubr.bf16.gmra.mxu0 %v5315
    %v5410 = vpop.f32.mrf.mxu0
    %v5411 = vadd.f32 0.0, %v5410
    %v5412 = vpop.f32.mrf.mxu0
    %v5413 = vpop.f32.mrf.mxu0
    %v5414 = vadd.f32 0.0, %v5413
    %v5415 = vpop.f32.mrf.mxu0
    %5416 = vmatprep.mubr.bf16.mxu0 0
    %5417 = vmatmul.mubr.bf16.gmra.mxu0 %v5318
    %v5418 = vpop.f32.mrf.mxu0
    %v5419 = vadd.f32 0.0, %v5418
    %v5420 = vpop.f32.mrf.mxu0
    %v5421 = vpop.f32.mrf.mxu0
    %v5422 = vadd.f32 0.0, %v5421
    %v5423 = vpop.f32.mrf.mxu0
    %5424 = vmatprep.mubr.bf16.mxu0 0
    %5425 = vmatmul.mubr.bf16.gmra.mxu0 %v5321
    %v5426 = vpop.f32.mrf.mxu0
    %v5427 = vadd.f32 0.0, %v5426
    %v5428 = vpop.f32.mrf.mxu0
    %v5429 = vpop.f32.mrf.mxu0
    %v5430 = vadd.f32 0.0, %v5429
    %v5431 = vpop.f32.mrf.mxu0
    %5432 = vmatprep.mubr.bf16.mxu0 0
    %5433 = vmatmul.mubr.bf16.gmra.mxu0 %v5324
    %v5434 = vpop.f32.mrf.mxu0
    %v5435 = vadd.f32 0.0, %v5434
    %v5436 = vpop.f32.mrf.mxu0
    %v5437 = vpop.f32.mrf.mxu0
    %v5438 = vadd.f32 0.0, %v5437
    %v5439 = vpop.f32.mrf.mxu0
    %5440 = vmatprep.mubr.bf16.mxu0 0
    %5441 = vmatmul.mubr.bf16.gmra.mxu0 %v5327
    %v5442 = vpop.f32.mrf.mxu0
    %v5443 = vadd.f32 0.0, %v5442
    %v5444 = vpop.f32.mrf.mxu0
    %v5445 = vpop.f32.mrf.mxu0
    %v5446 = vadd.f32 0.0, %v5445
    %v5447 = vpop.f32.mrf.mxu0
    %5448 = vmatprep.mubr.bf16.mxu0 0
    %5449 = vmatmul.mubr.bf16.gmra.mxu0 %v5330
    %v5450 = vpop.f32.mrf.mxu0
    %v5451 = vadd.f32 0.0, %v5450
    %v5452 = vpop.f32.mrf.mxu0
    %v5453 = vpop.f32.mrf.mxu0
    %v5454 = vadd.f32 0.0, %v5453
    %v5455 = vpop.f32.mrf.mxu0
    %5456 = vmatprep.mubr.bf16.mxu0 0
    %5457 = vmatmul.mubr.bf16.gmra.mxu0 %v5333
    %v5458 = vpop.f32.mrf.mxu0
    %v5459 = vadd.f32 0.0, %v5458
    %v5460 = vpop.f32.mrf.mxu0
    %v5461 = vpop.f32.mrf.mxu0
    %v5462 = vadd.f32 0.0, %v5461
    %v5463 = vpop.f32.mrf.mxu0
    %5464 = vmatprep.mubr.bf16.mxu0 0
    %5465 = vmatmul.mubr.bf16.gmra.mxu0 %v5336
    %v5466 = vpop.f32.mrf.mxu0
    %v5467 = vadd.f32 0.0, %v5466
    %v5468 = vpop.f32.mrf.mxu0
    %v5469 = vpop.f32.mrf.mxu0
    %v5470 = vadd.f32 0.0, %v5469
    %v5471 = vpop.f32.mrf.mxu0
    %5472 = vmatprep.mubr.bf16.mxu0 0
    %5473 = vmatmul.mubr.bf16.gmra.mxu0 %v5339
    %v5474 = vpop.f32.mrf.mxu0
    %v5475 = vadd.f32 0.0, %v5474
    %v5476 = vpop.f32.mrf.mxu0
    %v5477 = vpop.f32.mrf.mxu0
    %v5478 = vadd.f32 0.0, %v5477
    %v5479 = vpop.f32.mrf.mxu0
    %5480 = vmatprep.mubr.bf16.mxu0 0
    %5481 = vmatmul.mubr.bf16.gmra.mxu0 %v5342
    %v5482 = vpop.f32.mrf.mxu0
    %v5483 = vadd.f32 0.0, %v5482
    %v5484 = vpop.f32.mrf.mxu0
    %v5485 = vpop.f32.mrf.mxu0
    %v5486 = vadd.f32 0.0, %v5485
    %v5487 = vpop.f32.mrf.mxu0
    %5488 = vmatprep.mubr.bf16.mxu0 0
    %5489 = vmatmul.mubr.bf16.gmra.mxu0 %v5345
    %v5490 = vpop.f32.mrf.mxu0
    %v5491 = vadd.f32 0.0, %v5490
    %v5492 = vpop.f32.mrf.mxu0
    %v5493 = vpop.f32.mrf.mxu0
    %v5494 = vadd.f32 0.0, %v5493
    %v5495 = vpop.f32.mrf.mxu0
    %5496 = vmatprep.mubr.bf16.mxu0 0
    %5497 = vmatmul.mubr.bf16.gmra.mxu0 %v5348
    %v5498 = vpop.f32.mrf.mxu0
    %v5499 = vadd.f32 0.0, %v5498
    %v5500 = vpop.f32.mrf.mxu0
    %v5501 = vpop.f32.mrf.mxu0
    %v5502 = vadd.f32 0.0, %v5501
    %v5503 = vpop.f32.mrf.mxu0
    %5504 = vmatprep.mubr.bf16.mxu0 0
    %5505 = vmatmul.mubr.bf16.gmra.mxu0 %v5351
    %v5506 = vpop.f32.mrf.mxu0
    %v5507 = vadd.f32 0.0, %v5506
    %v5508 = vpop.f32.mrf.mxu0
    %v5509 = vpop.f32.mrf.mxu0
    %v5510 = vadd.f32 0.0, %v5509
    %v5511 = vpop.f32.mrf.mxu0
    %5512 = vmatprep.mubr.bf16.mxu0 0
    %5513 = vmatmul.mubr.bf16.gmra.mxu0 %v5354
    %v5514 = vpop.f32.mrf.mxu0
    %v5515 = vadd.f32 0.0, %v5514
    %v5516 = vpop.f32.mrf.mxu0
    %v5517 = vpop.f32.mrf.mxu0
    %v5518 = vadd.f32 0.0, %v5517
    %v5519 = vpop.f32.mrf.mxu0
    %5520 = vmatprep.mubr.bf16.mxu0 0
    %5521 = vmatmul.mubr.bf16.gmra.mxu0 %v5357
    %v5522 = vpop.f32.mrf.mxu0
    %v5523 = vadd.f32 0.0, %v5522
    %v5524 = vpop.f32.mrf.mxu0
    %v5525 = vpop.f32.mrf.mxu0
    %v5526 = vadd.f32 0.0, %v5525
    %v5527 = vpop.f32.mrf.mxu0
    %5528 = vmatprep.mubr.bf16.mxu0 0
    %5529 = vmatmul.mubr.bf16.gmra.mxu0 %v5360
    %v5530 = vpop.f32.mrf.mxu0
    %v5531 = vadd.f32 0.0, %v5530
    %v5532 = vpop.f32.mrf.mxu0
    %v5533 = vpop.f32.mrf.mxu0
    %v5534 = vadd.f32 0.0, %v5533
    %v5535 = vpop.f32.mrf.mxu0
    %5536 = vmatprep.mubr.bf16.mxu0 0
    %5537 = vmatmul.mubr.bf16.gmra.mxu0 %v5363
    %v5538 = vpop.f32.mrf.mxu0
    %v5539 = vadd.f32 0.0, %v5538
    %v5540 = vpop.f32.mrf.mxu0
    %v5541 = vpop.f32.mrf.mxu0
    %v5542 = vadd.f32 0.0, %v5541
    %v5543 = vpop.f32.mrf.mxu0
    %5544 = vmatprep.mubr.bf16.mxu0 0
    %5545 = vmatmul.mubr.bf16.gmra.mxu0 %v5366
    %v5546 = vpop.f32.mrf.mxu0
    %v5547 = vadd.f32 0.0, %v5546
    %v5548 = vpop.f32.mrf.mxu0
    %v5549 = vpop.f32.mrf.mxu0
    %v5550 = vadd.f32 0.0, %v5549
    %v5551 = vpop.f32.mrf.mxu0
    %5552 = vdwg.mxu0
    %v5553 = vadd.f32 %v4963, %v5403
    %v5554 = vadd.f32 %v4964, %v5406
    %v5555 = vadd.f32 %v4965, %v5411
    %v5556 = vadd.f32 %v4966, %v5414
    %v5557 = vadd.f32 %v4967, %v5419
    %v5558 = vadd.f32 %v4968, %v5422
    %v5559 = vadd.f32 %v4969, %v5427
    %v5560 = vadd.f32 %v4970, %v5430
    %v5561 = vadd.f32 %v4971, %v5435
    %v5562 = vadd.f32 %v4972, %v5438
    %v5563 = vadd.f32 %v4973, %v5443
    %v5564 = vadd.f32 %v4974, %v5446
    %v5565 = vadd.f32 %v4975, %v5451
    %v5566 = vadd.f32 %v4976, %v5454
    %v5567 = vadd.f32 %v4977, %v5459
    %v5568 = vadd.f32 %v4978, %v5462
    %v5569 = vadd.f32 %v4979, %v5467
    %v5570 = vadd.f32 %v4980, %v5470
    %v5571 = vadd.f32 %v4981, %v5475
    %v5572 = vadd.f32 %v4982, %v5478
    %v5573 = vadd.f32 %v4983, %v5483
    %v5574 = vadd.f32 %v4984, %v5486
    %v5575 = vadd.f32 %v4985, %v5491
    %v5576 = vadd.f32 %v4986, %v5494
    %v5577 = vadd.f32 %v4987, %v5499
    %v5578 = vadd.f32 %v4988, %v5502
    %v5579 = vadd.f32 %v4989, %v5507
    %v5580 = vadd.f32 %v4990, %v5510
    %v5581 = vadd.f32 %v4991, %v5515
    %v5582 = vadd.f32 %v4992, %v5518
    %v5583 = vadd.f32 %v4993, %v5523
    %v5584 = vadd.f32 %v4994, %v5526
    %v5585 = vadd.f32 %v4995, %v5531
    %v5586 = vadd.f32 %v4996, %v5534
    %v5587 = vadd.f32 %v4997, %v5539
    %v5588 = vadd.f32 %v4998, %v5542
    %v5589 = vadd.f32 %v4999, %v5547
    %v5590 = vadd.f32 %v5000, %v5550
    %v5591 = vld [vmem:[%s4] sm:$0x1]
    %v5593 = vlaneseq
    %v5594 = vshrl.u32 %v5593, 7
    %v5595 = vsub.s32 0, %v5594
    %v5596 = vrot.slane %v5591, %v5595
    %v5598 = vadd.f32 %v5553, %v5596
    %v5599 = vadd.f32 %v5554, %v5596
    %v5600 = vadd.f32 %v5555, %v5596
    %v5601 = vadd.f32 %v5556, %v5596
    %v5602 = vadd.f32 %v5557, %v5596
    %v5603 = vadd.f32 %v5558, %v5596
    %v5604 = vadd.f32 %v5559, %v5596
    %v5605 = vadd.f32 %v5560, %v5596
    %v5606 = vadd.f32 %v5561, %v5596
    %v5607 = vadd.f32 %v5562, %v5596
    %v5608 = vadd.f32 %v5563, %v5596
    %v5609 = vadd.f32 %v5564, %v5596
    %v5610 = vadd.f32 %v5565, %v5596
    %v5611 = vadd.f32 %v5566, %v5596
    %v5612 = vadd.f32 %v5567, %v5596
    %v5613 = vadd.f32 %v5568, %v5596
    %v5614 = vadd.f32 %v5569, %v5596
    %v5615 = vadd.f32 %v5570, %v5596
    %v5616 = vadd.f32 %v5571, %v5596
    %v5617 = vadd.f32 %v5572, %v5596
    %v5618 = vadd.f32 %v5573, %v5596
    %v5619 = vadd.f32 %v5574, %v5596
    %v5620 = vadd.f32 %v5575, %v5596
    %v5621 = vadd.f32 %v5576, %v5596
    %v5622 = vadd.f32 %v5577, %v5596
    %v5623 = vadd.f32 %v5578, %v5596
    %v5624 = vadd.f32 %v5579, %v5596
    %v5625 = vadd.f32 %v5580, %v5596
    %v5626 = vadd.f32 %v5581, %v5596
    %v5627 = vadd.f32 %v5582, %v5596
    %v5628 = vadd.f32 %v5583, %v5596
    %v5629 = vadd.f32 %v5584, %v5596
    %v5630 = vadd.f32 %v5585, %v5596
    %v5631 = vadd.f32 %v5586, %v5596
    %v5632 = vadd.f32 %v5587, %v5596
    %v5633 = vadd.f32 %v5588, %v5596
    %v5634 = vadd.f32 %v5589, %v5596
    %v5635 = vadd.f32 %v5590, %v5596
    %v5636 = vmax.f32 %v5598, 0.0
    %v5637 = vmax.f32 %v5599, 0.0
    %v5638 = vmax.f32 %v5600, 0.0
    %v5639 = vmax.f32 %v5601, 0.0
    %v5640 = vmax.f32 %v5602, 0.0
    %v5641 = vmax.f32 %v5603, 0.0
    %v5642 = vmax.f32 %v5604, 0.0
    %v5643 = vmax.f32 %v5605, 0.0
    %v5644 = vmax.f32 %v5606, 0.0
    %v5645 = vmax.f32 %v5607, 0.0
    %v5646 = vmax.f32 %v5608, 0.0
    %v5647 = vmax.f32 %v5609, 0.0
    %v5648 = vmax.f32 %v5610, 0.0
    %v5649 = vmax.f32 %v5611, 0.0
    %v5650 = vmax.f32 %v5612, 0.0
    %v5651 = vmax.f32 %v5613, 0.0
    %v5652 = vmax.f32 %v5614, 0.0
    %v5653 = vmax.f32 %v5615, 0.0
    %v5654 = vmax.f32 %v5616, 0.0
    %v5655 = vmax.f32 %v5617, 0.0
    %v5656 = vmax.f32 %v5618, 0.0
    %v5657 = vmax.f32 %v5619, 0.0
    %v5658 = vmax.f32 %v5620, 0.0
    %v5659 = vmax.f32 %v5621, 0.0
    %v5660 = vmax.f32 %v5622, 0.0
    %v5661 = vmax.f32 %v5623, 0.0
    %v5662 = vmax.f32 %v5624, 0.0
    %v5663 = vmax.f32 %v5625, 0.0
    %v5664 = vmax.f32 %v5626, 0.0
    %v5665 = vmax.f32 %v5627, 0.0
    %v5666 = vmax.f32 %v5628, 0.0
    %v5667 = vmax.f32 %v5629, 0.0
    %v5668 = vmax.f32 %v5630, 0.0
    %v5669 = vmax.f32 %v5631, 0.0
    %v5670 = vmax.f32 %v5632, 0.0
    %v5671 = vmax.f32 %v5633, 0.0
    %v5672 = vmax.f32 %v5634, 0.0
    %v5673 = vmax.f32 %v5635, 0.0
    %vm5674 = vcmask 523264
    %5675 = vst.msk [vmem:[#allocation4] sm:$0xff] %vm5674, %v5636
    %5676 = vst.msk [vmem:[#allocation4 + $0x8] sm:$0xff] %vm5674, %v5637
    %5677 = vst.msk [vmem:[#allocation4 + $0x10] sm:$0xff] %vm5674, %v5638
    %5678 = vst.msk [vmem:[#allocation4 + $0x18] sm:$0xff] %vm5674, %v5639
    %5679 = vst.msk [vmem:[#allocation4 + $0x20] sm:$0xff] %vm5674, %v5640
    %5680 = vst.msk [vmem:[#allocation4 + $0x28] sm:$0xff] %vm5674, %v5641
    %5681 = vst.msk [vmem:[#allocation4 + $0x30] sm:$0xff] %vm5674, %v5642
    %5682 = vst.msk [vmem:[#allocation4 + $0x38] sm:$0xff] %vm5674, %v5643
    %5683 = vst.msk [vmem:[#allocation4 + $0x40] sm:$0xff] %vm5674, %v5644
    %5684 = vst.msk [vmem:[#allocation4 + $0x48] sm:$0xff] %vm5674, %v5645
    %5685 = vst.msk [vmem:[#allocation4 + $0x50] sm:$0xff] %vm5674, %v5646
    %5686 = vst.msk [vmem:[#allocation4 + $0x58] sm:$0xff] %vm5674, %v5647
    %5687 = vst.msk [vmem:[#allocation4 + $0x60] sm:$0xff] %vm5674, %v5648
    %5688 = vst.msk [vmem:[#allocation4 + $0x68] sm:$0xff] %vm5674, %v5649
    %5689 = vst.msk [vmem:[#allocation4 + $0x70] sm:$0xff] %vm5674, %v5650
    %5690 = vst.msk [vmem:[#allocation4 + $0x78] sm:$0xff] %vm5674, %v5651
    %5691 = vst.msk [vmem:[#allocation4 + $0x80] sm:$0xff] %vm5674, %v5652
    %5692 = vst.msk [vmem:[#allocation4 + $0x88] sm:$0xff] %vm5674, %v5653
    %5693 = vst.msk [vmem:[#allocation4 + $0x90] sm:$0xff] %vm5674, %v5654
    %5694 = vst.msk [vmem:[#allocation4 + $0x98] sm:$0xff] %vm5674, %v5655
    %5695 = vst.msk [vmem:[#allocation4 + $0xa0] sm:$0xff] %vm5674, %v5656
    %5696 = vst.msk [vmem:[#allocation4 + $0xa8] sm:$0xff] %vm5674, %v5657
    %5697 = vst.msk [vmem:[#allocation4 + $0xb0] sm:$0xff] %vm5674, %v5658
    %5698 = vst.msk [vmem:[#allocation4 + $0xb8] sm:$0xff] %vm5674, %v5659
    %5699 = vst.msk [vmem:[#allocation4 + $0xc0] sm:$0xff] %vm5674, %v5660
    %5700 = vst.msk [vmem:[#allocation4 + $0xc8] sm:$0xff] %vm5674, %v5661
    %5701 = vst.msk [vmem:[#allocation4 + $0xd0] sm:$0xff] %vm5674, %v5662
    %5702 = vst.msk [vmem:[#allocation4 + $0xd8] sm:$0xff] %vm5674, %v5663
    %5703 = vst.msk [vmem:[#allocation4 + $0xe0] sm:$0xff] %vm5674, %v5664
    %5704 = vst.msk [vmem:[#allocation4 + $0xe8] sm:$0xff] %vm5674, %v5665
    %5705 = vst.msk [vmem:[#allocation4 + $0xf0] sm:$0xff] %vm5674, %v5666
    %5706 = vst.msk [vmem:[#allocation4 + $0xf8] sm:$0xff] %vm5674, %v5667
    %5707 = vst.msk [vmem:[#allocation4 + $0x100] sm:$0xff] %vm5674, %v5668
    %5708 = vst.msk [vmem:[#allocation4 + $0x108] sm:$0xff] %vm5674, %v5669
    %5709 = vst.msk [vmem:[#allocation4 + $0x110] sm:$0xff] %vm5674, %v5670
    %5710 = vst.msk [vmem:[#allocation4 + $0x118] sm:$0xff] %vm5674, %v5671
    %5711 = vst.msk [vmem:[#allocation4 + $0x120] sm:$0xff] %vm5674, %v5672
    %5712 = vst.msk [vmem:[#allocation4 + $0x128] sm:$0xff] %vm5674, %v5673
    %v5713 = vld [vmem:[#allocation4] ss:$2 sm:$0xf]
    %s5714 = scalar_lea.vmem [#allocation4], 1
    %v5715 = vld [vmem:[%s5714] ss:$2 sm:$0xf]
    %v5716 = vmax.f32 %v5713, %v5715
    %s5717 = scalar_lea.vmem [#allocation4], 16
    %v5718 = vld [vmem:[%s5717] ss:$2 sm:$0xf]
    %s5719 = scalar_lea.vmem [#allocation4], 17
    %v5720 = vld [vmem:[%s5719] ss:$2 sm:$0xf]
    %v5721 = vmax.f32 %v5718, %v5720
    %v5722 = vmax.f32 %v5716, %v5721
    %v5723 = vpack.c.bf16 %v5722, %v5722
    %vm5724 = vcmask 517120
    %5725 = vst.msk [vmem:[#allocation5 + $0x8] sm:$0x3] %vm5724, %v5723
    %s5726 = scalar_lea.vmem [#allocation4], 32
    %v5727 = vld [vmem:[%s5726] ss:$2 sm:$0xf]
    %s5728 = scalar_lea.vmem [#allocation4], 33
    %v5729 = vld [vmem:[%s5728] ss:$2 sm:$0xf]
    %v5730 = vmax.f32 %v5727, %v5729
    %s5731 = scalar_lea.vmem [#allocation4], 48
    %v5732 = vld [vmem:[%s5731] ss:$2 sm:$0xf]
    %s5733 = scalar_lea.vmem [#allocation4], 49
    %v5734 = vld [vmem:[%s5733] ss:$2 sm:$0xf]
    %v5735 = vmax.f32 %v5732, %v5734
    %v5736 = vmax.f32 %v5730, %v5735
    %v5737 = vpack.c.bf16 %v5736, %v5736
    %5738 = vst.msk [vmem:[#allocation5 + $0xc] sm:$0x3] %vm5724, %v5737
    %s5739 = scalar_lea.vmem [#allocation4], 64
    %v5740 = vld [vmem:[%s5739] ss:$2 sm:$0xf]
    %s5741 = scalar_lea.vmem [#allocation4], 65
    %v5742 = vld [vmem:[%s5741] ss:$2 sm:$0xf]
    %v5743 = vmax.f32 %v5740, %v5742
    %s5744 = scalar_lea.vmem [#allocation4], 80
    %v5745 = vld [vmem:[%s5744] ss:$2 sm:$0xf]
    %s5746 = scalar_lea.vmem [#allocation4], 81
    %v5747 = vld [vmem:[%s5746] ss:$2 sm:$0xf]
    %v5748 = vmax.f32 %v5745, %v5747
    %v5749 = vmax.f32 %v5743, %v5748
    %v5750 = vpack.c.bf16 %v5749, %v5749
    %5751 = vst.msk [vmem:[#allocation5 + $0x10] sm:$0x3] %vm5724, %v5750
    %s5752 = scalar_lea.vmem [#allocation4], 96
    %v5753 = vld [vmem:[%s5752] ss:$2 sm:$0xf]
    %s5754 = scalar_lea.vmem [#allocation4], 97
    %v5755 = vld [vmem:[%s5754] ss:$2 sm:$0xf]
    %v5756 = vmax.f32 %v5753, %v5755
    %s5757 = scalar_lea.vmem [#allocation4], 112
    %v5758 = vld [vmem:[%s5757] ss:$2 sm:$0xf]
    %s5759 = scalar_lea.vmem [#allocation4], 113
    %v5760 = vld [vmem:[%s5759] ss:$2 sm:$0xf]
    %v5761 = vmax.f32 %v5758, %v5760
    %v5762 = vmax.f32 %v5756, %v5761
    %v5763 = vpack.c.bf16 %v5762, %v5762
    %5764 = vst.msk [vmem:[#allocation5 + $0x14] sm:$0x3] %vm5724, %v5763
    %s5765 = scalar_lea.vmem [#allocation4], 176
    %v5766 = vld [vmem:[%s5765] ss:$2 sm:$0xf]
    %s5767 = scalar_lea.vmem [#allocation4], 177
    %v5768 = vld [vmem:[%s5767] ss:$2 sm:$0xf]
    %v5769 = vmax.f32 %v5766, %v5768
    %s5770 = scalar_lea.vmem [#allocation4], 192
    %v5771 = vld [vmem:[%s5770] ss:$2 sm:$0xf]
    %s5772 = scalar_lea.vmem [#allocation4], 193
    %v5773 = vld [vmem:[%s5772] ss:$2 sm:$0xf]
    %v5774 = vmax.f32 %v5771, %v5773
    %v5775 = vmax.f32 %v5769, %v5774
    %v5776 = vpack.c.bf16 %v5775, %v5775
    %5777 = vst.msk [vmem:[#allocation5 + $0x28] sm:$0x3] %vm5724, %v5776
    %s5778 = scalar_lea.vmem [#allocation4], 208
    %v5779 = vld [vmem:[%s5778] ss:$2 sm:$0xf]
    %s5780 = scalar_lea.vmem [#allocation4], 209
    %v5781 = vld [vmem:[%s5780] ss:$2 sm:$0xf]
    %v5782 = vmax.f32 %v5779, %v5781
    %s5783 = scalar_lea.vmem [#allocation4], 224
    %v5784 = vld [vmem:[%s5783] ss:$2 sm:$0xf]
    %s5785 = scalar_lea.vmem [#allocation4], 225
    %v5786 = vld [vmem:[%s5785] ss:$2 sm:$0xf]
    %v5787 = vmax.f32 %v5784, %v5786
    %v5788 = vmax.f32 %v5782, %v5787
    %v5789 = vpack.c.bf16 %v5788, %v5788
    %5790 = vst.msk [vmem:[#allocation5 + $0x2c] sm:$0x3] %vm5724, %v5789
    %s5791 = scalar_lea.vmem [#allocation4], 240
    %v5792 = vld [vmem:[%s5791] ss:$2 sm:$0xf]
    %s5793 = scalar_lea.vmem [#allocation4], 241
    %v5794 = vld [vmem:[%s5793] ss:$2 sm:$0xf]
    %v5795 = vmax.f32 %v5792, %v5794
    %s5796 = scalar_lea.vmem [#allocation4], 256
    %v5797 = vld [vmem:[%s5796] ss:$2 sm:$0xf]
    %s5798 = scalar_lea.vmem [#allocation4], 257
    %v5799 = vld [vmem:[%s5798] ss:$2 sm:$0xf]
    %v5800 = vmax.f32 %v5797, %v5799
    %v5801 = vmax.f32 %v5795, %v5800
    %v5802 = vpack.c.bf16 %v5801, %v5801
    %5803 = vst.msk [vmem:[#allocation5 + $0x30] sm:$0x3] %vm5724, %v5802
    %s5804 = scalar_lea.vmem [#allocation4], 272
    %v5805 = vld [vmem:[%s5804] ss:$2 sm:$0xf]
    %s5806 = scalar_lea.vmem [#allocation4], 273
    %v5807 = vld [vmem:[%s5806] ss:$2 sm:$0xf]
    %v5808 = vmax.f32 %v5805, %v5807
    %s5809 = scalar_lea.vmem [#allocation4], 288
    %v5810 = vld [vmem:[%s5809] ss:$2 sm:$0xf]
    %s5811 = scalar_lea.vmem [#allocation4], 289
    %v5812 = vld [vmem:[%s5811] ss:$2 sm:$0xf]
    %v5813 = vmax.f32 %v5810, %v5812
    %v5814 = vmax.f32 %v5808, %v5813
    %v5815 = vpack.c.bf16 %v5814, %v5814
    %5816 = vst.msk [vmem:[#allocation5 + $0x34] sm:$0x3] %vm5724, %v5815
    %v5817 = vld [vmem:[#allocation5] sm:$0x8]
    %v5818 = vld [vmem:[#allocation5 + $0x4] sm:$0xf]
    %v5819 = vld [vmem:[#allocation5 + $0x8] sm:$0xf]
    %v5820 = vld [vmem:[#allocation5 + $0xc] sm:$0xf]
    %v5821 = vld [vmem:[#allocation5 + $0x10] sm:$0xf]
    %v5822 = vld [vmem:[#allocation5 + $0x14] sm:$0xf]
    %v5823 = vld [vmem:[#allocation5 + $0x18] sm:$0xf]
    %v5824 = vld [vmem:[#allocation5 + $0x1c] sm:$0xf]
    %v5825 = vld [vmem:[#allocation5 + $0x20] sm:$0xf]
    %v5826 = vld [vmem:[#allocation5 + $0x24] sm:$0xf]
    %v5827 = vld [vmem:[#allocation5 + $0x28] sm:$0xf]
    %v5828 = vld [vmem:[#allocation5 + $0x2c] sm:$0xf]
    %v5829 = vld [vmem:[#allocation5 + $0x30] sm:$0xf]
    %v5830 = vld [vmem:[%s5] sm:$0xf]
    %v5831 = vld [vmem:[%s5 + $0x4] sm:$0xf]
    %v5832 = vld [vmem:[%s5 + $0x8] sm:$0xf]
    %v5833 = vld [vmem:[%s5 + $0xc] sm:$0xf]
    %v5834 = vld [vmem:[%s5 + $0x10] sm:$0xf]
    %v5835 = vld [vmem:[%s5 + $0x14] sm:$0xf]
    %v5836 = vld [vmem:[%s5 + $0x18] sm:$0xf]
    %v5837 = vld [vmem:[%s5 + $0x1c] sm:$0xf]
    %s5838 = scalar_lea.vmem %s5, 32
    %v5839 = vld [vmem:[%s5838] sm:$0xf]
    %v5840 = vld [vmem:[%s5838 + $0x4] sm:$0xf]
    %v5841 = vld [vmem:[%s5838 + $0x8] sm:$0xf]
    %v5842 = vld [vmem:[%s5838 + $0xc] sm:$0xf]
    %v5843 = vld [vmem:[%s5838 + $0x10] sm:$0xf]
    %v5844 = vld [vmem:[%s5838 + $0x14] sm:$0xf]
    %v5845 = vld [vmem:[%s5838 + $0x18] sm:$0xf]
    %v5846 = vld [vmem:[%s5838 + $0x1c] sm:$0xf]
    %v5859 = vunpack.c.l.b16 %v5818
    %v5860 = vunpack.c.l.b16 %v5819
    %v5861 = vunpack.c.l.b16 %v5820
    %v5862 = vunpack.c.l.b16 %v5821
    %v5863 = vunpack.c.l.b16 %v5822
    %v5864 = vunpack.c.l.b16 %v5823
    %v5865 = vunpack.c.l.b16 %v5824
    %v5866 = vunpack.c.l.b16 %v5825
    %v5867 = vunpack.c.l.b16 %v5826
    %v5868 = vunpack.c.l.b16 %v5827
    %v5869 = vunpack.c.l.b16 %v5828
    %v5870 = vunpack.c.l.b16 %v5829
    %v5871 = vpack.c.b16 %v5860, %v5859
    %v5872 = vpack.c.b16 %v5862, %v5861
    %v5873 = vpack.c.b16 %v5864, %v5863
    %v5874 = vpack.c.b16 %v5866, %v5865
    %v5875 = vpack.c.b16 %v5868, %v5867
    %v5876 = vpack.c.b16 %v5870, %v5869
    %v5885 = vunpack.c.l.b16 %v5839
    %v5886 = vunpack.c.l.b16 %v5840
    %v5887 = vunpack.c.l.b16 %v5841
    %v5888 = vunpack.c.l.b16 %v5842
    %v5889 = vunpack.c.l.b16 %v5843
    %v5890 = vunpack.c.l.b16 %v5844
    %v5891 = vunpack.c.l.b16 %v5845
    %v5892 = vunpack.c.l.b16 %v5846
    %v5893 = vpack.c.b16 %v5886, %v5885
    %v5894 = vpack.c.b16 %v5888, %v5887
    %v5895 = vpack.c.b16 %v5890, %v5889
    %v5896 = vpack.c.b16 %v5892, %v5891
    %v5902 = vsel %vm5674, %v5871, 0
    %v5905 = vsel %vm5674, %v5872, 0
    %v5908 = vsel %vm5674, %v5873, 0
    %v5911 = vsel %vm5674, %v5874, 0
    %v5914 = vsel %vm5674, %v5875, 0
    %v5917 = vsel %vm5674, %v5876, 0
    %5919 = vmatprep.subr.bf16.mxu0 0
    %5920 = vmatpush1.bf16.msra.mxu0 0
    %5921 = vmatprep.subr.bf16.mxu0 0
    %5922 = vmatpush1.bf16.msra.mxu0 0
    %5923 = vmatprep.subr.bf16.mxu0 0
    %5924 = vmatpush1.bf16.msra.mxu0 0
    %5925 = vmatprep.subr.bf16.mxu0 0
    %5926 = vmatpush1.bf16.msra.mxu0 0
    %5927 = vmatprep.subr.bf16.mxu0 0
    %5928 = vmatpush1.bf16.msra.mxu0 %v5896
    %5929 = vmatprep.subr.bf16.mxu0 0
    %5930 = vmatpush1.bf16.msra.mxu0 %v5895
    %5931 = vmatprep.subr.bf16.mxu0 0
    %5932 = vmatpush1.bf16.msra.mxu0 %v5894
    %5933 = vmatprep.subr.bf16.mxu0 0
    %5934 = vmatpush1.bf16.msra.mxu0 %v5893
    %5935 = vmatprep.subr.bf16.mxu0 0
    %5936 = vmatpush2.bf16.msra.mxu0 0
    %5937 = vmatprep.subr.bf16.mxu0 0
    %5938 = vmatpush2.bf16.msra.mxu0 0
    %5939 = vmatprep.subr.bf16.mxu0 0
    %5940 = vmatpush2.bf16.msra.mxu0 0
    %5941 = vmatprep.subr.bf16.mxu0 0
    %5942 = vmatpush2.bf16.msra.mxu0 0
    %5943 = vmatprep.subr.bf16.mxu0 0
    %5944 = vmatpush2.bf16.msra.mxu0 0
    %5945 = vmatprep.subr.bf16.mxu0 0
    %5946 = vmatpush2.bf16.msra.mxu0 0
    %5947 = vmatprep.subr.bf16.mxu0 0
    %5948 = vmatpush2.bf16.msra.mxu0 0
    %5949 = vmatprep.subr.bf16.mxu0 0
    %5950 = vmatpush2.bf16.msra.mxu0 0
    %5951 = vmatprep.mubr.bf16.mxu0 0
    %5952 = vmatmul.mubr.bf16.gmra.mxu0 %v5902
    %v5953 = vpop.f32.mrf.mxu0
    %v5954 = vadd.f32 0.0, %v5953
    %v5955 = vpop.f32.mrf.mxu0
    %v5956 = vpop.f32.mrf.mxu0
    %v5957 = vadd.f32 0.0, %v5956
    %v5958 = vpop.f32.mrf.mxu0
    %5959 = vmatprep.mubr.bf16.mxu0 0
    %5960 = vmatmul.mubr.bf16.gmra.mxu0 %v5905
    %v5961 = vpop.f32.mrf.mxu0
    %v5962 = vadd.f32 0.0, %v5961
    %v5963 = vpop.f32.mrf.mxu0
    %v5964 = vpop.f32.mrf.mxu0
    %v5965 = vadd.f32 0.0, %v5964
    %v5966 = vpop.f32.mrf.mxu0
    %5967 = vmatprep.mubr.bf16.mxu0 0
    %5968 = vmatmul.mubr.bf16.gmra.mxu0 %v5908
    %v5969 = vpop.f32.mrf.mxu0
    %v5970 = vadd.f32 0.0, %v5969
    %v5971 = vpop.f32.mrf.mxu0
    %v5972 = vpop.f32.mrf.mxu0
    %v5973 = vadd.f32 0.0, %v5972
    %v5974 = vpop.f32.mrf.mxu0
    %5975 = vmatprep.mubr.bf16.mxu0 0
    %5976 = vmatmul.mubr.bf16.gmra.mxu0 %v5911
    %v5977 = vpop.f32.mrf.mxu0
    %v5978 = vadd.f32 0.0, %v5977
    %v5979 = vpop.f32.mrf.mxu0
    %v5980 = vpop.f32.mrf.mxu0
    %v5981 = vadd.f32 0.0, %v5980
    %v5982 = vpop.f32.mrf.mxu0
    %5983 = vmatprep.mubr.bf16.mxu0 0
    %5984 = vmatmul.mubr.bf16.gmra.mxu0 %v5914
    %v5985 = vpop.f32.mrf.mxu0
    %v5986 = vadd.f32 0.0, %v5985
    %v5987 = vpop.f32.mrf.mxu0
    %v5988 = vpop.f32.mrf.mxu0
    %v5989 = vadd.f32 0.0, %v5988
    %v5990 = vpop.f32.mrf.mxu0
    %5991 = vmatprep.mubr.bf16.mxu0 0
    %5992 = vmatmul.mubr.bf16.gmra.mxu0 %v5917
    %v5993 = vpop.f32.mrf.mxu0
    %v5994 = vadd.f32 0.0, %v5993
    %v5995 = vpop.f32.mrf.mxu0
    %v5996 = vpop.f32.mrf.mxu0
    %v5997 = vadd.f32 0.0, %v5996
    %v5998 = vpop.f32.mrf.mxu0
    %5999 = vdwg.mxu0
    %v6001 = vunpack.c.l.b16 %v5817
    %v6002 = vpack.c.b16 %v5859, %v6001
    %v6003 = vpack.c.b16 %v5861, %v5860
    %v6004 = vpack.c.b16 %v5863, %v5862
    %v6005 = vpack.c.b16 %v5865, %v5864
    %v6006 = vpack.c.b16 %v5867, %v5866
    %v6007 = vpack.c.b16 %v5869, %v5868
    %v6008 = vpack.c.b16 %v5870, %v5870
    %v6010 = vshrl.u32 %v6002, 16
    %v6012 = vrot.slane %v6010, 3
    %v6013 = vshll.u32 %v6002, 16
    %v6015 = vrot.slane %v6013, 4
    %v6016 = vor.u32 %v6012, %v6015
    %v6018 = vshrl.u32 %v6003, 16
    %v6020 = vrot.slane %v6018, 3
    %v6021 = vshll.u32 %v6003, 16
    %v6023 = vrot.slane %v6021, 4
    %v6024 = vor.u32 %v6020, %v6023
    %v6025 = vsel %vm1528, %v6016, %v6024
    %v6027 = vshrl.u32 %v6004, 16
    %v6029 = vrot.slane %v6027, 3
    %v6030 = vshll.u32 %v6004, 16
    %v6032 = vrot.slane %v6030, 4
    %v6033 = vor.u32 %v6029, %v6032
    %v6034 = vsel %vm1528, %v6024, %v6033
    %v6036 = vshrl.u32 %v6005, 16
    %v6038 = vrot.slane %v6036, 3
    %v6039 = vshll.u32 %v6005, 16
    %v6041 = vrot.slane %v6039, 4
    %v6042 = vor.u32 %v6038, %v6041
    %v6043 = vsel %vm1528, %v6033, %v6042
    %v6045 = vshrl.u32 %v6006, 16
    %v6047 = vrot.slane %v6045, 3
    %v6048 = vshll.u32 %v6006, 16
    %v6050 = vrot.slane %v6048, 4
    %v6051 = vor.u32 %v6047, %v6050
    %v6052 = vsel %vm1528, %v6042, %v6051
    %v6054 = vshrl.u32 %v6007, 16
    %v6056 = vrot.slane %v6054, 3
    %v6057 = vshll.u32 %v6007, 16
    %v6059 = vrot.slane %v6057, 4
    %v6060 = vor.u32 %v6056, %v6059
    %v6061 = vsel %vm1528, %v6051, %v6060
    %v6063 = vshrl.u32 %v6008, 16
    %v6065 = vrot.slane %v6063, 3
    %v6066 = vshll.u32 %v6008, 16
    %v6068 = vrot.slane %v6066, 4
    %v6069 = vor.u32 %v6065, %v6068
    %v6070 = vsel %vm1528, %v6060, %v6069
    %v6079 = vunpack.c.l.b16 %v5830
    %v6080 = vunpack.c.l.b16 %v5831
    %v6081 = vunpack.c.l.b16 %v5832
    %v6082 = vunpack.c.l.b16 %v5833
    %v6083 = vunpack.c.l.b16 %v5834
    %v6084 = vunpack.c.l.b16 %v5835
    %v6085 = vunpack.c.l.b16 %v5836
    %v6086 = vunpack.c.l.b16 %v5837
    %v6087 = vpack.c.b16 %v6080, %v6079
    %v6088 = vpack.c.b16 %v6082, %v6081
    %v6089 = vpack.c.b16 %v6084, %v6083
    %v6090 = vpack.c.b16 %v6086, %v6085
    %v6096 = vsel %vm5674, %v6025, 0
    %v6099 = vsel %vm5674, %v6034, 0
    %v6102 = vsel %vm5674, %v6043, 0
    %v6105 = vsel %vm5674, %v6052, 0
    %v6108 = vsel %vm5674, %v6061, 0
    %v6111 = vsel %vm5674, %v6070, 0
    %6113 = vmatprep.subr.bf16.mxu0 0
    %6114 = vmatpush1.bf16.msra.mxu0 0
    %6115 = vmatprep.subr.bf16.mxu0 0
    %6116 = vmatpush1.bf16.msra.mxu0 0
    %6117 = vmatprep.subr.bf16.mxu0 0
    %6118 = vmatpush1.bf16.msra.mxu0 0
    %6119 = vmatprep.subr.bf16.mxu0 0
    %6120 = vmatpush1.bf16.msra.mxu0 0
    %6121 = vmatprep.subr.bf16.mxu0 0
    %6122 = vmatpush1.bf16.msra.mxu0 %v6090
    %6123 = vmatprep.subr.bf16.mxu0 0
    %6124 = vmatpush1.bf16.msra.mxu0 %v6089
    %6125 = vmatprep.subr.bf16.mxu0 0
    %6126 = vmatpush1.bf16.msra.mxu0 %v6088
    %6127 = vmatprep.subr.bf16.mxu0 0
    %6128 = vmatpush1.bf16.msra.mxu0 %v6087
    %6129 = vmatprep.subr.bf16.mxu0 0
    %6130 = vmatpush2.bf16.msra.mxu0 0
    %6131 = vmatprep.subr.bf16.mxu0 0
    %6132 = vmatpush2.bf16.msra.mxu0 0
    %6133 = vmatprep.subr.bf16.mxu0 0
    %6134 = vmatpush2.bf16.msra.mxu0 0
    %6135 = vmatprep.subr.bf16.mxu0 0
    %6136 = vmatpush2.bf16.msra.mxu0 0
    %6137 = vmatprep.subr.bf16.mxu0 0
    %6138 = vmatpush2.bf16.msra.mxu0 0
    %6139 = vmatprep.subr.bf16.mxu0 0
    %6140 = vmatpush2.bf16.msra.mxu0 0
    %6141 = vmatprep.subr.bf16.mxu0 0
    %6142 = vmatpush2.bf16.msra.mxu0 0
    %6143 = vmatprep.subr.bf16.mxu0 0
    %6144 = vmatpush2.bf16.msra.mxu0 0
    %6145 = vmatprep.mubr.bf16.mxu0 0
    %6146 = vmatmul.mubr.bf16.gmra.mxu0 %v6096
    %v6147 = vpop.f32.mrf.mxu0
    %v6148 = vadd.f32 %v5954, %v6147
    %v6149 = vpop.f32.mrf.mxu0
    %v6150 = vpop.f32.mrf.mxu0
    %v6151 = vadd.f32 %v5957, %v6150
    %v6152 = vpop.f32.mrf.mxu0
    %6153 = vmatprep.mubr.bf16.mxu0 0
    %6154 = vmatmul.mubr.bf16.gmra.mxu0 %v6099
    %v6155 = vpop.f32.mrf.mxu0
    %v6156 = vadd.f32 %v5962, %v6155
    %v6157 = vpop.f32.mrf.mxu0
    %v6158 = vpop.f32.mrf.mxu0
    %v6159 = vadd.f32 %v5965, %v6158
    %v6160 = vpop.f32.mrf.mxu0
    %6161 = vmatprep.mubr.bf16.mxu0 0
    %6162 = vmatmul.mubr.bf16.gmra.mxu0 %v6102
    %v6163 = vpop.f32.mrf.mxu0
    %v6164 = vadd.f32 %v5970, %v6163
    %v6165 = vpop.f32.mrf.mxu0
    %v6166 = vpop.f32.mrf.mxu0
    %v6167 = vadd.f32 %v5973, %v6166
    %v6168 = vpop.f32.mrf.mxu0
    %6169 = vmatprep.mubr.bf16.mxu0 0
    %6170 = vmatmul.mubr.bf16.gmra.mxu0 %v6105
    %v6171 = vpop.f32.mrf.mxu0
    %v6172 = vadd.f32 %v5978, %v6171
    %v6173 = vpop.f32.mrf.mxu0
    %v6174 = vpop.f32.mrf.mxu0
    %v6175 = vadd.f32 %v5981, %v6174
    %v6176 = vpop.f32.mrf.mxu0
    %6177 = vmatprep.mubr.bf16.mxu0 0
    %6178 = vmatmul.mubr.bf16.gmra.mxu0 %v6108
    %v6179 = vpop.f32.mrf.mxu0
    %v6180 = vadd.f32 %v5986, %v6179
    %v6181 = vpop.f32.mrf.mxu0
    %v6182 = vpop.f32.mrf.mxu0
    %v6183 = vadd.f32 %v5989, %v6182
    %v6184 = vpop.f32.mrf.mxu0
    %6185 = vmatprep.mubr.bf16.mxu0 0
    %6186 = vmatmul.mubr.bf16.gmra.mxu0 %v6111
    %v6187 = vpop.f32.mrf.mxu0
    %v6188 = vadd.f32 %v5994, %v6187
    %v6189 = vpop.f32.mrf.mxu0
    %v6190 = vpop.f32.mrf.mxu0
    %v6191 = vadd.f32 %v5997, %v6190
    %v6192 = vpop.f32.mrf.mxu0
    %6193 = vdwg.mxu0
    %v6194 = vld [vmem:[#allocation5 + $0x4] sm:$0xf]
    %v6195 = vld [vmem:[#allocation5 + $0x8] sm:$0xf]
    %v6196 = vld [vmem:[#allocation5 + $0xc] sm:$0xf]
    %v6197 = vld [vmem:[#allocation5 + $0x10] sm:$0xf]
    %v6198 = vld [vmem:[#allocation5 + $0x14] sm:$0xf]
    %v6199 = vld [vmem:[#allocation5 + $0x18] sm:$0xf]
    %v6200 = vld [vmem:[#allocation5 + $0x1c] sm:$0xf]
    %v6201 = vld [vmem:[#allocation5 + $0x20] sm:$0xf]
    %v6202 = vld [vmem:[#allocation5 + $0x24] sm:$0xf]
    %v6203 = vld [vmem:[#allocation5 + $0x28] sm:$0xf]
    %v6204 = vld [vmem:[#allocation5 + $0x2c] sm:$0xf]
    %v6205 = vld [vmem:[#allocation5 + $0x30] sm:$0xf]
    %v6206 = vld [vmem:[#allocation5 + $0x34] sm:$0x1]
    %s6207 = scalar_lea.vmem %s5, 64
    %v6208 = vld [vmem:[%s6207] sm:$0xf]
    %v6209 = vld [vmem:[%s6207 + $0x4] sm:$0xf]
    %v6210 = vld [vmem:[%s6207 + $0x8] sm:$0xf]
    %v6211 = vld [vmem:[%s6207 + $0xc] sm:$0xf]
    %v6212 = vld [vmem:[%s6207 + $0x10] sm:$0xf]
    %v6213 = vld [vmem:[%s6207 + $0x14] sm:$0xf]
    %v6214 = vld [vmem:[%s6207 + $0x18] sm:$0xf]
    %v6215 = vld [vmem:[%s6207 + $0x1c] sm:$0xf]
    %v6229 = vunpack.c.l.b16 %v6194
    %v6230 = vunpack.c.l.b16 %v6195
    %v6231 = vunpack.c.l.b16 %v6196
    %v6232 = vunpack.c.l.b16 %v6197
    %v6233 = vunpack.c.l.b16 %v6198
    %v6234 = vunpack.c.l.b16 %v6199
    %v6235 = vunpack.c.l.b16 %v6200
    %v6236 = vunpack.c.l.b16 %v6201
    %v6237 = vunpack.c.l.b16 %v6202
    %v6238 = vunpack.c.l.b16 %v6203
    %v6239 = vunpack.c.l.b16 %v6204
    %v6240 = vunpack.c.l.b16 %v6205
    %v6241 = vunpack.c.l.b16 %v6206
    %v6242 = vpack.c.b16 %v6230, %v6229
    %v6243 = vpack.c.b16 %v6232, %v6231
    %v6244 = vpack.c.b16 %v6234, %v6233
    %v6245 = vpack.c.b16 %v6236, %v6235
    %v6246 = vpack.c.b16 %v6238, %v6237
    %v6247 = vpack.c.b16 %v6240, %v6239
    %v6248 = vpack.c.b16 %v6241, %v6241
    %v6250 = vshrl.u32 %v6242, 16
    %v6252 = vshll.u32 %v6242, 16
    %v6254 = vrot.slane %v6252, 1
    %v6255 = vor.u32 %v6250, %v6254
    %v6257 = vshll.u32 %v6243, 16
    %v6259 = vrot.slane %v6257, 1
    %v6260 = vsel %vm2104, %v6255, %v6259
    %v6261 = vshrl.u32 %v6243, 16
    %v6263 = vor.u32 %v6261, %v6259
    %v6265 = vshll.u32 %v6244, 16
    %v6267 = vrot.slane %v6265, 1
    %v6268 = vsel %vm2104, %v6263, %v6267
    %v6269 = vshrl.u32 %v6244, 16
    %v6271 = vor.u32 %v6269, %v6267
    %v6273 = vshll.u32 %v6245, 16
    %v6275 = vrot.slane %v6273, 1
    %v6276 = vsel %vm2104, %v6271, %v6275
    %v6277 = vshrl.u32 %v6245, 16
    %v6279 = vor.u32 %v6277, %v6275
    %v6281 = vshll.u32 %v6246, 16
    %v6283 = vrot.slane %v6281, 1
    %v6284 = vsel %vm2104, %v6279, %v6283
    %v6285 = vshrl.u32 %v6246, 16
    %v6287 = vor.u32 %v6285, %v6283
    %v6289 = vshll.u32 %v6247, 16
    %v6291 = vrot.slane %v6289, 1
    %v6292 = vsel %vm2104, %v6287, %v6291
    %v6293 = vshrl.u32 %v6247, 16
    %v6295 = vor.u32 %v6293, %v6291
    %v6297 = vshll.u32 %v6248, 16
    %v6299 = vrot.slane %v6297, 1
    %v6300 = vsel %vm2104, %v6295, %v6299
    %v6309 = vunpack.c.l.b16 %v6208
    %v6310 = vunpack.c.l.b16 %v6209
    %v6311 = vunpack.c.l.b16 %v6210
    %v6312 = vunpack.c.l.b16 %v6211
    %v6313 = vunpack.c.l.b16 %v6212
    %v6314 = vunpack.c.l.b16 %v6213
    %v6315 = vunpack.c.l.b16 %v6214
    %v6316 = vunpack.c.l.b16 %v6215
    %v6317 = vpack.c.b16 %v6310, %v6309
    %v6318 = vpack.c.b16 %v6312, %v6311
    %v6319 = vpack.c.b16 %v6314, %v6313
    %v6320 = vpack.c.b16 %v6316, %v6315
    %v6326 = vsel %vm5674, %v6260, 0
    %v6329 = vsel %vm5674, %v6268, 0
    %v6332 = vsel %vm5674, %v6276, 0
    %v6335 = vsel %vm5674, %v6284, 0
    %v6338 = vsel %vm5674, %v6292, 0
    %v6341 = vsel %vm5674, %v6300, 0
    %6343 = vmatprep.subr.bf16.mxu0 0
    %6344 = vmatpush1.bf16.msra.mxu0 0
    %6345 = vmatprep.subr.bf16.mxu0 0
    %6346 = vmatpush1.bf16.msra.mxu0 0
    %6347 = vmatprep.subr.bf16.mxu0 0
    %6348 = vmatpush1.bf16.msra.mxu0 0
    %6349 = vmatprep.subr.bf16.mxu0 0
    %6350 = vmatpush1.bf16.msra.mxu0 0
    %6351 = vmatprep.subr.bf16.mxu0 0
    %6352 = vmatpush1.bf16.msra.mxu0 %v6320
    %6353 = vmatprep.subr.bf16.mxu0 0
    %6354 = vmatpush1.bf16.msra.mxu0 %v6319
    %6355 = vmatprep.subr.bf16.mxu0 0
    %6356 = vmatpush1.bf16.msra.mxu0 %v6318
    %6357 = vmatprep.subr.bf16.mxu0 0
    %6358 = vmatpush1.bf16.msra.mxu0 %v6317
    %6359 = vmatprep.subr.bf16.mxu0 0
    %6360 = vmatpush2.bf16.msra.mxu0 0
    %6361 = vmatprep.subr.bf16.mxu0 0
    %6362 = vmatpush2.bf16.msra.mxu0 0
    %6363 = vmatprep.subr.bf16.mxu0 0
    %6364 = vmatpush2.bf16.msra.mxu0 0
    %6365 = vmatprep.subr.bf16.mxu0 0
    %6366 = vmatpush2.bf16.msra.mxu0 0
    %6367 = vmatprep.subr.bf16.mxu0 0
    %6368 = vmatpush2.bf16.msra.mxu0 0
    %6369 = vmatprep.subr.bf16.mxu0 0
    %6370 = vmatpush2.bf16.msra.mxu0 0
    %6371 = vmatprep.subr.bf16.mxu0 0
    %6372 = vmatpush2.bf16.msra.mxu0 0
    %6373 = vmatprep.subr.bf16.mxu0 0
    %6374 = vmatpush2.bf16.msra.mxu0 0
    %6375 = vmatprep.mubr.bf16.mxu0 0
    %6376 = vmatmul.mubr.bf16.gmra.mxu0 %v6326
    %v6377 = vpop.f32.mrf.mxu0
    %v6378 = vadd.f32 0.0, %v6377
    %v6379 = vpop.f32.mrf.mxu0
    %v6380 = vpop.f32.mrf.mxu0
    %v6381 = vadd.f32 0.0, %v6380
    %v6382 = vpop.f32.mrf.mxu0
    %6383 = vmatprep.mubr.bf16.mxu0 0
    %6384 = vmatmul.mubr.bf16.gmra.mxu0 %v6329
    %v6385 = vpop.f32.mrf.mxu0
    %v6386 = vadd.f32 0.0, %v6385
    %v6387 = vpop.f32.mrf.mxu0
    %v6388 = vpop.f32.mrf.mxu0
    %v6389 = vadd.f32 0.0, %v6388
    %v6390 = vpop.f32.mrf.mxu0
    %6391 = vmatprep.mubr.bf16.mxu0 0
    %6392 = vmatmul.mubr.bf16.gmra.mxu0 %v6332
    %v6393 = vpop.f32.mrf.mxu0
    %v6394 = vadd.f32 0.0, %v6393
    %v6395 = vpop.f32.mrf.mxu0
    %v6396 = vpop.f32.mrf.mxu0
    %v6397 = vadd.f32 0.0, %v6396
    %v6398 = vpop.f32.mrf.mxu0
    %6399 = vmatprep.mubr.bf16.mxu0 0
    %6400 = vmatmul.mubr.bf16.gmra.mxu0 %v6335
    %v6401 = vpop.f32.mrf.mxu0
    %v6402 = vadd.f32 0.0, %v6401
    %v6403 = vpop.f32.mrf.mxu0
    %v6404 = vpop.f32.mrf.mxu0
    %v6405 = vadd.f32 0.0, %v6404
    %v6406 = vpop.f32.mrf.mxu0
    %6407 = vmatprep.mubr.bf16.mxu0 0
    %6408 = vmatmul.mubr.bf16.gmra.mxu0 %v6338
    %v6409 = vpop.f32.mrf.mxu0
    %v6410 = vadd.f32 0.0, %v6409
    %v6411 = vpop.f32.mrf.mxu0
    %v6412 = vpop.f32.mrf.mxu0
    %v6413 = vadd.f32 0.0, %v6412
    %v6414 = vpop.f32.mrf.mxu0
    %6415 = vmatprep.mubr.bf16.mxu0 0
    %6416 = vmatmul.mubr.bf16.gmra.mxu0 %v6341
    %v6417 = vpop.f32.mrf.mxu0
    %v6418 = vadd.f32 0.0, %v6417
    %v6419 = vpop.f32.mrf.mxu0
    %v6420 = vpop.f32.mrf.mxu0
    %v6421 = vadd.f32 0.0, %v6420
    %v6422 = vpop.f32.mrf.mxu0
    %6423 = vdwg.mxu0
    %v6424 = vadd.f32 %v6148, %v6378
    %v6425 = vadd.f32 %v6151, %v6381
    %v6426 = vadd.f32 %v6156, %v6386
    %v6427 = vadd.f32 %v6159, %v6389
    %v6428 = vadd.f32 %v6164, %v6394
    %v6429 = vadd.f32 %v6167, %v6397
    %v6430 = vadd.f32 %v6172, %v6402
    %v6431 = vadd.f32 %v6175, %v6405
    %v6432 = vadd.f32 %v6180, %v6410
    %v6433 = vadd.f32 %v6183, %v6413
    %v6434 = vadd.f32 %v6188, %v6418
    %v6435 = vadd.f32 %v6191, %v6421
    %v6436 = vld [vmem:[#allocation5 + $0x4] sm:$0x8]
    %v6437 = vld [vmem:[#allocation5 + $0x34] sm:$0xf]
    %s6438 = scalar_lea.vmem %s5, 96
    %v6439 = vld [vmem:[%s6438] sm:$0xf]
    %v6440 = vld [vmem:[%s6438 + $0x4] sm:$0xf]
    %v6441 = vld [vmem:[%s6438 + $0x8] sm:$0xf]
    %v6442 = vld [vmem:[%s6438 + $0xc] sm:$0xf]
    %v6443 = vld [vmem:[%s6438 + $0x10] sm:$0xf]
    %v6444 = vld [vmem:[%s6438 + $0x14] sm:$0xf]
    %v6445 = vld [vmem:[%s6438 + $0x18] sm:$0xf]
    %v6446 = vld [vmem:[%s6438 + $0x1c] sm:$0xf]
    %v6449 = vunpack.c.l.b16 %v6436
    %v6450 = vunpack.c.l.b16 %v6437
    %v6451 = vpack.c.b16 %v6230, %v6449
    %v6452 = vpack.c.b16 %v6450, %v6450
    %v6454 = vshrl.u32 %v6451, 16
    %v6456 = vrot.slane %v6454, 3
    %v6457 = vshll.u32 %v6451, 16
    %v6459 = vrot.slane %v6457, 4
    %v6460 = vor.u32 %v6456, %v6459
    %v6461 = vrot.slane %v6261, 3
    %v6462 = vrot.slane %v6257, 4
    %v6463 = vor.u32 %v6461, %v6462
    %v6464 = vsel %vm1528, %v6460, %v6463
    %v6465 = vrot.slane %v6269, 3
    %v6466 = vrot.slane %v6265, 4
    %v6467 = vor.u32 %v6465, %v6466
    %v6468 = vsel %vm1528, %v6463, %v6467
    %v6469 = vrot.slane %v6277, 3
    %v6470 = vrot.slane %v6273, 4
    %v6471 = vor.u32 %v6469, %v6470
    %v6472 = vsel %vm1528, %v6467, %v6471
    %v6473 = vrot.slane %v6285, 3
    %v6474 = vrot.slane %v6281, 4
    %v6475 = vor.u32 %v6473, %v6474
    %v6476 = vsel %vm1528, %v6471, %v6475
    %v6477 = vrot.slane %v6293, 3
    %v6478 = vrot.slane %v6289, 4
    %v6479 = vor.u32 %v6477, %v6478
    %v6480 = vsel %vm1528, %v6475, %v6479
    %v6482 = vshrl.u32 %v6452, 16
    %v6484 = vrot.slane %v6482, 3
    %v6485 = vshll.u32 %v6452, 16
    %v6487 = vrot.slane %v6485, 4
    %v6488 = vor.u32 %v6484, %v6487
    %v6489 = vsel %vm1528, %v6479, %v6488
    %v6498 = vunpack.c.l.b16 %v6439
    %v6499 = vunpack.c.l.b16 %v6440
    %v6500 = vunpack.c.l.b16 %v6441
    %v6501 = vunpack.c.l.b16 %v6442
    %v6502 = vunpack.c.l.b16 %v6443
    %v6503 = vunpack.c.l.b16 %v6444
    %v6504 = vunpack.c.l.b16 %v6445
    %v6505 = vunpack.c.l.b16 %v6446
    %v6506 = vpack.c.b16 %v6499, %v6498
    %v6507 = vpack.c.b16 %v6501, %v6500
    %v6508 = vpack.c.b16 %v6503, %v6502
    %v6509 = vpack.c.b16 %v6505, %v6504
    %v6515 = vsel %vm5674, %v6464, 0
    %v6518 = vsel %vm5674, %v6468, 0
    %v6521 = vsel %vm5674, %v6472, 0
    %v6524 = vsel %vm5674, %v6476, 0
    %v6527 = vsel %vm5674, %v6480, 0
    %v6530 = vsel %vm5674, %v6489, 0
    %6532 = vmatprep.subr.bf16.mxu0 0
    %6533 = vmatpush1.bf16.msra.mxu0 0
    %6534 = vmatprep.subr.bf16.mxu0 0
    %6535 = vmatpush1.bf16.msra.mxu0 0
    %6536 = vmatprep.subr.bf16.mxu0 0
    %6537 = vmatpush1.bf16.msra.mxu0 0
    %6538 = vmatprep.subr.bf16.mxu0 0
    %6539 = vmatpush1.bf16.msra.mxu0 0
    %6540 = vmatprep.subr.bf16.mxu0 0
    %6541 = vmatpush1.bf16.msra.mxu0 %v6509
    %6542 = vmatprep.subr.bf16.mxu0 0
    %6543 = vmatpush1.bf16.msra.mxu0 %v6508
    %6544 = vmatprep.subr.bf16.mxu0 0
    %6545 = vmatpush1.bf16.msra.mxu0 %v6507
    %6546 = vmatprep.subr.bf16.mxu0 0
    %6547 = vmatpush1.bf16.msra.mxu0 %v6506
    %6548 = vmatprep.subr.bf16.mxu0 0
    %6549 = vmatpush2.bf16.msra.mxu0 0
    %6550 = vmatprep.subr.bf16.mxu0 0
    %6551 = vmatpush2.bf16.msra.mxu0 0
    %6552 = vmatprep.subr.bf16.mxu0 0
    %6553 = vmatpush2.bf16.msra.mxu0 0
    %6554 = vmatprep.subr.bf16.mxu0 0
    %6555 = vmatpush2.bf16.msra.mxu0 0
    %6556 = vmatprep.subr.bf16.mxu0 0
    %6557 = vmatpush2.bf16.msra.mxu0 0
    %6558 = vmatprep.subr.bf16.mxu0 0
    %6559 = vmatpush2.bf16.msra.mxu0 0
    %6560 = vmatprep.subr.bf16.mxu0 0
    %6561 = vmatpush2.bf16.msra.mxu0 0
    %6562 = vmatprep.subr.bf16.mxu0 0
    %6563 = vmatpush2.bf16.msra.mxu0 0
    %6564 = vmatprep.mubr.bf16.mxu0 0
    %6565 = vmatmul.mubr.bf16.gmra.mxu0 %v6515
    %v6566 = vpop.f32.mrf.mxu0
    %v6567 = vadd.f32 0.0, %v6566
    %v6568 = vpop.f32.mrf.mxu0
    %v6569 = vpop.f32.mrf.mxu0
    %v6570 = vadd.f32 0.0, %v6569
    %v6571 = vpop.f32.mrf.mxu0
    %6572 = vmatprep.mubr.bf16.mxu0 0
    %6573 = vmatmul.mubr.bf16.gmra.mxu0 %v6518
    %v6574 = vpop.f32.mrf.mxu0
    %v6575 = vadd.f32 0.0, %v6574
    %v6576 = vpop.f32.mrf.mxu0
    %v6577 = vpop.f32.mrf.mxu0
    %v6578 = vadd.f32 0.0, %v6577
    %v6579 = vpop.f32.mrf.mxu0
    %6580 = vmatprep.mubr.bf16.mxu0 0
    %6581 = vmatmul.mubr.bf16.gmra.mxu0 %v6521
    %v6582 = vpop.f32.mrf.mxu0
    %v6583 = vadd.f32 0.0, %v6582
    %v6584 = vpop.f32.mrf.mxu0
    %v6585 = vpop.f32.mrf.mxu0
    %v6586 = vadd.f32 0.0, %v6585
    %v6587 = vpop.f32.mrf.mxu0
    %6588 = vmatprep.mubr.bf16.mxu0 0
    %6589 = vmatmul.mubr.bf16.gmra.mxu0 %v6524
    %v6590 = vpop.f32.mrf.mxu0
    %v6591 = vadd.f32 0.0, %v6590
    %v6592 = vpop.f32.mrf.mxu0
    %v6593 = vpop.f32.mrf.mxu0
    %v6594 = vadd.f32 0.0, %v6593
    %v6595 = vpop.f32.mrf.mxu0
    %6596 = vmatprep.mubr.bf16.mxu0 0
    %6597 = vmatmul.mubr.bf16.gmra.mxu0 %v6527
    %v6598 = vpop.f32.mrf.mxu0
    %v6599 = vadd.f32 0.0, %v6598
    %v6600 = vpop.f32.mrf.mxu0
    %v6601 = vpop.f32.mrf.mxu0
    %v6602 = vadd.f32 0.0, %v6601
    %v6603 = vpop.f32.mrf.mxu0
    %6604 = vmatprep.mubr.bf16.mxu0 0
    %6605 = vmatmul.mubr.bf16.gmra.mxu0 %v6530
    %v6606 = vpop.f32.mrf.mxu0
    %v6607 = vadd.f32 0.0, %v6606
    %v6608 = vpop.f32.mrf.mxu0
    %v6609 = vpop.f32.mrf.mxu0
    %v6610 = vadd.f32 0.0, %v6609
    %v6611 = vpop.f32.mrf.mxu0
    %6612 = vdwg.mxu0
    %v6613 = vadd.f32 %v6424, %v6567
    %v6614 = vadd.f32 %v6425, %v6570
    %v6615 = vadd.f32 %v6426, %v6575
    %v6616 = vadd.f32 %v6427, %v6578
    %v6617 = vadd.f32 %v6428, %v6583
    %v6618 = vadd.f32 %v6429, %v6586
    %v6619 = vadd.f32 %v6430, %v6591
    %v6620 = vadd.f32 %v6431, %v6594
    %v6621 = vadd.f32 %v6432, %v6599
    %v6622 = vadd.f32 %v6433, %v6602
    %v6623 = vadd.f32 %v6434, %v6607
    %v6624 = vadd.f32 %v6435, %v6610
    %s6625 = scalar_lea.vmem %s5, 128
    %v6626 = vld [vmem:[%s6625] sm:$0xf]
    %v6627 = vld [vmem:[%s6625 + $0x4] sm:$0xf]
    %v6628 = vld [vmem:[%s6625 + $0x8] sm:$0xf]
    %v6629 = vld [vmem:[%s6625 + $0xc] sm:$0xf]
    %v6630 = vld [vmem:[%s6625 + $0x10] sm:$0xf]
    %v6631 = vld [vmem:[%s6625 + $0x14] sm:$0xf]
    %v6632 = vld [vmem:[%s6625 + $0x18] sm:$0xf]
    %v6633 = vld [vmem:[%s6625 + $0x1c] sm:$0xf]
    %v6634 = vpack.c.b16 %v6231, %v6230
    %v6635 = vpack.c.b16 %v6233, %v6232
    %v6636 = vpack.c.b16 %v6235, %v6234
    %v6637 = vpack.c.b16 %v6237, %v6236
    %v6638 = vpack.c.b16 %v6239, %v6238
    %v6639 = vpack.c.b16 %v6450, %v6240
    %v6648 = vunpack.c.l.b16 %v6626
    %v6649 = vunpack.c.l.b16 %v6627
    %v6650 = vunpack.c.l.b16 %v6628
    %v6651 = vunpack.c.l.b16 %v6629
    %v6652 = vunpack.c.l.b16 %v6630
    %v6653 = vunpack.c.l.b16 %v6631
    %v6654 = vunpack.c.l.b16 %v6632
    %v6655 = vunpack.c.l.b16 %v6633
    %v6656 = vpack.c.b16 %v6649, %v6648
    %v6657 = vpack.c.b16 %v6651, %v6650
    %v6658 = vpack.c.b16 %v6653, %v6652
    %v6659 = vpack.c.b16 %v6655, %v6654
    %v6665 = vsel %vm5674, %v6634, 0
    %v6668 = vsel %vm5674, %v6635, 0
    %v6671 = vsel %vm5674, %v6636, 0
    %v6674 = vsel %vm5674, %v6637, 0
    %v6677 = vsel %vm5674, %v6638, 0
    %v6680 = vsel %vm5674, %v6639, 0
    %6682 = vmatprep.subr.bf16.mxu0 0
    %6683 = vmatpush1.bf16.msra.mxu0 0
    %6684 = vmatprep.subr.bf16.mxu0 0
    %6685 = vmatpush1.bf16.msra.mxu0 0
    %6686 = vmatprep.subr.bf16.mxu0 0
    %6687 = vmatpush1.bf16.msra.mxu0 0
    %6688 = vmatprep.subr.bf16.mxu0 0
    %6689 = vmatpush1.bf16.msra.mxu0 0
    %6690 = vmatprep.subr.bf16.mxu0 0
    %6691 = vmatpush1.bf16.msra.mxu0 %v6659
    %6692 = vmatprep.subr.bf16.mxu0 0
    %6693 = vmatpush1.bf16.msra.mxu0 %v6658
    %6694 = vmatprep.subr.bf16.mxu0 0
    %6695 = vmatpush1.bf16.msra.mxu0 %v6657
    %6696 = vmatprep.subr.bf16.mxu0 0
    %6697 = vmatpush1.bf16.msra.mxu0 %v6656
    %6698 = vmatprep.subr.bf16.mxu0 0
    %6699 = vmatpush2.bf16.msra.mxu0 0
    %6700 = vmatprep.subr.bf16.mxu0 0
    %6701 = vmatpush2.bf16.msra.mxu0 0
    %6702 = vmatprep.subr.bf16.mxu0 0
    %6703 = vmatpush2.bf16.msra.mxu0 0
    %6704 = vmatprep.subr.bf16.mxu0 0
    %6705 = vmatpush2.bf16.msra.mxu0 0
    %6706 = vmatprep.subr.bf16.mxu0 0
    %6707 = vmatpush2.bf16.msra.mxu0 0
    %6708 = vmatprep.subr.bf16.mxu0 0
    %6709 = vmatpush2.bf16.msra.mxu0 0
    %6710 = vmatprep.subr.bf16.mxu0 0
    %6711 = vmatpush2.bf16.msra.mxu0 0
    %6712 = vmatprep.subr.bf16.mxu0 0
    %6713 = vmatpush2.bf16.msra.mxu0 0
    %6714 = vmatprep.mubr.bf16.mxu0 0
    %6715 = vmatmul.mubr.bf16.gmra.mxu0 %v6665
    %v6716 = vpop.f32.mrf.mxu0
    %v6717 = vadd.f32 0.0, %v6716
    %v6718 = vpop.f32.mrf.mxu0
    %v6719 = vpop.f32.mrf.mxu0
    %v6720 = vadd.f32 0.0, %v6719
    %v6721 = vpop.f32.mrf.mxu0
    %6722 = vmatprep.mubr.bf16.mxu0 0
    %6723 = vmatmul.mubr.bf16.gmra.mxu0 %v6668
    %v6724 = vpop.f32.mrf.mxu0
    %v6725 = vadd.f32 0.0, %v6724
    %v6726 = vpop.f32.mrf.mxu0
    %v6727 = vpop.f32.mrf.mxu0
    %v6728 = vadd.f32 0.0, %v6727
    %v6729 = vpop.f32.mrf.mxu0
    %6730 = vmatprep.mubr.bf16.mxu0 0
    %6731 = vmatmul.mubr.bf16.gmra.mxu0 %v6671
    %v6732 = vpop.f32.mrf.mxu0
    %v6733 = vadd.f32 0.0, %v6732
    %v6734 = vpop.f32.mrf.mxu0
    %v6735 = vpop.f32.mrf.mxu0
    %v6736 = vadd.f32 0.0, %v6735
    %v6737 = vpop.f32.mrf.mxu0
    %6738 = vmatprep.mubr.bf16.mxu0 0
    %6739 = vmatmul.mubr.bf16.gmra.mxu0 %v6674
    %v6740 = vpop.f32.mrf.mxu0
    %v6741 = vadd.f32 0.0, %v6740
    %v6742 = vpop.f32.mrf.mxu0
    %v6743 = vpop.f32.mrf.mxu0
    %v6744 = vadd.f32 0.0, %v6743
    %v6745 = vpop.f32.mrf.mxu0
    %6746 = vmatprep.mubr.bf16.mxu0 0
    %6747 = vmatmul.mubr.bf16.gmra.mxu0 %v6677
    %v6748 = vpop.f32.mrf.mxu0
    %v6749 = vadd.f32 0.0, %v6748
    %v6750 = vpop.f32.mrf.mxu0
    %v6751 = vpop.f32.mrf.mxu0
    %v6752 = vadd.f32 0.0, %v6751
    %v6753 = vpop.f32.mrf.mxu0
    %6754 = vmatprep.mubr.bf16.mxu0 0
    %6755 = vmatmul.mubr.bf16.gmra.mxu0 %v6680
    %v6756 = vpop.f32.mrf.mxu0
    %v6757 = vadd.f32 0.0, %v6756
    %v6758 = vpop.f32.mrf.mxu0
    %v6759 = vpop.f32.mrf.mxu0
    %v6760 = vadd.f32 0.0, %v6759
    %v6761 = vpop.f32.mrf.mxu0
    %6762 = vdwg.mxu0
    %v6763 = vadd.f32 %v6613, %v6717
    %v6764 = vadd.f32 %v6614, %v6720
    %v6765 = vadd.f32 %v6615, %v6725
    %v6766 = vadd.f32 %v6616, %v6728
    %v6767 = vadd.f32 %v6617, %v6733
    %v6768 = vadd.f32 %v6618, %v6736
    %v6769 = vadd.f32 %v6619, %v6741
    %v6770 = vadd.f32 %v6620, %v6744
    %v6771 = vadd.f32 %v6621, %v6749
    %v6772 = vadd.f32 %v6622, %v6752
    %v6773 = vadd.f32 %v6623, %v6757
    %v6774 = vadd.f32 %v6624, %v6760
    %v6775 = vld [vmem:[#allocation5 + $0x8] sm:$0xf]
    %v6776 = vld [vmem:[#allocation5 + $0xc] sm:$0xf]
    %v6777 = vld [vmem:[#allocation5 + $0x10] sm:$0xf]
    %v6778 = vld [vmem:[#allocation5 + $0x14] sm:$0xf]
    %v6779 = vld [vmem:[#allocation5 + $0x18] sm:$0xf]
    %v6780 = vld [vmem:[#allocation5 + $0x1c] sm:$0xf]
    %v6781 = vld [vmem:[#allocation5 + $0x20] sm:$0xf]
    %v6782 = vld [vmem:[#allocation5 + $0x24] sm:$0xf]
    %v6783 = vld [vmem:[#allocation5 + $0x28] sm:$0xf]
    %v6784 = vld [vmem:[#allocation5 + $0x2c] sm:$0xf]
    %v6785 = vld [vmem:[#allocation5 + $0x30] sm:$0xf]
    %v6786 = vld [vmem:[#allocation5 + $0x34] sm:$0xf]
    %v6787 = vld [vmem:[#allocation5 + $0x38] sm:$0x1]
    %s6788 = scalar_lea.vmem %s5, 160
    %v6789 = vld [vmem:[%s6788] sm:$0xf]
    %v6790 = vld [vmem:[%s6788 + $0x4] sm:$0xf]
    %v6791 = vld [vmem:[%s6788 + $0x8] sm:$0xf]
    %v6792 = vld [vmem:[%s6788 + $0xc] sm:$0xf]
    %v6793 = vld [vmem:[%s6788 + $0x10] sm:$0xf]
    %v6794 = vld [vmem:[%s6788 + $0x14] sm:$0xf]
    %v6795 = vld [vmem:[%s6788 + $0x18] sm:$0xf]
    %v6796 = vld [vmem:[%s6788 + $0x1c] sm:$0xf]
    %v6810 = vunpack.c.l.b16 %v6775
    %v6811 = vunpack.c.l.b16 %v6776
    %v6812 = vunpack.c.l.b16 %v6777
    %v6813 = vunpack.c.l.b16 %v6778
    %v6814 = vunpack.c.l.b16 %v6779
    %v6815 = vunpack.c.l.b16 %v6780
    %v6816 = vunpack.c.l.b16 %v6781
    %v6817 = vunpack.c.l.b16 %v6782
    %v6818 = vunpack.c.l.b16 %v6783
    %v6819 = vunpack.c.l.b16 %v6784
    %v6820 = vunpack.c.l.b16 %v6785
    %v6821 = vunpack.c.l.b16 %v6786
    %v6822 = vunpack.c.l.b16 %v6787
    %v6823 = vpack.c.b16 %v6811, %v6810
    %v6824 = vpack.c.b16 %v6813, %v6812
    %v6825 = vpack.c.b16 %v6815, %v6814
    %v6826 = vpack.c.b16 %v6817, %v6816
    %v6827 = vpack.c.b16 %v6819, %v6818
    %v6828 = vpack.c.b16 %v6821, %v6820
    %v6829 = vpack.c.b16 %v6822, %v6822
    %v6831 = vshrl.u32 %v6823, 16
    %v6833 = vshll.u32 %v6823, 16
    %v6835 = vrot.slane %v6833, 1
    %v6836 = vor.u32 %v6831, %v6835
    %v6838 = vshll.u32 %v6824, 16
    %v6840 = vrot.slane %v6838, 1
    %v6841 = vsel %vm2104, %v6836, %v6840
    %v6842 = vshrl.u32 %v6824, 16
    %v6844 = vor.u32 %v6842, %v6840
    %v6846 = vshll.u32 %v6825, 16
    %v6848 = vrot.slane %v6846, 1
    %v6849 = vsel %vm2104, %v6844, %v6848
    %v6850 = vshrl.u32 %v6825, 16
    %v6852 = vor.u32 %v6850, %v6848
    %v6854 = vshll.u32 %v6826, 16
    %v6856 = vrot.slane %v6854, 1
    %v6857 = vsel %vm2104, %v6852, %v6856
    %v6858 = vshrl.u32 %v6826, 16
    %v6860 = vor.u32 %v6858, %v6856
    %v6862 = vshll.u32 %v6827, 16
    %v6864 = vrot.slane %v6862, 1
    %v6865 = vsel %vm2104, %v6860, %v6864
    %v6866 = vshrl.u32 %v6827, 16
    %v6868 = vor.u32 %v6866, %v6864
    %v6870 = vshll.u32 %v6828, 16
    %v6872 = vrot.slane %v6870, 1
    %v6873 = vsel %vm2104, %v6868, %v6872
    %v6874 = vshrl.u32 %v6828, 16
    %v6876 = vor.u32 %v6874, %v6872
    %v6878 = vshll.u32 %v6829, 16
    %v6880 = vrot.slane %v6878, 1
    %v6881 = vsel %vm2104, %v6876, %v6880
    %v6890 = vunpack.c.l.b16 %v6789
    %v6891 = vunpack.c.l.b16 %v6790
    %v6892 = vunpack.c.l.b16 %v6791
    %v6893 = vunpack.c.l.b16 %v6792
    %v6894 = vunpack.c.l.b16 %v6793
    %v6895 = vunpack.c.l.b16 %v6794
    %v6896 = vunpack.c.l.b16 %v6795
    %v6897 = vunpack.c.l.b16 %v6796
    %v6898 = vpack.c.b16 %v6891, %v6890
    %v6899 = vpack.c.b16 %v6893, %v6892
    %v6900 = vpack.c.b16 %v6895, %v6894
    %v6901 = vpack.c.b16 %v6897, %v6896
    %v6907 = vsel %vm5674, %v6841, 0
    %v6910 = vsel %vm5674, %v6849, 0
    %v6913 = vsel %vm5674, %v6857, 0
    %v6916 = vsel %vm5674, %v6865, 0
    %v6919 = vsel %vm5674, %v6873, 0
    %v6922 = vsel %vm5674, %v6881, 0
    %6924 = vmatprep.subr.bf16.mxu0 0
    %6925 = vmatpush1.bf16.msra.mxu0 0
    %6926 = vmatprep.subr.bf16.mxu0 0
    %6927 = vmatpush1.bf16.msra.mxu0 0
    %6928 = vmatprep.subr.bf16.mxu0 0
    %6929 = vmatpush1.bf16.msra.mxu0 0
    %6930 = vmatprep.subr.bf16.mxu0 0
    %6931 = vmatpush1.bf16.msra.mxu0 0
    %6932 = vmatprep.subr.bf16.mxu0 0
    %6933 = vmatpush1.bf16.msra.mxu0 %v6901
    %6934 = vmatprep.subr.bf16.mxu0 0
    %6935 = vmatpush1.bf16.msra.mxu0 %v6900
    %6936 = vmatprep.subr.bf16.mxu0 0
    %6937 = vmatpush1.bf16.msra.mxu0 %v6899
    %6938 = vmatprep.subr.bf16.mxu0 0
    %6939 = vmatpush1.bf16.msra.mxu0 %v6898
    %6940 = vmatprep.subr.bf16.mxu0 0
    %6941 = vmatpush2.bf16.msra.mxu0 0
    %6942 = vmatprep.subr.bf16.mxu0 0
    %6943 = vmatpush2.bf16.msra.mxu0 0
    %6944 = vmatprep.subr.bf16.mxu0 0
    %6945 = vmatpush2.bf16.msra.mxu0 0
    %6946 = vmatprep.subr.bf16.mxu0 0
    %6947 = vmatpush2.bf16.msra.mxu0 0
    %6948 = vmatprep.subr.bf16.mxu0 0
    %6949 = vmatpush2.bf16.msra.mxu0 0
    %6950 = vmatprep.subr.bf16.mxu0 0
    %6951 = vmatpush2.bf16.msra.mxu0 0
    %6952 = vmatprep.subr.bf16.mxu0 0
    %6953 = vmatpush2.bf16.msra.mxu0 0
    %6954 = vmatprep.subr.bf16.mxu0 0
    %6955 = vmatpush2.bf16.msra.mxu0 0
    %6956 = vmatprep.mubr.bf16.mxu0 0
    %6957 = vmatmul.mubr.bf16.gmra.mxu0 %v6907
    %v6958 = vpop.f32.mrf.mxu0
    %v6959 = vadd.f32 0.0, %v6958
    %v6960 = vpop.f32.mrf.mxu0
    %v6961 = vpop.f32.mrf.mxu0
    %v6962 = vadd.f32 0.0, %v6961
    %v6963 = vpop.f32.mrf.mxu0
    %6964 = vmatprep.mubr.bf16.mxu0 0
    %6965 = vmatmul.mubr.bf16.gmra.mxu0 %v6910
    %v6966 = vpop.f32.mrf.mxu0
    %v6967 = vadd.f32 0.0, %v6966
    %v6968 = vpop.f32.mrf.mxu0
    %v6969 = vpop.f32.mrf.mxu0
    %v6970 = vadd.f32 0.0, %v6969
    %v6971 = vpop.f32.mrf.mxu0
    %6972 = vmatprep.mubr.bf16.mxu0 0
    %6973 = vmatmul.mubr.bf16.gmra.mxu0 %v6913
    %v6974 = vpop.f32.mrf.mxu0
    %v6975 = vadd.f32 0.0, %v6974
    %v6976 = vpop.f32.mrf.mxu0
    %v6977 = vpop.f32.mrf.mxu0
    %v6978 = vadd.f32 0.0, %v6977
    %v6979 = vpop.f32.mrf.mxu0
    %6980 = vmatprep.mubr.bf16.mxu0 0
    %6981 = vmatmul.mubr.bf16.gmra.mxu0 %v6916
    %v6982 = vpop.f32.mrf.mxu0
    %v6983 = vadd.f32 0.0, %v6982
    %v6984 = vpop.f32.mrf.mxu0
    %v6985 = vpop.f32.mrf.mxu0
    %v6986 = vadd.f32 0.0, %v6985
    %v6987 = vpop.f32.mrf.mxu0
    %6988 = vmatprep.mubr.bf16.mxu0 0
    %6989 = vmatmul.mubr.bf16.gmra.mxu0 %v6919
    %v6990 = vpop.f32.mrf.mxu0
    %v6991 = vadd.f32 0.0, %v6990
    %v6992 = vpop.f32.mrf.mxu0
    %v6993 = vpop.f32.mrf.mxu0
    %v6994 = vadd.f32 0.0, %v6993
    %v6995 = vpop.f32.mrf.mxu0
    %6996 = vmatprep.mubr.bf16.mxu0 0
    %6997 = vmatmul.mubr.bf16.gmra.mxu0 %v6922
    %v6998 = vpop.f32.mrf.mxu0
    %v6999 = vadd.f32 0.0, %v6998
    %v7000 = vpop.f32.mrf.mxu0
    %v7001 = vpop.f32.mrf.mxu0
    %v7002 = vadd.f32 0.0, %v7001
    %v7003 = vpop.f32.mrf.mxu0
    %7004 = vdwg.mxu0
    %v7005 = vadd.f32 %v6763, %v6959
    %v7006 = vadd.f32 %v6764, %v6962
    %v7007 = vadd.f32 %v6765, %v6967
    %v7008 = vadd.f32 %v6766, %v6970
    %v7009 = vadd.f32 %v6767, %v6975
    %v7010 = vadd.f32 %v6768, %v6978
    %v7011 = vadd.f32 %v6769, %v6983
    %v7012 = vadd.f32 %v6770, %v6986
    %v7013 = vadd.f32 %v6771, %v6991
    %v7014 = vadd.f32 %v6772, %v6994
    %v7015 = vadd.f32 %v6773, %v6999
    %v7016 = vadd.f32 %v6774, %v7002
    %v7017 = vld [vmem:[#allocation5 + $0x8] sm:$0x8]
    %v7018 = vld [vmem:[#allocation5 + $0x38] sm:$0xf]
    %s7019 = scalar_lea.vmem %s5, 192
    %v7020 = vld [vmem:[%s7019] sm:$0xf]
    %v7021 = vld [vmem:[%s7019 + $0x4] sm:$0xf]
    %v7022 = vld [vmem:[%s7019 + $0x8] sm:$0xf]
    %v7023 = vld [vmem:[%s7019 + $0xc] sm:$0xf]
    %v7024 = vld [vmem:[%s7019 + $0x10] sm:$0xf]
    %v7025 = vld [vmem:[%s7019 + $0x14] sm:$0xf]
    %v7026 = vld [vmem:[%s7019 + $0x18] sm:$0xf]
    %v7027 = vld [vmem:[%s7019 + $0x1c] sm:$0xf]
    %v7030 = vunpack.c.l.b16 %v7017
    %v7031 = vunpack.c.l.b16 %v7018
    %v7032 = vpack.c.b16 %v6811, %v7030
    %v7033 = vpack.c.b16 %v7031, %v7031
    %v7035 = vshrl.u32 %v7032, 16
    %v7037 = vrot.slane %v7035, 3
    %v7038 = vshll.u32 %v7032, 16
    %v7040 = vrot.slane %v7038, 4
    %v7041 = vor.u32 %v7037, %v7040
    %v7042 = vrot.slane %v6842, 3
    %v7043 = vrot.slane %v6838, 4
    %v7044 = vor.u32 %v7042, %v7043
    %v7045 = vsel %vm1528, %v7041, %v7044
    %v7046 = vrot.slane %v6850, 3
    %v7047 = vrot.slane %v6846, 4
    %v7048 = vor.u32 %v7046, %v7047
    %v7049 = vsel %vm1528, %v7044, %v7048
    %v7050 = vrot.slane %v6858, 3
    %v7051 = vrot.slane %v6854, 4
    %v7052 = vor.u32 %v7050, %v7051
    %v7053 = vsel %vm1528, %v7048, %v7052
    %v7054 = vrot.slane %v6866, 3
    %v7055 = vrot.slane %v6862, 4
    %v7056 = vor.u32 %v7054, %v7055
    %v7057 = vsel %vm1528, %v7052, %v7056
    %v7058 = vrot.slane %v6874, 3
    %v7059 = vrot.slane %v6870, 4
    %v7060 = vor.u32 %v7058, %v7059
    %v7061 = vsel %vm1528, %v7056, %v7060
    %v7063 = vshrl.u32 %v7033, 16
    %v7065 = vrot.slane %v7063, 3
    %v7066 = vshll.u32 %v7033, 16
    %v7068 = vrot.slane %v7066, 4
    %v7069 = vor.u32 %v7065, %v7068
    %v7070 = vsel %vm1528, %v7060, %v7069
    %v7079 = vunpack.c.l.b16 %v7020
    %v7080 = vunpack.c.l.b16 %v7021
    %v7081 = vunpack.c.l.b16 %v7022
    %v7082 = vunpack.c.l.b16 %v7023
    %v7083 = vunpack.c.l.b16 %v7024
    %v7084 = vunpack.c.l.b16 %v7025
    %v7085 = vunpack.c.l.b16 %v7026
    %v7086 = vunpack.c.l.b16 %v7027
    %v7087 = vpack.c.b16 %v7080, %v7079
    %v7088 = vpack.c.b16 %v7082, %v7081
    %v7089 = vpack.c.b16 %v7084, %v7083
    %v7090 = vpack.c.b16 %v7086, %v7085
    %v7096 = vsel %vm5674, %v7045, 0
    %v7099 = vsel %vm5674, %v7049, 0
    %v7102 = vsel %vm5674, %v7053, 0
    %v7105 = vsel %vm5674, %v7057, 0
    %v7108 = vsel %vm5674, %v7061, 0
    %v7111 = vsel %vm5674, %v7070, 0
    %7113 = vmatprep.subr.bf16.mxu0 0
    %7114 = vmatpush1.bf16.msra.mxu0 0
    %7115 = vmatprep.subr.bf16.mxu0 0
    %7116 = vmatpush1.bf16.msra.mxu0 0
    %7117 = vmatprep.subr.bf16.mxu0 0
    %7118 = vmatpush1.bf16.msra.mxu0 0
    %7119 = vmatprep.subr.bf16.mxu0 0
    %7120 = vmatpush1.bf16.msra.mxu0 0
    %7121 = vmatprep.subr.bf16.mxu0 0
    %7122 = vmatpush1.bf16.msra.mxu0 %v7090
    %7123 = vmatprep.subr.bf16.mxu0 0
    %7124 = vmatpush1.bf16.msra.mxu0 %v7089
    %7125 = vmatprep.subr.bf16.mxu0 0
    %7126 = vmatpush1.bf16.msra.mxu0 %v7088
    %7127 = vmatprep.subr.bf16.mxu0 0
    %7128 = vmatpush1.bf16.msra.mxu0 %v7087
    %7129 = vmatprep.subr.bf16.mxu0 0
    %7130 = vmatpush2.bf16.msra.mxu0 0
    %7131 = vmatprep.subr.bf16.mxu0 0
    %7132 = vmatpush2.bf16.msra.mxu0 0
    %7133 = vmatprep.subr.bf16.mxu0 0
    %7134 = vmatpush2.bf16.msra.mxu0 0
    %7135 = vmatprep.subr.bf16.mxu0 0
    %7136 = vmatpush2.bf16.msra.mxu0 0
    %7137 = vmatprep.subr.bf16.mxu0 0
    %7138 = vmatpush2.bf16.msra.mxu0 0
    %7139 = vmatprep.subr.bf16.mxu0 0
    %7140 = vmatpush2.bf16.msra.mxu0 0
    %7141 = vmatprep.subr.bf16.mxu0 0
    %7142 = vmatpush2.bf16.msra.mxu0 0
    %7143 = vmatprep.subr.bf16.mxu0 0
    %7144 = vmatpush2.bf16.msra.mxu0 0
    %7145 = vmatprep.mubr.bf16.mxu0 0
    %7146 = vmatmul.mubr.bf16.gmra.mxu0 %v7096
    %v7147 = vpop.f32.mrf.mxu0
    %v7148 = vadd.f32 0.0, %v7147
    %v7149 = vpop.f32.mrf.mxu0
    %v7150 = vpop.f32.mrf.mxu0
    %v7151 = vadd.f32 0.0, %v7150
    %v7152 = vpop.f32.mrf.mxu0
    %7153 = vmatprep.mubr.bf16.mxu0 0
    %7154 = vmatmul.mubr.bf16.gmra.mxu0 %v7099
    %v7155 = vpop.f32.mrf.mxu0
    %v7156 = vadd.f32 0.0, %v7155
    %v7157 = vpop.f32.mrf.mxu0
    %v7158 = vpop.f32.mrf.mxu0
    %v7159 = vadd.f32 0.0, %v7158
    %v7160 = vpop.f32.mrf.mxu0
    %7161 = vmatprep.mubr.bf16.mxu0 0
    %7162 = vmatmul.mubr.bf16.gmra.mxu0 %v7102
    %v7163 = vpop.f32.mrf.mxu0
    %v7164 = vadd.f32 0.0, %v7163
    %v7165 = vpop.f32.mrf.mxu0
    %v7166 = vpop.f32.mrf.mxu0
    %v7167 = vadd.f32 0.0, %v7166
    %v7168 = vpop.f32.mrf.mxu0
    %7169 = vmatprep.mubr.bf16.mxu0 0
    %7170 = vmatmul.mubr.bf16.gmra.mxu0 %v7105
    %v7171 = vpop.f32.mrf.mxu0
    %v7172 = vadd.f32 0.0, %v7171
    %v7173 = vpop.f32.mrf.mxu0
    %v7174 = vpop.f32.mrf.mxu0
    %v7175 = vadd.f32 0.0, %v7174
    %v7176 = vpop.f32.mrf.mxu0
    %7177 = vmatprep.mubr.bf16.mxu0 0
    %7178 = vmatmul.mubr.bf16.gmra.mxu0 %v7108
    %v7179 = vpop.f32.mrf.mxu0
    %v7180 = vadd.f32 0.0, %v7179
    %v7181 = vpop.f32.mrf.mxu0
    %v7182 = vpop.f32.mrf.mxu0
    %v7183 = vadd.f32 0.0, %v7182
    %v7184 = vpop.f32.mrf.mxu0
    %7185 = vmatprep.mubr.bf16.mxu0 0
    %7186 = vmatmul.mubr.bf16.gmra.mxu0 %v7111
    %v7187 = vpop.f32.mrf.mxu0
    %v7188 = vadd.f32 0.0, %v7187
    %v7189 = vpop.f32.mrf.mxu0
    %v7190 = vpop.f32.mrf.mxu0
    %v7191 = vadd.f32 0.0, %v7190
    %v7192 = vpop.f32.mrf.mxu0
    %7193 = vdwg.mxu0
    %v7194 = vadd.f32 %v7005, %v7148
    %v7195 = vadd.f32 %v7006, %v7151
    %v7196 = vadd.f32 %v7007, %v7156
    %v7197 = vadd.f32 %v7008, %v7159
    %v7198 = vadd.f32 %v7009, %v7164
    %v7199 = vadd.f32 %v7010, %v7167
    %v7200 = vadd.f32 %v7011, %v7172
    %v7201 = vadd.f32 %v7012, %v7175
    %v7202 = vadd.f32 %v7013, %v7180
    %v7203 = vadd.f32 %v7014, %v7183
    %v7204 = vadd.f32 %v7015, %v7188
    %v7205 = vadd.f32 %v7016, %v7191
    %s7206 = scalar_lea.vmem %s5, 224
    %v7207 = vld [vmem:[%s7206] sm:$0xf]
    %v7208 = vld [vmem:[%s7206 + $0x4] sm:$0xf]
    %v7209 = vld [vmem:[%s7206 + $0x8] sm:$0xf]
    %v7210 = vld [vmem:[%s7206 + $0xc] sm:$0xf]
    %v7211 = vld [vmem:[%s7206 + $0x10] sm:$0xf]
    %v7212 = vld [vmem:[%s7206 + $0x14] sm:$0xf]
    %v7213 = vld [vmem:[%s7206 + $0x18] sm:$0xf]
    %v7214 = vld [vmem:[%s7206 + $0x1c] sm:$0xf]
    %v7215 = vpack.c.b16 %v6812, %v6811
    %v7216 = vpack.c.b16 %v6814, %v6813
    %v7217 = vpack.c.b16 %v6816, %v6815
    %v7218 = vpack.c.b16 %v6818, %v6817
    %v7219 = vpack.c.b16 %v6820, %v6819
    %v7220 = vpack.c.b16 %v7031, %v6821
    %v7229 = vunpack.c.l.b16 %v7207
    %v7230 = vunpack.c.l.b16 %v7208
    %v7231 = vunpack.c.l.b16 %v7209
    %v7232 = vunpack.c.l.b16 %v7210
    %v7233 = vunpack.c.l.b16 %v7211
    %v7234 = vunpack.c.l.b16 %v7212
    %v7235 = vunpack.c.l.b16 %v7213
    %v7236 = vunpack.c.l.b16 %v7214
    %v7237 = vpack.c.b16 %v7230, %v7229
    %v7238 = vpack.c.b16 %v7232, %v7231
    %v7239 = vpack.c.b16 %v7234, %v7233
    %v7240 = vpack.c.b16 %v7236, %v7235
    %v7246 = vsel %vm5674, %v7215, 0
    %v7249 = vsel %vm5674, %v7216, 0
    %v7252 = vsel %vm5674, %v7217, 0
    %v7255 = vsel %vm5674, %v7218, 0
    %v7258 = vsel %vm5674, %v7219, 0
    %v7261 = vsel %vm5674, %v7220, 0
    %7263 = vmatprep.subr.bf16.mxu0 0
    %7264 = vmatpush1.bf16.msra.mxu0 0
    %7265 = vmatprep.subr.bf16.mxu0 0
    %7266 = vmatpush1.bf16.msra.mxu0 0
    %7267 = vmatprep.subr.bf16.mxu0 0
    %7268 = vmatpush1.bf16.msra.mxu0 0
    %7269 = vmatprep.subr.bf16.mxu0 0
    %7270 = vmatpush1.bf16.msra.mxu0 0
    %7271 = vmatprep.subr.bf16.mxu0 0
    %7272 = vmatpush1.bf16.msra.mxu0 %v7240
    %7273 = vmatprep.subr.bf16.mxu0 0
    %7274 = vmatpush1.bf16.msra.mxu0 %v7239
    %7275 = vmatprep.subr.bf16.mxu0 0
    %7276 = vmatpush1.bf16.msra.mxu0 %v7238
    %7277 = vmatprep.subr.bf16.mxu0 0
    %7278 = vmatpush1.bf16.msra.mxu0 %v7237
    %7279 = vmatprep.subr.bf16.mxu0 0
    %7280 = vmatpush2.bf16.msra.mxu0 0
    %7281 = vmatprep.subr.bf16.mxu0 0
    %7282 = vmatpush2.bf16.msra.mxu0 0
    %7283 = vmatprep.subr.bf16.mxu0 0
    %7284 = vmatpush2.bf16.msra.mxu0 0
    %7285 = vmatprep.subr.bf16.mxu0 0
    %7286 = vmatpush2.bf16.msra.mxu0 0
    %7287 = vmatprep.subr.bf16.mxu0 0
    %7288 = vmatpush2.bf16.msra.mxu0 0
    %7289 = vmatprep.subr.bf16.mxu0 0
    %7290 = vmatpush2.bf16.msra.mxu0 0
    %7291 = vmatprep.subr.bf16.mxu0 0
    %7292 = vmatpush2.bf16.msra.mxu0 0
    %7293 = vmatprep.subr.bf16.mxu0 0
    %7294 = vmatpush2.bf16.msra.mxu0 0
    %7295 = vmatprep.mubr.bf16.mxu0 0
    %7296 = vmatmul.mubr.bf16.gmra.mxu0 %v7246
    %v7297 = vpop.f32.mrf.mxu0
    %v7298 = vadd.f32 0.0, %v7297
    %v7299 = vpop.f32.mrf.mxu0
    %v7300 = vpop.f32.mrf.mxu0
    %v7301 = vadd.f32 0.0, %v7300
    %v7302 = vpop.f32.mrf.mxu0
    %7303 = vmatprep.mubr.bf16.mxu0 0
    %7304 = vmatmul.mubr.bf16.gmra.mxu0 %v7249
    %v7305 = vpop.f32.mrf.mxu0
    %v7306 = vadd.f32 0.0, %v7305
    %v7307 = vpop.f32.mrf.mxu0
    %v7308 = vpop.f32.mrf.mxu0
    %v7309 = vadd.f32 0.0, %v7308
    %v7310 = vpop.f32.mrf.mxu0
    %7311 = vmatprep.mubr.bf16.mxu0 0
    %7312 = vmatmul.mubr.bf16.gmra.mxu0 %v7252
    %v7313 = vpop.f32.mrf.mxu0
    %v7314 = vadd.f32 0.0, %v7313
    %v7315 = vpop.f32.mrf.mxu0
    %v7316 = vpop.f32.mrf.mxu0
    %v7317 = vadd.f32 0.0, %v7316
    %v7318 = vpop.f32.mrf.mxu0
    %7319 = vmatprep.mubr.bf16.mxu0 0
    %7320 = vmatmul.mubr.bf16.gmra.mxu0 %v7255
    %v7321 = vpop.f32.mrf.mxu0
    %v7322 = vadd.f32 0.0, %v7321
    %v7323 = vpop.f32.mrf.mxu0
    %v7324 = vpop.f32.mrf.mxu0
    %v7325 = vadd.f32 0.0, %v7324
    %v7326 = vpop.f32.mrf.mxu0
    %7327 = vmatprep.mubr.bf16.mxu0 0
    %7328 = vmatmul.mubr.bf16.gmra.mxu0 %v7258
    %v7329 = vpop.f32.mrf.mxu0
    %v7330 = vadd.f32 0.0, %v7329
    %v7331 = vpop.f32.mrf.mxu0
    %v7332 = vpop.f32.mrf.mxu0
    %v7333 = vadd.f32 0.0, %v7332
    %v7334 = vpop.f32.mrf.mxu0
    %7335 = vmatprep.mubr.bf16.mxu0 0
    %7336 = vmatmul.mubr.bf16.gmra.mxu0 %v7261
    %v7337 = vpop.f32.mrf.mxu0
    %v7338 = vadd.f32 0.0, %v7337
    %v7339 = vpop.f32.mrf.mxu0
    %v7340 = vpop.f32.mrf.mxu0
    %v7341 = vadd.f32 0.0, %v7340
    %v7342 = vpop.f32.mrf.mxu0
    %7343 = vdwg.mxu0
    %v7344 = vadd.f32 %v7194, %v7298
    %v7345 = vadd.f32 %v7195, %v7301
    %v7346 = vadd.f32 %v7196, %v7306
    %v7347 = vadd.f32 %v7197, %v7309
    %v7348 = vadd.f32 %v7198, %v7314
    %v7349 = vadd.f32 %v7199, %v7317
    %v7350 = vadd.f32 %v7200, %v7322
    %v7351 = vadd.f32 %v7201, %v7325
    %v7352 = vadd.f32 %v7202, %v7330
    %v7353 = vadd.f32 %v7203, %v7333
    %v7354 = vadd.f32 %v7204, %v7338
    %v7355 = vadd.f32 %v7205, %v7341
    %v7356 = vld [vmem:[#allocation5 + $0xc] sm:$0xf]
    %v7357 = vld [vmem:[#allocation5 + $0x10] sm:$0xf]
    %v7358 = vld [vmem:[#allocation5 + $0x14] sm:$0xf]
    %v7359 = vld [vmem:[#allocation5 + $0x18] sm:$0xf]
    %v7360 = vld [vmem:[#allocation5 + $0x1c] sm:$0xf]
    %v7361 = vld [vmem:[#allocation5 + $0x20] sm:$0xf]
    %v7362 = vld [vmem:[#allocation5 + $0x24] sm:$0xf]
    %v7363 = vld [vmem:[#allocation5 + $0x28] sm:$0xf]
    %v7364 = vld [vmem:[#allocation5 + $0x2c] sm:$0xf]
    %v7365 = vld [vmem:[#allocation5 + $0x30] sm:$0xf]
    %v7366 = vld [vmem:[#allocation5 + $0x34] sm:$0xf]
    %v7367 = vld [vmem:[#allocation5 + $0x38] sm:$0xf]
    %v7368 = vld [vmem:[#allocation5 + $0x3c] sm:$0x1]
    %s7369 = scalar_lea.vmem %s5, 256
    %v7370 = vld [vmem:[%s7369] sm:$0xf]
    %v7371 = vld [vmem:[%s7369 + $0x4] sm:$0xf]
    %v7372 = vld [vmem:[%s7369 + $0x8] sm:$0xf]
    %v7373 = vld [vmem:[%s7369 + $0xc] sm:$0xf]
    %v7374 = vld [vmem:[%s7369 + $0x10] sm:$0xf]
    %v7375 = vld [vmem:[%s7369 + $0x14] sm:$0xf]
    %v7376 = vld [vmem:[%s7369 + $0x18] sm:$0xf]
    %v7377 = vld [vmem:[%s7369 + $0x1c] sm:$0xf]
    %v7391 = vunpack.c.l.b16 %v7356
    %v7392 = vunpack.c.l.b16 %v7357
    %v7393 = vunpack.c.l.b16 %v7358
    %v7394 = vunpack.c.l.b16 %v7359
    %v7395 = vunpack.c.l.b16 %v7360
    %v7396 = vunpack.c.l.b16 %v7361
    %v7397 = vunpack.c.l.b16 %v7362
    %v7398 = vunpack.c.l.b16 %v7363
    %v7399 = vunpack.c.l.b16 %v7364
    %v7400 = vunpack.c.l.b16 %v7365
    %v7401 = vunpack.c.l.b16 %v7366
    %v7402 = vunpack.c.l.b16 %v7367
    %v7403 = vunpack.c.l.b16 %v7368
    %v7404 = vpack.c.b16 %v7392, %v7391
    %v7405 = vpack.c.b16 %v7394, %v7393
    %v7406 = vpack.c.b16 %v7396, %v7395
    %v7407 = vpack.c.b16 %v7398, %v7397
    %v7408 = vpack.c.b16 %v7400, %v7399
    %v7409 = vpack.c.b16 %v7402, %v7401
    %v7410 = vpack.c.b16 %v7403, %v7403
    %v7412 = vshrl.u32 %v7404, 16
    %v7414 = vshll.u32 %v7404, 16
    %v7416 = vrot.slane %v7414, 1
    %v7417 = vor.u32 %v7412, %v7416
    %v7419 = vshll.u32 %v7405, 16
    %v7421 = vrot.slane %v7419, 1
    %v7422 = vsel %vm2104, %v7417, %v7421
    %v7423 = vshrl.u32 %v7405, 16
    %v7425 = vor.u32 %v7423, %v7421
    %v7427 = vshll.u32 %v7406, 16
    %v7429 = vrot.slane %v7427, 1
    %v7430 = vsel %vm2104, %v7425, %v7429
    %v7431 = vshrl.u32 %v7406, 16
    %v7433 = vor.u32 %v7431, %v7429
    %v7435 = vshll.u32 %v7407, 16
    %v7437 = vrot.slane %v7435, 1
    %v7438 = vsel %vm2104, %v7433, %v7437
    %v7439 = vshrl.u32 %v7407, 16
    %v7441 = vor.u32 %v7439, %v7437
    %v7443 = vshll.u32 %v7408, 16
    %v7445 = vrot.slane %v7443, 1
    %v7446 = vsel %vm2104, %v7441, %v7445
    %v7447 = vshrl.u32 %v7408, 16
    %v7449 = vor.u32 %v7447, %v7445
    %v7451 = vshll.u32 %v7409, 16
    %v7453 = vrot.slane %v7451, 1
    %v7454 = vsel %vm2104, %v7449, %v7453
    %v7455 = vshrl.u32 %v7409, 16
    %v7457 = vor.u32 %v7455, %v7453
    %v7459 = vshll.u32 %v7410, 16
    %v7461 = vrot.slane %v7459, 1
    %v7462 = vsel %vm2104, %v7457, %v7461
    %v7471 = vunpack.c.l.b16 %v7370
    %v7472 = vunpack.c.l.b16 %v7371
    %v7473 = vunpack.c.l.b16 %v7372
    %v7474 = vunpack.c.l.b16 %v7373
    %v7475 = vunpack.c.l.b16 %v7374
    %v7476 = vunpack.c.l.b16 %v7375
    %v7477 = vunpack.c.l.b16 %v7376
    %v7478 = vunpack.c.l.b16 %v7377
    %v7479 = vpack.c.b16 %v7472, %v7471
    %v7480 = vpack.c.b16 %v7474, %v7473
    %v7481 = vpack.c.b16 %v7476, %v7475
    %v7482 = vpack.c.b16 %v7478, %v7477
    %v7488 = vsel %vm5674, %v7422, 0
    %v7491 = vsel %vm5674, %v7430, 0
    %v7494 = vsel %vm5674, %v7438, 0
    %v7497 = vsel %vm5674, %v7446, 0
    %v7500 = vsel %vm5674, %v7454, 0
    %v7503 = vsel %vm5674, %v7462, 0
    %7505 = vmatprep.subr.bf16.mxu0 0
    %7506 = vmatpush1.bf16.msra.mxu0 0
    %7507 = vmatprep.subr.bf16.mxu0 0
    %7508 = vmatpush1.bf16.msra.mxu0 0
    %7509 = vmatprep.subr.bf16.mxu0 0
    %7510 = vmatpush1.bf16.msra.mxu0 0
    %7511 = vmatprep.subr.bf16.mxu0 0
    %7512 = vmatpush1.bf16.msra.mxu0 0
    %7513 = vmatprep.subr.bf16.mxu0 0
    %7514 = vmatpush1.bf16.msra.mxu0 %v7482
    %7515 = vmatprep.subr.bf16.mxu0 0
    %7516 = vmatpush1.bf16.msra.mxu0 %v7481
    %7517 = vmatprep.subr.bf16.mxu0 0
    %7518 = vmatpush1.bf16.msra.mxu0 %v7480
    %7519 = vmatprep.subr.bf16.mxu0 0
    %7520 = vmatpush1.bf16.msra.mxu0 %v7479
    %7521 = vmatprep.subr.bf16.mxu0 0
    %7522 = vmatpush2.bf16.msra.mxu0 0
    %7523 = vmatprep.subr.bf16.mxu0 0
    %7524 = vmatpush2.bf16.msra.mxu0 0
    %7525 = vmatprep.subr.bf16.mxu0 0
    %7526 = vmatpush2.bf16.msra.mxu0 0
    %7527 = vmatprep.subr.bf16.mxu0 0
    %7528 = vmatpush2.bf16.msra.mxu0 0
    %7529 = vmatprep.subr.bf16.mxu0 0
    %7530 = vmatpush2.bf16.msra.mxu0 0
    %7531 = vmatprep.subr.bf16.mxu0 0
    %7532 = vmatpush2.bf16.msra.mxu0 0
    %7533 = vmatprep.subr.bf16.mxu0 0
    %7534 = vmatpush2.bf16.msra.mxu0 0
    %7535 = vmatprep.subr.bf16.mxu0 0
    %7536 = vmatpush2.bf16.msra.mxu0 0
    %7537 = vmatprep.mubr.bf16.mxu0 0
    %7538 = vmatmul.mubr.bf16.gmra.mxu0 %v7488
    %v7539 = vpop.f32.mrf.mxu0
    %v7540 = vadd.f32 0.0, %v7539
    %v7541 = vpop.f32.mrf.mxu0
    %v7542 = vpop.f32.mrf.mxu0
    %v7543 = vadd.f32 0.0, %v7542
    %v7544 = vpop.f32.mrf.mxu0
    %7545 = vmatprep.mubr.bf16.mxu0 0
    %7546 = vmatmul.mubr.bf16.gmra.mxu0 %v7491
    %v7547 = vpop.f32.mrf.mxu0
    %v7548 = vadd.f32 0.0, %v7547
    %v7549 = vpop.f32.mrf.mxu0
    %v7550 = vpop.f32.mrf.mxu0
    %v7551 = vadd.f32 0.0, %v7550
    %v7552 = vpop.f32.mrf.mxu0
    %7553 = vmatprep.mubr.bf16.mxu0 0
    %7554 = vmatmul.mubr.bf16.gmra.mxu0 %v7494
    %v7555 = vpop.f32.mrf.mxu0
    %v7556 = vadd.f32 0.0, %v7555
    %v7557 = vpop.f32.mrf.mxu0
    %v7558 = vpop.f32.mrf.mxu0
    %v7559 = vadd.f32 0.0, %v7558
    %v7560 = vpop.f32.mrf.mxu0
    %7561 = vmatprep.mubr.bf16.mxu0 0
    %7562 = vmatmul.mubr.bf16.gmra.mxu0 %v7497
    %v7563 = vpop.f32.mrf.mxu0
    %v7564 = vadd.f32 0.0, %v7563
    %v7565 = vpop.f32.mrf.mxu0
    %v7566 = vpop.f32.mrf.mxu0
    %v7567 = vadd.f32 0.0, %v7566
    %v7568 = vpop.f32.mrf.mxu0
    %7569 = vmatprep.mubr.bf16.mxu0 0
    %7570 = vmatmul.mubr.bf16.gmra.mxu0 %v7500
    %v7571 = vpop.f32.mrf.mxu0
    %v7572 = vadd.f32 0.0, %v7571
    %v7573 = vpop.f32.mrf.mxu0
    %v7574 = vpop.f32.mrf.mxu0
    %v7575 = vadd.f32 0.0, %v7574
    %v7576 = vpop.f32.mrf.mxu0
    %7577 = vmatprep.mubr.bf16.mxu0 0
    %7578 = vmatmul.mubr.bf16.gmra.mxu0 %v7503
    %v7579 = vpop.f32.mrf.mxu0
    %v7580 = vadd.f32 0.0, %v7579
    %v7581 = vpop.f32.mrf.mxu0
    %v7582 = vpop.f32.mrf.mxu0
    %v7583 = vadd.f32 0.0, %v7582
    %v7584 = vpop.f32.mrf.mxu0
    %7585 = vdwg.mxu0
    %v7586 = vadd.f32 %v7344, %v7540
    %v7587 = vadd.f32 %v7345, %v7543
    %v7588 = vadd.f32 %v7346, %v7548
    %v7589 = vadd.f32 %v7347, %v7551
    %v7590 = vadd.f32 %v7348, %v7556
    %v7591 = vadd.f32 %v7349, %v7559
    %v7592 = vadd.f32 %v7350, %v7564
    %v7593 = vadd.f32 %v7351, %v7567
    %v7594 = vadd.f32 %v7352, %v7572
    %v7595 = vadd.f32 %v7353, %v7575
    %v7596 = vadd.f32 %v7354, %v7580
    %v7597 = vadd.f32 %v7355, %v7583
    %v7598 = vld [vmem:[%s6] sm:$0x1]
    %v7600 = vlaneseq
    %v7601 = vshrl.u32 %v7600, 7
    %v7602 = vsub.s32 0, %v7601
    %v7603 = vrot.slane %v7598, %v7602
    %v7605 = vadd.f32 %v7586, %v7603
    %v7606 = vadd.f32 %v7587, %v7603
    %v7607 = vadd.f32 %v7588, %v7603
    %v7608 = vadd.f32 %v7589, %v7603
    %v7609 = vadd.f32 %v7590, %v7603
    %v7610 = vadd.f32 %v7591, %v7603
    %v7611 = vadd.f32 %v7592, %v7603
    %v7612 = vadd.f32 %v7593, %v7603
    %v7613 = vadd.f32 %v7594, %v7603
    %v7614 = vadd.f32 %v7595, %v7603
    %v7615 = vadd.f32 %v7596, %v7603
    %v7616 = vadd.f32 %v7597, %v7603
    %v7617 = vmax.f32 %v7605, 0.0
    %v7618 = vmax.f32 %v7606, 0.0
    %v7619 = vmax.f32 %v7607, 0.0
    %v7620 = vmax.f32 %v7608, 0.0
    %v7621 = vmax.f32 %v7609, 0.0
    %v7622 = vmax.f32 %v7610, 0.0
    %v7623 = vmax.f32 %v7611, 0.0
    %v7624 = vmax.f32 %v7612, 0.0
    %v7625 = vmax.f32 %v7613, 0.0
    %v7626 = vmax.f32 %v7614, 0.0
    %v7627 = vmax.f32 %v7615, 0.0
    %v7628 = vmax.f32 %v7616, 0.0
    %7629 = vst [vmem:[#allocation6] sm:$0xff] %v7617
    %7630 = vst [vmem:[#allocation6 + $0x8] sm:$0xff] %v7618
    %7631 = vst [vmem:[#allocation6 + $0x10] sm:$0xff] %v7619
    %7632 = vst [vmem:[#allocation6 + $0x18] sm:$0xff] %v7620
    %7633 = vst [vmem:[#allocation6 + $0x20] sm:$0xff] %v7621
    %7634 = vst [vmem:[#allocation6 + $0x28] sm:$0xff] %v7622
    %7635 = vst [vmem:[#allocation6 + $0x30] sm:$0xff] %v7623
    %7636 = vst [vmem:[#allocation6 + $0x38] sm:$0xff] %v7624
    %7637 = vst [vmem:[#allocation6 + $0x40] sm:$0xff] %v7625
    %7638 = vst [vmem:[#allocation6 + $0x48] sm:$0xff] %v7626
    %7639 = vst [vmem:[#allocation6 + $0x50] sm:$0xff] %v7627
    %7640 = vst [vmem:[#allocation6 + $0x58] sm:$0xff] %v7628
    %v7641 = vld [vmem:[#allocation6] ss:$2 sm:$0x3]
    %s7642 = scalar_lea.vmem [#allocation6], 1
    %v7643 = vld [vmem:[%s7642] ss:$2 sm:$0x3]
    %v7644 = vmax.f32 %v7641, %v7643
    %s7645 = scalar_lea.vmem [#allocation6], 8
    %v7646 = vld [vmem:[%s7645] ss:$2 sm:$0x3]
    %s7647 = scalar_lea.vmem [#allocation6], 9
    %v7648 = vld [vmem:[%s7647] ss:$2 sm:$0x3]
    %v7649 = vmax.f32 %v7646, %v7648
    %v7650 = vmax.f32 %v7644, %v7649
    %v7651 = vpack.c.bf16 %v7650, %v7650
    %7652 = vst [vmem:[#allocation7 + $0x8] sm:$0x1] %v7651
    %s7653 = scalar_lea.vmem [#allocation6], 16
    %v7654 = vld [vmem:[%s7653] ss:$2 sm:$0x3]
    %s7655 = scalar_lea.vmem [#allocation6], 17
    %v7656 = vld [vmem:[%s7655] ss:$2 sm:$0x3]
    %v7657 = vmax.f32 %v7654, %v7656
    %s7658 = scalar_lea.vmem [#allocation6], 24
    %v7659 = vld [vmem:[%s7658] ss:$2 sm:$0x3]
    %s7660 = scalar_lea.vmem [#allocation6], 25
    %v7661 = vld [vmem:[%s7660] ss:$2 sm:$0x3]
    %v7662 = vmax.f32 %v7659, %v7661
    %v7663 = vmax.f32 %v7657, %v7662
    %v7664 = vpack.c.bf16 %v7663, %v7663
    %7665 = vst [vmem:[#allocation7 + $0xc] sm:$0x1] %v7664
    %s7666 = scalar_lea.vmem [#allocation6], 64
    %v7667 = vld [vmem:[%s7666] ss:$2 sm:$0x3]
    %s7668 = scalar_lea.vmem [#allocation6], 65
    %v7669 = vld [vmem:[%s7668] ss:$2 sm:$0x3]
    %v7670 = vmax.f32 %v7667, %v7669
    %s7671 = scalar_lea.vmem [#allocation6], 72
    %v7672 = vld [vmem:[%s7671] ss:$2 sm:$0x3]
    %s7673 = scalar_lea.vmem [#allocation6], 73
    %v7674 = vld [vmem:[%s7673] ss:$2 sm:$0x3]
    %v7675 = vmax.f32 %v7672, %v7674
    %v7676 = vmax.f32 %v7670, %v7675
    %v7677 = vpack.c.bf16 %v7676, %v7676
    %7678 = vst [vmem:[#allocation7 + $0x20] sm:$0x1] %v7677
    %s7679 = scalar_lea.vmem [#allocation6], 80
    %v7680 = vld [vmem:[%s7679] ss:$2 sm:$0x3]
    %s7681 = scalar_lea.vmem [#allocation6], 81
    %v7682 = vld [vmem:[%s7681] ss:$2 sm:$0x3]
    %v7683 = vmax.f32 %v7680, %v7682
    %s7684 = scalar_lea.vmem [#allocation6], 88
    %v7685 = vld [vmem:[%s7684] ss:$2 sm:$0x3]
    %s7686 = scalar_lea.vmem [#allocation6], 89
    %v7687 = vld [vmem:[%s7686] ss:$2 sm:$0x3]
    %v7688 = vmax.f32 %v7685, %v7687
    %v7689 = vmax.f32 %v7683, %v7688
    %v7690 = vpack.c.bf16 %v7689, %v7689
    %7691 = vst [vmem:[#allocation7 + $0x24] sm:$0x1] %v7690
    %v7692 = vld [vmem:[#allocation7] sm:$0x8]
    %v7693 = vld [vmem:[#allocation7 + $0x4] sm:$0xf]
    %v7694 = vld [vmem:[#allocation7 + $0x8] sm:$0xf]
    %v7695 = vld [vmem:[#allocation7 + $0xc] sm:$0xf]
    %v7696 = vld [vmem:[#allocation7 + $0x10] sm:$0xf]
    %v7697 = vld [vmem:[#allocation7 + $0x14] sm:$0xf]
    %v7698 = vld [vmem:[#allocation7 + $0x18] sm:$0xf]
    %v7699 = vld [vmem:[#allocation7 + $0x1c] sm:$0xf]
    %v7700 = vld [vmem:[#allocation7 + $0x20] sm:$0xf]
    %v7701 = vld [vmem:[#allocation12] sm:$0xff]
    %v7702 = vld [vmem:[#allocation12 + $0x8] sm:$0xff]
    %v7703 = vld [vmem:[#allocation12 + $0x10] sm:$0xff]
    %v7704 = vld [vmem:[#allocation12 + $0x18] sm:$0xff]
    %v7705 = vld [vmem:[#allocation12 + $0x20] sm:$0xff]
    %v7706 = vld [vmem:[#allocation12 + $0x28] sm:$0xff]
    %v7707 = vld [vmem:[#allocation12 + $0x30] sm:$0xff]
    %v7708 = vld [vmem:[#allocation12 + $0x38] sm:$0xff]
    %v7709 = vld [vmem:[#allocation12 + $0x40] sm:$0xff]
    %v7710 = vld [vmem:[#allocation12 + $0x48] sm:$0xff]
    %v7711 = vld [vmem:[#allocation12 + $0x50] sm:$0xff]
    %v7712 = vld [vmem:[#allocation12 + $0x58] sm:$0xff]
    %v7713 = vld [vmem:[#allocation12 + $0x60] sm:$0xff]
    %v7714 = vld [vmem:[#allocation12 + $0x68] sm:$0xff]
    %v7715 = vld [vmem:[#allocation12 + $0x70] sm:$0xff]
    %v7716 = vld [vmem:[#allocation12 + $0x78] sm:$0xff]
    %s7717 = scalar_lea.vmem [#allocation12], 128
    %v7718 = vld [vmem:[%s7717] sm:$0xff]
    %v7719 = vld [vmem:[%s7717 + $0x8] sm:$0xff]
    %v7720 = vld [vmem:[%s7717 + $0x10] sm:$0xff]
    %v7721 = vld [vmem:[%s7717 + $0x18] sm:$0xff]
    %v7722 = vld [vmem:[%s7717 + $0x20] sm:$0xff]
    %v7723 = vld [vmem:[%s7717 + $0x28] sm:$0xff]
    %v7724 = vld [vmem:[%s7717 + $0x30] sm:$0xff]
    %v7725 = vld [vmem:[%s7717 + $0x38] sm:$0xff]
    %v7726 = vld [vmem:[%s7717 + $0x40] sm:$0xff]
    %v7727 = vld [vmem:[%s7717 + $0x48] sm:$0xff]
    %v7728 = vld [vmem:[%s7717 + $0x50] sm:$0xff]
    %v7729 = vld [vmem:[%s7717 + $0x58] sm:$0xff]
    %v7730 = vld [vmem:[%s7717 + $0x60] sm:$0xff]
    %v7731 = vld [vmem:[%s7717 + $0x68] sm:$0xff]
    %v7732 = vld [vmem:[%s7717 + $0x70] sm:$0xff]
    %v7733 = vld [vmem:[%s7717 + $0x78] sm:$0xff]
    %v7742 = vunpack.c.l.b16 %v7693
    %v7743 = vunpack.c.l.b16 %v7694
    %v7744 = vunpack.c.l.b16 %v7695
    %v7745 = vunpack.c.l.b16 %v7696
    %v7746 = vunpack.c.l.b16 %v7697
    %v7747 = vunpack.c.l.b16 %v7698
    %v7748 = vunpack.c.l.b16 %v7699
    %v7749 = vunpack.c.l.b16 %v7700
    %v7750 = vpack.c.b16 %v7743, %v7742
    %v7751 = vpack.c.b16 %v7745, %v7744
    %v7752 = vpack.c.b16 %v7747, %v7746
    %v7753 = vpack.c.b16 %v7749, %v7748
    %v7774 = vunpack.c.l.b16 %v7718
    %v7775 = vunpack.c.h.b16 %v7718
    %v7776 = vunpack.c.l.b16 %v7719
    %v7777 = vunpack.c.h.b16 %v7719
    %v7778 = vunpack.c.l.b16 %v7720
    %v7779 = vunpack.c.h.b16 %v7720
    %v7780 = vunpack.c.l.b16 %v7721
    %v7781 = vunpack.c.h.b16 %v7721
    %v7782 = vunpack.c.l.b16 %v7722
    %v7783 = vunpack.c.h.b16 %v7722
    %v7784 = vunpack.c.l.b16 %v7723
    %v7785 = vunpack.c.h.b16 %v7723
    %v7786 = vunpack.c.l.b16 %v7724
    %v7787 = vunpack.c.h.b16 %v7724
    %v7788 = vunpack.c.l.b16 %v7725
    %v7789 = vunpack.c.h.b16 %v7725
    %v7790 = vunpack.c.l.b16 %v7726
    %v7791 = vunpack.c.h.b16 %v7726
    %v7792 = vunpack.c.l.b16 %v7727
    %v7793 = vunpack.c.h.b16 %v7727
    %v7794 = vunpack.c.l.b16 %v7728
    %v7795 = vunpack.c.h.b16 %v7728
    %v7796 = vunpack.c.l.b16 %v7729
    %v7797 = vunpack.c.h.b16 %v7729
    %v7798 = vunpack.c.l.b16 %v7730
    %v7799 = vunpack.c.h.b16 %v7730
    %v7800 = vunpack.c.l.b16 %v7731
    %v7801 = vunpack.c.h.b16 %v7731
    %v7802 = vunpack.c.l.b16 %v7732
    %v7803 = vunpack.c.h.b16 %v7732
    %v7804 = vunpack.c.l.b16 %v7733
    %v7805 = vunpack.c.h.b16 %v7733
    %v7806 = vpack.c.b16 %v7776, %v7774
    %v7807 = vpack.c.b16 %v7777, %v7775
    %v7808 = vpack.c.b16 %v7780, %v7778
    %v7809 = vpack.c.b16 %v7781, %v7779
    %v7810 = vpack.c.b16 %v7784, %v7782
    %v7811 = vpack.c.b16 %v7785, %v7783
    %v7812 = vpack.c.b16 %v7788, %v7786
    %v7813 = vpack.c.b16 %v7789, %v7787
    %v7814 = vpack.c.b16 %v7792, %v7790
    %v7815 = vpack.c.b16 %v7793, %v7791
    %v7816 = vpack.c.b16 %v7796, %v7794
    %v7817 = vpack.c.b16 %v7797, %v7795
    %v7818 = vpack.c.b16 %v7800, %v7798
    %v7819 = vpack.c.b16 %v7801, %v7799
    %v7820 = vpack.c.b16 %v7804, %v7802
    %v7821 = vpack.c.b16 %v7805, %v7803
    %7838 = vmatprep.subr.bf16.mxu0 %v7821
    %7839 = vmatpush1.bf16.msra.mxu0 %v7820
    %7840 = vmatprep.subr.bf16.mxu0 %v7819
    %7841 = vmatpush1.bf16.msra.mxu0 %v7818
    %7842 = vmatprep.subr.bf16.mxu0 %v7817
    %7843 = vmatpush1.bf16.msra.mxu0 %v7816
    %7844 = vmatprep.subr.bf16.mxu0 %v7815
    %7845 = vmatpush1.bf16.msra.mxu0 %v7814
    %7846 = vmatprep.subr.bf16.mxu0 %v7813
    %7847 = vmatpush1.bf16.msra.mxu0 %v7812
    %7848 = vmatprep.subr.bf16.mxu0 %v7811
    %7849 = vmatpush1.bf16.msra.mxu0 %v7810
    %7850 = vmatprep.subr.bf16.mxu0 %v7809
    %7851 = vmatpush1.bf16.msra.mxu0 %v7808
    %7852 = vmatprep.subr.bf16.mxu0 %v7807
    %7853 = vmatpush1.bf16.msra.mxu0 %v7806
    %7854 = vmatprep.subr.bf16.mxu0 0
    %7855 = vmatpush2.bf16.msra.mxu0 0
    %7856 = vmatprep.subr.bf16.mxu0 0
    %7857 = vmatpush2.bf16.msra.mxu0 0
    %7858 = vmatprep.subr.bf16.mxu0 0
    %7859 = vmatpush2.bf16.msra.mxu0 0
    %7860 = vmatprep.subr.bf16.mxu0 0
    %7861 = vmatpush2.bf16.msra.mxu0 0
    %7862 = vmatprep.subr.bf16.mxu0 0
    %7863 = vmatpush2.bf16.msra.mxu0 0
    %7864 = vmatprep.subr.bf16.mxu0 0
    %7865 = vmatpush2.bf16.msra.mxu0 0
    %7866 = vmatprep.subr.bf16.mxu0 0
    %7867 = vmatpush2.bf16.msra.mxu0 0
    %7868 = vmatprep.subr.bf16.mxu0 0
    %7869 = vmatpush2.bf16.msra.mxu0 0
    %7870 = vmatprep.mubr.bf16.mxu0 0
    %7871 = vmatmul.mubr.bf16.gmra.mxu0 %v7750
    %v7872 = vpop.f32.mrf.mxu0
    %v7873 = vadd.f32 0.0, %v7872
    %v7874 = vpop.f32.mrf.mxu0
    %v7875 = vadd.f32 0.0, %v7874
    %v7876 = vpop.f32.mrf.mxu0
    %v7877 = vadd.f32 0.0, %v7876
    %v7878 = vpop.f32.mrf.mxu0
    %v7879 = vadd.f32 0.0, %v7878
    %7880 = vmatprep.mubr.bf16.mxu0 0
    %7881 = vmatmul.mubr.bf16.gmra.mxu0 %v7751
    %v7882 = vpop.f32.mrf.mxu0
    %v7883 = vadd.f32 0.0, %v7882
    %v7884 = vpop.f32.mrf.mxu0
    %v7885 = vadd.f32 0.0, %v7884
    %v7886 = vpop.f32.mrf.mxu0
    %v7887 = vadd.f32 0.0, %v7886
    %v7888 = vpop.f32.mrf.mxu0
    %v7889 = vadd.f32 0.0, %v7888
    %7890 = vmatprep.mubr.bf16.mxu0 0
    %7891 = vmatmul.mubr.bf16.gmra.mxu0 %v7752
    %v7892 = vpop.f32.mrf.mxu0
    %v7893 = vadd.f32 0.0, %v7892
    %v7894 = vpop.f32.mrf.mxu0
    %v7895 = vadd.f32 0.0, %v7894
    %v7896 = vpop.f32.mrf.mxu0
    %v7897 = vadd.f32 0.0, %v7896
    %v7898 = vpop.f32.mrf.mxu0
    %v7899 = vadd.f32 0.0, %v7898
    %7900 = vmatprep.mubr.bf16.mxu0 0
    %7901 = vmatmul.mubr.bf16.gmra.mxu0 %v7753
    %v7902 = vpop.f32.mrf.mxu0
    %v7903 = vadd.f32 0.0, %v7902
    %v7904 = vpop.f32.mrf.mxu0
    %v7905 = vadd.f32 0.0, %v7904
    %v7906 = vpop.f32.mrf.mxu0
    %v7907 = vadd.f32 0.0, %v7906
    %v7908 = vpop.f32.mrf.mxu0
    %v7909 = vadd.f32 0.0, %v7908
    %7910 = vdwg.mxu0
    %v7912 = vunpack.c.l.b16 %v7692
    %v7913 = vpack.c.b16 %v7742, %v7912
    %v7914 = vpack.c.b16 %v7744, %v7743
    %v7915 = vpack.c.b16 %v7746, %v7745
    %v7916 = vpack.c.b16 %v7748, %v7747
    %v7917 = vpack.c.b16 %v7749, %v7749
    %v7919 = vshrl.u32 %v7913, 16
    %v7921 = vrot.slane %v7919, 3
    %v7922 = vshll.u32 %v7913, 16
    %v7924 = vrot.slane %v7922, 4
    %v7925 = vor.u32 %v7921, %v7924
    %v7927 = vshrl.u32 %v7914, 16
    %v7929 = vrot.slane %v7927, 3
    %v7930 = vshll.u32 %v7914, 16
    %v7932 = vrot.slane %v7930, 4
    %v7933 = vor.u32 %v7929, %v7932
    %v7934 = vsel %vm1528, %v7925, %v7933
    %v7936 = vshrl.u32 %v7915, 16
    %v7938 = vrot.slane %v7936, 3
    %v7939 = vshll.u32 %v7915, 16
    %v7941 = vrot.slane %v7939, 4
    %v7942 = vor.u32 %v7938, %v7941
    %v7943 = vsel %vm1528, %v7933, %v7942
    %v7945 = vshrl.u32 %v7916, 16
    %v7947 = vrot.slane %v7945, 3
    %v7948 = vshll.u32 %v7916, 16
    %v7950 = vrot.slane %v7948, 4
    %v7951 = vor.u32 %v7947, %v7950
    %v7952 = vsel %vm1528, %v7942, %v7951
    %v7954 = vshrl.u32 %v7917, 16
    %v7956 = vrot.slane %v7954, 3
    %v7957 = vshll.u32 %v7917, 16
    %v7959 = vrot.slane %v7957, 4
    %v7960 = vor.u32 %v7956, %v7959
    %v7961 = vsel %vm1528, %v7951, %v7960
    %v7982 = vunpack.c.l.b16 %v7701
    %v7983 = vunpack.c.h.b16 %v7701
    %v7984 = vunpack.c.l.b16 %v7702
    %v7985 = vunpack.c.h.b16 %v7702
    %v7986 = vunpack.c.l.b16 %v7703
    %v7987 = vunpack.c.h.b16 %v7703
    %v7988 = vunpack.c.l.b16 %v7704
    %v7989 = vunpack.c.h.b16 %v7704
    %v7990 = vunpack.c.l.b16 %v7705
    %v7991 = vunpack.c.h.b16 %v7705
    %v7992 = vunpack.c.l.b16 %v7706
    %v7993 = vunpack.c.h.b16 %v7706
    %v7994 = vunpack.c.l.b16 %v7707
    %v7995 = vunpack.c.h.b16 %v7707
    %v7996 = vunpack.c.l.b16 %v7708
    %v7997 = vunpack.c.h.b16 %v7708
    %v7998 = vunpack.c.l.b16 %v7709
    %v7999 = vunpack.c.h.b16 %v7709
    %v8000 = vunpack.c.l.b16 %v7710
    %v8001 = vunpack.c.h.b16 %v7710
    %v8002 = vunpack.c.l.b16 %v7711
    %v8003 = vunpack.c.h.b16 %v7711
    %v8004 = vunpack.c.l.b16 %v7712
    %v8005 = vunpack.c.h.b16 %v7712
    %v8006 = vunpack.c.l.b16 %v7713
    %v8007 = vunpack.c.h.b16 %v7713
    %v8008 = vunpack.c.l.b16 %v7714
    %v8009 = vunpack.c.h.b16 %v7714
    %v8010 = vunpack.c.l.b16 %v7715
    %v8011 = vunpack.c.h.b16 %v7715
    %v8012 = vunpack.c.l.b16 %v7716
    %v8013 = vunpack.c.h.b16 %v7716
    %v8014 = vpack.c.b16 %v7984, %v7982
    %v8015 = vpack.c.b16 %v7985, %v7983
    %v8016 = vpack.c.b16 %v7988, %v7986
    %v8017 = vpack.c.b16 %v7989, %v7987
    %v8018 = vpack.c.b16 %v7992, %v7990
    %v8019 = vpack.c.b16 %v7993, %v7991
    %v8020 = vpack.c.b16 %v7996, %v7994
    %v8021 = vpack.c.b16 %v7997, %v7995
    %v8022 = vpack.c.b16 %v8000, %v7998
    %v8023 = vpack.c.b16 %v8001, %v7999
    %v8024 = vpack.c.b16 %v8004, %v8002
    %v8025 = vpack.c.b16 %v8005, %v8003
    %v8026 = vpack.c.b16 %v8008, %v8006
    %v8027 = vpack.c.b16 %v8009, %v8007
    %v8028 = vpack.c.b16 %v8012, %v8010
    %v8029 = vpack.c.b16 %v8013, %v8011
    %8046 = vmatprep.subr.bf16.mxu0 %v8029
    %8047 = vmatpush1.bf16.msra.mxu0 %v8028
    %8048 = vmatprep.subr.bf16.mxu0 %v8027
    %8049 = vmatpush1.bf16.msra.mxu0 %v8026
    %8050 = vmatprep.subr.bf16.mxu0 %v8025
    %8051 = vmatpush1.bf16.msra.mxu0 %v8024
    %8052 = vmatprep.subr.bf16.mxu0 %v8023
    %8053 = vmatpush1.bf16.msra.mxu0 %v8022
    %8054 = vmatprep.subr.bf16.mxu0 %v8021
    %8055 = vmatpush1.bf16.msra.mxu0 %v8020
    %8056 = vmatprep.subr.bf16.mxu0 %v8019
    %8057 = vmatpush1.bf16.msra.mxu0 %v8018
    %8058 = vmatprep.subr.bf16.mxu0 %v8017
    %8059 = vmatpush1.bf16.msra.mxu0 %v8016
    %8060 = vmatprep.subr.bf16.mxu0 %v8015
    %8061 = vmatpush1.bf16.msra.mxu0 %v8014
    %8062 = vmatprep.subr.bf16.mxu0 0
    %8063 = vmatpush2.bf16.msra.mxu0 0
    %8064 = vmatprep.subr.bf16.mxu0 0
    %8065 = vmatpush2.bf16.msra.mxu0 0
    %8066 = vmatprep.subr.bf16.mxu0 0
    %8067 = vmatpush2.bf16.msra.mxu0 0
    %8068 = vmatprep.subr.bf16.mxu0 0
    %8069 = vmatpush2.bf16.msra.mxu0 0
    %8070 = vmatprep.subr.bf16.mxu0 0
    %8071 = vmatpush2.bf16.msra.mxu0 0
    %8072 = vmatprep.subr.bf16.mxu0 0
    %8073 = vmatpush2.bf16.msra.mxu0 0
    %8074 = vmatprep.subr.bf16.mxu0 0
    %8075 = vmatpush2.bf16.msra.mxu0 0
    %8076 = vmatprep.subr.bf16.mxu0 0
    %8077 = vmatpush2.bf16.msra.mxu0 0
    %8078 = vmatprep.mubr.bf16.mxu0 0
    %8079 = vmatmul.mubr.bf16.gmra.mxu0 %v7934
    %v8080 = vpop.f32.mrf.mxu0
    %v8081 = vadd.f32 %v7873, %v8080
    %v8082 = vpop.f32.mrf.mxu0
    %v8083 = vadd.f32 %v7875, %v8082
    %v8084 = vpop.f32.mrf.mxu0
    %v8085 = vadd.f32 %v7877, %v8084
    %v8086 = vpop.f32.mrf.mxu0
    %v8087 = vadd.f32 %v7879, %v8086
    %8088 = vmatprep.mubr.bf16.mxu0 0
    %8089 = vmatmul.mubr.bf16.gmra.mxu0 %v7943
    %v8090 = vpop.f32.mrf.mxu0
    %v8091 = vadd.f32 %v7883, %v8090
    %v8092 = vpop.f32.mrf.mxu0
    %v8093 = vadd.f32 %v7885, %v8092
    %v8094 = vpop.f32.mrf.mxu0
    %v8095 = vadd.f32 %v7887, %v8094
    %v8096 = vpop.f32.mrf.mxu0
    %v8097 = vadd.f32 %v7889, %v8096
    %8098 = vmatprep.mubr.bf16.mxu0 0
    %8099 = vmatmul.mubr.bf16.gmra.mxu0 %v7952
    %v8100 = vpop.f32.mrf.mxu0
    %v8101 = vadd.f32 %v7893, %v8100
    %v8102 = vpop.f32.mrf.mxu0
    %v8103 = vadd.f32 %v7895, %v8102
    %v8104 = vpop.f32.mrf.mxu0
    %v8105 = vadd.f32 %v7897, %v8104
    %v8106 = vpop.f32.mrf.mxu0
    %v8107 = vadd.f32 %v7899, %v8106
    %8108 = vmatprep.mubr.bf16.mxu0 0
    %8109 = vmatmul.mubr.bf16.gmra.mxu0 %v7961
    %v8110 = vpop.f32.mrf.mxu0
    %v8111 = vadd.f32 %v7903, %v8110
    %v8112 = vpop.f32.mrf.mxu0
    %v8113 = vadd.f32 %v7905, %v8112
    %v8114 = vpop.f32.mrf.mxu0
    %v8115 = vadd.f32 %v7907, %v8114
    %v8116 = vpop.f32.mrf.mxu0
    %v8117 = vadd.f32 %v7909, %v8116
    %8118 = vdwg.mxu0
    %v8119 = vld [vmem:[#allocation7 + $0x4] sm:$0xf]
    %v8120 = vld [vmem:[#allocation7 + $0x8] sm:$0xf]
    %v8121 = vld [vmem:[#allocation7 + $0xc] sm:$0xf]
    %v8122 = vld [vmem:[#allocation7 + $0x10] sm:$0xf]
    %v8123 = vld [vmem:[#allocation7 + $0x14] sm:$0xf]
    %v8124 = vld [vmem:[#allocation7 + $0x18] sm:$0xf]
    %v8125 = vld [vmem:[#allocation7 + $0x1c] sm:$0xf]
    %v8126 = vld [vmem:[#allocation7 + $0x20] sm:$0xf]
    %v8127 = vld [vmem:[#allocation7 + $0x24] sm:$0x1]
    %s8128 = scalar_lea.vmem [#allocation12], 256
    %v8129 = vld [vmem:[%s8128] sm:$0xff]
    %v8130 = vld [vmem:[%s8128 + $0x8] sm:$0xff]
    %v8131 = vld [vmem:[%s8128 + $0x10] sm:$0xff]
    %v8132 = vld [vmem:[%s8128 + $0x18] sm:$0xff]
    %v8133 = vld [vmem:[%s8128 + $0x20] sm:$0xff]
    %v8134 = vld [vmem:[%s8128 + $0x28] sm:$0xff]
    %v8135 = vld [vmem:[%s8128 + $0x30] sm:$0xff]
    %v8136 = vld [vmem:[%s8128 + $0x38] sm:$0xff]
    %v8137 = vld [vmem:[%s8128 + $0x40] sm:$0xff]
    %v8138 = vld [vmem:[%s8128 + $0x48] sm:$0xff]
    %v8139 = vld [vmem:[%s8128 + $0x50] sm:$0xff]
    %v8140 = vld [vmem:[%s8128 + $0x58] sm:$0xff]
    %v8141 = vld [vmem:[%s8128 + $0x60] sm:$0xff]
    %v8142 = vld [vmem:[%s8128 + $0x68] sm:$0xff]
    %v8143 = vld [vmem:[%s8128 + $0x70] sm:$0xff]
    %v8144 = vld [vmem:[%s8128 + $0x78] sm:$0xff]
    %v8154 = vunpack.c.l.b16 %v8119
    %v8155 = vunpack.c.l.b16 %v8120
    %v8156 = vunpack.c.l.b16 %v8121
    %v8157 = vunpack.c.l.b16 %v8122
    %v8158 = vunpack.c.l.b16 %v8123
    %v8159 = vunpack.c.l.b16 %v8124
    %v8160 = vunpack.c.l.b16 %v8125
    %v8161 = vunpack.c.l.b16 %v8126
    %v8162 = vunpack.c.l.b16 %v8127
    %v8163 = vpack.c.b16 %v8155, %v8154
    %v8164 = vpack.c.b16 %v8157, %v8156
    %v8165 = vpack.c.b16 %v8159, %v8158
    %v8166 = vpack.c.b16 %v8161, %v8160
    %v8167 = vpack.c.b16 %v8162, %v8162
    %v8169 = vshrl.u32 %v8163, 16
    %v8171 = vshll.u32 %v8163, 16
    %v8173 = vrot.slane %v8171, 1
    %v8174 = vor.u32 %v8169, %v8173
    %v8176 = vshll.u32 %v8164, 16
    %v8178 = vrot.slane %v8176, 1
    %v8179 = vsel %vm2104, %v8174, %v8178
    %v8180 = vshrl.u32 %v8164, 16
    %v8182 = vor.u32 %v8180, %v8178
    %v8184 = vshll.u32 %v8165, 16
    %v8186 = vrot.slane %v8184, 1
    %v8187 = vsel %vm2104, %v8182, %v8186
    %v8188 = vshrl.u32 %v8165, 16
    %v8190 = vor.u32 %v8188, %v8186
    %v8192 = vshll.u32 %v8166, 16
    %v8194 = vrot.slane %v8192, 1
    %v8195 = vsel %vm2104, %v8190, %v8194
    %v8196 = vshrl.u32 %v8166, 16
    %v8198 = vor.u32 %v8196, %v8194
    %v8200 = vshll.u32 %v8167, 16
    %v8202 = vrot.slane %v8200, 1
    %v8203 = vsel %vm2104, %v8198, %v8202
    %v8224 = vunpack.c.l.b16 %v8129
    %v8225 = vunpack.c.h.b16 %v8129
    %v8226 = vunpack.c.l.b16 %v8130
    %v8227 = vunpack.c.h.b16 %v8130
    %v8228 = vunpack.c.l.b16 %v8131
    %v8229 = vunpack.c.h.b16 %v8131
    %v8230 = vunpack.c.l.b16 %v8132
    %v8231 = vunpack.c.h.b16 %v8132
    %v8232 = vunpack.c.l.b16 %v8133
    %v8233 = vunpack.c.h.b16 %v8133
    %v8234 = vunpack.c.l.b16 %v8134
    %v8235 = vunpack.c.h.b16 %v8134
    %v8236 = vunpack.c.l.b16 %v8135
    %v8237 = vunpack.c.h.b16 %v8135
    %v8238 = vunpack.c.l.b16 %v8136
    %v8239 = vunpack.c.h.b16 %v8136
    %v8240 = vunpack.c.l.b16 %v8137
    %v8241 = vunpack.c.h.b16 %v8137
    %v8242 = vunpack.c.l.b16 %v8138
    %v8243 = vunpack.c.h.b16 %v8138
    %v8244 = vunpack.c.l.b16 %v8139
    %v8245 = vunpack.c.h.b16 %v8139
    %v8246 = vunpack.c.l.b16 %v8140
    %v8247 = vunpack.c.h.b16 %v8140
    %v8248 = vunpack.c.l.b16 %v8141
    %v8249 = vunpack.c.h.b16 %v8141
    %v8250 = vunpack.c.l.b16 %v8142
    %v8251 = vunpack.c.h.b16 %v8142
    %v8252 = vunpack.c.l.b16 %v8143
    %v8253 = vunpack.c.h.b16 %v8143
    %v8254 = vunpack.c.l.b16 %v8144
    %v8255 = vunpack.c.h.b16 %v8144
    %v8256 = vpack.c.b16 %v8226, %v8224
    %v8257 = vpack.c.b16 %v8227, %v8225
    %v8258 = vpack.c.b16 %v8230, %v8228
    %v8259 = vpack.c.b16 %v8231, %v8229
    %v8260 = vpack.c.b16 %v8234, %v8232
    %v8261 = vpack.c.b16 %v8235, %v8233
    %v8262 = vpack.c.b16 %v8238, %v8236
    %v8263 = vpack.c.b16 %v8239, %v8237
    %v8264 = vpack.c.b16 %v8242, %v8240
    %v8265 = vpack.c.b16 %v8243, %v8241
    %v8266 = vpack.c.b16 %v8246, %v8244
    %v8267 = vpack.c.b16 %v8247, %v8245
    %v8268 = vpack.c.b16 %v8250, %v8248
    %v8269 = vpack.c.b16 %v8251, %v8249
    %v8270 = vpack.c.b16 %v8254, %v8252
    %v8271 = vpack.c.b16 %v8255, %v8253
    %8288 = vmatprep.subr.bf16.mxu0 %v8271
    %8289 = vmatpush1.bf16.msra.mxu0 %v8270
    %8290 = vmatprep.subr.bf16.mxu0 %v8269
    %8291 = vmatpush1.bf16.msra.mxu0 %v8268
    %8292 = vmatprep.subr.bf16.mxu0 %v8267
    %8293 = vmatpush1.bf16.msra.mxu0 %v8266
    %8294 = vmatprep.subr.bf16.mxu0 %v8265
    %8295 = vmatpush1.bf16.msra.mxu0 %v8264
    %8296 = vmatprep.subr.bf16.mxu0 %v8263
    %8297 = vmatpush1.bf16.msra.mxu0 %v8262
    %8298 = vmatprep.subr.bf16.mxu0 %v8261
    %8299 = vmatpush1.bf16.msra.mxu0 %v8260
    %8300 = vmatprep.subr.bf16.mxu0 %v8259
    %8301 = vmatpush1.bf16.msra.mxu0 %v8258
    %8302 = vmatprep.subr.bf16.mxu0 %v8257
    %8303 = vmatpush1.bf16.msra.mxu0 %v8256
    %8304 = vmatprep.subr.bf16.mxu0 0
    %8305 = vmatpush2.bf16.msra.mxu0 0
    %8306 = vmatprep.subr.bf16.mxu0 0
    %8307 = vmatpush2.bf16.msra.mxu0 0
    %8308 = vmatprep.subr.bf16.mxu0 0
    %8309 = vmatpush2.bf16.msra.mxu0 0
    %8310 = vmatprep.subr.bf16.mxu0 0
    %8311 = vmatpush2.bf16.msra.mxu0 0
    %8312 = vmatprep.subr.bf16.mxu0 0
    %8313 = vmatpush2.bf16.msra.mxu0 0
    %8314 = vmatprep.subr.bf16.mxu0 0
    %8315 = vmatpush2.bf16.msra.mxu0 0
    %8316 = vmatprep.subr.bf16.mxu0 0
    %8317 = vmatpush2.bf16.msra.mxu0 0
    %8318 = vmatprep.subr.bf16.mxu0 0
    %8319 = vmatpush2.bf16.msra.mxu0 0
    %8320 = vmatprep.mubr.bf16.mxu0 0
    %8321 = vmatmul.mubr.bf16.gmra.mxu0 %v8179
    %v8322 = vpop.f32.mrf.mxu0
    %v8323 = vadd.f32 0.0, %v8322
    %v8324 = vpop.f32.mrf.mxu0
    %v8325 = vadd.f32 0.0, %v8324
    %v8326 = vpop.f32.mrf.mxu0
    %v8327 = vadd.f32 0.0, %v8326
    %v8328 = vpop.f32.mrf.mxu0
    %v8329 = vadd.f32 0.0, %v8328
    %8330 = vmatprep.mubr.bf16.mxu0 0
    %8331 = vmatmul.mubr.bf16.gmra.mxu0 %v8187
    %v8332 = vpop.f32.mrf.mxu0
    %v8333 = vadd.f32 0.0, %v8332
    %v8334 = vpop.f32.mrf.mxu0
    %v8335 = vadd.f32 0.0, %v8334
    %v8336 = vpop.f32.mrf.mxu0
    %v8337 = vadd.f32 0.0, %v8336
    %v8338 = vpop.f32.mrf.mxu0
    %v8339 = vadd.f32 0.0, %v8338
    %8340 = vmatprep.mubr.bf16.mxu0 0
    %8341 = vmatmul.mubr.bf16.gmra.mxu0 %v8195
    %v8342 = vpop.f32.mrf.mxu0
    %v8343 = vadd.f32 0.0, %v8342
    %v8344 = vpop.f32.mrf.mxu0
    %v8345 = vadd.f32 0.0, %v8344
    %v8346 = vpop.f32.mrf.mxu0
    %v8347 = vadd.f32 0.0, %v8346
    %v8348 = vpop.f32.mrf.mxu0
    %v8349 = vadd.f32 0.0, %v8348
    %8350 = vmatprep.mubr.bf16.mxu0 0
    %8351 = vmatmul.mubr.bf16.gmra.mxu0 %v8203
    %v8352 = vpop.f32.mrf.mxu0
    %v8353 = vadd.f32 0.0, %v8352
    %v8354 = vpop.f32.mrf.mxu0
    %v8355 = vadd.f32 0.0, %v8354
    %v8356 = vpop.f32.mrf.mxu0
    %v8357 = vadd.f32 0.0, %v8356
    %v8358 = vpop.f32.mrf.mxu0
    %v8359 = vadd.f32 0.0, %v8358
    %8360 = vdwg.mxu0
    %v8361 = vadd.f32 %v8081, %v8323
    %v8362 = vadd.f32 %v8083, %v8325
    %v8363 = vadd.f32 %v8085, %v8327
    %v8364 = vadd.f32 %v8087, %v8329
    %v8365 = vadd.f32 %v8091, %v8333
    %v8366 = vadd.f32 %v8093, %v8335
    %v8367 = vadd.f32 %v8095, %v8337
    %v8368 = vadd.f32 %v8097, %v8339
    %v8369 = vadd.f32 %v8101, %v8343
    %v8370 = vadd.f32 %v8103, %v8345
    %v8371 = vadd.f32 %v8105, %v8347
    %v8372 = vadd.f32 %v8107, %v8349
    %v8373 = vadd.f32 %v8111, %v8353
    %v8374 = vadd.f32 %v8113, %v8355
    %v8375 = vadd.f32 %v8115, %v8357
    %v8376 = vadd.f32 %v8117, %v8359
    %v8377 = vld [vmem:[#allocation7 + $0x4] sm:$0x8]
    %v8378 = vld [vmem:[#allocation7 + $0x24] sm:$0xf]
    %s8379 = scalar_lea.vmem [#allocation12], 384
    %v8380 = vld [vmem:[%s8379] sm:$0xff]
    %v8381 = vld [vmem:[%s8379 + $0x8] sm:$0xff]
    %v8382 = vld [vmem:[%s8379 + $0x10] sm:$0xff]
    %v8383 = vld [vmem:[%s8379 + $0x18] sm:$0xff]
    %v8384 = vld [vmem:[%s8379 + $0x20] sm:$0xff]
    %v8385 = vld [vmem:[%s8379 + $0x28] sm:$0xff]
    %v8386 = vld [vmem:[%s8379 + $0x30] sm:$0xff]
    %v8387 = vld [vmem:[%s8379 + $0x38] sm:$0xff]
    %v8388 = vld [vmem:[%s8379 + $0x40] sm:$0xff]
    %v8389 = vld [vmem:[%s8379 + $0x48] sm:$0xff]
    %v8390 = vld [vmem:[%s8379 + $0x50] sm:$0xff]
    %v8391 = vld [vmem:[%s8379 + $0x58] sm:$0xff]
    %v8392 = vld [vmem:[%s8379 + $0x60] sm:$0xff]
    %v8393 = vld [vmem:[%s8379 + $0x68] sm:$0xff]
    %v8394 = vld [vmem:[%s8379 + $0x70] sm:$0xff]
    %v8395 = vld [vmem:[%s8379 + $0x78] sm:$0xff]
    %v8398 = vunpack.c.l.b16 %v8377
    %v8399 = vunpack.c.l.b16 %v8378
    %v8400 = vpack.c.b16 %v8155, %v8398
    %v8401 = vpack.c.b16 %v8399, %v8399
    %v8403 = vshrl.u32 %v8400, 16
    %v8405 = vrot.slane %v8403, 3
    %v8406 = vshll.u32 %v8400, 16
    %v8408 = vrot.slane %v8406, 4
    %v8409 = vor.u32 %v8405, %v8408
    %v8410 = vrot.slane %v8180, 3
    %v8411 = vrot.slane %v8176, 4
    %v8412 = vor.u32 %v8410, %v8411
    %v8413 = vsel %vm1528, %v8409, %v8412
    %v8414 = vrot.slane %v8188, 3
    %v8415 = vrot.slane %v8184, 4
    %v8416 = vor.u32 %v8414, %v8415
    %v8417 = vsel %vm1528, %v8412, %v8416
    %v8418 = vrot.slane %v8196, 3
    %v8419 = vrot.slane %v8192, 4
    %v8420 = vor.u32 %v8418, %v8419
    %v8421 = vsel %vm1528, %v8416, %v8420
    %v8423 = vshrl.u32 %v8401, 16
    %v8425 = vrot.slane %v8423, 3
    %v8426 = vshll.u32 %v8401, 16
    %v8428 = vrot.slane %v8426, 4
    %v8429 = vor.u32 %v8425, %v8428
    %v8430 = vsel %vm1528, %v8420, %v8429
    %v8451 = vunpack.c.l.b16 %v8380
    %v8452 = vunpack.c.h.b16 %v8380
    %v8453 = vunpack.c.l.b16 %v8381
    %v8454 = vunpack.c.h.b16 %v8381
    %v8455 = vunpack.c.l.b16 %v8382
    %v8456 = vunpack.c.h.b16 %v8382
    %v8457 = vunpack.c.l.b16 %v8383
    %v8458 = vunpack.c.h.b16 %v8383
    %v8459 = vunpack.c.l.b16 %v8384
    %v8460 = vunpack.c.h.b16 %v8384
    %v8461 = vunpack.c.l.b16 %v8385
    %v8462 = vunpack.c.h.b16 %v8385
    %v8463 = vunpack.c.l.b16 %v8386
    %v8464 = vunpack.c.h.b16 %v8386
    %v8465 = vunpack.c.l.b16 %v8387
    %v8466 = vunpack.c.h.b16 %v8387
    %v8467 = vunpack.c.l.b16 %v8388
    %v8468 = vunpack.c.h.b16 %v8388
    %v8469 = vunpack.c.l.b16 %v8389
    %v8470 = vunpack.c.h.b16 %v8389
    %v8471 = vunpack.c.l.b16 %v8390
    %v8472 = vunpack.c.h.b16 %v8390
    %v8473 = vunpack.c.l.b16 %v8391
    %v8474 = vunpack.c.h.b16 %v8391
    %v8475 = vunpack.c.l.b16 %v8392
    %v8476 = vunpack.c.h.b16 %v8392
    %v8477 = vunpack.c.l.b16 %v8393
    %v8478 = vunpack.c.h.b16 %v8393
    %v8479 = vunpack.c.l.b16 %v8394
    %v8480 = vunpack.c.h.b16 %v8394
    %v8481 = vunpack.c.l.b16 %v8395
    %v8482 = vunpack.c.h.b16 %v8395
    %v8483 = vpack.c.b16 %v8453, %v8451
    %v8484 = vpack.c.b16 %v8454, %v8452
    %v8485 = vpack.c.b16 %v8457, %v8455
    %v8486 = vpack.c.b16 %v8458, %v8456
    %v8487 = vpack.c.b16 %v8461, %v8459
    %v8488 = vpack.c.b16 %v8462, %v8460
    %v8489 = vpack.c.b16 %v8465, %v8463
    %v8490 = vpack.c.b16 %v8466, %v8464
    %v8491 = vpack.c.b16 %v8469, %v8467
    %v8492 = vpack.c.b16 %v8470, %v8468
    %v8493 = vpack.c.b16 %v8473, %v8471
    %v8494 = vpack.c.b16 %v8474, %v8472
    %v8495 = vpack.c.b16 %v8477, %v8475
    %v8496 = vpack.c.b16 %v8478, %v8476
    %v8497 = vpack.c.b16 %v8481, %v8479
    %v8498 = vpack.c.b16 %v8482, %v8480
    %8515 = vmatprep.subr.bf16.mxu0 %v8498
    %8516 = vmatpush1.bf16.msra.mxu0 %v8497
    %8517 = vmatprep.subr.bf16.mxu0 %v8496
    %8518 = vmatpush1.bf16.msra.mxu0 %v8495
    %8519 = vmatprep.subr.bf16.mxu0 %v8494
    %8520 = vmatpush1.bf16.msra.mxu0 %v8493
    %8521 = vmatprep.subr.bf16.mxu0 %v8492
    %8522 = vmatpush1.bf16.msra.mxu0 %v8491
    %8523 = vmatprep.subr.bf16.mxu0 %v8490
    %8524 = vmatpush1.bf16.msra.mxu0 %v8489
    %8525 = vmatprep.subr.bf16.mxu0 %v8488
    %8526 = vmatpush1.bf16.msra.mxu0 %v8487
    %8527 = vmatprep.subr.bf16.mxu0 %v8486
    %8528 = vmatpush1.bf16.msra.mxu0 %v8485
    %8529 = vmatprep.subr.bf16.mxu0 %v8484
    %8530 = vmatpush1.bf16.msra.mxu0 %v8483
    %8531 = vmatprep.subr.bf16.mxu0 0
    %8532 = vmatpush2.bf16.msra.mxu0 0
    %8533 = vmatprep.subr.bf16.mxu0 0
    %8534 = vmatpush2.bf16.msra.mxu0 0
    %8535 = vmatprep.subr.bf16.mxu0 0
    %8536 = vmatpush2.bf16.msra.mxu0 0
    %8537 = vmatprep.subr.bf16.mxu0 0
    %8538 = vmatpush2.bf16.msra.mxu0 0
    %8539 = vmatprep.subr.bf16.mxu0 0
    %8540 = vmatpush2.bf16.msra.mxu0 0
    %8541 = vmatprep.subr.bf16.mxu0 0
    %8542 = vmatpush2.bf16.msra.mxu0 0
    %8543 = vmatprep.subr.bf16.mxu0 0
    %8544 = vmatpush2.bf16.msra.mxu0 0
    %8545 = vmatprep.subr.bf16.mxu0 0
    %8546 = vmatpush2.bf16.msra.mxu0 0
    %8547 = vmatprep.mubr.bf16.mxu0 0
    %8548 = vmatmul.mubr.bf16.gmra.mxu0 %v8413
    %v8549 = vpop.f32.mrf.mxu0
    %v8550 = vadd.f32 0.0, %v8549
    %v8551 = vpop.f32.mrf.mxu0
    %v8552 = vadd.f32 0.0, %v8551
    %v8553 = vpop.f32.mrf.mxu0
    %v8554 = vadd.f32 0.0, %v8553
    %v8555 = vpop.f32.mrf.mxu0
    %v8556 = vadd.f32 0.0, %v8555
    %8557 = vmatprep.mubr.bf16.mxu0 0
    %8558 = vmatmul.mubr.bf16.gmra.mxu0 %v8417
    %v8559 = vpop.f32.mrf.mxu0
    %v8560 = vadd.f32 0.0, %v8559
    %v8561 = vpop.f32.mrf.mxu0
    %v8562 = vadd.f32 0.0, %v8561
    %v8563 = vpop.f32.mrf.mxu0
    %v8564 = vadd.f32 0.0, %v8563
    %v8565 = vpop.f32.mrf.mxu0
    %v8566 = vadd.f32 0.0, %v8565
    %8567 = vmatprep.mubr.bf16.mxu0 0
    %8568 = vmatmul.mubr.bf16.gmra.mxu0 %v8421
    %v8569 = vpop.f32.mrf.mxu0
    %v8570 = vadd.f32 0.0, %v8569
    %v8571 = vpop.f32.mrf.mxu0
    %v8572 = vadd.f32 0.0, %v8571
    %v8573 = vpop.f32.mrf.mxu0
    %v8574 = vadd.f32 0.0, %v8573
    %v8575 = vpop.f32.mrf.mxu0
    %v8576 = vadd.f32 0.0, %v8575
    %8577 = vmatprep.mubr.bf16.mxu0 0
    %8578 = vmatmul.mubr.bf16.gmra.mxu0 %v8430
    %v8579 = vpop.f32.mrf.mxu0
    %v8580 = vadd.f32 0.0, %v8579
    %v8581 = vpop.f32.mrf.mxu0
    %v8582 = vadd.f32 0.0, %v8581
    %v8583 = vpop.f32.mrf.mxu0
    %v8584 = vadd.f32 0.0, %v8583
    %v8585 = vpop.f32.mrf.mxu0
    %v8586 = vadd.f32 0.0, %v8585
    %8587 = vdwg.mxu0
    %v8588 = vadd.f32 %v8361, %v8550
    %v8589 = vadd.f32 %v8362, %v8552
    %v8590 = vadd.f32 %v8363, %v8554
    %v8591 = vadd.f32 %v8364, %v8556
    %v8592 = vadd.f32 %v8365, %v8560
    %v8593 = vadd.f32 %v8366, %v8562
    %v8594 = vadd.f32 %v8367, %v8564
    %v8595 = vadd.f32 %v8368, %v8566
    %v8596 = vadd.f32 %v8369, %v8570
    %v8597 = vadd.f32 %v8370, %v8572
    %v8598 = vadd.f32 %v8371, %v8574
    %v8599 = vadd.f32 %v8372, %v8576
    %v8600 = vadd.f32 %v8373, %v8580
    %v8601 = vadd.f32 %v8374, %v8582
    %v8602 = vadd.f32 %v8375, %v8584
    %v8603 = vadd.f32 %v8376, %v8586
    %s8604 = scalar_lea.vmem [#allocation12], 512
    %v8605 = vld [vmem:[%s8604] sm:$0xff]
    %v8606 = vld [vmem:[%s8604 + $0x8] sm:$0xff]
    %v8607 = vld [vmem:[%s8604 + $0x10] sm:$0xff]
    %v8608 = vld [vmem:[%s8604 + $0x18] sm:$0xff]
    %v8609 = vld [vmem:[%s8604 + $0x20] sm:$0xff]
    %v8610 = vld [vmem:[%s8604 + $0x28] sm:$0xff]
    %v8611 = vld [vmem:[%s8604 + $0x30] sm:$0xff]
    %v8612 = vld [vmem:[%s8604 + $0x38] sm:$0xff]
    %v8613 = vld [vmem:[%s8604 + $0x40] sm:$0xff]
    %v8614 = vld [vmem:[%s8604 + $0x48] sm:$0xff]
    %v8615 = vld [vmem:[%s8604 + $0x50] sm:$0xff]
    %v8616 = vld [vmem:[%s8604 + $0x58] sm:$0xff]
    %v8617 = vld [vmem:[%s8604 + $0x60] sm:$0xff]
    %v8618 = vld [vmem:[%s8604 + $0x68] sm:$0xff]
    %v8619 = vld [vmem:[%s8604 + $0x70] sm:$0xff]
    %v8620 = vld [vmem:[%s8604 + $0x78] sm:$0xff]
    %v8621 = vpack.c.b16 %v8156, %v8155
    %v8622 = vpack.c.b16 %v8158, %v8157
    %v8623 = vpack.c.b16 %v8160, %v8159
    %v8624 = vpack.c.b16 %v8399, %v8161
    %v8645 = vunpack.c.l.b16 %v8605
    %v8646 = vunpack.c.h.b16 %v8605
    %v8647 = vunpack.c.l.b16 %v8606
    %v8648 = vunpack.c.h.b16 %v8606
    %v8649 = vunpack.c.l.b16 %v8607
    %v8650 = vunpack.c.h.b16 %v8607
    %v8651 = vunpack.c.l.b16 %v8608
    %v8652 = vunpack.c.h.b16 %v8608
    %v8653 = vunpack.c.l.b16 %v8609
    %v8654 = vunpack.c.h.b16 %v8609
    %v8655 = vunpack.c.l.b16 %v8610
    %v8656 = vunpack.c.h.b16 %v8610
    %v8657 = vunpack.c.l.b16 %v8611
    %v8658 = vunpack.c.h.b16 %v8611
    %v8659 = vunpack.c.l.b16 %v8612
    %v8660 = vunpack.c.h.b16 %v8612
    %v8661 = vunpack.c.l.b16 %v8613
    %v8662 = vunpack.c.h.b16 %v8613
    %v8663 = vunpack.c.l.b16 %v8614
    %v8664 = vunpack.c.h.b16 %v8614
    %v8665 = vunpack.c.l.b16 %v8615
    %v8666 = vunpack.c.h.b16 %v8615
    %v8667 = vunpack.c.l.b16 %v8616
    %v8668 = vunpack.c.h.b16 %v8616
    %v8669 = vunpack.c.l.b16 %v8617
    %v8670 = vunpack.c.h.b16 %v8617
    %v8671 = vunpack.c.l.b16 %v8618
    %v8672 = vunpack.c.h.b16 %v8618
    %v8673 = vunpack.c.l.b16 %v8619
    %v8674 = vunpack.c.h.b16 %v8619
    %v8675 = vunpack.c.l.b16 %v8620
    %v8676 = vunpack.c.h.b16 %v8620
    %v8677 = vpack.c.b16 %v8647, %v8645
    %v8678 = vpack.c.b16 %v8648, %v8646
    %v8679 = vpack.c.b16 %v8651, %v8649
    %v8680 = vpack.c.b16 %v8652, %v8650
    %v8681 = vpack.c.b16 %v8655, %v8653
    %v8682 = vpack.c.b16 %v8656, %v8654
    %v8683 = vpack.c.b16 %v8659, %v8657
    %v8684 = vpack.c.b16 %v8660, %v8658
    %v8685 = vpack.c.b16 %v8663, %v8661
    %v8686 = vpack.c.b16 %v8664, %v8662
    %v8687 = vpack.c.b16 %v8667, %v8665
    %v8688 = vpack.c.b16 %v8668, %v8666
    %v8689 = vpack.c.b16 %v8671, %v8669
    %v8690 = vpack.c.b16 %v8672, %v8670
    %v8691 = vpack.c.b16 %v8675, %v8673
    %v8692 = vpack.c.b16 %v8676, %v8674
    %8709 = vmatprep.subr.bf16.mxu0 %v8692
    %8710 = vmatpush1.bf16.msra.mxu0 %v8691
    %8711 = vmatprep.subr.bf16.mxu0 %v8690
    %8712 = vmatpush1.bf16.msra.mxu0 %v8689
    %8713 = vmatprep.subr.bf16.mxu0 %v8688
    %8714 = vmatpush1.bf16.msra.mxu0 %v8687
    %8715 = vmatprep.subr.bf16.mxu0 %v8686
    %8716 = vmatpush1.bf16.msra.mxu0 %v8685
    %8717 = vmatprep.subr.bf16.mxu0 %v8684
    %8718 = vmatpush1.bf16.msra.mxu0 %v8683
    %8719 = vmatprep.subr.bf16.mxu0 %v8682
    %8720 = vmatpush1.bf16.msra.mxu0 %v8681
    %8721 = vmatprep.subr.bf16.mxu0 %v8680
    %8722 = vmatpush1.bf16.msra.mxu0 %v8679
    %8723 = vmatprep.subr.bf16.mxu0 %v8678
    %8724 = vmatpush1.bf16.msra.mxu0 %v8677
    %8725 = vmatprep.subr.bf16.mxu0 0
    %8726 = vmatpush2.bf16.msra.mxu0 0
    %8727 = vmatprep.subr.bf16.mxu0 0
    %8728 = vmatpush2.bf16.msra.mxu0 0
    %8729 = vmatprep.subr.bf16.mxu0 0
    %8730 = vmatpush2.bf16.msra.mxu0 0
    %8731 = vmatprep.subr.bf16.mxu0 0
    %8732 = vmatpush2.bf16.msra.mxu0 0
    %8733 = vmatprep.subr.bf16.mxu0 0
    %8734 = vmatpush2.bf16.msra.mxu0 0
    %8735 = vmatprep.subr.bf16.mxu0 0
    %8736 = vmatpush2.bf16.msra.mxu0 0
    %8737 = vmatprep.subr.bf16.mxu0 0
    %8738 = vmatpush2.bf16.msra.mxu0 0
    %8739 = vmatprep.subr.bf16.mxu0 0
    %8740 = vmatpush2.bf16.msra.mxu0 0
    %8741 = vmatprep.mubr.bf16.mxu0 0
    %8742 = vmatmul.mubr.bf16.gmra.mxu0 %v8621
    %v8743 = vpop.f32.mrf.mxu0
    %v8744 = vadd.f32 0.0, %v8743
    %v8745 = vpop.f32.mrf.mxu0
    %v8746 = vadd.f32 0.0, %v8745
    %v8747 = vpop.f32.mrf.mxu0
    %v8748 = vadd.f32 0.0, %v8747
    %v8749 = vpop.f32.mrf.mxu0
    %v8750 = vadd.f32 0.0, %v8749
    %8751 = vmatprep.mubr.bf16.mxu0 0
    %8752 = vmatmul.mubr.bf16.gmra.mxu0 %v8622
    %v8753 = vpop.f32.mrf.mxu0
    %v8754 = vadd.f32 0.0, %v8753
    %v8755 = vpop.f32.mrf.mxu0
    %v8756 = vadd.f32 0.0, %v8755
    %v8757 = vpop.f32.mrf.mxu0
    %v8758 = vadd.f32 0.0, %v8757
    %v8759 = vpop.f32.mrf.mxu0
    %v8760 = vadd.f32 0.0, %v8759
    %8761 = vmatprep.mubr.bf16.mxu0 0
    %8762 = vmatmul.mubr.bf16.gmra.mxu0 %v8623
    %v8763 = vpop.f32.mrf.mxu0
    %v8764 = vadd.f32 0.0, %v8763
    %v8765 = vpop.f32.mrf.mxu0
    %v8766 = vadd.f32 0.0, %v8765
    %v8767 = vpop.f32.mrf.mxu0
    %v8768 = vadd.f32 0.0, %v8767
    %v8769 = vpop.f32.mrf.mxu0
    %v8770 = vadd.f32 0.0, %v8769
    %8771 = vmatprep.mubr.bf16.mxu0 0
    %8772 = vmatmul.mubr.bf16.gmra.mxu0 %v8624
    %v8773 = vpop.f32.mrf.mxu0
    %v8774 = vadd.f32 0.0, %v8773
    %v8775 = vpop.f32.mrf.mxu0
    %v8776 = vadd.f32 0.0, %v8775
    %v8777 = vpop.f32.mrf.mxu0
    %v8778 = vadd.f32 0.0, %v8777
    %v8779 = vpop.f32.mrf.mxu0
    %v8780 = vadd.f32 0.0, %v8779
    %8781 = vdwg.mxu0
    %v8782 = vadd.f32 %v8588, %v8744
    %v8783 = vadd.f32 %v8589, %v8746
    %v8784 = vadd.f32 %v8590, %v8748
    %v8785 = vadd.f32 %v8591, %v8750
    %v8786 = vadd.f32 %v8592, %v8754
    %v8787 = vadd.f32 %v8593, %v8756
    %v8788 = vadd.f32 %v8594, %v8758
    %v8789 = vadd.f32 %v8595, %v8760
    %v8790 = vadd.f32 %v8596, %v8764
    %v8791 = vadd.f32 %v8597, %v8766
    %v8792 = vadd.f32 %v8598, %v8768
    %v8793 = vadd.f32 %v8599, %v8770
    %v8794 = vadd.f32 %v8600, %v8774
    %v8795 = vadd.f32 %v8601, %v8776
    %v8796 = vadd.f32 %v8602, %v8778
    %v8797 = vadd.f32 %v8603, %v8780
    %v8798 = vld [vmem:[#allocation7 + $0x8] sm:$0xf]
    %v8799 = vld [vmem:[#allocation7 + $0xc] sm:$0xf]
    %v8800 = vld [vmem:[#allocation7 + $0x10] sm:$0xf]
    %v8801 = vld [vmem:[#allocation7 + $0x14] sm:$0xf]
    %v8802 = vld [vmem:[#allocation7 + $0x18] sm:$0xf]
    %v8803 = vld [vmem:[#allocation7 + $0x1c] sm:$0xf]
    %v8804 = vld [vmem:[#allocation7 + $0x20] sm:$0xf]
    %v8805 = vld [vmem:[#allocation7 + $0x24] sm:$0xf]
    %v8806 = vld [vmem:[#allocation7 + $0x28] sm:$0x1]
    %s8807 = scalar_lea.vmem [#allocation12], 640
    %v8808 = vld [vmem:[%s8807] sm:$0xff]
    %v8809 = vld [vmem:[%s8807 + $0x8] sm:$0xff]
    %v8810 = vld [vmem:[%s8807 + $0x10] sm:$0xff]
    %v8811 = vld [vmem:[%s8807 + $0x18] sm:$0xff]
    %v8812 = vld [vmem:[%s8807 + $0x20] sm:$0xff]
    %v8813 = vld [vmem:[%s8807 + $0x28] sm:$0xff]
    %v8814 = vld [vmem:[%s8807 + $0x30] sm:$0xff]
    %v8815 = vld [vmem:[%s8807 + $0x38] sm:$0xff]
    %v8816 = vld [vmem:[%s8807 + $0x40] sm:$0xff]
    %v8817 = vld [vmem:[%s8807 + $0x48] sm:$0xff]
    %v8818 = vld [vmem:[%s8807 + $0x50] sm:$0xff]
    %v8819 = vld [vmem:[%s8807 + $0x58] sm:$0xff]
    %v8820 = vld [vmem:[%s8807 + $0x60] sm:$0xff]
    %v8821 = vld [vmem:[%s8807 + $0x68] sm:$0xff]
    %v8822 = vld [vmem:[%s8807 + $0x70] sm:$0xff]
    %v8823 = vld [vmem:[%s8807 + $0x78] sm:$0xff]
    %v8833 = vunpack.c.l.b16 %v8798
    %v8834 = vunpack.c.l.b16 %v8799
    %v8835 = vunpack.c.l.b16 %v8800
    %v8836 = vunpack.c.l.b16 %v8801
    %v8837 = vunpack.c.l.b16 %v8802
    %v8838 = vunpack.c.l.b16 %v8803
    %v8839 = vunpack.c.l.b16 %v8804
    %v8840 = vunpack.c.l.b16 %v8805
    %v8841 = vunpack.c.l.b16 %v8806
    %v8842 = vpack.c.b16 %v8834, %v8833
    %v8843 = vpack.c.b16 %v8836, %v8835
    %v8844 = vpack.c.b16 %v8838, %v8837
    %v8845 = vpack.c.b16 %v8840, %v8839
    %v8846 = vpack.c.b16 %v8841, %v8841
    %v8848 = vshrl.u32 %v8842, 16
    %v8850 = vshll.u32 %v8842, 16
    %v8852 = vrot.slane %v8850, 1
    %v8853 = vor.u32 %v8848, %v8852
    %v8855 = vshll.u32 %v8843, 16
    %v8857 = vrot.slane %v8855, 1
    %v8858 = vsel %vm2104, %v8853, %v8857
    %v8859 = vshrl.u32 %v8843, 16
    %v8861 = vor.u32 %v8859, %v8857
    %v8863 = vshll.u32 %v8844, 16
    %v8865 = vrot.slane %v8863, 1
    %v8866 = vsel %vm2104, %v8861, %v8865
    %v8867 = vshrl.u32 %v8844, 16
    %v8869 = vor.u32 %v8867, %v8865
    %v8871 = vshll.u32 %v8845, 16
    %v8873 = vrot.slane %v8871, 1
    %v8874 = vsel %vm2104, %v8869, %v8873
    %v8875 = vshrl.u32 %v8845, 16
    %v8877 = vor.u32 %v8875, %v8873
    %v8879 = vshll.u32 %v8846, 16
    %v8881 = vrot.slane %v8879, 1
    %v8882 = vsel %vm2104, %v8877, %v8881
    %v8903 = vunpack.c.l.b16 %v8808
    %v8904 = vunpack.c.h.b16 %v8808
    %v8905 = vunpack.c.l.b16 %v8809
    %v8906 = vunpack.c.h.b16 %v8809
    %v8907 = vunpack.c.l.b16 %v8810
    %v8908 = vunpack.c.h.b16 %v8810
    %v8909 = vunpack.c.l.b16 %v8811
    %v8910 = vunpack.c.h.b16 %v8811
    %v8911 = vunpack.c.l.b16 %v8812
    %v8912 = vunpack.c.h.b16 %v8812
    %v8913 = vunpack.c.l.b16 %v8813
    %v8914 = vunpack.c.h.b16 %v8813
    %v8915 = vunpack.c.l.b16 %v8814
    %v8916 = vunpack.c.h.b16 %v8814
    %v8917 = vunpack.c.l.b16 %v8815
    %v8918 = vunpack.c.h.b16 %v8815
    %v8919 = vunpack.c.l.b16 %v8816
    %v8920 = vunpack.c.h.b16 %v8816
    %v8921 = vunpack.c.l.b16 %v8817
    %v8922 = vunpack.c.h.b16 %v8817
    %v8923 = vunpack.c.l.b16 %v8818
    %v8924 = vunpack.c.h.b16 %v8818
    %v8925 = vunpack.c.l.b16 %v8819
    %v8926 = vunpack.c.h.b16 %v8819
    %v8927 = vunpack.c.l.b16 %v8820
    %v8928 = vunpack.c.h.b16 %v8820
    %v8929 = vunpack.c.l.b16 %v8821
    %v8930 = vunpack.c.h.b16 %v8821
    %v8931 = vunpack.c.l.b16 %v8822
    %v8932 = vunpack.c.h.b16 %v8822
    %v8933 = vunpack.c.l.b16 %v8823
    %v8934 = vunpack.c.h.b16 %v8823
    %v8935 = vpack.c.b16 %v8905, %v8903
    %v8936 = vpack.c.b16 %v8906, %v8904
    %v8937 = vpack.c.b16 %v8909, %v8907
    %v8938 = vpack.c.b16 %v8910, %v8908
    %v8939 = vpack.c.b16 %v8913, %v8911
    %v8940 = vpack.c.b16 %v8914, %v8912
    %v8941 = vpack.c.b16 %v8917, %v8915
    %v8942 = vpack.c.b16 %v8918, %v8916
    %v8943 = vpack.c.b16 %v8921, %v8919
    %v8944 = vpack.c.b16 %v8922, %v8920
    %v8945 = vpack.c.b16 %v8925, %v8923
    %v8946 = vpack.c.b16 %v8926, %v8924
    %v8947 = vpack.c.b16 %v8929, %v8927
    %v8948 = vpack.c.b16 %v8930, %v8928
    %v8949 = vpack.c.b16 %v8933, %v8931
    %v8950 = vpack.c.b16 %v8934, %v8932
    %8967 = vmatprep.subr.bf16.mxu0 %v8950
    %8968 = vmatpush1.bf16.msra.mxu0 %v8949
    %8969 = vmatprep.subr.bf16.mxu0 %v8948
    %8970 = vmatpush1.bf16.msra.mxu0 %v8947
    %8971 = vmatprep.subr.bf16.mxu0 %v8946
    %8972 = vmatpush1.bf16.msra.mxu0 %v8945
    %8973 = vmatprep.subr.bf16.mxu0 %v8944
    %8974 = vmatpush1.bf16.msra.mxu0 %v8943
    %8975 = vmatprep.subr.bf16.mxu0 %v8942
    %8976 = vmatpush1.bf16.msra.mxu0 %v8941
    %8977 = vmatprep.subr.bf16.mxu0 %v8940
    %8978 = vmatpush1.bf16.msra.mxu0 %v8939
    %8979 = vmatprep.subr.bf16.mxu0 %v8938
    %8980 = vmatpush1.bf16.msra.mxu0 %v8937
    %8981 = vmatprep.subr.bf16.mxu0 %v8936
    %8982 = vmatpush1.bf16.msra.mxu0 %v8935
    %8983 = vmatprep.subr.bf16.mxu0 0
    %8984 = vmatpush2.bf16.msra.mxu0 0
    %8985 = vmatprep.subr.bf16.mxu0 0
    %8986 = vmatpush2.bf16.msra.mxu0 0
    %8987 = vmatprep.subr.bf16.mxu0 0
    %8988 = vmatpush2.bf16.msra.mxu0 0
    %8989 = vmatprep.subr.bf16.mxu0 0
    %8990 = vmatpush2.bf16.msra.mxu0 0
    %8991 = vmatprep.subr.bf16.mxu0 0
    %8992 = vmatpush2.bf16.msra.mxu0 0
    %8993 = vmatprep.subr.bf16.mxu0 0
    %8994 = vmatpush2.bf16.msra.mxu0 0
    %8995 = vmatprep.subr.bf16.mxu0 0
    %8996 = vmatpush2.bf16.msra.mxu0 0
    %8997 = vmatprep.subr.bf16.mxu0 0
    %8998 = vmatpush2.bf16.msra.mxu0 0
    %8999 = vmatprep.mubr.bf16.mxu0 0
    %9000 = vmatmul.mubr.bf16.gmra.mxu0 %v8858
    %v9001 = vpop.f32.mrf.mxu0
    %v9002 = vadd.f32 0.0, %v9001
    %v9003 = vpop.f32.mrf.mxu0
    %v9004 = vadd.f32 0.0, %v9003
    %v9005 = vpop.f32.mrf.mxu0
    %v9006 = vadd.f32 0.0, %v9005
    %v9007 = vpop.f32.mrf.mxu0
    %v9008 = vadd.f32 0.0, %v9007
    %9009 = vmatprep.mubr.bf16.mxu0 0
    %9010 = vmatmul.mubr.bf16.gmra.mxu0 %v8866
    %v9011 = vpop.f32.mrf.mxu0
    %v9012 = vadd.f32 0.0, %v9011
    %v9013 = vpop.f32.mrf.mxu0
    %v9014 = vadd.f32 0.0, %v9013
    %v9015 = vpop.f32.mrf.mxu0
    %v9016 = vadd.f32 0.0, %v9015
    %v9017 = vpop.f32.mrf.mxu0
    %v9018 = vadd.f32 0.0, %v9017
    %9019 = vmatprep.mubr.bf16.mxu0 0
    %9020 = vmatmul.mubr.bf16.gmra.mxu0 %v8874
    %v9021 = vpop.f32.mrf.mxu0
    %v9022 = vadd.f32 0.0, %v9021
    %v9023 = vpop.f32.mrf.mxu0
    %v9024 = vadd.f32 0.0, %v9023
    %v9025 = vpop.f32.mrf.mxu0
    %v9026 = vadd.f32 0.0, %v9025
    %v9027 = vpop.f32.mrf.mxu0
    %v9028 = vadd.f32 0.0, %v9027
    %9029 = vmatprep.mubr.bf16.mxu0 0
    %9030 = vmatmul.mubr.bf16.gmra.mxu0 %v8882
    %v9031 = vpop.f32.mrf.mxu0
    %v9032 = vadd.f32 0.0, %v9031
    %v9033 = vpop.f32.mrf.mxu0
    %v9034 = vadd.f32 0.0, %v9033
    %v9035 = vpop.f32.mrf.mxu0
    %v9036 = vadd.f32 0.0, %v9035
    %v9037 = vpop.f32.mrf.mxu0
    %v9038 = vadd.f32 0.0, %v9037
    %9039 = vdwg.mxu0
    %v9040 = vadd.f32 %v8782, %v9002
    %v9041 = vadd.f32 %v8783, %v9004
    %v9042 = vadd.f32 %v8784, %v9006
    %v9043 = vadd.f32 %v8785, %v9008
    %v9044 = vadd.f32 %v8786, %v9012
    %v9045 = vadd.f32 %v8787, %v9014
    %v9046 = vadd.f32 %v8788, %v9016
    %v9047 = vadd.f32 %v8789, %v9018
    %v9048 = vadd.f32 %v8790, %v9022
    %v9049 = vadd.f32 %v8791, %v9024
    %v9050 = vadd.f32 %v8792, %v9026
    %v9051 = vadd.f32 %v8793, %v9028
    %v9052 = vadd.f32 %v8794, %v9032
    %v9053 = vadd.f32 %v8795, %v9034
    %v9054 = vadd.f32 %v8796, %v9036
    %v9055 = vadd.f32 %v8797, %v9038
    %v9056 = vld [vmem:[#allocation7 + $0x8] sm:$0x8]
    %v9057 = vld [vmem:[#allocation7 + $0x28] sm:$0xf]
    %s9058 = scalar_lea.vmem [#allocation12], 768
    %v9059 = vld [vmem:[%s9058] sm:$0xff]
    %v9060 = vld [vmem:[%s9058 + $0x8] sm:$0xff]
    %v9061 = vld [vmem:[%s9058 + $0x10] sm:$0xff]
    %v9062 = vld [vmem:[%s9058 + $0x18] sm:$0xff]
    %v9063 = vld [vmem:[%s9058 + $0x20] sm:$0xff]
    %v9064 = vld [vmem:[%s9058 + $0x28] sm:$0xff]
    %v9065 = vld [vmem:[%s9058 + $0x30] sm:$0xff]
    %v9066 = vld [vmem:[%s9058 + $0x38] sm:$0xff]
    %v9067 = vld [vmem:[%s9058 + $0x40] sm:$0xff]
    %v9068 = vld [vmem:[%s9058 + $0x48] sm:$0xff]
    %v9069 = vld [vmem:[%s9058 + $0x50] sm:$0xff]
    %v9070 = vld [vmem:[%s9058 + $0x58] sm:$0xff]
    %v9071 = vld [vmem:[%s9058 + $0x60] sm:$0xff]
    %v9072 = vld [vmem:[%s9058 + $0x68] sm:$0xff]
    %v9073 = vld [vmem:[%s9058 + $0x70] sm:$0xff]
    %v9074 = vld [vmem:[%s9058 + $0x78] sm:$0xff]
    %v9077 = vunpack.c.l.b16 %v9056
    %v9078 = vunpack.c.l.b16 %v9057
    %v9079 = vpack.c.b16 %v8834, %v9077
    %v9080 = vpack.c.b16 %v9078, %v9078
    %v9082 = vshrl.u32 %v9079, 16
    %v9084 = vrot.slane %v9082, 3
    %v9085 = vshll.u32 %v9079, 16
    %v9087 = vrot.slane %v9085, 4
    %v9088 = vor.u32 %v9084, %v9087
    %v9089 = vrot.slane %v8859, 3
    %v9090 = vrot.slane %v8855, 4
    %v9091 = vor.u32 %v9089, %v9090
    %v9092 = vsel %vm1528, %v9088, %v9091
    %v9093 = vrot.slane %v8867, 3
    %v9094 = vrot.slane %v8863, 4
    %v9095 = vor.u32 %v9093, %v9094
    %v9096 = vsel %vm1528, %v9091, %v9095
    %v9097 = vrot.slane %v8875, 3
    %v9098 = vrot.slane %v8871, 4
    %v9099 = vor.u32 %v9097, %v9098
    %v9100 = vsel %vm1528, %v9095, %v9099
    %v9102 = vshrl.u32 %v9080, 16
    %v9104 = vrot.slane %v9102, 3
    %v9105 = vshll.u32 %v9080, 16
    %v9107 = vrot.slane %v9105, 4
    %v9108 = vor.u32 %v9104, %v9107
    %v9109 = vsel %vm1528, %v9099, %v9108
    %v9130 = vunpack.c.l.b16 %v9059
    %v9131 = vunpack.c.h.b16 %v9059
    %v9132 = vunpack.c.l.b16 %v9060
    %v9133 = vunpack.c.h.b16 %v9060
    %v9134 = vunpack.c.l.b16 %v9061
    %v9135 = vunpack.c.h.b16 %v9061
    %v9136 = vunpack.c.l.b16 %v9062
    %v9137 = vunpack.c.h.b16 %v9062
    %v9138 = vunpack.c.l.b16 %v9063
    %v9139 = vunpack.c.h.b16 %v9063
    %v9140 = vunpack.c.l.b16 %v9064
    %v9141 = vunpack.c.h.b16 %v9064
    %v9142 = vunpack.c.l.b16 %v9065
    %v9143 = vunpack.c.h.b16 %v9065
    %v9144 = vunpack.c.l.b16 %v9066
    %v9145 = vunpack.c.h.b16 %v9066
    %v9146 = vunpack.c.l.b16 %v9067
    %v9147 = vunpack.c.h.b16 %v9067
    %v9148 = vunpack.c.l.b16 %v9068
    %v9149 = vunpack.c.h.b16 %v9068
    %v9150 = vunpack.c.l.b16 %v9069
    %v9151 = vunpack.c.h.b16 %v9069
    %v9152 = vunpack.c.l.b16 %v9070
    %v9153 = vunpack.c.h.b16 %v9070
    %v9154 = vunpack.c.l.b16 %v9071
    %v9155 = vunpack.c.h.b16 %v9071
    %v9156 = vunpack.c.l.b16 %v9072
    %v9157 = vunpack.c.h.b16 %v9072
    %v9158 = vunpack.c.l.b16 %v9073
    %v9159 = vunpack.c.h.b16 %v9073
    %v9160 = vunpack.c.l.b16 %v9074
    %v9161 = vunpack.c.h.b16 %v9074
    %v9162 = vpack.c.b16 %v9132, %v9130
    %v9163 = vpack.c.b16 %v9133, %v9131
    %v9164 = vpack.c.b16 %v9136, %v9134
    %v9165 = vpack.c.b16 %v9137, %v9135
    %v9166 = vpack.c.b16 %v9140, %v9138
    %v9167 = vpack.c.b16 %v9141, %v9139
    %v9168 = vpack.c.b16 %v9144, %v9142
    %v9169 = vpack.c.b16 %v9145, %v9143
    %v9170 = vpack.c.b16 %v9148, %v9146
    %v9171 = vpack.c.b16 %v9149, %v9147
    %v9172 = vpack.c.b16 %v9152, %v9150
    %v9173 = vpack.c.b16 %v9153, %v9151
    %v9174 = vpack.c.b16 %v9156, %v9154
    %v9175 = vpack.c.b16 %v9157, %v9155
    %v9176 = vpack.c.b16 %v9160, %v9158
    %v9177 = vpack.c.b16 %v9161, %v9159
    %9194 = vmatprep.subr.bf16.mxu0 %v9177
    %9195 = vmatpush1.bf16.msra.mxu0 %v9176
    %9196 = vmatprep.subr.bf16.mxu0 %v9175
    %9197 = vmatpush1.bf16.msra.mxu0 %v9174
    %9198 = vmatprep.subr.bf16.mxu0 %v9173
    %9199 = vmatpush1.bf16.msra.mxu0 %v9172
    %9200 = vmatprep.subr.bf16.mxu0 %v9171
    %9201 = vmatpush1.bf16.msra.mxu0 %v9170
    %9202 = vmatprep.subr.bf16.mxu0 %v9169
    %9203 = vmatpush1.bf16.msra.mxu0 %v9168
    %9204 = vmatprep.subr.bf16.mxu0 %v9167
    %9205 = vmatpush1.bf16.msra.mxu0 %v9166
    %9206 = vmatprep.subr.bf16.mxu0 %v9165
    %9207 = vmatpush1.bf16.msra.mxu0 %v9164
    %9208 = vmatprep.subr.bf16.mxu0 %v9163
    %9209 = vmatpush1.bf16.msra.mxu0 %v9162
    %9210 = vmatprep.subr.bf16.mxu0 0
    %9211 = vmatpush2.bf16.msra.mxu0 0
    %9212 = vmatprep.subr.bf16.mxu0 0
    %9213 = vmatpush2.bf16.msra.mxu0 0
    %9214 = vmatprep.subr.bf16.mxu0 0
    %9215 = vmatpush2.bf16.msra.mxu0 0
    %9216 = vmatprep.subr.bf16.mxu0 0
    %9217 = vmatpush2.bf16.msra.mxu0 0
    %9218 = vmatprep.subr.bf16.mxu0 0
    %9219 = vmatpush2.bf16.msra.mxu0 0
    %9220 = vmatprep.subr.bf16.mxu0 0
    %9221 = vmatpush2.bf16.msra.mxu0 0
    %9222 = vmatprep.subr.bf16.mxu0 0
    %9223 = vmatpush2.bf16.msra.mxu0 0
    %9224 = vmatprep.subr.bf16.mxu0 0
    %9225 = vmatpush2.bf16.msra.mxu0 0
    %9226 = vmatprep.mubr.bf16.mxu0 0
    %9227 = vmatmul.mubr.bf16.gmra.mxu0 %v9092
    %v9228 = vpop.f32.mrf.mxu0
    %v9229 = vadd.f32 0.0, %v9228
    %v9230 = vpop.f32.mrf.mxu0
    %v9231 = vadd.f32 0.0, %v9230
    %v9232 = vpop.f32.mrf.mxu0
    %v9233 = vadd.f32 0.0, %v9232
    %v9234 = vpop.f32.mrf.mxu0
    %v9235 = vadd.f32 0.0, %v9234
    %9236 = vmatprep.mubr.bf16.mxu0 0
    %9237 = vmatmul.mubr.bf16.gmra.mxu0 %v9096
    %v9238 = vpop.f32.mrf.mxu0
    %v9239 = vadd.f32 0.0, %v9238
    %v9240 = vpop.f32.mrf.mxu0
    %v9241 = vadd.f32 0.0, %v9240
    %v9242 = vpop.f32.mrf.mxu0
    %v9243 = vadd.f32 0.0, %v9242
    %v9244 = vpop.f32.mrf.mxu0
    %v9245 = vadd.f32 0.0, %v9244
    %9246 = vmatprep.mubr.bf16.mxu0 0
    %9247 = vmatmul.mubr.bf16.gmra.mxu0 %v9100
    %v9248 = vpop.f32.mrf.mxu0
    %v9249 = vadd.f32 0.0, %v9248
    %v9250 = vpop.f32.mrf.mxu0
    %v9251 = vadd.f32 0.0, %v9250
    %v9252 = vpop.f32.mrf.mxu0
    %v9253 = vadd.f32 0.0, %v9252
    %v9254 = vpop.f32.mrf.mxu0
    %v9255 = vadd.f32 0.0, %v9254
    %9256 = vmatprep.mubr.bf16.mxu0 0
    %9257 = vmatmul.mubr.bf16.gmra.mxu0 %v9109
    %v9258 = vpop.f32.mrf.mxu0
    %v9259 = vadd.f32 0.0, %v9258
    %v9260 = vpop.f32.mrf.mxu0
    %v9261 = vadd.f32 0.0, %v9260
    %v9262 = vpop.f32.mrf.mxu0
    %v9263 = vadd.f32 0.0, %v9262
    %v9264 = vpop.f32.mrf.mxu0
    %v9265 = vadd.f32 0.0, %v9264
    %9266 = vdwg.mxu0
    %v9267 = vadd.f32 %v9040, %v9229
    %v9268 = vadd.f32 %v9041, %v9231
    %v9269 = vadd.f32 %v9042, %v9233
    %v9270 = vadd.f32 %v9043, %v9235
    %v9271 = vadd.f32 %v9044, %v9239
    %v9272 = vadd.f32 %v9045, %v9241
    %v9273 = vadd.f32 %v9046, %v9243
    %v9274 = vadd.f32 %v9047, %v9245
    %v9275 = vadd.f32 %v9048, %v9249
    %v9276 = vadd.f32 %v9049, %v9251
    %v9277 = vadd.f32 %v9050, %v9253
    %v9278 = vadd.f32 %v9051, %v9255
    %v9279 = vadd.f32 %v9052, %v9259
    %v9280 = vadd.f32 %v9053, %v9261
    %v9281 = vadd.f32 %v9054, %v9263
    %v9282 = vadd.f32 %v9055, %v9265
    %s9283 = scalar_lea.vmem [#allocation12], 896
    %v9284 = vld [vmem:[%s9283] sm:$0xff]
    %v9285 = vld [vmem:[%s9283 + $0x8] sm:$0xff]
    %v9286 = vld [vmem:[%s9283 + $0x10] sm:$0xff]
    %v9287 = vld [vmem:[%s9283 + $0x18] sm:$0xff]
    %v9288 = vld [vmem:[%s9283 + $0x20] sm:$0xff]
    %v9289 = vld [vmem:[%s9283 + $0x28] sm:$0xff]
    %v9290 = vld [vmem:[%s9283 + $0x30] sm:$0xff]
    %v9291 = vld [vmem:[%s9283 + $0x38] sm:$0xff]
    %v9292 = vld [vmem:[%s9283 + $0x40] sm:$0xff]
    %v9293 = vld [vmem:[%s9283 + $0x48] sm:$0xff]
    %v9294 = vld [vmem:[%s9283 + $0x50] sm:$0xff]
    %v9295 = vld [vmem:[%s9283 + $0x58] sm:$0xff]
    %v9296 = vld [vmem:[%s9283 + $0x60] sm:$0xff]
    %v9297 = vld [vmem:[%s9283 + $0x68] sm:$0xff]
    %v9298 = vld [vmem:[%s9283 + $0x70] sm:$0xff]
    %v9299 = vld [vmem:[%s9283 + $0x78] sm:$0xff]
    %v9300 = vpack.c.b16 %v8835, %v8834
    %v9301 = vpack.c.b16 %v8837, %v8836
    %v9302 = vpack.c.b16 %v8839, %v8838
    %v9303 = vpack.c.b16 %v9078, %v8840
    %v9324 = vunpack.c.l.b16 %v9284
    %v9325 = vunpack.c.h.b16 %v9284
    %v9326 = vunpack.c.l.b16 %v9285
    %v9327 = vunpack.c.h.b16 %v9285
    %v9328 = vunpack.c.l.b16 %v9286
    %v9329 = vunpack.c.h.b16 %v9286
    %v9330 = vunpack.c.l.b16 %v9287
    %v9331 = vunpack.c.h.b16 %v9287
    %v9332 = vunpack.c.l.b16 %v9288
    %v9333 = vunpack.c.h.b16 %v9288
    %v9334 = vunpack.c.l.b16 %v9289
    %v9335 = vunpack.c.h.b16 %v9289
    %v9336 = vunpack.c.l.b16 %v9290
    %v9337 = vunpack.c.h.b16 %v9290
    %v9338 = vunpack.c.l.b16 %v9291
    %v9339 = vunpack.c.h.b16 %v9291
    %v9340 = vunpack.c.l.b16 %v9292
    %v9341 = vunpack.c.h.b16 %v9292
    %v9342 = vunpack.c.l.b16 %v9293
    %v9343 = vunpack.c.h.b16 %v9293
    %v9344 = vunpack.c.l.b16 %v9294
    %v9345 = vunpack.c.h.b16 %v9294
    %v9346 = vunpack.c.l.b16 %v9295
    %v9347 = vunpack.c.h.b16 %v9295
    %v9348 = vunpack.c.l.b16 %v9296
    %v9349 = vunpack.c.h.b16 %v9296
    %v9350 = vunpack.c.l.b16 %v9297
    %v9351 = vunpack.c.h.b16 %v9297
    %v9352 = vunpack.c.l.b16 %v9298
    %v9353 = vunpack.c.h.b16 %v9298
    %v9354 = vunpack.c.l.b16 %v9299
    %v9355 = vunpack.c.h.b16 %v9299
    %v9356 = vpack.c.b16 %v9326, %v9324
    %v9357 = vpack.c.b16 %v9327, %v9325
    %v9358 = vpack.c.b16 %v9330, %v9328
    %v9359 = vpack.c.b16 %v9331, %v9329
    %v9360 = vpack.c.b16 %v9334, %v9332
    %v9361 = vpack.c.b16 %v9335, %v9333
    %v9362 = vpack.c.b16 %v9338, %v9336
    %v9363 = vpack.c.b16 %v9339, %v9337
    %v9364 = vpack.c.b16 %v9342, %v9340
    %v9365 = vpack.c.b16 %v9343, %v9341
    %v9366 = vpack.c.b16 %v9346, %v9344
    %v9367 = vpack.c.b16 %v9347, %v9345
    %v9368 = vpack.c.b16 %v9350, %v9348
    %v9369 = vpack.c.b16 %v9351, %v9349
    %v9370 = vpack.c.b16 %v9354, %v9352
    %v9371 = vpack.c.b16 %v9355, %v9353
    %9388 = vmatprep.subr.bf16.mxu0 %v9371
    %9389 = vmatpush1.bf16.msra.mxu0 %v9370
    %9390 = vmatprep.subr.bf16.mxu0 %v9369
    %9391 = vmatpush1.bf16.msra.mxu0 %v9368
    %9392 = vmatprep.subr.bf16.mxu0 %v9367
    %9393 = vmatpush1.bf16.msra.mxu0 %v9366
    %9394 = vmatprep.subr.bf16.mxu0 %v9365
    %9395 = vmatpush1.bf16.msra.mxu0 %v9364
    %9396 = vmatprep.subr.bf16.mxu0 %v9363
    %9397 = vmatpush1.bf16.msra.mxu0 %v9362
    %9398 = vmatprep.subr.bf16.mxu0 %v9361
    %9399 = vmatpush1.bf16.msra.mxu0 %v9360
    %9400 = vmatprep.subr.bf16.mxu0 %v9359
    %9401 = vmatpush1.bf16.msra.mxu0 %v9358
    %9402 = vmatprep.subr.bf16.mxu0 %v9357
    %9403 = vmatpush1.bf16.msra.mxu0 %v9356
    %9404 = vmatprep.subr.bf16.mxu0 0
    %9405 = vmatpush2.bf16.msra.mxu0 0
    %9406 = vmatprep.subr.bf16.mxu0 0
    %9407 = vmatpush2.bf16.msra.mxu0 0
    %9408 = vmatprep.subr.bf16.mxu0 0
    %9409 = vmatpush2.bf16.msra.mxu0 0
    %9410 = vmatprep.subr.bf16.mxu0 0
    %9411 = vmatpush2.bf16.msra.mxu0 0
    %9412 = vmatprep.subr.bf16.mxu0 0
    %9413 = vmatpush2.bf16.msra.mxu0 0
    %9414 = vmatprep.subr.bf16.mxu0 0
    %9415 = vmatpush2.bf16.msra.mxu0 0
    %9416 = vmatprep.subr.bf16.mxu0 0
    %9417 = vmatpush2.bf16.msra.mxu0 0
    %9418 = vmatprep.subr.bf16.mxu0 0
    %9419 = vmatpush2.bf16.msra.mxu0 0
    %9420 = vmatprep.mubr.bf16.mxu0 0
    %9421 = vmatmul.mubr.bf16.gmra.mxu0 %v9300
    %v9422 = vpop.f32.mrf.mxu0
    %v9423 = vadd.f32 0.0, %v9422
    %v9424 = vpop.f32.mrf.mxu0
    %v9425 = vadd.f32 0.0, %v9424
    %v9426 = vpop.f32.mrf.mxu0
    %v9427 = vadd.f32 0.0, %v9426
    %v9428 = vpop.f32.mrf.mxu0
    %v9429 = vadd.f32 0.0, %v9428
    %9430 = vmatprep.mubr.bf16.mxu0 0
    %9431 = vmatmul.mubr.bf16.gmra.mxu0 %v9301
    %v9432 = vpop.f32.mrf.mxu0
    %v9433 = vadd.f32 0.0, %v9432
    %v9434 = vpop.f32.mrf.mxu0
    %v9435 = vadd.f32 0.0, %v9434
    %v9436 = vpop.f32.mrf.mxu0
    %v9437 = vadd.f32 0.0, %v9436
    %v9438 = vpop.f32.mrf.mxu0
    %v9439 = vadd.f32 0.0, %v9438
    %9440 = vmatprep.mubr.bf16.mxu0 0
    %9441 = vmatmul.mubr.bf16.gmra.mxu0 %v9302
    %v9442 = vpop.f32.mrf.mxu0
    %v9443 = vadd.f32 0.0, %v9442
    %v9444 = vpop.f32.mrf.mxu0
    %v9445 = vadd.f32 0.0, %v9444
    %v9446 = vpop.f32.mrf.mxu0
    %v9447 = vadd.f32 0.0, %v9446
    %v9448 = vpop.f32.mrf.mxu0
    %v9449 = vadd.f32 0.0, %v9448
    %9450 = vmatprep.mubr.bf16.mxu0 0
    %9451 = vmatmul.mubr.bf16.gmra.mxu0 %v9303
    %v9452 = vpop.f32.mrf.mxu0
    %v9453 = vadd.f32 0.0, %v9452
    %v9454 = vpop.f32.mrf.mxu0
    %v9455 = vadd.f32 0.0, %v9454
    %v9456 = vpop.f32.mrf.mxu0
    %v9457 = vadd.f32 0.0, %v9456
    %v9458 = vpop.f32.mrf.mxu0
    %v9459 = vadd.f32 0.0, %v9458
    %9460 = vdwg.mxu0
    %v9461 = vadd.f32 %v9267, %v9423
    %v9462 = vadd.f32 %v9268, %v9425
    %v9463 = vadd.f32 %v9269, %v9427
    %v9464 = vadd.f32 %v9270, %v9429
    %v9465 = vadd.f32 %v9271, %v9433
    %v9466 = vadd.f32 %v9272, %v9435
    %v9467 = vadd.f32 %v9273, %v9437
    %v9468 = vadd.f32 %v9274, %v9439
    %v9469 = vadd.f32 %v9275, %v9443
    %v9470 = vadd.f32 %v9276, %v9445
    %v9471 = vadd.f32 %v9277, %v9447
    %v9472 = vadd.f32 %v9278, %v9449
    %v9473 = vadd.f32 %v9279, %v9453
    %v9474 = vadd.f32 %v9280, %v9455
    %v9475 = vadd.f32 %v9281, %v9457
    %v9476 = vadd.f32 %v9282, %v9459
    %v9477 = vld [vmem:[#allocation7 + $0xc] sm:$0xf]
    %v9478 = vld [vmem:[#allocation7 + $0x10] sm:$0xf]
    %v9479 = vld [vmem:[#allocation7 + $0x14] sm:$0xf]
    %v9480 = vld [vmem:[#allocation7 + $0x18] sm:$0xf]
    %v9481 = vld [vmem:[#allocation7 + $0x1c] sm:$0xf]
    %v9482 = vld [vmem:[#allocation7 + $0x20] sm:$0xf]
    %v9483 = vld [vmem:[#allocation7 + $0x24] sm:$0xf]
    %v9484 = vld [vmem:[#allocation7 + $0x28] sm:$0xf]
    %v9485 = vld [vmem:[#allocation7 + $0x2c] sm:$0x1]
    %s9486 = scalar_lea.vmem [#allocation12], 1024
    %v9487 = vld [vmem:[%s9486] sm:$0xff]
    %v9488 = vld [vmem:[%s9486 + $0x8] sm:$0xff]
    %v9489 = vld [vmem:[%s9486 + $0x10] sm:$0xff]
    %v9490 = vld [vmem:[%s9486 + $0x18] sm:$0xff]
    %v9491 = vld [vmem:[%s9486 + $0x20] sm:$0xff]
    %v9492 = vld [vmem:[%s9486 + $0x28] sm:$0xff]
    %v9493 = vld [vmem:[%s9486 + $0x30] sm:$0xff]
    %v9494 = vld [vmem:[%s9486 + $0x38] sm:$0xff]
    %v9495 = vld [vmem:[%s9486 + $0x40] sm:$0xff]
    %v9496 = vld [vmem:[%s9486 + $0x48] sm:$0xff]
    %v9497 = vld [vmem:[%s9486 + $0x50] sm:$0xff]
    %v9498 = vld [vmem:[%s9486 + $0x58] sm:$0xff]
    %v9499 = vld [vmem:[%s9486 + $0x60] sm:$0xff]
    %v9500 = vld [vmem:[%s9486 + $0x68] sm:$0xff]
    %v9501 = vld [vmem:[%s9486 + $0x70] sm:$0xff]
    %v9502 = vld [vmem:[%s9486 + $0x78] sm:$0xff]
    %v9512 = vunpack.c.l.b16 %v9477
    %v9513 = vunpack.c.l.b16 %v9478
    %v9514 = vunpack.c.l.b16 %v9479
    %v9515 = vunpack.c.l.b16 %v9480
    %v9516 = vunpack.c.l.b16 %v9481
    %v9517 = vunpack.c.l.b16 %v9482
    %v9518 = vunpack.c.l.b16 %v9483
    %v9519 = vunpack.c.l.b16 %v9484
    %v9520 = vunpack.c.l.b16 %v9485
    %v9521 = vpack.c.b16 %v9513, %v9512
    %v9522 = vpack.c.b16 %v9515, %v9514
    %v9523 = vpack.c.b16 %v9517, %v9516
    %v9524 = vpack.c.b16 %v9519, %v9518
    %v9525 = vpack.c.b16 %v9520, %v9520
    %v9527 = vshrl.u32 %v9521, 16
    %v9529 = vshll.u32 %v9521, 16
    %v9531 = vrot.slane %v9529, 1
    %v9532 = vor.u32 %v9527, %v9531
    %v9534 = vshll.u32 %v9522, 16
    %v9536 = vrot.slane %v9534, 1
    %v9537 = vsel %vm2104, %v9532, %v9536
    %v9538 = vshrl.u32 %v9522, 16
    %v9540 = vor.u32 %v9538, %v9536
    %v9542 = vshll.u32 %v9523, 16
    %v9544 = vrot.slane %v9542, 1
    %v9545 = vsel %vm2104, %v9540, %v9544
    %v9546 = vshrl.u32 %v9523, 16
    %v9548 = vor.u32 %v9546, %v9544
    %v9550 = vshll.u32 %v9524, 16
    %v9552 = vrot.slane %v9550, 1
    %v9553 = vsel %vm2104, %v9548, %v9552
    %v9554 = vshrl.u32 %v9524, 16
    %v9556 = vor.u32 %v9554, %v9552
    %v9558 = vshll.u32 %v9525, 16
    %v9560 = vrot.slane %v9558, 1
    %v9561 = vsel %vm2104, %v9556, %v9560
    %v9582 = vunpack.c.l.b16 %v9487
    %v9583 = vunpack.c.h.b16 %v9487
    %v9584 = vunpack.c.l.b16 %v9488
    %v9585 = vunpack.c.h.b16 %v9488
    %v9586 = vunpack.c.l.b16 %v9489
    %v9587 = vunpack.c.h.b16 %v9489
    %v9588 = vunpack.c.l.b16 %v9490
    %v9589 = vunpack.c.h.b16 %v9490
    %v9590 = vunpack.c.l.b16 %v9491
    %v9591 = vunpack.c.h.b16 %v9491
    %v9592 = vunpack.c.l.b16 %v9492
    %v9593 = vunpack.c.h.b16 %v9492
    %v9594 = vunpack.c.l.b16 %v9493
    %v9595 = vunpack.c.h.b16 %v9493
    %v9596 = vunpack.c.l.b16 %v9494
    %v9597 = vunpack.c.h.b16 %v9494
    %v9598 = vunpack.c.l.b16 %v9495
    %v9599 = vunpack.c.h.b16 %v9495
    %v9600 = vunpack.c.l.b16 %v9496
    %v9601 = vunpack.c.h.b16 %v9496
    %v9602 = vunpack.c.l.b16 %v9497
    %v9603 = vunpack.c.h.b16 %v9497
    %v9604 = vunpack.c.l.b16 %v9498
    %v9605 = vunpack.c.h.b16 %v9498
    %v9606 = vunpack.c.l.b16 %v9499
    %v9607 = vunpack.c.h.b16 %v9499
    %v9608 = vunpack.c.l.b16 %v9500
    %v9609 = vunpack.c.h.b16 %v9500
    %v9610 = vunpack.c.l.b16 %v9501
    %v9611 = vunpack.c.h.b16 %v9501
    %v9612 = vunpack.c.l.b16 %v9502
    %v9613 = vunpack.c.h.b16 %v9502
    %v9614 = vpack.c.b16 %v9584, %v9582
    %v9615 = vpack.c.b16 %v9585, %v9583
    %v9616 = vpack.c.b16 %v9588, %v9586
    %v9617 = vpack.c.b16 %v9589, %v9587
    %v9618 = vpack.c.b16 %v9592, %v9590
    %v9619 = vpack.c.b16 %v9593, %v9591
    %v9620 = vpack.c.b16 %v9596, %v9594
    %v9621 = vpack.c.b16 %v9597, %v9595
    %v9622 = vpack.c.b16 %v9600, %v9598
    %v9623 = vpack.c.b16 %v9601, %v9599
    %v9624 = vpack.c.b16 %v9604, %v9602
    %v9625 = vpack.c.b16 %v9605, %v9603
    %v9626 = vpack.c.b16 %v9608, %v9606
    %v9627 = vpack.c.b16 %v9609, %v9607
    %v9628 = vpack.c.b16 %v9612, %v9610
    %v9629 = vpack.c.b16 %v9613, %v9611
    %9646 = vmatprep.subr.bf16.mxu0 %v9629
    %9647 = vmatpush1.bf16.msra.mxu0 %v9628
    %9648 = vmatprep.subr.bf16.mxu0 %v9627
    %9649 = vmatpush1.bf16.msra.mxu0 %v9626
    %9650 = vmatprep.subr.bf16.mxu0 %v9625
    %9651 = vmatpush1.bf16.msra.mxu0 %v9624
    %9652 = vmatprep.subr.bf16.mxu0 %v9623
    %9653 = vmatpush1.bf16.msra.mxu0 %v9622
    %9654 = vmatprep.subr.bf16.mxu0 %v9621
    %9655 = vmatpush1.bf16.msra.mxu0 %v9620
    %9656 = vmatprep.subr.bf16.mxu0 %v9619
    %9657 = vmatpush1.bf16.msra.mxu0 %v9618
    %9658 = vmatprep.subr.bf16.mxu0 %v9617
    %9659 = vmatpush1.bf16.msra.mxu0 %v9616
    %9660 = vmatprep.subr.bf16.mxu0 %v9615
    %9661 = vmatpush1.bf16.msra.mxu0 %v9614
    %9662 = vmatprep.subr.bf16.mxu0 0
    %9663 = vmatpush2.bf16.msra.mxu0 0
    %9664 = vmatprep.subr.bf16.mxu0 0
    %9665 = vmatpush2.bf16.msra.mxu0 0
    %9666 = vmatprep.subr.bf16.mxu0 0
    %9667 = vmatpush2.bf16.msra.mxu0 0
    %9668 = vmatprep.subr.bf16.mxu0 0
    %9669 = vmatpush2.bf16.msra.mxu0 0
    %9670 = vmatprep.subr.bf16.mxu0 0
    %9671 = vmatpush2.bf16.msra.mxu0 0
    %9672 = vmatprep.subr.bf16.mxu0 0
    %9673 = vmatpush2.bf16.msra.mxu0 0
    %9674 = vmatprep.subr.bf16.mxu0 0
    %9675 = vmatpush2.bf16.msra.mxu0 0
    %9676 = vmatprep.subr.bf16.mxu0 0
    %9677 = vmatpush2.bf16.msra.mxu0 0
    %9678 = vmatprep.mubr.bf16.mxu0 0
    %9679 = vmatmul.mubr.bf16.gmra.mxu0 %v9537
    %v9680 = vpop.f32.mrf.mxu0
    %v9681 = vadd.f32 0.0, %v9680
    %v9682 = vpop.f32.mrf.mxu0
    %v9683 = vadd.f32 0.0, %v9682
    %v9684 = vpop.f32.mrf.mxu0
    %v9685 = vadd.f32 0.0, %v9684
    %v9686 = vpop.f32.mrf.mxu0
    %v9687 = vadd.f32 0.0, %v9686
    %9688 = vmatprep.mubr.bf16.mxu0 0
    %9689 = vmatmul.mubr.bf16.gmra.mxu0 %v9545
    %v9690 = vpop.f32.mrf.mxu0
    %v9691 = vadd.f32 0.0, %v9690
    %v9692 = vpop.f32.mrf.mxu0
    %v9693 = vadd.f32 0.0, %v9692
    %v9694 = vpop.f32.mrf.mxu0
    %v9695 = vadd.f32 0.0, %v9694
    %v9696 = vpop.f32.mrf.mxu0
    %v9697 = vadd.f32 0.0, %v9696
    %9698 = vmatprep.mubr.bf16.mxu0 0
    %9699 = vmatmul.mubr.bf16.gmra.mxu0 %v9553
    %v9700 = vpop.f32.mrf.mxu0
    %v9701 = vadd.f32 0.0, %v9700
    %v9702 = vpop.f32.mrf.mxu0
    %v9703 = vadd.f32 0.0, %v9702
    %v9704 = vpop.f32.mrf.mxu0
    %v9705 = vadd.f32 0.0, %v9704
    %v9706 = vpop.f32.mrf.mxu0
    %v9707 = vadd.f32 0.0, %v9706
    %9708 = vmatprep.mubr.bf16.mxu0 0
    %9709 = vmatmul.mubr.bf16.gmra.mxu0 %v9561
    %v9710 = vpop.f32.mrf.mxu0
    %v9711 = vadd.f32 0.0, %v9710
    %v9712 = vpop.f32.mrf.mxu0
    %v9713 = vadd.f32 0.0, %v9712
    %v9714 = vpop.f32.mrf.mxu0
    %v9715 = vadd.f32 0.0, %v9714
    %v9716 = vpop.f32.mrf.mxu0
    %v9717 = vadd.f32 0.0, %v9716
    %9718 = vdwg.mxu0
    %v9719 = vadd.f32 %v9461, %v9681
    %v9720 = vadd.f32 %v9462, %v9683
    %v9721 = vadd.f32 %v9463, %v9685
    %v9722 = vadd.f32 %v9464, %v9687
    %v9723 = vadd.f32 %v9465, %v9691
    %v9724 = vadd.f32 %v9466, %v9693
    %v9725 = vadd.f32 %v9467, %v9695
    %v9726 = vadd.f32 %v9468, %v9697
    %v9727 = vadd.f32 %v9469, %v9701
    %v9728 = vadd.f32 %v9470, %v9703
    %v9729 = vadd.f32 %v9471, %v9705
    %v9730 = vadd.f32 %v9472, %v9707
    %v9731 = vadd.f32 %v9473, %v9711
    %v9732 = vadd.f32 %v9474, %v9713
    %v9733 = vadd.f32 %v9475, %v9715
    %v9734 = vadd.f32 %v9476, %v9717
    %v9735 = vld [vmem:[%s8] sm:$0x3]
    %v9737 = vlaneseq
    %v9738 = vshrl.u32 %v9737, 7
    %v9739 = vsub.s32 0, %v9738
    %v9740 = vrot.slane %v9735, %v9739
    %v9741 = vlaneseq
    %v9742 = vshrl.u32 %v9741, 7
    %v9743 = vsub.s32 1, %v9742
    %v9744 = vrot.slane %v9735, %v9743
    %v9747 = vadd.f32 %v9719, %v9740
    %v9748 = vadd.f32 %v9720, %v9744
    %v9749 = vadd.f32 %v9721, %v9740
    %v9750 = vadd.f32 %v9722, %v9744
    %v9751 = vadd.f32 %v9723, %v9740
    %v9752 = vadd.f32 %v9724, %v9744
    %v9753 = vadd.f32 %v9725, %v9740
    %v9754 = vadd.f32 %v9726, %v9744
    %v9755 = vadd.f32 %v9727, %v9740
    %v9756 = vadd.f32 %v9728, %v9744
    %v9757 = vadd.f32 %v9729, %v9740
    %v9758 = vadd.f32 %v9730, %v9744
    %v9759 = vadd.f32 %v9731, %v9740
    %v9760 = vadd.f32 %v9732, %v9744
    %v9761 = vadd.f32 %v9733, %v9740
    %v9762 = vadd.f32 %v9734, %v9744
    %v9763 = vmax.f32 %v9747, 0.0
    %v9764 = vmax.f32 %v9748, 0.0
    %v9765 = vmax.f32 %v9749, 0.0
    %v9766 = vmax.f32 %v9750, 0.0
    %v9767 = vmax.f32 %v9751, 0.0
    %v9768 = vmax.f32 %v9752, 0.0
    %v9769 = vmax.f32 %v9753, 0.0
    %v9770 = vmax.f32 %v9754, 0.0
    %v9771 = vmax.f32 %v9755, 0.0
    %v9772 = vmax.f32 %v9756, 0.0
    %v9773 = vmax.f32 %v9757, 0.0
    %v9774 = vmax.f32 %v9758, 0.0
    %v9775 = vmax.f32 %v9759, 0.0
    %v9776 = vmax.f32 %v9760, 0.0
    %v9777 = vmax.f32 %v9761, 0.0
    %v9778 = vmax.f32 %v9762, 0.0
    %9779 = vst [vmem:[#allocation8] sm:$0xff] %v9763
    %9780 = vst [vmem:[#allocation8 + $0x8] sm:$0xff] %v9764
    %9781 = vst [vmem:[#allocation8 + $0x10] sm:$0xff] %v9765
    %9782 = vst [vmem:[#allocation8 + $0x18] sm:$0xff] %v9766
    %9783 = vst [vmem:[#allocation8 + $0x20] sm:$0xff] %v9767
    %9784 = vst [vmem:[#allocation8 + $0x28] sm:$0xff] %v9768
    %9785 = vst [vmem:[#allocation8 + $0x30] sm:$0xff] %v9769
    %9786 = vst [vmem:[#allocation8 + $0x38] sm:$0xff] %v9770
    %9787 = vst [vmem:[#allocation8 + $0x40] sm:$0xff] %v9771
    %9788 = vst [vmem:[#allocation8 + $0x48] sm:$0xff] %v9772
    %9789 = vst [vmem:[#allocation8 + $0x50] sm:$0xff] %v9773
    %9790 = vst [vmem:[#allocation8 + $0x58] sm:$0xff] %v9774
    %9791 = vst [vmem:[#allocation8 + $0x60] sm:$0xff] %v9775
    %9792 = vst [vmem:[#allocation8 + $0x68] sm:$0xff] %v9776
    %9793 = vst [vmem:[#allocation8 + $0x70] sm:$0xff] %v9777
    %9794 = vst [vmem:[#allocation8 + $0x78] sm:$0xff] %v9778
    %v9795 = vld [vmem:[#allocation8] ss:$8 sm:$0x3]
    %s9796 = scalar_lea.vmem [#allocation8], 1
    %v9797 = vld [vmem:[%s9796] ss:$8 sm:$0x3]
    %v9798 = vmax.f32 %v9795, %v9797
    %s9799 = scalar_lea.vmem [#allocation8], 16
    %v9800 = vld [vmem:[%s9799] ss:$8 sm:$0x3]
    %s9801 = scalar_lea.vmem [#allocation8], 17
    %v9802 = vld [vmem:[%s9801] ss:$8 sm:$0x3]
    %v9803 = vmax.f32 %v9800, %v9802
    %v9804 = vmax.f32 %v9798, %v9803
    %v9805 = vlaneseq
    %vm9806 = vcmp.ge.s32.totalorder %v9805, 0
    %vm9807 = vcmp.lt.s32.totalorder %v9805, 256
    %vm9808 = vmand %vm9806, %vm9807
    %9809 = vst.msk [vmem:[#allocation14] sm:$0x3] %vm9808, %v9804
    %s9810 = scalar_lea.vmem [#allocation8], 96
    %v9811 = vld [vmem:[%s9810] ss:$8 sm:$0x3]
    %s9812 = scalar_lea.vmem [#allocation8], 97
    %v9813 = vld [vmem:[%s9812] ss:$8 sm:$0x3]
    %v9814 = vmax.f32 %v9811, %v9813
    %s9815 = scalar_lea.vmem [#allocation8], 112
    %v9816 = vld [vmem:[%s9815] ss:$8 sm:$0x3]
    %s9817 = scalar_lea.vmem [#allocation8], 113
    %v9818 = vld [vmem:[%s9817] ss:$8 sm:$0x3]
    %v9819 = vmax.f32 %v9816, %v9818
    %v9820 = vmax.f32 %v9814, %v9819
    %s9821 = scalar_lea.vmem [#allocation14], 2
    %9822 = vst.msk [vmem:[%s9821] sm:$0x3] %vm9808, %v9820
    // Predicated region
    $region50: #{tpu_custom_call.1} parent=1 // pred_check
      _
    $region51: #{tpu_custom_call.1} parent=1 // pred_check_branch
      %9824 = sbr.rel (0) target = $region53
    $region52: #{tpu_custom_call.1} parent=1 // pred_region
      %s9826 = ssub.s32 64, 64
      %9827 = vsyncadd [#allocation11], %s9826
      %s9828 = sshll.u32 [#allocation14], 4
      %s9829 = int_to_ptr.vmem [resolvable:$true] %s9828
      %9834 = dma.vmem_to_hbm [thread:$0]  %s9829, 64, %s9, [#allocation11], 32, 32, 2
    $region53: #{tpu_custom_call.1} parent=1 // pred_fallthru
      _
    // Predicated region
    $region54: #{tpu_custom_call.1} parent=1 // pred_check
      _
    $region55: #{tpu_custom_call.1} parent=1 // pred_check_branch
      %9836 = sbr.rel (0) target = $region57
    $region56: #{tpu_custom_call.1} parent=1 // pred_region
      %9837 = dma.done [#allocation11], 64
    $region57: #{tpu_custom_call.1} parent=1 // pred_fallthru
      _
    %9838 = vsyncpa [#allocation10], 1
    %9839 = vsyncpa [#allocation13], 1
    %9840 = vsyncpa [#allocation11], 1

</llo_original>
